<compile_context>
chip_gen: v7x
topology: tpu7x:2x2x1
jax: 0.10.0
libtpu: 0.0.40
codegen_flags: <defaults>
</compile_context>

<pallas_src>
import functools

import jax
import jax.numpy as jnp
import numpy as np
from jax import lax
from jax.experimental import pallas as pl
from jax.experimental.pallas import tpu as pltpu

# ---- single CPC module config (encoder + GRU autoregressor + InfoNCE) ----
KERNEL_SIZES = (10, 8, 4)
STRIDES = (5, 4, 2)
PADDINGS = (2, 2, 2)
CNN_HIDDEN = 32        # cnn_hidden_dim
REG_HIDDEN = 32        # regressor_hidden_dim (= output_dim)
PRED_STEPS = 4         # prediction_step
GATE_WIDTH = 128       # 3*REG_HIDDEN (=96) zero-padded to a full 128-lane tile
BP = 8                 # batch rows padded to a full 8-sublane tile inside the GRU

assert PRED_STEPS * CNN_HIDDEN == GATE_WIDTH  # one 128-lane slab fits all wide weights


def _encoder_dims(L):
    T1 = (L + 2 * PADDINGS[0] - KERNEL_SIZES[0]) // STRIDES[0] + 1
    T2 = (T1 + 2 * PADDINGS[1] - KERNEL_SIZES[1]) // STRIDES[1] + 1
    T3 = (T2 + 2 * PADDINGS[2] - KERNEL_SIZES[2]) // STRIDES[2] + 1
    return T1, T2, T3


# =====================================================================================
# One fused kernel: conv encoder -> GRU -> InfoNCE (all prediction steps)
# =====================================================================================
def _cpc_fused_kernel(patches_ref, cw_ref, ww_ref, sels_ref,       # inputs
                      nce_ref, z_out_ref,                          # outputs
                      y0_ref, y1_ref, gi_ref, c_ref,               # VMEM scratch
                      *, B, T1, T2, T3):
    C = CNN_HIDDEN
    R = REG_HIDDEN
    K0, K1, K2 = KERNEL_SIZES
    P1, P2 = PADDINGS[1], PADDINGS[2]
    L1p = T1 + 2 * P1                 # padded per-batch length feeding conv-1
    L2p = T2 + 2 * P2                 # padded per-batch length feeding conv-2
    V1 = B * L1p - K1 + 1             # stride-1 positions over the flat conv-1 slab
    V2 = B * L2p - K2 + 1
    R1 = B * L2p                      # rows of the conv-1 output slab
    T = T3

    # row offsets inside the packed conv-weight slab
    o_w1 = K0 + 1
    o_w2 = o_w1 + K1 * C
    o_b1 = o_w2 + K2 * C
    o_b2 = o_b1 + 1

    # ---------------- conv layer 0 ----------------------------------------------------
    # conv-0 bias is folded into the im2col ones-column; pad rows of `patches` are all
    # zero so relu(0)=0 reproduces the zero padding that conv-1 expects.
    y0_ref[...] = jnp.maximum(
        jnp.dot(patches_ref[...], cw_ref[0:o_w1, :],
                preferred_element_type=jnp.float32), 0.0)           # (B*L1p, C)

    # ---------------- conv layer 1: K1 per-tap matmuls over the whole flat slab -------
    acc1 = jnp.dot(y0_ref[0:V1, :], cw_ref[o_w1:o_w1 + C, :],
                   preferred_element_type=jnp.float32)
    for j in range(1, K1):
        acc1 = acc1 + jnp.dot(
            y0_ref[j:j + V1, :],
            cw_ref[o_w1 + j * C:o_w1 + (j + 1) * C, :],
            preferred_element_type=jnp.float32)
    acc1 = acc1 + cw_ref[o_b1:o_b1 + 1, :]
    # block-one-hot selection: realises the stride, drops batch-straddling rows and
    # re-inserts zero pad rows (all-zero sel rows -> relu(0) = 0).
    y1_ref[...] = jnp.maximum(
        jnp.dot(sels_ref[0:R1, 0:V1], acc1,
                preferred_element_type=jnp.float32), 0.0)            # (B*L2p, C)

    # ---------------- conv layer 2 -> latents z (time-major) --------------------------
    acc2 = jnp.dot(y1_ref[0:V2, :], cw_ref[o_w2:o_w2 + C, :],
                   preferred_element_type=jnp.float32)
    for j in range(1, K2):
        acc2 = acc2 + jnp.dot(
            y1_ref[j:j + V2, :],
            cw_ref[o_w2 + j * C:o_w2 + (j + 1) * C, :],
            preferred_element_type=jnp.float32)
    a2 = jnp.maximum(acc2 + cw_ref[o_b2:o_b2 + 1, :], 0.0)           # (V2, C)
    # compact time-major latents (row = t*B + b) for InfoNCE ...
    z_c = jnp.dot(sels_ref[R1 + T * BP:R1 + T * BP + T * B, 0:V2], a2,
                  preferred_element_type=jnp.float32)                # (T*B, C)
    # ... and an 8-sublane-padded copy (row = t*BP + b, dead rows zero) for the GRU.
    z_g = jnp.dot(sels_ref[R1:R1 + T * BP, 0:V2], a2,
                  preferred_element_type=jnp.float32)                # (T*BP, C)
    z_out_ref[...] = z_c

    # ---------------- GRU autoregressor ------------------------------------------------
    wih = ww_ref[0:R, :]
    whh = ww_ref[R:2 * R, :]
    wcat = ww_ref[2 * R:3 * R, :]
    bih = ww_ref[3 * R:3 * R + 1, :]
    bhh = ww_ref[3 * R + 1:3 * R + 2, :]
    bcat = ww_ref[3 * R + 2:3 * R + 3, :]

    # input-to-hidden matmul hoisted out of the recurrence; each gi_t below is one
    # aligned full (8,128) tile.
    gi_ref[...] = jnp.dot(z_g, wih, preferred_element_type=jnp.float32) + bih

    h = jnp.zeros((BP, R), jnp.float32)           # rows >= B are dead (never read back)
    for t in range(T):                            # static unroll (T == 13)
        gi_t = gi_ref[t * BP:(t + 1) * BP, :]                         # (8, 128)
        gh = jnp.dot(h, whh, preferred_element_type=jnp.float32) + bhh
        s = gi_t + gh
        r = jax.nn.sigmoid(s[:, 0:R])
        u = jax.nn.sigmoid(s[:, R:2 * R])
        n = jnp.tanh(gi_t[:, 2 * R:3 * R] + r * gh[:, 2 * R:3 * R])
        h = (1.0 - u) * n + u * h
        c_ref[t * B:(t + 1) * B, :] = h[0:B, :]   # compact time-major context rows

    # ---------------- InfoNCE: all PRED_STEPS heads in one 128-lane matmul -------------
    preds = jnp.dot(c_ref[...], wcat, preferred_element_type=jnp.float32) + bcat
    total = jnp.zeros((1, 1), jnp.float32)
    for k in range(1, PRED_STEPS + 1):
        nk = (T - k) * B
        pred_k = preds[0:nk, (k - 1) * C:k * C]        # contiguous block (time-major)
        z_k = z_c[k * B:T * B, :]                      # contiguous block (time-major)
        scores = lax.dot_general(pred_k, z_k, (((1,), (1,)), ((), ())),
                                 preferred_element_type=jnp.float32)   # (nk, nk)
        pos = jnp.sum(pred_k * z_k, axis=-1, keepdims=True)            # positive scores
        m = jnp.max(scores, axis=-1, keepdims=True)
        lse = jnp.log(jnp.sum(jnp.exp(scores - m), axis=-1, keepdims=True)) + m
        total = total + jnp.sum(lse - pos, axis=0, keepdims=True) * (1.0 / nk)
    nce_ref[...] = total * (1.0 / PRED_STEPS)


# =====================================================================================
# Host-side packing (run ONCE, outside the jitted path)
# =====================================================================================
def _build_sels(B, T1, T2, T3):
    """Constant block-one-hot selection matrices for both conv strides + relayouts."""
    P1, P2 = PADDINGS[1], PADDINGS[2]
    K1, K2 = KERNEL_SIZES[1], KERNEL_SIZES[2]
    S1, S2 = STRIDES[1], STRIDES[2]
    L1p, L2p = T1 + 2 * P1, T2 + 2 * P2
    V1 = B * L1p - K1 + 1
    V2 = B * L2p - K2 + 1
    R1 = B * L2p
    sels = np.zeros((R1 + T3 * BP + T3 * B, max(V1, V2)), np.float32)
    for b in range(B):
        for t in range(T2):      # conv-1: stride + re-pad, keeps padded batch-major rows
            sels[b * L2p + P2 + t, b * L1p + S1 * t] = 1.0
        for t in range(T3):      # conv-2: stride + relayout to time-major
            sels[R1 + t * BP + b, b * L2p + S2 * t] = 1.0            # GRU copy (8-row pad)
            sels[R1 + T3 * BP + t * B + b, b * L2p + S2 * t] = 1.0   # InfoNCE copy
    return jnp.asarray(sels)


def pack_params(params, B, L):
    """Pack all weights / biases / selectors into 3 kernel inputs (computed once)."""
    assert B <= BP
    C = CNN_HIDDEN
    K0, K1, K2 = KERNEL_SIZES
    T1, T2, T3 = _encoder_dims(L)

    # conv weights in (K*Cin, Cout) tap-major layout; conv-0 bias folded as extra row
    w0 = jnp.transpose(params["conv0_w"], (2, 1, 0)).reshape(K0, C)      # cin == 1
    w0_ext = jnp.concatenate([w0, params["conv0_b"].reshape(1, C)], axis=0)
    w1 = jnp.transpose(params["conv1_w"], (2, 1, 0)).reshape(K1 * C, C)
    w2 = jnp.transpose(params["conv2_w"], (2, 1, 0)).reshape(K2 * C, C)
    cw = jnp.concatenate([w0_ext, w1, w2,
                          params["conv1_b"].reshape(1, C),
                          params["conv2_b"].reshape(1, C)], axis=0)       # (397, 32)

    # GRU + InfoNCE-head weights, gate width zero-padded 96 -> 128 (lane-dense)
    gpad = GATE_WIDTH - 3 * REG_HIDDEN
    wih = jnp.pad(params["gru_w_ih_t"], ((0, 0), (0, gpad)))
    whh = jnp.pad(params["gru_w_hh_t"], ((0, 0), (0, gpad)))
    bih = jnp.pad(params["gru_b_ih"], (0, gpad)).reshape(1, GATE_WIDTH)
    bhh = jnp.pad(params["gru_b_hh"], (0, gpad)).reshape(1, GATE_WIDTH)
    wcat = jnp.concatenate([params[f"W{k}_t"] for k in range(1, PRED_STEPS + 1)], axis=1)
    bcat = jnp.concatenate([params[f"W{k}_b"] for k in range(1, PRED_STEPS + 1)],
                           axis=0).reshape(1, PRED_STEPS * CNN_HIDDEN)
    ww = jnp.concatenate([wih, whh, wcat, bih, bhh, bcat], axis=0)        # (99, 128)

    sels = _build_sels(B, T1, T2, T3)
    return {"cw": cw, "ww": ww, "sels": sels}


# =====================================================================================
# Forward wrapper
# =====================================================================================
@jax.jit
def _forward_impl(x, cw, ww, sels):
    # x: (B, 1, L)  (PyTorch NCW audio)
    B, _, L = x.shape
    K0, S0, P0 = KERNEL_SIZES[0], STRIDES[0], PADDINGS[0]
    P1, P2 = PADDINGS[1], PADDINGS[2]
    T1, T2, T3 = _encoder_dims(L)
    L1p, L2p = T1 + 2 * P1, T2 + 2 * P2

    # layer-0 im2col (the only data-dependent prep), laid out directly as the padded
    # batch-major slab conv-1 consumes; the trailing ones-column carries the conv-0 bias
    # and is zero on pad rows so they stay exactly zero.
    xp = jnp.pad(x[:, 0, :].astype(jnp.float32), ((0, 0), (P0, P0)))
    idx = jnp.arange(T1)[:, None] * S0 + jnp.arange(K0)[None, :]
    patches = jnp.concatenate([xp[:, idx], jnp.ones((B, T1, 1), jnp.float32)], axis=-1)
    patches = jnp.pad(patches, ((0, 0), (P1, P1), (0, 0))).reshape(B * L1p, K0 + 1)

    kern = functools.partial(_cpc_fused_kernel, B=B, T1=T1, T2=T2, T3=T3)
    nce, z = pl.pallas_call(
        kern,
        out_shape=(jax.ShapeDtypeStruct((1, 1), jnp.float32),
                   jax.ShapeDtypeStruct((T3 * B, CNN_HIDDEN), jnp.float32)),
        in_specs=[pl.BlockSpec(memory_space=pltpu.MemorySpace.VMEM)] * 4,
        out_specs=(pl.BlockSpec(memory_space=pltpu.MemorySpace.VMEM),
                   pl.BlockSpec(memory_space=pltpu.MemorySpace.VMEM)),
        scratch_shapes=[
            pltpu.VMEM((B * L1p, CNN_HIDDEN), jnp.float32),   # conv-1 input slab
            pltpu.VMEM((B * L2p, CNN_HIDDEN), jnp.float32),   # conv-2 input slab
            pltpu.VMEM((T3 * BP, GATE_WIDTH), jnp.float32),   # hoisted GRU input gates
            pltpu.VMEM((T3 * B, REG_HIDDEN), jnp.float32),    # time-major GRU context
        ],
    )(patches, cw, ww, sels)

    n_modules = 1
    nce_loss = jnp.reshape(nce, (1, n_modules))
    kld_loss = jnp.zeros((1, n_modules), jnp.float32)    # predict_distributions=False
    loss = nce_loss + kld_loss
    return loss, nce_loss, kld_loss, z


def full_model_forward(x, cw, ww, sels):
    """FullModel.forward equivalent: returns (loss, nce_loss, kld_loss)."""
    loss, nce_loss, kld_loss, _ = _forward_impl(x, cw, ww, sels)
    return loss, nce_loss, kld_loss


# =====================================================================================
# Pure-JAX reference of the same forward pass (for runtime correctness check)
# =====================================================================================
def reference_forward(x, params):
    P = lax.Precision.HIGHEST
    h = x.astype(jnp.float32)
    for i in range(len(KERNEL_SIZES)):
        h = lax.conv_general_dilated(
            h, params[f"conv{i}_w"], window_strides=(STRIDES[i],),
            padding=[(PADDINGS[i], PADDINGS[i])],
            dimension_numbers=("NCH", "OIH", "NCH"), precision=P)
        h = jax.nn.relu(h + params[f"conv{i}_b"][None, :, None])
    z = jnp.transpose(h, (0, 2, 1))                      # (B, T, C)
    B, T, C = z.shape
    R = REG_HIDDEN
    gi = jnp.dot(z, params["gru_w_ih_t"], precision=P) + params["gru_b_ih"]
    hs = jnp.zeros((B, R), jnp.float32)
    ctx = []
    for t in range(T):
        gh = jnp.dot(hs, params["gru_w_hh_t"], precision=P) + params["gru_b_hh"]
        gt = gi[:, t, :]
        r = jax.nn.sigmoid(gt[:, :R] + gh[:, :R])
        u = jax.nn.sigmoid(gt[:, R:2 * R] + gh[:, R:2 * R])
        n = jnp.tanh(gt[:, 2 * R:] + r * gh[:, 2 * R:])
        hs = (1.0 - u) * n + u * hs
        ctx.append(hs)
    c = jnp.stack(ctx, axis=1)                           # (B, T, R)
    total = jnp.float32(0.0)
    for k in range(1, PRED_STEPS + 1):
        pred = jnp.dot(c[:, :T - k, :], params[f"W{k}_t"], precision=P) + params[f"W{k}_b"]
        zk = z[:, k:, :]
        pf = pred.reshape(-1, C)
        zf = zk.reshape(-1, C)
        scores = jnp.dot(pf, zf.T, precision=P)
        pos = jnp.sum(pf * zf, axis=-1)
        lse = jax.scipy.special.logsumexp(scores, axis=-1)
        total = total + jnp.mean(lse - pos)
    nce = total / PRED_STEPS
    z_tm = jnp.transpose(z, (1, 0, 2)).reshape(T * B, C)   # time-major, like the kernel
    return nce, z_tm


# ---------------- deterministic parameter init ----------------
def init_params(key):
    params = {}
    keys = jax.random.split(key, 4 * len(KERNEL_SIZES) + 8 + 2 * PRED_STEPS)
    ki = iter(keys)
    cins = (1,) + (CNN_HIDDEN,) * (len(KERNEL_SIZES) - 1)
    for i, (cin, k) in enumerate(zip(cins, KERNEL_SIZES)):
        bound = float(1.0 / (cin * k) ** 0.5)
        params[f"conv{i}_w"] = jax.random.uniform(
            next(ki), (CNN_HIDDEN, cin, k), jnp.float32, -bound, bound)
        params[f"conv{i}_b"] = jax.random.uniform(
            next(ki), (CNN_HIDDEN,), jnp.float32, -bound, bound)
    b = float(1.0 / REG_HIDDEN ** 0.5)
    params["gru_w_ih_t"] = jax.random.uniform(
        next(ki), (CNN_HIDDEN, 3 * REG_HIDDEN), jnp.float32, -b, b)
    params["gru_w_hh_t"] = jax.random.uniform(
        next(ki), (REG_HIDDEN, 3 * REG_HIDDEN), jnp.float32, -b, b)
    params["gru_b_ih"] = jax.random.uniform(next(ki), (3 * REG_HIDDEN,), jnp.float32, -b, b)
    params["gru_b_hh"] = jax.random.uniform(next(ki), (3 * REG_HIDDEN,), jnp.float32, -b, b)
    for k in range(1, PRED_STEPS + 1):
        params[f"W{k}_t"] = jax.random.uniform(
            next(ki), (REG_HIDDEN, CNN_HIDDEN), jnp.float32, -b, b)
        params[f"W{k}_b"] = jax.random.uniform(next(ki), (CNN_HIDDEN,), jnp.float32, -b, b)
    return params


if __name__ == "__main__":
    key = jax.random.PRNGKey(0)
    pkey, xkey = jax.random.split(key)
    params = init_params(pkey)

    B, L = 2, 512
    x = jax.random.normal(xkey, (B, 1, L), dtype=jnp.float32)

    packed = pack_params(params, B, L)       # once, outside the per-step jitted path

    loss, nce_loss, kld_loss, z_lat = _forward_impl(
        x, packed["cw"], packed["ww"], packed["sels"])
    jax.block_until_ready((loss, nce_loss, kld_loss, z_lat))

    assert loss.shape == (1, 1) and nce_loss.shape == (1, 1) and kld_loss.shape == (1, 1)
    assert bool(jnp.isfinite(loss).all())

    # runtime correctness check against the pure-JAX reference (latents + NCE loss)
    ref_nce, ref_z = jax.jit(reference_forward)(x, params)
    jax.block_until_ready((ref_nce, ref_z))
    z_err = float(jnp.max(jnp.abs(z_lat - ref_z)))
    z_scale = float(jnp.max(jnp.abs(ref_z))) + 1e-6
    assert z_err <= 2e-3 + 2e-2 * z_scale, ("latent mismatch", z_err, z_scale)
    nce_err = abs(float(nce_loss[0, 0]) - float(ref_nce))
    assert nce_err <= 5e-2 * max(1.0, abs(float(ref_nce))), ("nce mismatch", nce_err)

    print("KERNEL_OK")
</pallas_src>

<mosaic_0001>
module attributes {stable_mosaic.version = 11 : i64} {
  func.func @_cpc_fused_kernel(%arg0: memref<212x11xf32, #tpu.memory_space<vmem>>, %arg1: memref<397x32xf32, #tpu.memory_space<vmem>>, %arg2: memref<99x128xf32, #tpu.memory_space<vmem>>, %arg3: memref<188x205xf32, #tpu.memory_space<vmem>>, %arg4: memref<1x1xf32, #tpu.memory_space<vmem>>, %arg5: memref<26x32xf32, #tpu.memory_space<vmem>>, %arg6: memref<212x32xf32, #tpu.memory_space<vmem>>, %arg7: memref<58x32xf32, #tpu.memory_space<vmem>>, %arg8: memref<104x128xf32, #tpu.memory_space<vmem>>, %arg9: memref<26x32xf32, #tpu.memory_space<vmem>>) attributes {dimension_semantics = [], scalar_prefetch = 0 : i64, scratch_operands = 4 : i64, tpu.core_type = #tpu.core_type<tc>} {
    %c0 = arith.constant 0 : index
    %c0_0 = arith.constant 0 : index
    %0 = vector.load %arg0[%c0, %c0_0] : memref<212x11xf32, #tpu.memory_space<vmem>>, vector<212x11xf32>
    %c0_1 = arith.constant 0 : index
    %c0_2 = arith.constant 0 : index
    %1 = vector.load %arg1[%c0_1, %c0_2] : memref<397x32xf32, #tpu.memory_space<vmem>>, vector<11x32xf32>
    %cst = arith.constant dense<0.000000e+00> : vector<212x32xf32>
    %2 = tpu.matmul %0, %1, %cst {dimension_numbers = #tpu.dot_dimension_numbers<[1], [0], [0], [1], [0, 0, 1, 1], [], []>} : vector<212x11xf32>, vector<11x32xf32>, vector<212x32xf32> -> vector<212x32xf32>
    %cst_3 = arith.constant 0.000000e+00 : f32
    %3 = vector.broadcast %cst_3 : f32 to vector<212x32xf32>
    %4 = arith.maximumf %2, %3 : vector<212x32xf32>
    %c0_4 = arith.constant 0 : index
    %c0_5 = arith.constant 0 : index
    %5 = vector.load %arg6[%c0_4, %c0_5] : memref<212x32xf32, #tpu.memory_space<vmem>>, vector<212x32xf32>
    tpu.vector_store %arg6[%c0_4, %c0_5], %4 {strides = array<i32>} : memref<212x32xf32, #tpu.memory_space<vmem>>, vector<212x32xf32>,
    %c0_6 = arith.constant 0 : index
    %c0_7 = arith.constant 0 : index
    %6 = vector.load %arg6[%c0_6, %c0_7] : memref<212x32xf32, #tpu.memory_space<vmem>>, vector<205x32xf32>
    %c11 = arith.constant 11 : index
    %c0_8 = arith.constant 0 : index
    %7 = vector.load %arg1[%c11, %c0_8] : memref<397x32xf32, #tpu.memory_space<vmem>>, vector<32x32xf32>
    %cst_9 = arith.constant dense<0.000000e+00> : vector<205x32xf32>
    %8 = tpu.matmul %6, %7, %cst_9 {dimension_numbers = #tpu.dot_dimension_numbers<[1], [0], [0], [1], [0, 0, 1, 1], [], []>} : vector<205x32xf32>, vector<32x32xf32>, vector<205x32xf32> -> vector<205x32xf32>
    %c1 = arith.constant 1 : index
    %c0_10 = arith.constant 0 : index
    %9 = vector.load %arg6[%c1, %c0_10] : memref<212x32xf32, #tpu.memory_space<vmem>>, vector<205x32xf32>
    %c43 = arith.constant 43 : index
    %c0_11 = arith.constant 0 : index
    %10 = vector.load %arg1[%c43, %c0_11] : memref<397x32xf32, #tpu.memory_space<vmem>>, vector<32x32xf32>
    %cst_12 = arith.constant dense<0.000000e+00> : vector<205x32xf32>
    %11 = tpu.matmul %9, %10, %cst_12 {dimension_numbers = #tpu.dot_dimension_numbers<[1], [0], [0], [1], [0, 0, 1, 1], [], []>} : vector<205x32xf32>, vector<32x32xf32>, vector<205x32xf32> -> vector<205x32xf32>
    %12 = arith.addf %8, %11 : vector<205x32xf32>
    %c2 = arith.constant 2 : index
    %c0_13 = arith.constant 0 : index
    %13 = vector.load %arg6[%c2, %c0_13] : memref<212x32xf32, #tpu.memory_space<vmem>>, vector<205x32xf32>
    %c75 = arith.constant 75 : index
    %c0_14 = arith.constant 0 : index
    %14 = vector.load %arg1[%c75, %c0_14] : memref<397x32xf32, #tpu.memory_space<vmem>>, vector<32x32xf32>
    %cst_15 = arith.constant dense<0.000000e+00> : vector<205x32xf32>
    %15 = tpu.matmul %13, %14, %cst_15 {dimension_numbers = #tpu.dot_dimension_numbers<[1], [0], [0], [1], [0, 0, 1, 1], [], []>} : vector<205x32xf32>, vector<32x32xf32>, vector<205x32xf32> -> vector<205x32xf32>
    %16 = arith.addf %12, %15 : vector<205x32xf32>
    %c3 = arith.constant 3 : index
    %c0_16 = arith.constant 0 : index
    %17 = vector.load %arg6[%c3, %c0_16] : memref<212x32xf32, #tpu.memory_space<vmem>>, vector<205x32xf32>
    %c107 = arith.constant 107 : index
    %c0_17 = arith.constant 0 : index
    %18 = vector.load %arg1[%c107, %c0_17] : memref<397x32xf32, #tpu.memory_space<vmem>>, vector<32x32xf32>
    %cst_18 = arith.constant dense<0.000000e+00> : vector<205x32xf32>
    %19 = tpu.matmul %17, %18, %cst_18 {dimension_numbers = #tpu.dot_dimension_numbers<[1], [0], [0], [1], [0, 0, 1, 1], [], []>} : vector<205x32xf32>, vector<32x32xf32>, vector<205x32xf32> -> vector<205x32xf32>
    %20 = arith.addf %16, %19 : vector<205x32xf32>
    %c4 = arith.constant 4 : index
    %c0_19 = arith.constant 0 : index
    %21 = vector.load %arg6[%c4, %c0_19] : memref<212x32xf32, #tpu.memory_space<vmem>>, vector<205x32xf32>
    %c139 = arith.constant 139 : index
    %c0_20 = arith.constant 0 : index
    %22 = vector.load %arg1[%c139, %c0_20] : memref<397x32xf32, #tpu.memory_space<vmem>>, vector<32x32xf32>
    %cst_21 = arith.constant dense<0.000000e+00> : vector<205x32xf32>
    %23 = tpu.matmul %21, %22, %cst_21 {dimension_numbers = #tpu.dot_dimension_numbers<[1], [0], [0], [1], [0, 0, 1, 1], [], []>} : vector<205x32xf32>, vector<32x32xf32>, vector<205x32xf32> -> vector<205x32xf32>
    %24 = arith.addf %20, %23 : vector<205x32xf32>
    %c5 = arith.constant 5 : index
    %c0_22 = arith.constant 0 : index
    %25 = vector.load %arg6[%c5, %c0_22] : memref<212x32xf32, #tpu.memory_space<vmem>>, vector<205x32xf32>
    %c171 = arith.constant 171 : index
    %c0_23 = arith.constant 0 : index
    %26 = vector.load %arg1[%c171, %c0_23] : memref<397x32xf32, #tpu.memory_space<vmem>>, vector<32x32xf32>
    %cst_24 = arith.constant dense<0.000000e+00> : vector<205x32xf32>
    %27 = tpu.matmul %25, %26, %cst_24 {dimension_numbers = #tpu.dot_dimension_numbers<[1], [0], [0], [1], [0, 0, 1, 1], [], []>} : vector<205x32xf32>, vector<32x32xf32>, vector<205x32xf32> -> vector<205x32xf32>
    %28 = arith.addf %24, %27 : vector<205x32xf32>
    %c6 = arith.constant 6 : index
    %c0_25 = arith.constant 0 : index
    %29 = vector.load %arg6[%c6, %c0_25] : memref<212x32xf32, #tpu.memory_space<vmem>>, vector<205x32xf32>
    %c203 = arith.constant 203 : index
    %c0_26 = arith.constant 0 : index
    %30 = vector.load %arg1[%c203, %c0_26] : memref<397x32xf32, #tpu.memory_space<vmem>>, vector<32x32xf32>
    %cst_27 = arith.constant dense<0.000000e+00> : vector<205x32xf32>
    %31 = tpu.matmul %29, %30, %cst_27 {dimension_numbers = #tpu.dot_dimension_numbers<[1], [0], [0], [1], [0, 0, 1, 1], [], []>} : vector<205x32xf32>, vector<32x32xf32>, vector<205x32xf32> -> vector<205x32xf32>
    %32 = arith.addf %28, %31 : vector<205x32xf32>
    %c7 = arith.constant 7 : index
    %c0_28 = arith.constant 0 : index
    %33 = vector.load %arg6[%c7, %c0_28] : memref<212x32xf32, #tpu.memory_space<vmem>>, vector<205x32xf32>
    %c235 = arith.constant 235 : index
    %c0_29 = arith.constant 0 : index
    %34 = vector.load %arg1[%c235, %c0_29] : memref<397x32xf32, #tpu.memory_space<vmem>>, vector<32x32xf32>
    %cst_30 = arith.constant dense<0.000000e+00> : vector<205x32xf32>
    %35 = tpu.matmul %33, %34, %cst_30 {dimension_numbers = #tpu.dot_dimension_numbers<[1], [0], [0], [1], [0, 0, 1, 1], [], []>} : vector<205x32xf32>, vector<32x32xf32>, vector<205x32xf32> -> vector<205x32xf32>
    %36 = arith.addf %32, %35 : vector<205x32xf32>
    %c395 = arith.constant 395 : index
    %c0_31 = arith.constant 0 : index
    %37 = vector.load %arg1[%c395, %c0_31] : memref<397x32xf32, #tpu.memory_space<vmem>>, vector<1x32xf32>
    %38 = vector.broadcast %37 : vector<1x32xf32> to vector<205x32xf32>
    %39 = arith.addf %36, %38 : vector<205x32xf32>
    %c0_32 = arith.constant 0 : index
    %c0_33 = arith.constant 0 : index
    %40 = vector.load %arg3[%c0_32, %c0_33] : memref<188x205xf32, #tpu.memory_space<vmem>>, vector<58x205xf32>
    %cst_34 = arith.constant dense<0.000000e+00> : vector<58x32xf32>
    %41 = tpu.matmul %40, %39, %cst_34 {dimension_numbers = #tpu.dot_dimension_numbers<[1], [0], [0], [1], [0, 0, 1, 1], [], []>} : vector<58x205xf32>, vector<205x32xf32>, vector<58x32xf32> -> vector<58x32xf32>
    %cst_35 = arith.constant 0.000000e+00 : f32
    %42 = vector.broadcast %cst_35 : f32 to vector<58x32xf32>
    %43 = arith.maximumf %41, %42 : vector<58x32xf32>
    %c0_36 = arith.constant 0 : index
    %c0_37 = arith.constant 0 : index
    %44 = vector.load %arg7[%c0_36, %c0_37] : memref<58x32xf32, #tpu.memory_space<vmem>>, vector<58x32xf32>
    tpu.vector_store %arg7[%c0_36, %c0_37], %43 {strides = array<i32>} : memref<58x32xf32, #tpu.memory_space<vmem>>, vector<58x32xf32>,
    %c0_38 = arith.constant 0 : index
    %c0_39 = arith.constant 0 : index
    %45 = vector.load %arg7[%c0_38, %c0_39] : memref<58x32xf32, #tpu.memory_space<vmem>>, vector<55x32xf32>
    %c267 = arith.constant 267 : index
    %c0_40 = arith.constant 0 : index
    %46 = vector.load %arg1[%c267, %c0_40] : memref<397x32xf32, #tpu.memory_space<vmem>>, vector<32x32xf32>
    %cst_41 = arith.constant dense<0.000000e+00> : vector<55x32xf32>
    %47 = tpu.matmul %45, %46, %cst_41 {dimension_numbers = #tpu.dot_dimension_numbers<[1], [0], [0], [1], [0, 0, 1, 1], [], []>} : vector<55x32xf32>, vector<32x32xf32>, vector<55x32xf32> -> vector<55x32xf32>
    %c1_42 = arith.constant 1 : index
    %c0_43 = arith.constant 0 : index
    %48 = vector.load %arg7[%c1_42, %c0_43] : memref<58x32xf32, #tpu.memory_space<vmem>>, vector<55x32xf32>
    %c299 = arith.constant 299 : index
    %c0_44 = arith.constant 0 : index
    %49 = vector.load %arg1[%c299, %c0_44] : memref<397x32xf32, #tpu.memory_space<vmem>>, vector<32x32xf32>
    %cst_45 = arith.constant dense<0.000000e+00> : vector<55x32xf32>
    %50 = tpu.matmul %48, %49, %cst_45 {dimension_numbers = #tpu.dot_dimension_numbers<[1], [0], [0], [1], [0, 0, 1, 1], [], []>} : vector<55x32xf32>, vector<32x32xf32>, vector<55x32xf32> -> vector<55x32xf32>
    %51 = arith.addf %47, %50 : vector<55x32xf32>
    %c2_46 = arith.constant 2 : index
    %c0_47 = arith.constant 0 : index
    %52 = vector.load %arg7[%c2_46, %c0_47] : memref<58x32xf32, #tpu.memory_space<vmem>>, vector<55x32xf32>
    %c331 = arith.constant 331 : index
    %c0_48 = arith.constant 0 : index
    %53 = vector.load %arg1[%c331, %c0_48] : memref<397x32xf32, #tpu.memory_space<vmem>>, vector<32x32xf32>
    %cst_49 = arith.constant dense<0.000000e+00> : vector<55x32xf32>
    %54 = tpu.matmul %52, %53, %cst_49 {dimension_numbers = #tpu.dot_dimension_numbers<[1], [0], [0], [1], [0, 0, 1, 1], [], []>} : vector<55x32xf32>, vector<32x32xf32>, vector<55x32xf32> -> vector<55x32xf32>
    %55 = arith.addf %51, %54 : vector<55x32xf32>
    %c3_50 = arith.constant 3 : index
    %c0_51 = arith.constant 0 : index
    %56 = vector.load %arg7[%c3_50, %c0_51] : memref<58x32xf32, #tpu.memory_space<vmem>>, vector<55x32xf32>
    %c363 = arith.constant 363 : index
    %c0_52 = arith.constant 0 : index
    %57 = vector.load %arg1[%c363, %c0_52] : memref<397x32xf32, #tpu.memory_space<vmem>>, vector<32x32xf32>
    %cst_53 = arith.constant dense<0.000000e+00> : vector<55x32xf32>
    %58 = tpu.matmul %56, %57, %cst_53 {dimension_numbers = #tpu.dot_dimension_numbers<[1], [0], [0], [1], [0, 0, 1, 1], [], []>} : vector<55x32xf32>, vector<32x32xf32>, vector<55x32xf32> -> vector<55x32xf32>
    %59 = arith.addf %55, %58 : vector<55x32xf32>
    %c396 = arith.constant 396 : index
    %c0_54 = arith.constant 0 : index
    %60 = vector.load %arg1[%c396, %c0_54] : memref<397x32xf32, #tpu.memory_space<vmem>>, vector<1x32xf32>
    %61 = vector.broadcast %60 : vector<1x32xf32> to vector<55x32xf32>
    %62 = arith.addf %59, %61 : vector<55x32xf32>
    %cst_55 = arith.constant 0.000000e+00 : f32
    %63 = vector.broadcast %cst_55 : f32 to vector<55x32xf32>
    %64 = arith.maximumf %62, %63 : vector<55x32xf32>
    %c162 = arith.constant 162 : index
    %c0_56 = arith.constant 0 : index
    %65 = vector.load %arg3[%c162, %c0_56] : memref<188x205xf32, #tpu.memory_space<vmem>>, vector<26x55xf32>
    %cst_57 = arith.constant dense<0.000000e+00> : vector<26x32xf32>
    %66 = tpu.matmul %65, %64, %cst_57 {dimension_numbers = #tpu.dot_dimension_numbers<[1], [0], [0], [1], [0, 0, 1, 1], [], []>} : vector<26x55xf32>, vector<55x32xf32>, vector<26x32xf32> -> vector<26x32xf32>
    %c58 = arith.constant 58 : index
    %c0_58 = arith.constant 0 : index
    %67 = vector.load %arg3[%c58, %c0_58] : memref<188x205xf32, #tpu.memory_space<vmem>>, vector<104x55xf32>
    %cst_59 = arith.constant dense<0.000000e+00> : vector<104x32xf32>
    %68 = tpu.matmul %67, %64, %cst_59 {dimension_numbers = #tpu.dot_dimension_numbers<[1], [0], [0], [1], [0, 0, 1, 1], [], []>} : vector<104x55xf32>, vector<55x32xf32>, vector<104x32xf32> -> vector<104x32xf32>
    %c0_60 = arith.constant 0 : index
    %c0_61 = arith.constant 0 : index
    %69 = vector.load %arg5[%c0_60, %c0_61] : memref<26x32xf32, #tpu.memory_space<vmem>>, vector<26x32xf32>
    tpu.vector_store %arg5[%c0_60, %c0_61], %66 {strides = array<i32>} : memref<26x32xf32, #tpu.memory_space<vmem>>, vector<26x32xf32>,
    %c0_62 = arith.constant 0 : index
    %c0_63 = arith.constant 0 : index
    %70 = vector.load %arg2[%c0_62, %c0_63] : memref<99x128xf32, #tpu.memory_space<vmem>>, vector<32x128xf32>
    %c32 = arith.constant 32 : index
    %c0_64 = arith.constant 0 : index
    %71 = vector.load %arg2[%c32, %c0_64] : memref<99x128xf32, #tpu.memory_space<vmem>>, vector<32x128xf32>
    %c64 = arith.constant 64 : index
    %c0_65 = arith.constant 0 : index
    %72 = vector.load %arg2[%c64, %c0_65] : memref<99x128xf32, #tpu.memory_space<vmem>>, vector<32x128xf32>
    %c96 = arith.constant 96 : index
    %c0_66 = arith.constant 0 : index
    %73 = vector.load %arg2[%c96, %c0_66] : memref<99x128xf32, #tpu.memory_space<vmem>>, vector<1x128xf32>
    %c97 = arith.constant 97 : index
    %c0_67 = arith.constant 0 : index
    %74 = vector.load %arg2[%c97, %c0_67] : memref<99x128xf32, #tpu.memory_space<vmem>>, vector<1x128xf32>
    %c98 = arith.constant 98 : index
    %c0_68 = arith.constant 0 : index
    %75 = vector.load %arg2[%c98, %c0_68] : memref<99x128xf32, #tpu.memory_space<vmem>>, vector<1x128xf32>
    %cst_69 = arith.constant dense<0.000000e+00> : vector<104x128xf32>
    %76 = tpu.matmul %68, %70, %cst_69 {dimension_numbers = #tpu.dot_dimension_numbers<[1], [0], [0], [1], [0, 0, 1, 1], [], []>} : vector<104x32xf32>, vector<32x128xf32>, vector<104x128xf32> -> vector<104x128xf32>
    %77 = vector.broadcast %73 : vector<1x128xf32> to vector<104x128xf32>
    %78 = arith.addf %76, %77 : vector<104x128xf32>
    %c0_70 = arith.constant 0 : index
    %c0_71 = arith.constant 0 : index
    %79 = vector.load %arg8[%c0_70, %c0_71] : memref<104x128xf32, #tpu.memory_space<vmem>>, vector<104x128xf32>
    tpu.vector_store %arg8[%c0_70, %c0_71], %78 {strides = array<i32>} : memref<104x128xf32, #tpu.memory_space<vmem>>, vector<104x128xf32>,
    %cst_72 = arith.constant 0.000000e+00 : f32
    %80 = vector.broadcast %cst_72 : f32 to vector<8x32xf32>
    %c0_73 = arith.constant 0 : index
    %c0_74 = arith.constant 0 : index
    %81 = vector.load %arg8[%c0_73, %c0_74] : memref<104x128xf32, #tpu.memory_space<vmem>>, vector<8x128xf32>
    %cst_75 = arith.constant dense<0.000000e+00> : vector<8x128xf32>
    %82 = tpu.matmul %80, %71, %cst_75 {dimension_numbers = #tpu.dot_dimension_numbers<[1], [0], [0], [1], [0, 0, 1, 1], [], []>} : vector<8x32xf32>, vector<32x128xf32>, vector<8x128xf32> -> vector<8x128xf32>
    %83 = vector.broadcast %74 : vector<1x128xf32> to vector<8x128xf32>
    %84 = arith.addf %82, %83 : vector<8x128xf32>
    %85 = arith.addf %81, %84 : vector<8x128xf32>
    %86 = vector.extract_strided_slice %85 {offsets = [0, 0], sizes = [8, 32], strides = [1, 1]} : vector<8x128xf32> to vector<8x32xf32>
    %87 = arith.negf %86 : vector<8x32xf32>
    %88 = math.exp %87 : vector<8x32xf32>
    %cst_76 = arith.constant 1.000000e+00 : f32
    %89 = vector.broadcast %cst_76 : f32 to vector<8x32xf32>
    %90 = arith.addf %89, %88 : vector<8x32xf32>
    %91 = arith.divf %89, %90 : vector<8x32xf32>
    %92 = vector.extract_strided_slice %85 {offsets = [0, 32], sizes = [8, 32], strides = [1, 1]} : vector<8x128xf32> to vector<8x32xf32>
    %93 = arith.negf %92 : vector<8x32xf32>
    %94 = math.exp %93 : vector<8x32xf32>
    %cst_77 = arith.constant 1.000000e+00 : f32
    %95 = vector.broadcast %cst_77 : f32 to vector<8x32xf32>
    %96 = arith.addf %95, %94 : vector<8x32xf32>
    %97 = arith.divf %95, %96 : vector<8x32xf32>
    %98 = vector.extract_strided_slice %81 {offsets = [0, 64], sizes = [8, 32], strides = [1, 1]} : vector<8x128xf32> to vector<8x32xf32>
    %99 = vector.extract_strided_slice %84 {offsets = [0, 64], sizes = [8, 32], strides = [1, 1]} : vector<8x128xf32> to vector<8x32xf32>
    %100 = arith.mulf %91, %99 : vector<8x32xf32>
    %101 = arith.addf %98, %100 : vector<8x32xf32>
    %102 = math.tanh %101 : vector<8x32xf32>
    %cst_78 = arith.constant 1.000000e+00 : f32
    %103 = vector.broadcast %cst_78 : f32 to vector<8x32xf32>
    %104 = arith.subf %103, %97 : vector<8x32xf32>
    %105 = arith.mulf %104, %102 : vector<8x32xf32>
    %106 = arith.mulf %97, %80 : vector<8x32xf32>
    %107 = arith.addf %105, %106 : vector<8x32xf32>
    %108 = vector.extract_strided_slice %107 {offsets = [0, 0], sizes = [2, 32], strides = [1, 1]} : vector<8x32xf32> to vector<2x32xf32>
    %c0_79 = arith.constant 0 : index
    %c0_80 = arith.constant 0 : index
    %109 = vector.load %arg9[%c0_79, %c0_80] : memref<26x32xf32, #tpu.memory_space<vmem>>, vector<2x32xf32>
    tpu.vector_store %arg9[%c0_79, %c0_80], %108 {strides = array<i32>} : memref<26x32xf32, #tpu.memory_space<vmem>>, vector<2x32xf32>,
    %c8 = arith.constant 8 : index
    %c0_81 = arith.constant 0 : index
    %110 = vector.load %arg8[%c8, %c0_81] : memref<104x128xf32, #tpu.memory_space<vmem>>, vector<8x128xf32>
    %cst_82 = arith.constant dense<0.000000e+00> : vector<8x128xf32>
    %111 = tpu.matmul %107, %71, %cst_82 {dimension_numbers = #tpu.dot_dimension_numbers<[1], [0], [0], [1], [0, 0, 1, 1], [], []>} : vector<8x32xf32>, vector<32x128xf32>, vector<8x128xf32> -> vector<8x128xf32>
    %112 = vector.broadcast %74 : vector<1x128xf32> to vector<8x128xf32>
    %113 = arith.addf %111, %112 : vector<8x128xf32>
    %114 = arith.addf %110, %113 : vector<8x128xf32>
    %115 = vector.extract_strided_slice %114 {offsets = [0, 0], sizes = [8, 32], strides = [1, 1]} : vector<8x128xf32> to vector<8x32xf32>
    %116 = arith.negf %115 : vector<8x32xf32>
    %117 = math.exp %116 : vector<8x32xf32>
    %cst_83 = arith.constant 1.000000e+00 : f32
    %118 = vector.broadcast %cst_83 : f32 to vector<8x32xf32>
    %119 = arith.addf %118, %117 : vector<8x32xf32>
    %120 = arith.divf %118, %119 : vector<8x32xf32>
    %121 = vector.extract_strided_slice %114 {offsets = [0, 32], sizes = [8, 32], strides = [1, 1]} : vector<8x128xf32> to vector<8x32xf32>
    %122 = arith.negf %121 : vector<8x32xf32>
    %123 = math.exp %122 : vector<8x32xf32>
    %cst_84 = arith.constant 1.000000e+00 : f32
    %124 = vector.broadcast %cst_84 : f32 to vector<8x32xf32>
    %125 = arith.addf %124, %123 : vector<8x32xf32>
    %126 = arith.divf %124, %125 : vector<8x32xf32>
    %127 = vector.extract_strided_slice %110 {offsets = [0, 64], sizes = [8, 32], strides = [1, 1]} : vector<8x128xf32> to vector<8x32xf32>
    %128 = vector.extract_strided_slice %113 {offsets = [0, 64], sizes = [8, 32], strides = [1, 1]} : vector<8x128xf32> to vector<8x32xf32>
    %129 = arith.mulf %120, %128 : vector<8x32xf32>
    %130 = arith.addf %127, %129 : vector<8x32xf32>
    %131 = math.tanh %130 : vector<8x32xf32>
    %cst_85 = arith.constant 1.000000e+00 : f32
    %132 = vector.broadcast %cst_85 : f32 to vector<8x32xf32>
    %133 = arith.subf %132, %126 : vector<8x32xf32>
    %134 = arith.mulf %133, %131 : vector<8x32xf32>
    %135 = arith.mulf %126, %107 : vector<8x32xf32>
    %136 = arith.addf %134, %135 : vector<8x32xf32>
    %137 = vector.extract_strided_slice %136 {offsets = [0, 0], sizes = [2, 32], strides = [1, 1]} : vector<8x32xf32> to vector<2x32xf32>
    %c2_86 = arith.constant 2 : index
    %c0_87 = arith.constant 0 : index
    %138 = vector.load %arg9[%c2_86, %c0_87] : memref<26x32xf32, #tpu.memory_space<vmem>>, vector<2x32xf32>
    tpu.vector_store %arg9[%c2_86, %c0_87], %137 {strides = array<i32>} : memref<26x32xf32, #tpu.memory_space<vmem>>, vector<2x32xf32>,
    %c16 = arith.constant 16 : index
    %c0_88 = arith.constant 0 : index
    %139 = vector.load %arg8[%c16, %c0_88] : memref<104x128xf32, #tpu.memory_space<vmem>>, vector<8x128xf32>
    %cst_89 = arith.constant dense<0.000000e+00> : vector<8x128xf32>
    %140 = tpu.matmul %136, %71, %cst_89 {dimension_numbers = #tpu.dot_dimension_numbers<[1], [0], [0], [1], [0, 0, 1, 1], [], []>} : vector<8x32xf32>, vector<32x128xf32>, vector<8x128xf32> -> vector<8x128xf32>
    %141 = vector.broadcast %74 : vector<1x128xf32> to vector<8x128xf32>
    %142 = arith.addf %140, %141 : vector<8x128xf32>
    %143 = arith.addf %139, %142 : vector<8x128xf32>
    %144 = vector.extract_strided_slice %143 {offsets = [0, 0], sizes = [8, 32], strides = [1, 1]} : vector<8x128xf32> to vector<8x32xf32>
    %145 = arith.negf %144 : vector<8x32xf32>
    %146 = math.exp %145 : vector<8x32xf32>
    %cst_90 = arith.constant 1.000000e+00 : f32
    %147 = vector.broadcast %cst_90 : f32 to vector<8x32xf32>
    %148 = arith.addf %147, %146 : vector<8x32xf32>
    %149 = arith.divf %147, %148 : vector<8x32xf32>
    %150 = vector.extract_strided_slice %143 {offsets = [0, 32], sizes = [8, 32], strides = [1, 1]} : vector<8x128xf32> to vector<8x32xf32>
    %151 = arith.negf %150 : vector<8x32xf32>
    %152 = math.exp %151 : vector<8x32xf32>
    %cst_91 = arith.constant 1.000000e+00 : f32
    %153 = vector.broadcast %cst_91 : f32 to vector<8x32xf32>
    %154 = arith.addf %153, %152 : vector<8x32xf32>
    %155 = arith.divf %153, %154 : vector<8x32xf32>
    %156 = vector.extract_strided_slice %139 {offsets = [0, 64], sizes = [8, 32], strides = [1, 1]} : vector<8x128xf32> to vector<8x32xf32>
    %157 = vector.extract_strided_slice %142 {offsets = [0, 64], sizes = [8, 32], strides = [1, 1]} : vector<8x128xf32> to vector<8x32xf32>
    %158 = arith.mulf %149, %157 : vector<8x32xf32>
    %159 = arith.addf %156, %158 : vector<8x32xf32>
    %160 = math.tanh %159 : vector<8x32xf32>
    %cst_92 = arith.constant 1.000000e+00 : f32
    %161 = vector.broadcast %cst_92 : f32 to vector<8x32xf32>
    %162 = arith.subf %161, %155 : vector<8x32xf32>
    %163 = arith.mulf %162, %160 : vector<8x32xf32>
    %164 = arith.mulf %155, %136 : vector<8x32xf32>
    %165 = arith.addf %163, %164 : vector<8x32xf32>
    %166 = vector.extract_strided_slice %165 {offsets = [0, 0], sizes = [2, 32], strides = [1, 1]} : vector<8x32xf32> to vector<2x32xf32>
    %c4_93 = arith.constant 4 : index
    %c0_94 = arith.constant 0 : index
    %167 = vector.load %arg9[%c4_93, %c0_94] : memref<26x32xf32, #tpu.memory_space<vmem>>, vector<2x32xf32>
    tpu.vector_store %arg9[%c4_93, %c0_94], %166 {strides = array<i32>} : memref<26x32xf32, #tpu.memory_space<vmem>>, vector<2x32xf32>,
    %c24 = arith.constant 24 : index
    %c0_95 = arith.constant 0 : index
    %168 = vector.load %arg8[%c24, %c0_95] : memref<104x128xf32, #tpu.memory_space<vmem>>, vector<8x128xf32>
    %cst_96 = arith.constant dense<0.000000e+00> : vector<8x128xf32>
    %169 = tpu.matmul %165, %71, %cst_96 {dimension_numbers = #tpu.dot_dimension_numbers<[1], [0], [0], [1], [0, 0, 1, 1], [], []>} : vector<8x32xf32>, vector<32x128xf32>, vector<8x128xf32> -> vector<8x128xf32>
    %170 = vector.broadcast %74 : vector<1x128xf32> to vector<8x128xf32>
    %171 = arith.addf %169, %170 : vector<8x128xf32>
    %172 = arith.addf %168, %171 : vector<8x128xf32>
    %173 = vector.extract_strided_slice %172 {offsets = [0, 0], sizes = [8, 32], strides = [1, 1]} : vector<8x128xf32> to vector<8x32xf32>
    %174 = arith.negf %173 : vector<8x32xf32>
    %175 = math.exp %174 : vector<8x32xf32>
    %cst_97 = arith.constant 1.000000e+00 : f32
    %176 = vector.broadcast %cst_97 : f32 to vector<8x32xf32>
    %177 = arith.addf %176, %175 : vector<8x32xf32>
    %178 = arith.divf %176, %177 : vector<8x32xf32>
    %179 = vector.extract_strided_slice %172 {offsets = [0, 32], sizes = [8, 32], strides = [1, 1]} : vector<8x128xf32> to vector<8x32xf32>
    %180 = arith.negf %179 : vector<8x32xf32>
    %181 = math.exp %180 : vector<8x32xf32>
    %cst_98 = arith.constant 1.000000e+00 : f32
    %182 = vector.broadcast %cst_98 : f32 to vector<8x32xf32>
    %183 = arith.addf %182, %181 : vector<8x32xf32>
    %184 = arith.divf %182, %183 : vector<8x32xf32>
    %185 = vector.extract_strided_slice %168 {offsets = [0, 64], sizes = [8, 32], strides = [1, 1]} : vector<8x128xf32> to vector<8x32xf32>
    %186 = vector.extract_strided_slice %171 {offsets = [0, 64], sizes = [8, 32], strides = [1, 1]} : vector<8x128xf32> to vector<8x32xf32>
    %187 = arith.mulf %178, %186 : vector<8x32xf32>
    %188 = arith.addf %185, %187 : vector<8x32xf32>
    %189 = math.tanh %188 : vector<8x32xf32>
    %cst_99 = arith.constant 1.000000e+00 : f32
    %190 = vector.broadcast %cst_99 : f32 to vector<8x32xf32>
    %191 = arith.subf %190, %184 : vector<8x32xf32>
    %192 = arith.mulf %191, %189 : vector<8x32xf32>
    %193 = arith.mulf %184, %165 : vector<8x32xf32>
    %194 = arith.addf %192, %193 : vector<8x32xf32>
    %195 = vector.extract_strided_slice %194 {offsets = [0, 0], sizes = [2, 32], strides = [1, 1]} : vector<8x32xf32> to vector<2x32xf32>
    %c6_100 = arith.constant 6 : index
    %c0_101 = arith.constant 0 : index
    %196 = vector.load %arg9[%c6_100, %c0_101] : memref<26x32xf32, #tpu.memory_space<vmem>>, vector<2x32xf32>
    tpu.vector_store %arg9[%c6_100, %c0_101], %195 {strides = array<i32>} : memref<26x32xf32, #tpu.memory_space<vmem>>, vector<2x32xf32>,
    %c32_102 = arith.constant 32 : index
    %c0_103 = arith.constant 0 : index
    %197 = vector.load %arg8[%c32_102, %c0_103] : memref<104x128xf32, #tpu.memory_space<vmem>>, vector<8x128xf32>
    %cst_104 = arith.constant dense<0.000000e+00> : vector<8x128xf32>
    %198 = tpu.matmul %194, %71, %cst_104 {dimension_numbers = #tpu.dot_dimension_numbers<[1], [0], [0], [1], [0, 0, 1, 1], [], []>} : vector<8x32xf32>, vector<32x128xf32>, vector<8x128xf32> -> vector<8x128xf32>
    %199 = vector.broadcast %74 : vector<1x128xf32> to vector<8x128xf32>
    %200 = arith.addf %198, %199 : vector<8x128xf32>
    %201 = arith.addf %197, %200 : vector<8x128xf32>
    %202 = vector.extract_strided_slice %201 {offsets = [0, 0], sizes = [8, 32], strides = [1, 1]} : vector<8x128xf32> to vector<8x32xf32>
    %203 = arith.negf %202 : vector<8x32xf32>
    %204 = math.exp %203 : vector<8x32xf32>
    %cst_105 = arith.constant 1.000000e+00 : f32
    %205 = vector.broadcast %cst_105 : f32 to vector<8x32xf32>
    %206 = arith.addf %205, %204 : vector<8x32xf32>
    %207 = arith.divf %205, %206 : vector<8x32xf32>
    %208 = vector.extract_strided_slice %201 {offsets = [0, 32], sizes = [8, 32], strides = [1, 1]} : vector<8x128xf32> to vector<8x32xf32>
    %209 = arith.negf %208 : vector<8x32xf32>
    %210 = math.exp %209 : vector<8x32xf32>
    %cst_106 = arith.constant 1.000000e+00 : f32
    %211 = vector.broadcast %cst_106 : f32 to vector<8x32xf32>
    %212 = arith.addf %211, %210 : vector<8x32xf32>
    %213 = arith.divf %211, %212 : vector<8x32xf32>
    %214 = vector.extract_strided_slice %197 {offsets = [0, 64], sizes = [8, 32], strides = [1, 1]} : vector<8x128xf32> to vector<8x32xf32>
    %215 = vector.extract_strided_slice %200 {offsets = [0, 64], sizes = [8, 32], strides = [1, 1]} : vector<8x128xf32> to vector<8x32xf32>
    %216 = arith.mulf %207, %215 : vector<8x32xf32>
    %217 = arith.addf %214, %216 : vector<8x32xf32>
    %218 = math.tanh %217 : vector<8x32xf32>
    %cst_107 = arith.constant 1.000000e+00 : f32
    %219 = vector.broadcast %cst_107 : f32 to vector<8x32xf32>
    %220 = arith.subf %219, %213 : vector<8x32xf32>
    %221 = arith.mulf %220, %218 : vector<8x32xf32>
    %222 = arith.mulf %213, %194 : vector<8x32xf32>
    %223 = arith.addf %221, %222 : vector<8x32xf32>
    %224 = vector.extract_strided_slice %223 {offsets = [0, 0], sizes = [2, 32], strides = [1, 1]} : vector<8x32xf32> to vector<2x32xf32>
    %c8_108 = arith.constant 8 : index
    %c0_109 = arith.constant 0 : index
    %225 = vector.load %arg9[%c8_108, %c0_109] : memref<26x32xf32, #tpu.memory_space<vmem>>, vector<2x32xf32>
    tpu.vector_store %arg9[%c8_108, %c0_109], %224 {strides = array<i32>} : memref<26x32xf32, #tpu.memory_space<vmem>>, vector<2x32xf32>,
    %c40 = arith.constant 40 : index
    %c0_110 = arith.constant 0 : index
    %226 = vector.load %arg8[%c40, %c0_110] : memref<104x128xf32, #tpu.memory_space<vmem>>, vector<8x128xf32>
    %cst_111 = arith.constant dense<0.000000e+00> : vector<8x128xf32>
    %227 = tpu.matmul %223, %71, %cst_111 {dimension_numbers = #tpu.dot_dimension_numbers<[1], [0], [0], [1], [0, 0, 1, 1], [], []>} : vector<8x32xf32>, vector<32x128xf32>, vector<8x128xf32> -> vector<8x128xf32>
    %228 = vector.broadcast %74 : vector<1x128xf32> to vector<8x128xf32>
    %229 = arith.addf %227, %228 : vector<8x128xf32>
    %230 = arith.addf %226, %229 : vector<8x128xf32>
    %231 = vector.extract_strided_slice %230 {offsets = [0, 0], sizes = [8, 32], strides = [1, 1]} : vector<8x128xf32> to vector<8x32xf32>
    %232 = arith.negf %231 : vector<8x32xf32>
    %233 = math.exp %232 : vector<8x32xf32>
    %cst_112 = arith.constant 1.000000e+00 : f32
    %234 = vector.broadcast %cst_112 : f32 to vector<8x32xf32>
    %235 = arith.addf %234, %233 : vector<8x32xf32>
    %236 = arith.divf %234, %235 : vector<8x32xf32>
    %237 = vector.extract_strided_slice %230 {offsets = [0, 32], sizes = [8, 32], strides = [1, 1]} : vector<8x128xf32> to vector<8x32xf32>
    %238 = arith.negf %237 : vector<8x32xf32>
    %239 = math.exp %238 : vector<8x32xf32>
    %cst_113 = arith.constant 1.000000e+00 : f32
    %240 = vector.broadcast %cst_113 : f32 to vector<8x32xf32>
    %241 = arith.addf %240, %239 : vector<8x32xf32>
    %242 = arith.divf %240, %241 : vector<8x32xf32>
    %243 = vector.extract_strided_slice %226 {offsets = [0, 64], sizes = [8, 32], strides = [1, 1]} : vector<8x128xf32> to vector<8x32xf32>
    %244 = vector.extract_strided_slice %229 {offsets = [0, 64], sizes = [8, 32], strides = [1, 1]} : vector<8x128xf32> to vector<8x32xf32>
    %245 = arith.mulf %236, %244 : vector<8x32xf32>
    %246 = arith.addf %243, %245 : vector<8x32xf32>
    %247 = math.tanh %246 : vector<8x32xf32>
    %cst_114 = arith.constant 1.000000e+00 : f32
    %248 = vector.broadcast %cst_114 : f32 to vector<8x32xf32>
    %249 = arith.subf %248, %242 : vector<8x32xf32>
    %250 = arith.mulf %249, %247 : vector<8x32xf32>
    %251 = arith.mulf %242, %223 : vector<8x32xf32>
    %252 = arith.addf %250, %251 : vector<8x32xf32>
    %253 = vector.extract_strided_slice %252 {offsets = [0, 0], sizes = [2, 32], strides = [1, 1]} : vector<8x32xf32> to vector<2x32xf32>
    %c10 = arith.constant 10 : index
    %c0_115 = arith.constant 0 : index
    %254 = vector.load %arg9[%c10, %c0_115] : memref<26x32xf32, #tpu.memory_space<vmem>>, vector<2x32xf32>
    tpu.vector_store %arg9[%c10, %c0_115], %253 {strides = array<i32>} : memref<26x32xf32, #tpu.memory_space<vmem>>, vector<2x32xf32>,
    %c48 = arith.constant 48 : index
    %c0_116 = arith.constant 0 : index
    %255 = vector.load %arg8[%c48, %c0_116] : memref<104x128xf32, #tpu.memory_space<vmem>>, vector<8x128xf32>
    %cst_117 = arith.constant dense<0.000000e+00> : vector<8x128xf32>
    %256 = tpu.matmul %252, %71, %cst_117 {dimension_numbers = #tpu.dot_dimension_numbers<[1], [0], [0], [1], [0, 0, 1, 1], [], []>} : vector<8x32xf32>, vector<32x128xf32>, vector<8x128xf32> -> vector<8x128xf32>
    %257 = vector.broadcast %74 : vector<1x128xf32> to vector<8x128xf32>
    %258 = arith.addf %256, %257 : vector<8x128xf32>
    %259 = arith.addf %255, %258 : vector<8x128xf32>
    %260 = vector.extract_strided_slice %259 {offsets = [0, 0], sizes = [8, 32], strides = [1, 1]} : vector<8x128xf32> to vector<8x32xf32>
    %261 = arith.negf %260 : vector<8x32xf32>
    %262 = math.exp %261 : vector<8x32xf32>
    %cst_118 = arith.constant 1.000000e+00 : f32
    %263 = vector.broadcast %cst_118 : f32 to vector<8x32xf32>
    %264 = arith.addf %263, %262 : vector<8x32xf32>
    %265 = arith.divf %263, %264 : vector<8x32xf32>
    %266 = vector.extract_strided_slice %259 {offsets = [0, 32], sizes = [8, 32], strides = [1, 1]} : vector<8x128xf32> to vector<8x32xf32>
    %267 = arith.negf %266 : vector<8x32xf32>
    %268 = math.exp %267 : vector<8x32xf32>
    %cst_119 = arith.constant 1.000000e+00 : f32
    %269 = vector.broadcast %cst_119 : f32 to vector<8x32xf32>
    %270 = arith.addf %269, %268 : vector<8x32xf32>
    %271 = arith.divf %269, %270 : vector<8x32xf32>
    %272 = vector.extract_strided_slice %255 {offsets = [0, 64], sizes = [8, 32], strides = [1, 1]} : vector<8x128xf32> to vector<8x32xf32>
    %273 = vector.extract_strided_slice %258 {offsets = [0, 64], sizes = [8, 32], strides = [1, 1]} : vector<8x128xf32> to vector<8x32xf32>
    %274 = arith.mulf %265, %273 : vector<8x32xf32>
    %275 = arith.addf %272, %274 : vector<8x32xf32>
    %276 = math.tanh %275 : vector<8x32xf32>
    %cst_120 = arith.constant 1.000000e+00 : f32
    %277 = vector.broadcast %cst_120 : f32 to vector<8x32xf32>
    %278 = arith.subf %277, %271 : vector<8x32xf32>
    %279 = arith.mulf %278, %276 : vector<8x32xf32>
    %280 = arith.mulf %271, %252 : vector<8x32xf32>
    %281 = arith.addf %279, %280 : vector<8x32xf32>
    %282 = vector.extract_strided_slice %281 {offsets = [0, 0], sizes = [2, 32], strides = [1, 1]} : vector<8x32xf32> to vector<2x32xf32>
    %c12 = arith.constant 12 : index
    %c0_121 = arith.constant 0 : index
    %283 = vector.load %arg9[%c12, %c0_121] : memref<26x32xf32, #tpu.memory_space<vmem>>, vector<2x32xf32>
    tpu.vector_store %arg9[%c12, %c0_121], %282 {strides = array<i32>} : memref<26x32xf32, #tpu.memory_space<vmem>>, vector<2x32xf32>,
    %c56 = arith.constant 56 : index
    %c0_122 = arith.constant 0 : index
    %284 = vector.load %arg8[%c56, %c0_122] : memref<104x128xf32, #tpu.memory_space<vmem>>, vector<8x128xf32>
    %cst_123 = arith.constant dense<0.000000e+00> : vector<8x128xf32>
    %285 = tpu.matmul %281, %71, %cst_123 {dimension_numbers = #tpu.dot_dimension_numbers<[1], [0], [0], [1], [0, 0, 1, 1], [], []>} : vector<8x32xf32>, vector<32x128xf32>, vector<8x128xf32> -> vector<8x128xf32>
    %286 = vector.broadcast %74 : vector<1x128xf32> to vector<8x128xf32>
    %287 = arith.addf %285, %286 : vector<8x128xf32>
    %288 = arith.addf %284, %287 : vector<8x128xf32>
    %289 = vector.extract_strided_slice %288 {offsets = [0, 0], sizes = [8, 32], strides = [1, 1]} : vector<8x128xf32> to vector<8x32xf32>
    %290 = arith.negf %289 : vector<8x32xf32>
    %291 = math.exp %290 : vector<8x32xf32>
    %cst_124 = arith.constant 1.000000e+00 : f32
    %292 = vector.broadcast %cst_124 : f32 to vector<8x32xf32>
    %293 = arith.addf %292, %291 : vector<8x32xf32>
    %294 = arith.divf %292, %293 : vector<8x32xf32>
    %295 = vector.extract_strided_slice %288 {offsets = [0, 32], sizes = [8, 32], strides = [1, 1]} : vector<8x128xf32> to vector<8x32xf32>
    %296 = arith.negf %295 : vector<8x32xf32>
    %297 = math.exp %296 : vector<8x32xf32>
    %cst_125 = arith.constant 1.000000e+00 : f32
    %298 = vector.broadcast %cst_125 : f32 to vector<8x32xf32>
    %299 = arith.addf %298, %297 : vector<8x32xf32>
    %300 = arith.divf %298, %299 : vector<8x32xf32>
    %301 = vector.extract_strided_slice %284 {offsets = [0, 64], sizes = [8, 32], strides = [1, 1]} : vector<8x128xf32> to vector<8x32xf32>
    %302 = vector.extract_strided_slice %287 {offsets = [0, 64], sizes = [8, 32], strides = [1, 1]} : vector<8x128xf32> to vector<8x32xf32>
    %303 = arith.mulf %294, %302 : vector<8x32xf32>
    %304 = arith.addf %301, %303 : vector<8x32xf32>
    %305 = math.tanh %304 : vector<8x32xf32>
    %cst_126 = arith.constant 1.000000e+00 : f32
    %306 = vector.broadcast %cst_126 : f32 to vector<8x32xf32>
    %307 = arith.subf %306, %300 : vector<8x32xf32>
    %308 = arith.mulf %307, %305 : vector<8x32xf32>
    %309 = arith.mulf %300, %281 : vector<8x32xf32>
    %310 = arith.addf %308, %309 : vector<8x32xf32>
    %311 = vector.extract_strided_slice %310 {offsets = [0, 0], sizes = [2, 32], strides = [1, 1]} : vector<8x32xf32> to vector<2x32xf32>
    %c14 = arith.constant 14 : index
    %c0_127 = arith.constant 0 : index
    %312 = vector.load %arg9[%c14, %c0_127] : memref<26x32xf32, #tpu.memory_space<vmem>>, vector<2x32xf32>
    tpu.vector_store %arg9[%c14, %c0_127], %311 {strides = array<i32>} : memref<26x32xf32, #tpu.memory_space<vmem>>, vector<2x32xf32>,
    %c64_128 = arith.constant 64 : index
    %c0_129 = arith.constant 0 : index
    %313 = vector.load %arg8[%c64_128, %c0_129] : memref<104x128xf32, #tpu.memory_space<vmem>>, vector<8x128xf32>
    %cst_130 = arith.constant dense<0.000000e+00> : vector<8x128xf32>
    %314 = tpu.matmul %310, %71, %cst_130 {dimension_numbers = #tpu.dot_dimension_numbers<[1], [0], [0], [1], [0, 0, 1, 1], [], []>} : vector<8x32xf32>, vector<32x128xf32>, vector<8x128xf32> -> vector<8x128xf32>
    %315 = vector.broadcast %74 : vector<1x128xf32> to vector<8x128xf32>
    %316 = arith.addf %314, %315 : vector<8x128xf32>
    %317 = arith.addf %313, %316 : vector<8x128xf32>
    %318 = vector.extract_strided_slice %317 {offsets = [0, 0], sizes = [8, 32], strides = [1, 1]} : vector<8x128xf32> to vector<8x32xf32>
    %319 = arith.negf %318 : vector<8x32xf32>
    %320 = math.exp %319 : vector<8x32xf32>
    %cst_131 = arith.constant 1.000000e+00 : f32
    %321 = vector.broadcast %cst_131 : f32 to vector<8x32xf32>
    %322 = arith.addf %321, %320 : vector<8x32xf32>
    %323 = arith.divf %321, %322 : vector<8x32xf32>
    %324 = vector.extract_strided_slice %317 {offsets = [0, 32], sizes = [8, 32], strides = [1, 1]} : vector<8x128xf32> to vector<8x32xf32>
    %325 = arith.negf %324 : vector<8x32xf32>
    %326 = math.exp %325 : vector<8x32xf32>
    %cst_132 = arith.constant 1.000000e+00 : f32
    %327 = vector.broadcast %cst_132 : f32 to vector<8x32xf32>
    %328 = arith.addf %327, %326 : vector<8x32xf32>
    %329 = arith.divf %327, %328 : vector<8x32xf32>
    %330 = vector.extract_strided_slice %313 {offsets = [0, 64], sizes = [8, 32], strides = [1, 1]} : vector<8x128xf32> to vector<8x32xf32>
    %331 = vector.extract_strided_slice %316 {offsets = [0, 64], sizes = [8, 32], strides = [1, 1]} : vector<8x128xf32> to vector<8x32xf32>
    %332 = arith.mulf %323, %331 : vector<8x32xf32>
    %333 = arith.addf %330, %332 : vector<8x32xf32>
    %334 = math.tanh %333 : vector<8x32xf32>
    %cst_133 = arith.constant 1.000000e+00 : f32
    %335 = vector.broadcast %cst_133 : f32 to vector<8x32xf32>
    %336 = arith.subf %335, %329 : vector<8x32xf32>
    %337 = arith.mulf %336, %334 : vector<8x32xf32>
    %338 = arith.mulf %329, %310 : vector<8x32xf32>
    %339 = arith.addf %337, %338 : vector<8x32xf32>
    %340 = vector.extract_strided_slice %339 {offsets = [0, 0], sizes = [2, 32], strides = [1, 1]} : vector<8x32xf32> to vector<2x32xf32>
    %c16_134 = arith.constant 16 : index
    %c0_135 = arith.constant 0 : index
    %341 = vector.load %arg9[%c16_134, %c0_135] : memref<26x32xf32, #tpu.memory_space<vmem>>, vector<2x32xf32>
    tpu.vector_store %arg9[%c16_134, %c0_135], %340 {strides = array<i32>} : memref<26x32xf32, #tpu.memory_space<vmem>>, vector<2x32xf32>,
    %c72 = arith.constant 72 : index
    %c0_136 = arith.constant 0 : index
    %342 = vector.load %arg8[%c72, %c0_136] : memref<104x128xf32, #tpu.memory_space<vmem>>, vector<8x128xf32>
    %cst_137 = arith.constant dense<0.000000e+00> : vector<8x128xf32>
    %343 = tpu.matmul %339, %71, %cst_137 {dimension_numbers = #tpu.dot_dimension_numbers<[1], [0], [0], [1], [0, 0, 1, 1], [], []>} : vector<8x32xf32>, vector<32x128xf32>, vector<8x128xf32> -> vector<8x128xf32>
    %344 = vector.broadcast %74 : vector<1x128xf32> to vector<8x128xf32>
    %345 = arith.addf %343, %344 : vector<8x128xf32>
    %346 = arith.addf %342, %345 : vector<8x128xf32>
    %347 = vector.extract_strided_slice %346 {offsets = [0, 0], sizes = [8, 32], strides = [1, 1]} : vector<8x128xf32> to vector<8x32xf32>
    %348 = arith.negf %347 : vector<8x32xf32>
    %349 = math.exp %348 : vector<8x32xf32>
    %cst_138 = arith.constant 1.000000e+00 : f32
    %350 = vector.broadcast %cst_138 : f32 to vector<8x32xf32>
    %351 = arith.addf %350, %349 : vector<8x32xf32>
    %352 = arith.divf %350, %351 : vector<8x32xf32>
    %353 = vector.extract_strided_slice %346 {offsets = [0, 32], sizes = [8, 32], strides = [1, 1]} : vector<8x128xf32> to vector<8x32xf32>
    %354 = arith.negf %353 : vector<8x32xf32>
    %355 = math.exp %354 : vector<8x32xf32>
    %cst_139 = arith.constant 1.000000e+00 : f32
    %356 = vector.broadcast %cst_139 : f32 to vector<8x32xf32>
    %357 = arith.addf %356, %355 : vector<8x32xf32>
    %358 = arith.divf %356, %357 : vector<8x32xf32>
    %359 = vector.extract_strided_slice %342 {offsets = [0, 64], sizes = [8, 32], strides = [1, 1]} : vector<8x128xf32> to vector<8x32xf32>
    %360 = vector.extract_strided_slice %345 {offsets = [0, 64], sizes = [8, 32], strides = [1, 1]} : vector<8x128xf32> to vector<8x32xf32>
    %361 = arith.mulf %352, %360 : vector<8x32xf32>
    %362 = arith.addf %359, %361 : vector<8x32xf32>
    %363 = math.tanh %362 : vector<8x32xf32>
    %cst_140 = arith.constant 1.000000e+00 : f32
    %364 = vector.broadcast %cst_140 : f32 to vector<8x32xf32>
    %365 = arith.subf %364, %358 : vector<8x32xf32>
    %366 = arith.mulf %365, %363 : vector<8x32xf32>
    %367 = arith.mulf %358, %339 : vector<8x32xf32>
    %368 = arith.addf %366, %367 : vector<8x32xf32>
    %369 = vector.extract_strided_slice %368 {offsets = [0, 0], sizes = [2, 32], strides = [1, 1]} : vector<8x32xf32> to vector<2x32xf32>
    %c18 = arith.constant 18 : index
    %c0_141 = arith.constant 0 : index
    %370 = vector.load %arg9[%c18, %c0_141] : memref<26x32xf32, #tpu.memory_space<vmem>>, vector<2x32xf32>
    tpu.vector_store %arg9[%c18, %c0_141], %369 {strides = array<i32>} : memref<26x32xf32, #tpu.memory_space<vmem>>, vector<2x32xf32>,
    %c80 = arith.constant 80 : index
    %c0_142 = arith.constant 0 : index
    %371 = vector.load %arg8[%c80, %c0_142] : memref<104x128xf32, #tpu.memory_space<vmem>>, vector<8x128xf32>
    %cst_143 = arith.constant dense<0.000000e+00> : vector<8x128xf32>
    %372 = tpu.matmul %368, %71, %cst_143 {dimension_numbers = #tpu.dot_dimension_numbers<[1], [0], [0], [1], [0, 0, 1, 1], [], []>} : vector<8x32xf32>, vector<32x128xf32>, vector<8x128xf32> -> vector<8x128xf32>
    %373 = vector.broadcast %74 : vector<1x128xf32> to vector<8x128xf32>
    %374 = arith.addf %372, %373 : vector<8x128xf32>
    %375 = arith.addf %371, %374 : vector<8x128xf32>
    %376 = vector.extract_strided_slice %375 {offsets = [0, 0], sizes = [8, 32], strides = [1, 1]} : vector<8x128xf32> to vector<8x32xf32>
    %377 = arith.negf %376 : vector<8x32xf32>
    %378 = math.exp %377 : vector<8x32xf32>
    %cst_144 = arith.constant 1.000000e+00 : f32
    %379 = vector.broadcast %cst_144 : f32 to vector<8x32xf32>
    %380 = arith.addf %379, %378 : vector<8x32xf32>
    %381 = arith.divf %379, %380 : vector<8x32xf32>
    %382 = vector.extract_strided_slice %375 {offsets = [0, 32], sizes = [8, 32], strides = [1, 1]} : vector<8x128xf32> to vector<8x32xf32>
    %383 = arith.negf %382 : vector<8x32xf32>
    %384 = math.exp %383 : vector<8x32xf32>
    %cst_145 = arith.constant 1.000000e+00 : f32
    %385 = vector.broadcast %cst_145 : f32 to vector<8x32xf32>
    %386 = arith.addf %385, %384 : vector<8x32xf32>
    %387 = arith.divf %385, %386 : vector<8x32xf32>
    %388 = vector.extract_strided_slice %371 {offsets = [0, 64], sizes = [8, 32], strides = [1, 1]} : vector<8x128xf32> to vector<8x32xf32>
    %389 = vector.extract_strided_slice %374 {offsets = [0, 64], sizes = [8, 32], strides = [1, 1]} : vector<8x128xf32> to vector<8x32xf32>
    %390 = arith.mulf %381, %389 : vector<8x32xf32>
    %391 = arith.addf %388, %390 : vector<8x32xf32>
    %392 = math.tanh %391 : vector<8x32xf32>
    %cst_146 = arith.constant 1.000000e+00 : f32
    %393 = vector.broadcast %cst_146 : f32 to vector<8x32xf32>
    %394 = arith.subf %393, %387 : vector<8x32xf32>
    %395 = arith.mulf %394, %392 : vector<8x32xf32>
    %396 = arith.mulf %387, %368 : vector<8x32xf32>
    %397 = arith.addf %395, %396 : vector<8x32xf32>
    %398 = vector.extract_strided_slice %397 {offsets = [0, 0], sizes = [2, 32], strides = [1, 1]} : vector<8x32xf32> to vector<2x32xf32>
    %c20 = arith.constant 20 : index
    %c0_147 = arith.constant 0 : index
    %399 = vector.load %arg9[%c20, %c0_147] : memref<26x32xf32, #tpu.memory_space<vmem>>, vector<2x32xf32>
    tpu.vector_store %arg9[%c20, %c0_147], %398 {strides = array<i32>} : memref<26x32xf32, #tpu.memory_space<vmem>>, vector<2x32xf32>,
    %c88 = arith.constant 88 : index
    %c0_148 = arith.constant 0 : index
    %400 = vector.load %arg8[%c88, %c0_148] : memref<104x128xf32, #tpu.memory_space<vmem>>, vector<8x128xf32>
    %cst_149 = arith.constant dense<0.000000e+00> : vector<8x128xf32>
    %401 = tpu.matmul %397, %71, %cst_149 {dimension_numbers = #tpu.dot_dimension_numbers<[1], [0], [0], [1], [0, 0, 1, 1], [], []>} : vector<8x32xf32>, vector<32x128xf32>, vector<8x128xf32> -> vector<8x128xf32>
    %402 = vector.broadcast %74 : vector<1x128xf32> to vector<8x128xf32>
    %403 = arith.addf %401, %402 : vector<8x128xf32>
    %404 = arith.addf %400, %403 : vector<8x128xf32>
    %405 = vector.extract_strided_slice %404 {offsets = [0, 0], sizes = [8, 32], strides = [1, 1]} : vector<8x128xf32> to vector<8x32xf32>
    %406 = arith.negf %405 : vector<8x32xf32>
    %407 = math.exp %406 : vector<8x32xf32>
    %cst_150 = arith.constant 1.000000e+00 : f32
    %408 = vector.broadcast %cst_150 : f32 to vector<8x32xf32>
    %409 = arith.addf %408, %407 : vector<8x32xf32>
    %410 = arith.divf %408, %409 : vector<8x32xf32>
    %411 = vector.extract_strided_slice %404 {offsets = [0, 32], sizes = [8, 32], strides = [1, 1]} : vector<8x128xf32> to vector<8x32xf32>
    %412 = arith.negf %411 : vector<8x32xf32>
    %413 = math.exp %412 : vector<8x32xf32>
    %cst_151 = arith.constant 1.000000e+00 : f32
    %414 = vector.broadcast %cst_151 : f32 to vector<8x32xf32>
    %415 = arith.addf %414, %413 : vector<8x32xf32>
    %416 = arith.divf %414, %415 : vector<8x32xf32>
    %417 = vector.extract_strided_slice %400 {offsets = [0, 64], sizes = [8, 32], strides = [1, 1]} : vector<8x128xf32> to vector<8x32xf32>
    %418 = vector.extract_strided_slice %403 {offsets = [0, 64], sizes = [8, 32], strides = [1, 1]} : vector<8x128xf32> to vector<8x32xf32>
    %419 = arith.mulf %410, %418 : vector<8x32xf32>
    %420 = arith.addf %417, %419 : vector<8x32xf32>
    %421 = math.tanh %420 : vector<8x32xf32>
    %cst_152 = arith.constant 1.000000e+00 : f32
    %422 = vector.broadcast %cst_152 : f32 to vector<8x32xf32>
    %423 = arith.subf %422, %416 : vector<8x32xf32>
    %424 = arith.mulf %423, %421 : vector<8x32xf32>
    %425 = arith.mulf %416, %397 : vector<8x32xf32>
    %426 = arith.addf %424, %425 : vector<8x32xf32>
    %427 = vector.extract_strided_slice %426 {offsets = [0, 0], sizes = [2, 32], strides = [1, 1]} : vector<8x32xf32> to vector<2x32xf32>
    %c22 = arith.constant 22 : index
    %c0_153 = arith.constant 0 : index
    %428 = vector.load %arg9[%c22, %c0_153] : memref<26x32xf32, #tpu.memory_space<vmem>>, vector<2x32xf32>
    tpu.vector_store %arg9[%c22, %c0_153], %427 {strides = array<i32>} : memref<26x32xf32, #tpu.memory_space<vmem>>, vector<2x32xf32>,
    %c96_154 = arith.constant 96 : index
    %c0_155 = arith.constant 0 : index
    %429 = vector.load %arg8[%c96_154, %c0_155] : memref<104x128xf32, #tpu.memory_space<vmem>>, vector<8x128xf32>
    %cst_156 = arith.constant dense<0.000000e+00> : vector<8x128xf32>
    %430 = tpu.matmul %426, %71, %cst_156 {dimension_numbers = #tpu.dot_dimension_numbers<[1], [0], [0], [1], [0, 0, 1, 1], [], []>} : vector<8x32xf32>, vector<32x128xf32>, vector<8x128xf32> -> vector<8x128xf32>
    %431 = vector.broadcast %74 : vector<1x128xf32> to vector<8x128xf32>
    %432 = arith.addf %430, %431 : vector<8x128xf32>
    %433 = arith.addf %429, %432 : vector<8x128xf32>
    %434 = vector.extract_strided_slice %433 {offsets = [0, 0], sizes = [8, 32], strides = [1, 1]} : vector<8x128xf32> to vector<8x32xf32>
    %435 = arith.negf %434 : vector<8x32xf32>
    %436 = math.exp %435 : vector<8x32xf32>
    %cst_157 = arith.constant 1.000000e+00 : f32
    %437 = vector.broadcast %cst_157 : f32 to vector<8x32xf32>
    %438 = arith.addf %437, %436 : vector<8x32xf32>
    %439 = arith.divf %437, %438 : vector<8x32xf32>
    %440 = vector.extract_strided_slice %433 {offsets = [0, 32], sizes = [8, 32], strides = [1, 1]} : vector<8x128xf32> to vector<8x32xf32>
    %441 = arith.negf %440 : vector<8x32xf32>
    %442 = math.exp %441 : vector<8x32xf32>
    %cst_158 = arith.constant 1.000000e+00 : f32
    %443 = vector.broadcast %cst_158 : f32 to vector<8x32xf32>
    %444 = arith.addf %443, %442 : vector<8x32xf32>
    %445 = arith.divf %443, %444 : vector<8x32xf32>
    %446 = vector.extract_strided_slice %429 {offsets = [0, 64], sizes = [8, 32], strides = [1, 1]} : vector<8x128xf32> to vector<8x32xf32>
    %447 = vector.extract_strided_slice %432 {offsets = [0, 64], sizes = [8, 32], strides = [1, 1]} : vector<8x128xf32> to vector<8x32xf32>
    %448 = arith.mulf %439, %447 : vector<8x32xf32>
    %449 = arith.addf %446, %448 : vector<8x32xf32>
    %450 = math.tanh %449 : vector<8x32xf32>
    %cst_159 = arith.constant 1.000000e+00 : f32
    %451 = vector.broadcast %cst_159 : f32 to vector<8x32xf32>
    %452 = arith.subf %451, %445 : vector<8x32xf32>
    %453 = arith.mulf %452, %450 : vector<8x32xf32>
    %454 = arith.mulf %445, %426 : vector<8x32xf32>
    %455 = arith.addf %453, %454 : vector<8x32xf32>
    %456 = vector.extract_strided_slice %455 {offsets = [0, 0], sizes = [2, 32], strides = [1, 1]} : vector<8x32xf32> to vector<2x32xf32>
    %c24_160 = arith.constant 24 : index
    %c0_161 = arith.constant 0 : index
    %457 = vector.load %arg9[%c24_160, %c0_161] : memref<26x32xf32, #tpu.memory_space<vmem>>, vector<2x32xf32>
    tpu.vector_store %arg9[%c24_160, %c0_161], %456 {strides = array<i32>} : memref<26x32xf32, #tpu.memory_space<vmem>>, vector<2x32xf32>,
    %c0_162 = arith.constant 0 : index
    %c0_163 = arith.constant 0 : index
    %458 = vector.load %arg9[%c0_162, %c0_163] : memref<26x32xf32, #tpu.memory_space<vmem>>, vector<26x32xf32>
    %cst_164 = arith.constant dense<0.000000e+00> : vector<26x128xf32>
    %459 = tpu.matmul %458, %72, %cst_164 {dimension_numbers = #tpu.dot_dimension_numbers<[1], [0], [0], [1], [0, 0, 1, 1], [], []>} : vector<26x32xf32>, vector<32x128xf32>, vector<26x128xf32> -> vector<26x128xf32>
    %460 = vector.broadcast %75 : vector<1x128xf32> to vector<26x128xf32>
    %461 = arith.addf %459, %460 : vector<26x128xf32>
    %cst_165 = arith.constant 0.000000e+00 : f32
    %462 = vector.broadcast %cst_165 : f32 to vector<1x1xf32>
    %463 = vector.extract_strided_slice %461 {offsets = [0, 0], sizes = [24, 32], strides = [1, 1]} : vector<26x128xf32> to vector<24x32xf32>
    %464 = vector.extract_strided_slice %66 {offsets = [2, 0], sizes = [24, 32], strides = [1, 1]} : vector<26x32xf32> to vector<24x32xf32>
    %cst_166 = arith.constant dense<0.000000e+00> : vector<24x24xf32>
    %465 = tpu.matmul %463, %464, %cst_166 {dimension_numbers = #tpu.dot_dimension_numbers<[1], [1], [0], [0], [0, 0, 1, 0], [], []>} : vector<24x32xf32>, vector<24x32xf32>, vector<24x24xf32> -> vector<24x24xf32>
    %466 = arith.mulf %463, %464 : vector<24x32xf32>
    %cst_167 = arith.constant dense<0.000000e+00> : vector<24xf32>
    %467 = vector.multi_reduction <add>, %466, %cst_167 [1] : vector<24x32xf32> to vector<24xf32>
    %468 = vector.shape_cast %467 : vector<24xf32> to vector<24x1xf32>
    %cst_168 = arith.constant dense<0xFF800000> : vector<24xf32>
    %469 = vector.multi_reduction <maximumf>, %465, %cst_168 [1] : vector<24x24xf32> to vector<24xf32>
    %470 = vector.shape_cast %469 : vector<24xf32> to vector<24x1xf32>
    %471 = vector.broadcast %470 : vector<24x1xf32> to vector<24x24xf32>
    %472 = arith.subf %465, %471 : vector<24x24xf32>
    %473 = math.exp %472 : vector<24x24xf32>
    %cst_169 = arith.constant dense<0.000000e+00> : vector<24xf32>
    %474 = vector.multi_reduction <add>, %473, %cst_169 [1] : vector<24x24xf32> to vector<24xf32>
    %475 = vector.shape_cast %474 : vector<24xf32> to vector<24x1xf32>
    %476 = math.log %475 : vector<24x1xf32>
    %477 = arith.addf %476, %470 : vector<24x1xf32>
    %478 = arith.subf %477, %468 : vector<24x1xf32>
    %cst_170 = arith.constant dense<0.000000e+00> : vector<1xf32>
    %479 = vector.multi_reduction <add>, %478, %cst_170 [0] : vector<24x1xf32> to vector<1xf32>
    %480 = vector.shape_cast %479 : vector<1xf32> to vector<1x1xf32>
    %cst_171 = arith.constant 0.0416666679 : f32
    %481 = vector.broadcast %cst_171 : f32 to vector<1x1xf32>
    %482 = arith.mulf %480, %481 : vector<1x1xf32>
    %483 = arith.addf %462, %482 : vector<1x1xf32>
    %484 = vector.extract_strided_slice %461 {offsets = [0, 32], sizes = [22, 32], strides = [1, 1]} : vector<26x128xf32> to vector<22x32xf32>
    %485 = vector.extract_strided_slice %66 {offsets = [4, 0], sizes = [22, 32], strides = [1, 1]} : vector<26x32xf32> to vector<22x32xf32>
    %cst_172 = arith.constant dense<0.000000e+00> : vector<22x22xf32>
    %486 = tpu.matmul %484, %485, %cst_172 {dimension_numbers = #tpu.dot_dimension_numbers<[1], [1], [0], [0], [0, 0, 1, 0], [], []>} : vector<22x32xf32>, vector<22x32xf32>, vector<22x22xf32> -> vector<22x22xf32>
    %487 = arith.mulf %484, %485 : vector<22x32xf32>
    %cst_173 = arith.constant dense<0.000000e+00> : vector<22xf32>
    %488 = vector.multi_reduction <add>, %487, %cst_173 [1] : vector<22x32xf32> to vector<22xf32>
    %489 = vector.shape_cast %488 : vector<22xf32> to vector<22x1xf32>
    %cst_174 = arith.constant dense<0xFF800000> : vector<22xf32>
    %490 = vector.multi_reduction <maximumf>, %486, %cst_174 [1] : vector<22x22xf32> to vector<22xf32>
    %491 = vector.shape_cast %490 : vector<22xf32> to vector<22x1xf32>
    %492 = vector.broadcast %491 : vector<22x1xf32> to vector<22x22xf32>
    %493 = arith.subf %486, %492 : vector<22x22xf32>
    %494 = math.exp %493 : vector<22x22xf32>
    %cst_175 = arith.constant dense<0.000000e+00> : vector<22xf32>
    %495 = vector.multi_reduction <add>, %494, %cst_175 [1] : vector<22x22xf32> to vector<22xf32>
    %496 = vector.shape_cast %495 : vector<22xf32> to vector<22x1xf32>
    %497 = math.log %496 : vector<22x1xf32>
    %498 = arith.addf %497, %491 : vector<22x1xf32>
    %499 = arith.subf %498, %489 : vector<22x1xf32>
    %cst_176 = arith.constant dense<0.000000e+00> : vector<1xf32>
    %500 = vector.multi_reduction <add>, %499, %cst_176 [0] : vector<22x1xf32> to vector<1xf32>
    %501 = vector.shape_cast %500 : vector<1xf32> to vector<1x1xf32>
    %cst_177 = arith.constant 0.0454545468 : f32
    %502 = vector.broadcast %cst_177 : f32 to vector<1x1xf32>
    %503 = arith.mulf %501, %502 : vector<1x1xf32>
    %504 = arith.addf %483, %503 : vector<1x1xf32>
    %505 = vector.extract_strided_slice %461 {offsets = [0, 64], sizes = [20, 32], strides = [1, 1]} : vector<26x128xf32> to vector<20x32xf32>
    %506 = vector.extract_strided_slice %66 {offsets = [6, 0], sizes = [20, 32], strides = [1, 1]} : vector<26x32xf32> to vector<20x32xf32>
    %cst_178 = arith.constant dense<0.000000e+00> : vector<20x20xf32>
    %507 = tpu.matmul %505, %506, %cst_178 {dimension_numbers = #tpu.dot_dimension_numbers<[1], [1], [0], [0], [0, 0, 1, 0], [], []>} : vector<20x32xf32>, vector<20x32xf32>, vector<20x20xf32> -> vector<20x20xf32>
    %508 = arith.mulf %505, %506 : vector<20x32xf32>
    %cst_179 = arith.constant dense<0.000000e+00> : vector<20xf32>
    %509 = vector.multi_reduction <add>, %508, %cst_179 [1] : vector<20x32xf32> to vector<20xf32>
    %510 = vector.shape_cast %509 : vector<20xf32> to vector<20x1xf32>
    %cst_180 = arith.constant dense<0xFF800000> : vector<20xf32>
    %511 = vector.multi_reduction <maximumf>, %507, %cst_180 [1] : vector<20x20xf32> to vector<20xf32>
    %512 = vector.shape_cast %511 : vector<20xf32> to vector<20x1xf32>
    %513 = vector.broadcast %512 : vector<20x1xf32> to vector<20x20xf32>
    %514 = arith.subf %507, %513 : vector<20x20xf32>
    %515 = math.exp %514 : vector<20x20xf32>
    %cst_181 = arith.constant dense<0.000000e+00> : vector<20xf32>
    %516 = vector.multi_reduction <add>, %515, %cst_181 [1] : vector<20x20xf32> to vector<20xf32>
    %517 = vector.shape_cast %516 : vector<20xf32> to vector<20x1xf32>
    %518 = math.log %517 : vector<20x1xf32>
    %519 = arith.addf %518, %512 : vector<20x1xf32>
    %520 = arith.subf %519, %510 : vector<20x1xf32>
    %cst_182 = arith.constant dense<0.000000e+00> : vector<1xf32>
    %521 = vector.multi_reduction <add>, %520, %cst_182 [0] : vector<20x1xf32> to vector<1xf32>
    %522 = vector.shape_cast %521 : vector<1xf32> to vector<1x1xf32>
    %cst_183 = arith.constant 5.000000e-02 : f32
    %523 = vector.broadcast %cst_183 : f32 to vector<1x1xf32>
    %524 = arith.mulf %522, %523 : vector<1x1xf32>
    %525 = arith.addf %504, %524 : vector<1x1xf32>
    %526 = vector.extract_strided_slice %461 {offsets = [0, 96], sizes = [18, 32], strides = [1, 1]} : vector<26x128xf32> to vector<18x32xf32>
    %527 = vector.extract_strided_slice %66 {offsets = [8, 0], sizes = [18, 32], strides = [1, 1]} : vector<26x32xf32> to vector<18x32xf32>
    %cst_184 = arith.constant dense<0.000000e+00> : vector<18x18xf32>
    %528 = tpu.matmul %526, %527, %cst_184 {dimension_numbers = #tpu.dot_dimension_numbers<[1], [1], [0], [0], [0, 0, 1, 0], [], []>} : vector<18x32xf32>, vector<18x32xf32>, vector<18x18xf32> -> vector<18x18xf32>
    %529 = arith.mulf %526, %527 : vector<18x32xf32>
    %cst_185 = arith.constant dense<0.000000e+00> : vector<18xf32>
    %530 = vector.multi_reduction <add>, %529, %cst_185 [1] : vector<18x32xf32> to vector<18xf32>
    %531 = vector.shape_cast %530 : vector<18xf32> to vector<18x1xf32>
    %cst_186 = arith.constant dense<0xFF800000> : vector<18xf32>
    %532 = vector.multi_reduction <maximumf>, %528, %cst_186 [1] : vector<18x18xf32> to vector<18xf32>
    %533 = vector.shape_cast %532 : vector<18xf32> to vector<18x1xf32>
    %534 = vector.broadcast %533 : vector<18x1xf32> to vector<18x18xf32>
    %535 = arith.subf %528, %534 : vector<18x18xf32>
    %536 = math.exp %535 : vector<18x18xf32>
    %cst_187 = arith.constant dense<0.000000e+00> : vector<18xf32>
    %537 = vector.multi_reduction <add>, %536, %cst_187 [1] : vector<18x18xf32> to vector<18xf32>
    %538 = vector.shape_cast %537 : vector<18xf32> to vector<18x1xf32>
    %539 = math.log %538 : vector<18x1xf32>
    %540 = arith.addf %539, %533 : vector<18x1xf32>
    %541 = arith.subf %540, %531 : vector<18x1xf32>
    %cst_188 = arith.constant dense<0.000000e+00> : vector<1xf32>
    %542 = vector.multi_reduction <add>, %541, %cst_188 [0] : vector<18x1xf32> to vector<1xf32>
    %543 = vector.shape_cast %542 : vector<1xf32> to vector<1x1xf32>
    %cst_189 = arith.constant 0.055555556 : f32
    %544 = vector.broadcast %cst_189 : f32 to vector<1x1xf32>
    %545 = arith.mulf %543, %544 : vector<1x1xf32>
    %546 = arith.addf %525, %545 : vector<1x1xf32>
    %cst_190 = arith.constant 2.500000e-01 : f32
    %547 = vector.broadcast %cst_190 : f32 to vector<1x1xf32>
    %548 = arith.mulf %546, %547 : vector<1x1xf32>
    %c0_191 = arith.constant 0 : index
    %c0_192 = arith.constant 0 : index
    %549 = vector.load %arg4[%c0_191, %c0_192] : memref<1x1xf32, #tpu.memory_space<vmem>>, vector<1x1xf32>
    tpu.vector_store %arg4[%c0_191, %c0_192], %548 {strides = array<i32>} : memref<1x1xf32, #tpu.memory_space<vmem>>, vector<1x1xf32>,
    return
  }
}

</mosaic_0001>

<llo_original>
// kernel: _forward_impl.1
$region0: #{_forward_impl.1}
  #allocation0 [shape = 'u32[]', space=smem, size = 0x4, offset = 0x4, fixed_abs, tag = 'smem constant byte address 0x4 - core index']
  #allocation1 [shape = 'u32[144,128]{1,0:T(1,128)}', space=vmem, size = 0x12000, scoped, tag = 'internal scratch']
  #allocation2 [shape = 'f32[212,32]{1,0:T(8,128)}', space=vmem, size = 0x1b000, scoped, tag = 'scratch operand']
  #allocation3 [shape = 'f32[58,32]{1,0:T(8,128)}', space=vmem, size = 0x8000, scoped, tag = 'scratch operand']
  #allocation4 [shape = 'f32[104,128]{1,0:T(8,128)}', space=vmem, size = 0xd000, scoped, tag = 'scratch operand']
  #allocation5 [shape = 'f32[26,32]{1,0:T(8,128)}', space=vmem, size = 0x4000, scoped, tag = 'scratch operand']
  %s0 = inlined_call_operand.vmem [shape: f32[212,11], index: 0, kind: input, shape index: {}]
  %s1 = inlined_call_operand.vmem [shape: f32[397,32], index: 1, kind: input, shape index: {}]
  %s2 = inlined_call_operand.vmem [shape: f32[99,128], index: 2, kind: input, shape index: {}]
  %s3 = inlined_call_operand.vmem [shape: f32[188,205], index: 3, kind: input, shape index: {}]
  %s4 = inlined_call_operand.hbm [shape: f32[1,1], index: 4, kind: output, shape index: {0}]
  %s5 = inlined_call_operand.hbm [shape: f32[26,32], index: 5, kind: output, shape index: {1}]
  %6 = xla_tuple %s4, %s5
  %s7 = sld [smem:[#allocation0]]
  $region34: #{_forward_impl.1} parent=0
    _
  %s9 = ssub.s32 1, %s7
  %s10 = scalar_select 0, %s9, %s7
  $region1: #{_forward_impl.1} parent=0
    #allocation6 [shape = 'u8[512]{0}', space=vmem, size = 0x400, scoped, tag = 'output window, operand 0, single buffered']
    #allocation7 [shape = 's32[1]{0}', space=sflag, size = 0x4, scoped, tag = 'scoped memory for _forward_impl.1']
    #allocation8 [shape = 'u8[16384]{0}', space=vmem, size = 0x4000, scoped, tag = 'output window, operand 1, single buffered']
    #allocation9 [shape = 's32[1]{0}', space=sflag, size = 0x4, scoped, tag = 'scoped memory for _forward_impl.1']
    %11 = vsyncpa [#allocation7], 0
    %12 = vsyncpa [#allocation9], 0
    // Predicated region
    $region2: #{_forward_impl.1} parent=1 // pred_check
      _
    $region3: #{_forward_impl.1} parent=1 // pred_check_branch
      %14 = sbr.rel (0) target = $region5
    $region4: #{_forward_impl.1} parent=1 // pred_region
      _
    $region5: #{_forward_impl.1} parent=1 // pred_fallthru
      _
    // Predicated region
    $region6: #{_forward_impl.1} parent=1 // pred_check
      _
    $region7: #{_forward_impl.1} parent=1 // pred_check_branch
      %16 = sbr.rel (0) target = $region9
    $region8: #{_forward_impl.1} parent=1 // pred_region
      _
    $region9: #{_forward_impl.1} parent=1 // pred_fallthru
      _
    // Predicated region
    $region10: #{_forward_impl.1} parent=1 // pred_check
      _
    $region11: #{_forward_impl.1} parent=1 // pred_check_branch
      %18 = sbr.rel (0) target = $region13
    $region12: #{_forward_impl.1} parent=1 // pred_region
      _
    $region13: #{_forward_impl.1} parent=1 // pred_fallthru
      _
    // Predicated region
    $region14: #{_forward_impl.1} parent=1 // pred_check
      _
    $region15: #{_forward_impl.1} parent=1 // pred_check_branch
      %20 = sbr.rel (0) target = $region17
    $region16: #{_forward_impl.1} parent=1 // pred_region
      _
    $region17: #{_forward_impl.1} parent=1 // pred_fallthru
      _
    %v21 = vld [vmem:[%s0] sm:$0xff]
    %v22 = vld [vmem:[%s0 + $0x8] sm:$0xff]
    %v23 = vld [vmem:[%s0 + $0x10] sm:$0xff]
    %v24 = vld [vmem:[%s0 + $0x18] sm:$0xff]
    %v25 = vld [vmem:[%s0 + $0x20] sm:$0xff]
    %v26 = vld [vmem:[%s0 + $0x28] sm:$0xff]
    %v27 = vld [vmem:[%s0 + $0x30] sm:$0xff]
    %v28 = vld [vmem:[%s0 + $0x38] sm:$0xff]
    %v29 = vld [vmem:[%s0 + $0x40] sm:$0xff]
    %v30 = vld [vmem:[%s0 + $0x48] sm:$0xff]
    %v31 = vld [vmem:[%s0 + $0x50] sm:$0xff]
    %v32 = vld [vmem:[%s0 + $0x58] sm:$0xff]
    %v33 = vld [vmem:[%s0 + $0x60] sm:$0xff]
    %v34 = vld [vmem:[%s0 + $0x68] sm:$0xff]
    %v35 = vld [vmem:[%s0 + $0x70] sm:$0xff]
    %v36 = vld [vmem:[%s0 + $0x78] sm:$0xff]
    %v37 = vld [vmem:[%s0 + $0x80] sm:$0xff]
    %v38 = vld [vmem:[%s0 + $0x88] sm:$0xff]
    %v39 = vld [vmem:[%s0 + $0x90] sm:$0xff]
    %v40 = vld [vmem:[%s0 + $0x98] sm:$0xff]
    %v41 = vld [vmem:[%s0 + $0xa0] sm:$0xff]
    %v42 = vld [vmem:[%s0 + $0xa8] sm:$0xff]
    %v43 = vld [vmem:[%s0 + $0xb0] sm:$0xff]
    %v44 = vld [vmem:[%s0 + $0xb8] sm:$0xff]
    %v45 = vld [vmem:[%s0 + $0xc0] sm:$0xff]
    %v46 = vld [vmem:[%s0 + $0xc8] sm:$0xff]
    %v47 = vld [vmem:[%s0 + $0xd0] sm:$0xf]
    %v48 = vld [vmem:[%s1] sm:$0xff]
    %v49 = vld [vmem:[%s1 + $0x8] sm:$0x7]
    %vm50 = vcmask 89088
    %v52 = vsel %vm50, %v21, 0
    %v55 = vsel %vm50, %v22, 0
    %v58 = vsel %vm50, %v23, 0
    %v61 = vsel %vm50, %v24, 0
    %v64 = vsel %vm50, %v25, 0
    %v67 = vsel %vm50, %v26, 0
    %v70 = vsel %vm50, %v27, 0
    %v73 = vsel %vm50, %v28, 0
    %v76 = vsel %vm50, %v29, 0
    %v79 = vsel %vm50, %v30, 0
    %v82 = vsel %vm50, %v31, 0
    %v85 = vsel %vm50, %v32, 0
    %v88 = vsel %vm50, %v33, 0
    %v91 = vsel %vm50, %v34, 0
    %v94 = vsel %vm50, %v35, 0
    %v97 = vsel %vm50, %v36, 0
    %v100 = vsel %vm50, %v37, 0
    %v103 = vsel %vm50, %v38, 0
    %v106 = vsel %vm50, %v39, 0
    %v109 = vsel %vm50, %v40, 0
    %v112 = vsel %vm50, %v41, 0
    %v115 = vsel %vm50, %v42, 0
    %v118 = vsel %vm50, %v43, 0
    %v121 = vsel %vm50, %v44, 0
    %v124 = vsel %vm50, %v45, 0
    %v127 = vsel %vm50, %v46, 0
    %v130 = vsel %vm50, %v47, 0
    %vm132 = vcmask 1042432
    %v134 = vsel %vm132, %v49, 0
    %136 = vmatprep.subr.mxu0 0.0
    %137 = vmatpush1.msra.mxu0 %v48
    %138 = vmatprep.subr.mxu0 0.0
    %139 = vmatpush1.msra.mxu0 %v134
    %140 = vmatprep.subr.mxu0 0.0
    %141 = vmatpush1.msra.mxu0 0.0
    %142 = vmatprep.subr.mxu0 0.0
    %143 = vmatpush1.msra.mxu0 0.0
    %144 = vmatprep.subr.mxu0 0.0
    %145 = vmatpush1.msra.mxu0 0.0
    %146 = vmatprep.subr.mxu0 0.0
    %147 = vmatpush1.msra.mxu0 0.0
    %148 = vmatprep.subr.mxu0 0.0
    %149 = vmatpush1.msra.mxu0 0.0
    %150 = vmatprep.subr.mxu0 0.0
    %151 = vmatpush1.msra.mxu0 0.0
    %152 = vmatprep.subr.mxu0 0.0
    %153 = vmatpush1.msra.mxu0 0.0
    %154 = vmatprep.subr.mxu0 0.0
    %155 = vmatpush1.msra.mxu0 0.0
    %156 = vmatprep.subr.mxu0 0.0
    %157 = vmatpush1.msra.mxu0 0.0
    %158 = vmatprep.subr.mxu0 0.0
    %159 = vmatpush1.msra.mxu0 0.0
    %160 = vmatprep.subr.mxu0 0.0
    %161 = vmatpush1.msra.mxu0 0.0
    %162 = vmatprep.subr.mxu0 0.0
    %163 = vmatpush1.msra.mxu0 0.0
    %164 = vmatprep.subr.mxu0 0.0
    %165 = vmatpush1.msra.mxu0 0.0
    %166 = vmatprep.subr.mxu0 0.0
    %167 = vmatpush1.msra.mxu0 0.0
    %168 = vmatprep.subr.mxu0 0.0
    %169 = vmatpush1.msra.mxu0 0.0
    %170 = vmatprep.subr.mxu0 0.0
    %171 = vmatpush1.msra.mxu0 0.0
    %172 = vmatprep.subr.mxu0 0.0
    %173 = vmatpush1.msra.mxu0 0.0
    %174 = vmatprep.subr.mxu0 0.0
    %175 = vmatpush1.msra.mxu0 0.0
    %176 = vmatprep.subr.mxu0 0.0
    %177 = vmatpush1.msra.mxu0 0.0
    %178 = vmatprep.subr.mxu0 0.0
    %179 = vmatpush1.msra.mxu0 0.0
    %180 = vmatprep.subr.mxu0 0.0
    %181 = vmatpush1.msra.mxu0 0.0
    %182 = vmatprep.subr.mxu0 0.0
    %183 = vmatpush1.msra.mxu0 0.0
    %184 = vmatprep.subr.mxu0 0.0
    %185 = vmatpush1.msra.mxu0 0.0
    %186 = vmatprep.subr.mxu0 0.0
    %187 = vmatpush1.msra.mxu0 0.0
    %188 = vmatprep.subr.mxu0 0.0
    %189 = vmatpush1.msra.mxu0 0.0
    %190 = vmatprep.subr.mxu0 0.0
    %191 = vmatpush1.msra.mxu0 0.0
    %192 = vmatprep.subr.mxu0 0.0
    %193 = vmatpush1.msra.mxu0 0.0
    %194 = vmatprep.subr.mxu0 0.0
    %195 = vmatpush1.msra.mxu0 0.0
    %196 = vmatprep.subr.mxu0 0.0
    %197 = vmatpush1.msra.mxu0 0.0
    %198 = vmatprep.subr.mxu0 0.0
    %199 = vmatpush1.msra.mxu0 0.0
    %200 = vmatprep.mubr.f32.mxu0 0.0
    %201 = vmatmul.mubr.f32.gmra.mrb[0].mxu0 %v52
    %v202 = vpop.f32.mrb[0].mxu0
    %v203 = vadd.f32 0.0, %v202
    %v204 = vpop.f32.mrb[0].mxu0
    %205 = vmatprep.mubr.f32.mxu0 0.0
    %206 = vmatmul.mubr.f32.gmra.mrb[0].mxu0 %v55
    %v207 = vpop.f32.mrb[0].mxu0
    %v208 = vadd.f32 0.0, %v207
    %v209 = vpop.f32.mrb[0].mxu0
    %210 = vmatprep.mubr.f32.mxu0 0.0
    %211 = vmatmul.mubr.f32.gmra.mrb[0].mxu0 %v58
    %v212 = vpop.f32.mrb[0].mxu0
    %v213 = vadd.f32 0.0, %v212
    %v214 = vpop.f32.mrb[0].mxu0
    %215 = vmatprep.mubr.f32.mxu0 0.0
    %216 = vmatmul.mubr.f32.gmra.mrb[0].mxu0 %v61
    %v217 = vpop.f32.mrb[0].mxu0
    %v218 = vadd.f32 0.0, %v217
    %v219 = vpop.f32.mrb[0].mxu0
    %220 = vmatprep.mubr.f32.mxu0 0.0
    %221 = vmatmul.mubr.f32.gmra.mrb[0].mxu0 %v64
    %v222 = vpop.f32.mrb[0].mxu0
    %v223 = vadd.f32 0.0, %v222
    %v224 = vpop.f32.mrb[0].mxu0
    %225 = vmatprep.mubr.f32.mxu0 0.0
    %226 = vmatmul.mubr.f32.gmra.mrb[0].mxu0 %v67
    %v227 = vpop.f32.mrb[0].mxu0
    %v228 = vadd.f32 0.0, %v227
    %v229 = vpop.f32.mrb[0].mxu0
    %230 = vmatprep.mubr.f32.mxu0 0.0
    %231 = vmatmul.mubr.f32.gmra.mrb[0].mxu0 %v70
    %v232 = vpop.f32.mrb[0].mxu0
    %v233 = vadd.f32 0.0, %v232
    %v234 = vpop.f32.mrb[0].mxu0
    %235 = vmatprep.mubr.f32.mxu0 0.0
    %236 = vmatmul.mubr.f32.gmra.mrb[0].mxu0 %v73
    %v237 = vpop.f32.mrb[0].mxu0
    %v238 = vadd.f32 0.0, %v237
    %v239 = vpop.f32.mrb[0].mxu0
    %240 = vmatprep.mubr.f32.mxu0 0.0
    %241 = vmatmul.mubr.f32.gmra.mrb[0].mxu0 %v76
    %v242 = vpop.f32.mrb[0].mxu0
    %v243 = vadd.f32 0.0, %v242
    %v244 = vpop.f32.mrb[0].mxu0
    %245 = vmatprep.mubr.f32.mxu0 0.0
    %246 = vmatmul.mubr.f32.gmra.mrb[0].mxu0 %v79
    %v247 = vpop.f32.mrb[0].mxu0
    %v248 = vadd.f32 0.0, %v247
    %v249 = vpop.f32.mrb[0].mxu0
    %250 = vmatprep.mubr.f32.mxu0 0.0
    %251 = vmatmul.mubr.f32.gmra.mrb[0].mxu0 %v82
    %v252 = vpop.f32.mrb[0].mxu0
    %v253 = vadd.f32 0.0, %v252
    %v254 = vpop.f32.mrb[0].mxu0
    %255 = vmatprep.mubr.f32.mxu0 0.0
    %256 = vmatmul.mubr.f32.gmra.mrb[0].mxu0 %v85
    %v257 = vpop.f32.mrb[0].mxu0
    %v258 = vadd.f32 0.0, %v257
    %v259 = vpop.f32.mrb[0].mxu0
    %260 = vmatprep.mubr.f32.mxu0 0.0
    %261 = vmatmul.mubr.f32.gmra.mrb[0].mxu0 %v88
    %v262 = vpop.f32.mrb[0].mxu0
    %v263 = vadd.f32 0.0, %v262
    %v264 = vpop.f32.mrb[0].mxu0
    %265 = vmatprep.mubr.f32.mxu0 0.0
    %266 = vmatmul.mubr.f32.gmra.mrb[0].mxu0 %v91
    %v267 = vpop.f32.mrb[0].mxu0
    %v268 = vadd.f32 0.0, %v267
    %v269 = vpop.f32.mrb[0].mxu0
    %270 = vmatprep.mubr.f32.mxu0 0.0
    %271 = vmatmul.mubr.f32.gmra.mrb[0].mxu0 %v94
    %v272 = vpop.f32.mrb[0].mxu0
    %v273 = vadd.f32 0.0, %v272
    %v274 = vpop.f32.mrb[0].mxu0
    %275 = vmatprep.mubr.f32.mxu0 0.0
    %276 = vmatmul.mubr.f32.gmra.mrb[0].mxu0 %v97
    %v277 = vpop.f32.mrb[0].mxu0
    %v278 = vadd.f32 0.0, %v277
    %v279 = vpop.f32.mrb[0].mxu0
    %280 = vmatprep.mubr.f32.mxu0 0.0
    %281 = vmatmul.mubr.f32.gmra.mrb[0].mxu0 %v100
    %v282 = vpop.f32.mrb[0].mxu0
    %v283 = vadd.f32 0.0, %v282
    %v284 = vpop.f32.mrb[0].mxu0
    %285 = vmatprep.mubr.f32.mxu0 0.0
    %286 = vmatmul.mubr.f32.gmra.mrb[0].mxu0 %v103
    %v287 = vpop.f32.mrb[0].mxu0
    %v288 = vadd.f32 0.0, %v287
    %v289 = vpop.f32.mrb[0].mxu0
    %290 = vmatprep.mubr.f32.mxu0 0.0
    %291 = vmatmul.mubr.f32.gmra.mrb[0].mxu0 %v106
    %v292 = vpop.f32.mrb[0].mxu0
    %v293 = vadd.f32 0.0, %v292
    %v294 = vpop.f32.mrb[0].mxu0
    %295 = vmatprep.mubr.f32.mxu0 0.0
    %296 = vmatmul.mubr.f32.gmra.mrb[0].mxu0 %v109
    %v297 = vpop.f32.mrb[0].mxu0
    %v298 = vadd.f32 0.0, %v297
    %v299 = vpop.f32.mrb[0].mxu0
    %300 = vmatprep.mubr.f32.mxu0 0.0
    %301 = vmatmul.mubr.f32.gmra.mrb[0].mxu0 %v112
    %v302 = vpop.f32.mrb[0].mxu0
    %v303 = vadd.f32 0.0, %v302
    %v304 = vpop.f32.mrb[0].mxu0
    %305 = vmatprep.mubr.f32.mxu0 0.0
    %306 = vmatmul.mubr.f32.gmra.mrb[0].mxu0 %v115
    %v307 = vpop.f32.mrb[0].mxu0
    %v308 = vadd.f32 0.0, %v307
    %v309 = vpop.f32.mrb[0].mxu0
    %310 = vmatprep.mubr.f32.mxu0 0.0
    %311 = vmatmul.mubr.f32.gmra.mrb[0].mxu0 %v118
    %v312 = vpop.f32.mrb[0].mxu0
    %v313 = vadd.f32 0.0, %v312
    %v314 = vpop.f32.mrb[0].mxu0
    %315 = vmatprep.mubr.f32.mxu0 0.0
    %316 = vmatmul.mubr.f32.gmra.mrb[0].mxu0 %v121
    %v317 = vpop.f32.mrb[0].mxu0
    %v318 = vadd.f32 0.0, %v317
    %v319 = vpop.f32.mrb[0].mxu0
    %320 = vmatprep.mubr.f32.mxu0 0.0
    %321 = vmatmul.mubr.f32.gmra.mrb[0].mxu0 %v124
    %v322 = vpop.f32.mrb[0].mxu0
    %v323 = vadd.f32 0.0, %v322
    %v324 = vpop.f32.mrb[0].mxu0
    %325 = vmatprep.mubr.f32.mxu0 0.0
    %326 = vmatmul.mubr.f32.gmra.mrb[0].mxu0 %v127
    %v327 = vpop.f32.mrb[0].mxu0
    %v328 = vadd.f32 0.0, %v327
    %v329 = vpop.f32.mrb[0].mxu0
    %330 = vmatprep.mubr.f32.mxu0 0.0
    %331 = vmatmul.mubr.f32.gmra.mrb[0].mxu0 %v130
    %v332 = vpop.f32.mrb[0].mxu0
    %v333 = vadd.f32 0.0, %v332
    %v334 = vpop.f32.mrb[0].mxu0
    %335 = vdwg.mxu0
    %v336 = vmax.f32 %v203, 0.0
    %v337 = vmax.f32 %v208, 0.0
    %v338 = vmax.f32 %v213, 0.0
    %v339 = vmax.f32 %v218, 0.0
    %v340 = vmax.f32 %v223, 0.0
    %v341 = vmax.f32 %v228, 0.0
    %v342 = vmax.f32 %v233, 0.0
    %v343 = vmax.f32 %v238, 0.0
    %v344 = vmax.f32 %v243, 0.0
    %v345 = vmax.f32 %v248, 0.0
    %v346 = vmax.f32 %v253, 0.0
    %v347 = vmax.f32 %v258, 0.0
    %v348 = vmax.f32 %v263, 0.0
    %v349 = vmax.f32 %v268, 0.0
    %v350 = vmax.f32 %v273, 0.0
    %v351 = vmax.f32 %v278, 0.0
    %v352 = vmax.f32 %v283, 0.0
    %v353 = vmax.f32 %v288, 0.0
    %v354 = vmax.f32 %v293, 0.0
    %v355 = vmax.f32 %v298, 0.0
    %v356 = vmax.f32 %v303, 0.0
    %v357 = vmax.f32 %v308, 0.0
    %v358 = vmax.f32 %v313, 0.0
    %v359 = vmax.f32 %v318, 0.0
    %v360 = vmax.f32 %v323, 0.0
    %v361 = vmax.f32 %v328, 0.0
    %v362 = vmax.f32 %v333, 0.0
    %vm363 = vcmask 261120
    %364 = vst.msk [vmem:[#allocation2] sm:$0xff] %vm363, %v336
    %365 = vst.msk [vmem:[#allocation2 + $0x8] sm:$0xff] %vm363, %v337
    %366 = vst.msk [vmem:[#allocation2 + $0x10] sm:$0xff] %vm363, %v338
    %367 = vst.msk [vmem:[#allocation2 + $0x18] sm:$0xff] %vm363, %v339
    %368 = vst.msk [vmem:[#allocation2 + $0x20] sm:$0xff] %vm363, %v340
    %369 = vst.msk [vmem:[#allocation2 + $0x28] sm:$0xff] %vm363, %v341
    %370 = vst.msk [vmem:[#allocation2 + $0x30] sm:$0xff] %vm363, %v342
    %371 = vst.msk [vmem:[#allocation2 + $0x38] sm:$0xff] %vm363, %v343
    %372 = vst.msk [vmem:[#allocation2 + $0x40] sm:$0xff] %vm363, %v344
    %373 = vst.msk [vmem:[#allocation2 + $0x48] sm:$0xff] %vm363, %v345
    %374 = vst.msk [vmem:[#allocation2 + $0x50] sm:$0xff] %vm363, %v346
    %375 = vst.msk [vmem:[#allocation2 + $0x58] sm:$0xff] %vm363, %v347
    %376 = vst.msk [vmem:[#allocation2 + $0x60] sm:$0xff] %vm363, %v348
    %377 = vst.msk [vmem:[#allocation2 + $0x68] sm:$0xff] %vm363, %v349
    %378 = vst.msk [vmem:[#allocation2 + $0x70] sm:$0xff] %vm363, %v350
    %379 = vst.msk [vmem:[#allocation2 + $0x78] sm:$0xff] %vm363, %v351
    %380 = vst.msk [vmem:[#allocation2 + $0x80] sm:$0xff] %vm363, %v352
    %381 = vst.msk [vmem:[#allocation2 + $0x88] sm:$0xff] %vm363, %v353
    %382 = vst.msk [vmem:[#allocation2 + $0x90] sm:$0xff] %vm363, %v354
    %383 = vst.msk [vmem:[#allocation2 + $0x98] sm:$0xff] %vm363, %v355
    %384 = vst.msk [vmem:[#allocation2 + $0xa0] sm:$0xff] %vm363, %v356
    %385 = vst.msk [vmem:[#allocation2 + $0xa8] sm:$0xff] %vm363, %v357
    %386 = vst.msk [vmem:[#allocation2 + $0xb0] sm:$0xff] %vm363, %v358
    %387 = vst.msk [vmem:[#allocation2 + $0xb8] sm:$0xff] %vm363, %v359
    %388 = vst.msk [vmem:[#allocation2 + $0xc0] sm:$0xff] %vm363, %v360
    %389 = vst.msk [vmem:[#allocation2 + $0xc8] sm:$0xff] %vm363, %v361
    %vm390 = vcmask 257024
    %391 = vst.msk [vmem:[#allocation2 + $0xd0] sm:$0xf] %vm390, %v362
    %v392 = vld [vmem:[#allocation2] sm:$0xff]
    %v393 = vld [vmem:[#allocation2 + $0x8] sm:$0xff]
    %v394 = vld [vmem:[#allocation2 + $0x10] sm:$0xff]
    %v395 = vld [vmem:[#allocation2 + $0x18] sm:$0xff]
    %v396 = vld [vmem:[#allocation2 + $0x20] sm:$0xff]
    %v397 = vld [vmem:[#allocation2 + $0x28] sm:$0xff]
    %v398 = vld [vmem:[#allocation2 + $0x30] sm:$0xff]
    %v399 = vld [vmem:[#allocation2 + $0x38] sm:$0xff]
    %v400 = vld [vmem:[#allocation2 + $0x40] sm:$0xff]
    %v401 = vld [vmem:[#allocation2 + $0x48] sm:$0xff]
    %v402 = vld [vmem:[#allocation2 + $0x50] sm:$0xff]
    %v403 = vld [vmem:[#allocation2 + $0x58] sm:$0xff]
    %v404 = vld [vmem:[#allocation2 + $0x60] sm:$0xff]
    %v405 = vld [vmem:[#allocation2 + $0x68] sm:$0xff]
    %v406 = vld [vmem:[#allocation2 + $0x70] sm:$0xff]
    %v407 = vld [vmem:[#allocation2 + $0x78] sm:$0xff]
    %v408 = vld [vmem:[#allocation2 + $0x80] sm:$0xff]
    %v409 = vld [vmem:[#allocation2 + $0x88] sm:$0xff]
    %v410 = vld [vmem:[#allocation2 + $0x90] sm:$0xff]
    %v411 = vld [vmem:[#allocation2 + $0x98] sm:$0xff]
    %v412 = vld [vmem:[#allocation2 + $0xa0] sm:$0xff]
    %v413 = vld [vmem:[#allocation2 + $0xa8] sm:$0xff]
    %v414 = vld [vmem:[#allocation2 + $0xb0] sm:$0xff]
    %v415 = vld [vmem:[#allocation2 + $0xb8] sm:$0xff]
    %v416 = vld [vmem:[#allocation2 + $0xc0] sm:$0xff]
    %v417 = vld [vmem:[#allocation2 + $0xc8] sm:$0x1f]
    %v418 = vld [vmem:[%s1 + $0xb] sm:$0xff]
    %v419 = vld [vmem:[%s1 + $0x13] sm:$0xff]
    %v420 = vld [vmem:[%s1 + $0x1b] sm:$0xff]
    %v421 = vld [vmem:[%s1 + $0x23] sm:$0xff]
    %v422 = vld [vmem:[#allocation2 + $0x1] sm:$0xff]
    %v423 = vld [vmem:[#allocation2 + $0x9] sm:$0xff]
    %v424 = vld [vmem:[#allocation2 + $0x11] sm:$0xff]
    %v425 = vld [vmem:[#allocation2 + $0x19] sm:$0xff]
    %v426 = vld [vmem:[#allocation2 + $0x21] sm:$0xff]
    %v427 = vld [vmem:[#allocation2 + $0x29] sm:$0xff]
    %v428 = vld [vmem:[#allocation2 + $0x31] sm:$0xff]
    %v429 = vld [vmem:[#allocation2 + $0x39] sm:$0xff]
    %v430 = vld [vmem:[#allocation2 + $0x41] sm:$0xff]
    %v431 = vld [vmem:[#allocation2 + $0x49] sm:$0xff]
    %v432 = vld [vmem:[#allocation2 + $0x51] sm:$0xff]
    %v433 = vld [vmem:[#allocation2 + $0x59] sm:$0xff]
    %v434 = vld [vmem:[#allocation2 + $0x61] sm:$0xff]
    %v435 = vld [vmem:[#allocation2 + $0x69] sm:$0xff]
    %v436 = vld [vmem:[#allocation2 + $0x71] sm:$0xff]
    %v437 = vld [vmem:[#allocation2 + $0x79] sm:$0xff]
    %v438 = vld [vmem:[#allocation2 + $0x81] sm:$0xff]
    %v439 = vld [vmem:[#allocation2 + $0x89] sm:$0xff]
    %v440 = vld [vmem:[#allocation2 + $0x91] sm:$0xff]
    %v441 = vld [vmem:[#allocation2 + $0x99] sm:$0xff]
    %v442 = vld [vmem:[#allocation2 + $0xa1] sm:$0xff]
    %v443 = vld [vmem:[#allocation2 + $0xa9] sm:$0xff]
    %v444 = vld [vmem:[#allocation2 + $0xb1] sm:$0xff]
    %v445 = vld [vmem:[#allocation2 + $0xb9] sm:$0xff]
    %v446 = vld [vmem:[#allocation2 + $0xc1] sm:$0xff]
    %v447 = vld [vmem:[#allocation2 + $0xc9] sm:$0x1f]
    %v448 = vld [vmem:[%s1 + $0x2b] sm:$0xff]
    %v449 = vld [vmem:[%s1 + $0x33] sm:$0xff]
    %v450 = vld [vmem:[%s1 + $0x3b] sm:$0xff]
    %v451 = vld [vmem:[%s1 + $0x43] sm:$0xff]
    %v453 = vsel %vm363, %v422, 0
    %v456 = vsel %vm363, %v423, 0
    %v459 = vsel %vm363, %v424, 0
    %v462 = vsel %vm363, %v425, 0
    %v465 = vsel %vm363, %v426, 0
    %v468 = vsel %vm363, %v427, 0
    %v471 = vsel %vm363, %v428, 0
    %v474 = vsel %vm363, %v429, 0
    %v477 = vsel %vm363, %v430, 0
    %v480 = vsel %vm363, %v431, 0
    %v483 = vsel %vm363, %v432, 0
    %v486 = vsel %vm363, %v433, 0
    %v489 = vsel %vm363, %v434, 0
    %v492 = vsel %vm363, %v435, 0
    %v495 = vsel %vm363, %v436, 0
    %v498 = vsel %vm363, %v437, 0
    %v501 = vsel %vm363, %v438, 0
    %v504 = vsel %vm363, %v439, 0
    %v507 = vsel %vm363, %v440, 0
    %v510 = vsel %vm363, %v441, 0
    %v513 = vsel %vm363, %v442, 0
    %v516 = vsel %vm363, %v443, 0
    %v519 = vsel %vm363, %v444, 0
    %v522 = vsel %vm363, %v445, 0
    %v525 = vsel %vm363, %v446, 0
    %v528 = vsel %vm363, %v447, 0
    %530 = vmatprep.subr.mxu0 0.0
    %531 = vmatpush1.msra.mxu0 %v448
    %532 = vmatprep.subr.mxu0 0.0
    %533 = vmatpush1.msra.mxu0 %v449
    %534 = vmatprep.subr.mxu0 0.0
    %535 = vmatpush1.msra.mxu0 %v450
    %536 = vmatprep.subr.mxu0 0.0
    %537 = vmatpush1.msra.mxu0 %v451
    %538 = vmatprep.subr.mxu0 0.0
    %539 = vmatpush1.msra.mxu0 0.0
    %540 = vmatprep.subr.mxu0 0.0
    %541 = vmatpush1.msra.mxu0 0.0
    %542 = vmatprep.subr.mxu0 0.0
    %543 = vmatpush1.msra.mxu0 0.0
    %544 = vmatprep.subr.mxu0 0.0
    %545 = vmatpush1.msra.mxu0 0.0
    %546 = vmatprep.subr.mxu0 0.0
    %547 = vmatpush1.msra.mxu0 0.0
    %548 = vmatprep.subr.mxu0 0.0
    %549 = vmatpush1.msra.mxu0 0.0
    %550 = vmatprep.subr.mxu0 0.0
    %551 = vmatpush1.msra.mxu0 0.0
    %552 = vmatprep.subr.mxu0 0.0
    %553 = vmatpush1.msra.mxu0 0.0
    %554 = vmatprep.subr.mxu0 0.0
    %555 = vmatpush1.msra.mxu0 0.0
    %556 = vmatprep.subr.mxu0 0.0
    %557 = vmatpush1.msra.mxu0 0.0
    %558 = vmatprep.subr.mxu0 0.0
    %559 = vmatpush1.msra.mxu0 0.0
    %560 = vmatprep.subr.mxu0 0.0
    %561 = vmatpush1.msra.mxu0 0.0
    %562 = vmatprep.subr.mxu0 0.0
    %563 = vmatpush1.msra.mxu0 0.0
    %564 = vmatprep.subr.mxu0 0.0
    %565 = vmatpush1.msra.mxu0 0.0
    %566 = vmatprep.subr.mxu0 0.0
    %567 = vmatpush1.msra.mxu0 0.0
    %568 = vmatprep.subr.mxu0 0.0
    %569 = vmatpush1.msra.mxu0 0.0
    %570 = vmatprep.subr.mxu0 0.0
    %571 = vmatpush1.msra.mxu0 0.0
    %572 = vmatprep.subr.mxu0 0.0
    %573 = vmatpush1.msra.mxu0 0.0
    %574 = vmatprep.subr.mxu0 0.0
    %575 = vmatpush1.msra.mxu0 0.0
    %576 = vmatprep.subr.mxu0 0.0
    %577 = vmatpush1.msra.mxu0 0.0
    %578 = vmatprep.subr.mxu0 0.0
    %579 = vmatpush1.msra.mxu0 0.0
    %580 = vmatprep.subr.mxu0 0.0
    %581 = vmatpush1.msra.mxu0 0.0
    %582 = vmatprep.subr.mxu0 0.0
    %583 = vmatpush1.msra.mxu0 0.0
    %584 = vmatprep.subr.mxu0 0.0
    %585 = vmatpush1.msra.mxu0 0.0
    %586 = vmatprep.subr.mxu0 0.0
    %587 = vmatpush1.msra.mxu0 0.0
    %588 = vmatprep.subr.mxu0 0.0
    %589 = vmatpush1.msra.mxu0 0.0
    %590 = vmatprep.subr.mxu0 0.0
    %591 = vmatpush1.msra.mxu0 0.0
    %592 = vmatprep.subr.mxu0 0.0
    %593 = vmatpush1.msra.mxu0 0.0
    %594 = vmatprep.mubr.f32.mxu0 0.0
    %595 = vmatmul.mubr.f32.gmra.mrb[0].mxu0 %v453
    %v596 = vpop.f32.mrb[0].mxu0
    %v597 = vadd.f32 0.0, %v596
    %v598 = vpop.f32.mrb[0].mxu0
    %599 = vmatprep.mubr.f32.mxu0 0.0
    %600 = vmatmul.mubr.f32.gmra.mrb[0].mxu0 %v456
    %v601 = vpop.f32.mrb[0].mxu0
    %v602 = vadd.f32 0.0, %v601
    %v603 = vpop.f32.mrb[0].mxu0
    %604 = vmatprep.mubr.f32.mxu0 0.0
    %605 = vmatmul.mubr.f32.gmra.mrb[0].mxu0 %v459
    %v606 = vpop.f32.mrb[0].mxu0
    %v607 = vadd.f32 0.0, %v606
    %v608 = vpop.f32.mrb[0].mxu0
    %609 = vmatprep.mubr.f32.mxu0 0.0
    %610 = vmatmul.mubr.f32.gmra.mrb[0].mxu0 %v462
    %v611 = vpop.f32.mrb[0].mxu0
    %v612 = vadd.f32 0.0, %v611
    %v613 = vpop.f32.mrb[0].mxu0
    %614 = vmatprep.mubr.f32.mxu0 0.0
    %615 = vmatmul.mubr.f32.gmra.mrb[0].mxu0 %v465
    %v616 = vpop.f32.mrb[0].mxu0
    %v617 = vadd.f32 0.0, %v616
    %v618 = vpop.f32.mrb[0].mxu0
    %619 = vmatprep.mubr.f32.mxu0 0.0
    %620 = vmatmul.mubr.f32.gmra.mrb[0].mxu0 %v468
    %v621 = vpop.f32.mrb[0].mxu0
    %v622 = vadd.f32 0.0, %v621
    %v623 = vpop.f32.mrb[0].mxu0
    %624 = vmatprep.mubr.f32.mxu0 0.0
    %625 = vmatmul.mubr.f32.gmra.mrb[0].mxu0 %v471
    %v626 = vpop.f32.mrb[0].mxu0
    %v627 = vadd.f32 0.0, %v626
    %v628 = vpop.f32.mrb[0].mxu0
    %629 = vmatprep.mubr.f32.mxu0 0.0
    %630 = vmatmul.mubr.f32.gmra.mrb[0].mxu0 %v474
    %v631 = vpop.f32.mrb[0].mxu0
    %v632 = vadd.f32 0.0, %v631
    %v633 = vpop.f32.mrb[0].mxu0
    %634 = vmatprep.mubr.f32.mxu0 0.0
    %635 = vmatmul.mubr.f32.gmra.mrb[0].mxu0 %v477
    %v636 = vpop.f32.mrb[0].mxu0
    %v637 = vadd.f32 0.0, %v636
    %v638 = vpop.f32.mrb[0].mxu0
    %639 = vmatprep.mubr.f32.mxu0 0.0
    %640 = vmatmul.mubr.f32.gmra.mrb[0].mxu0 %v480
    %v641 = vpop.f32.mrb[0].mxu0
    %v642 = vadd.f32 0.0, %v641
    %v643 = vpop.f32.mrb[0].mxu0
    %644 = vmatprep.mubr.f32.mxu0 0.0
    %645 = vmatmul.mubr.f32.gmra.mrb[0].mxu0 %v483
    %v646 = vpop.f32.mrb[0].mxu0
    %v647 = vadd.f32 0.0, %v646
    %v648 = vpop.f32.mrb[0].mxu0
    %649 = vmatprep.mubr.f32.mxu0 0.0
    %650 = vmatmul.mubr.f32.gmra.mrb[0].mxu0 %v486
    %v651 = vpop.f32.mrb[0].mxu0
    %v652 = vadd.f32 0.0, %v651
    %v653 = vpop.f32.mrb[0].mxu0
    %654 = vmatprep.mubr.f32.mxu0 0.0
    %655 = vmatmul.mubr.f32.gmra.mrb[0].mxu0 %v489
    %v656 = vpop.f32.mrb[0].mxu0
    %v657 = vadd.f32 0.0, %v656
    %v658 = vpop.f32.mrb[0].mxu0
    %659 = vmatprep.mubr.f32.mxu0 0.0
    %660 = vmatmul.mubr.f32.gmra.mrb[0].mxu0 %v492
    %v661 = vpop.f32.mrb[0].mxu0
    %v662 = vadd.f32 0.0, %v661
    %v663 = vpop.f32.mrb[0].mxu0
    %664 = vmatprep.mubr.f32.mxu0 0.0
    %665 = vmatmul.mubr.f32.gmra.mrb[0].mxu0 %v495
    %v666 = vpop.f32.mrb[0].mxu0
    %v667 = vadd.f32 0.0, %v666
    %v668 = vpop.f32.mrb[0].mxu0
    %669 = vmatprep.mubr.f32.mxu0 0.0
    %670 = vmatmul.mubr.f32.gmra.mrb[0].mxu0 %v498
    %v671 = vpop.f32.mrb[0].mxu0
    %v672 = vadd.f32 0.0, %v671
    %v673 = vpop.f32.mrb[0].mxu0
    %674 = vmatprep.mubr.f32.mxu0 0.0
    %675 = vmatmul.mubr.f32.gmra.mrb[0].mxu0 %v501
    %v676 = vpop.f32.mrb[0].mxu0
    %v677 = vadd.f32 0.0, %v676
    %v678 = vpop.f32.mrb[0].mxu0
    %679 = vmatprep.mubr.f32.mxu0 0.0
    %680 = vmatmul.mubr.f32.gmra.mrb[0].mxu0 %v504
    %v681 = vpop.f32.mrb[0].mxu0
    %v682 = vadd.f32 0.0, %v681
    %v683 = vpop.f32.mrb[0].mxu0
    %684 = vmatprep.mubr.f32.mxu0 0.0
    %685 = vmatmul.mubr.f32.gmra.mrb[0].mxu0 %v507
    %v686 = vpop.f32.mrb[0].mxu0
    %v687 = vadd.f32 0.0, %v686
    %v688 = vpop.f32.mrb[0].mxu0
    %689 = vmatprep.mubr.f32.mxu0 0.0
    %690 = vmatmul.mubr.f32.gmra.mrb[0].mxu0 %v510
    %v691 = vpop.f32.mrb[0].mxu0
    %v692 = vadd.f32 0.0, %v691
    %v693 = vpop.f32.mrb[0].mxu0
    %694 = vmatprep.mubr.f32.mxu0 0.0
    %695 = vmatmul.mubr.f32.gmra.mrb[0].mxu0 %v513
    %v696 = vpop.f32.mrb[0].mxu0
    %v697 = vadd.f32 0.0, %v696
    %v698 = vpop.f32.mrb[0].mxu0
    %699 = vmatprep.mubr.f32.mxu0 0.0
    %700 = vmatmul.mubr.f32.gmra.mrb[0].mxu0 %v516
    %v701 = vpop.f32.mrb[0].mxu0
    %v702 = vadd.f32 0.0, %v701
    %v703 = vpop.f32.mrb[0].mxu0
    %704 = vmatprep.mubr.f32.mxu0 0.0
    %705 = vmatmul.mubr.f32.gmra.mrb[0].mxu0 %v519
    %v706 = vpop.f32.mrb[0].mxu0
    %v707 = vadd.f32 0.0, %v706
    %v708 = vpop.f32.mrb[0].mxu0
    %709 = vmatprep.mubr.f32.mxu0 0.0
    %710 = vmatmul.mubr.f32.gmra.mrb[0].mxu0 %v522
    %v711 = vpop.f32.mrb[0].mxu0
    %v712 = vadd.f32 0.0, %v711
    %v713 = vpop.f32.mrb[0].mxu0
    %714 = vmatprep.mubr.f32.mxu0 0.0
    %715 = vmatmul.mubr.f32.gmra.mrb[0].mxu0 %v525
    %v716 = vpop.f32.mrb[0].mxu0
    %v717 = vadd.f32 0.0, %v716
    %v718 = vpop.f32.mrb[0].mxu0
    %719 = vmatprep.mubr.f32.mxu0 0.0
    %720 = vmatmul.mubr.f32.gmra.mrb[0].mxu0 %v528
    %v721 = vpop.f32.mrb[0].mxu0
    %v722 = vadd.f32 0.0, %v721
    %v723 = vpop.f32.mrb[0].mxu0
    %724 = vdwg.mxu0
    %v726 = vsel %vm363, %v392, 0
    %v729 = vsel %vm363, %v393, 0
    %v732 = vsel %vm363, %v394, 0
    %v735 = vsel %vm363, %v395, 0
    %v738 = vsel %vm363, %v396, 0
    %v741 = vsel %vm363, %v397, 0
    %v744 = vsel %vm363, %v398, 0
    %v747 = vsel %vm363, %v399, 0
    %v750 = vsel %vm363, %v400, 0
    %v753 = vsel %vm363, %v401, 0
    %v756 = vsel %vm363, %v402, 0
    %v759 = vsel %vm363, %v403, 0
    %v762 = vsel %vm363, %v404, 0
    %v765 = vsel %vm363, %v405, 0
    %v768 = vsel %vm363, %v406, 0
    %v771 = vsel %vm363, %v407, 0
    %v774 = vsel %vm363, %v408, 0
    %v777 = vsel %vm363, %v409, 0
    %v780 = vsel %vm363, %v410, 0
    %v783 = vsel %vm363, %v411, 0
    %v786 = vsel %vm363, %v412, 0
    %v789 = vsel %vm363, %v413, 0
    %v792 = vsel %vm363, %v414, 0
    %v795 = vsel %vm363, %v415, 0
    %v798 = vsel %vm363, %v416, 0
    %v801 = vsel %vm363, %v417, 0
    %803 = vmatprep.subr.mxu0 0.0
    %804 = vmatpush1.msra.mxu0 %v418
    %805 = vmatprep.subr.mxu0 0.0
    %806 = vmatpush1.msra.mxu0 %v419
    %807 = vmatprep.subr.mxu0 0.0
    %808 = vmatpush1.msra.mxu0 %v420
    %809 = vmatprep.subr.mxu0 0.0
    %810 = vmatpush1.msra.mxu0 %v421
    %811 = vmatprep.subr.mxu0 0.0
    %812 = vmatpush1.msra.mxu0 0.0
    %813 = vmatprep.subr.mxu0 0.0
    %814 = vmatpush1.msra.mxu0 0.0
    %815 = vmatprep.subr.mxu0 0.0
    %816 = vmatpush1.msra.mxu0 0.0
    %817 = vmatprep.subr.mxu0 0.0
    %818 = vmatpush1.msra.mxu0 0.0
    %819 = vmatprep.subr.mxu0 0.0
    %820 = vmatpush1.msra.mxu0 0.0
    %821 = vmatprep.subr.mxu0 0.0
    %822 = vmatpush1.msra.mxu0 0.0
    %823 = vmatprep.subr.mxu0 0.0
    %824 = vmatpush1.msra.mxu0 0.0
    %825 = vmatprep.subr.mxu0 0.0
    %826 = vmatpush1.msra.mxu0 0.0
    %827 = vmatprep.subr.mxu0 0.0
    %828 = vmatpush1.msra.mxu0 0.0
    %829 = vmatprep.subr.mxu0 0.0
    %830 = vmatpush1.msra.mxu0 0.0
    %831 = vmatprep.subr.mxu0 0.0
    %832 = vmatpush1.msra.mxu0 0.0
    %833 = vmatprep.subr.mxu0 0.0
    %834 = vmatpush1.msra.mxu0 0.0
    %835 = vmatprep.subr.mxu0 0.0
    %836 = vmatpush1.msra.mxu0 0.0
    %837 = vmatprep.subr.mxu0 0.0
    %838 = vmatpush1.msra.mxu0 0.0
    %839 = vmatprep.subr.mxu0 0.0
    %840 = vmatpush1.msra.mxu0 0.0
    %841 = vmatprep.subr.mxu0 0.0
    %842 = vmatpush1.msra.mxu0 0.0
    %843 = vmatprep.subr.mxu0 0.0
    %844 = vmatpush1.msra.mxu0 0.0
    %845 = vmatprep.subr.mxu0 0.0
    %846 = vmatpush1.msra.mxu0 0.0
    %847 = vmatprep.subr.mxu0 0.0
    %848 = vmatpush1.msra.mxu0 0.0
    %849 = vmatprep.subr.mxu0 0.0
    %850 = vmatpush1.msra.mxu0 0.0
    %851 = vmatprep.subr.mxu0 0.0
    %852 = vmatpush1.msra.mxu0 0.0
    %853 = vmatprep.subr.mxu0 0.0
    %854 = vmatpush1.msra.mxu0 0.0
    %855 = vmatprep.subr.mxu0 0.0
    %856 = vmatpush1.msra.mxu0 0.0
    %857 = vmatprep.subr.mxu0 0.0
    %858 = vmatpush1.msra.mxu0 0.0
    %859 = vmatprep.subr.mxu0 0.0
    %860 = vmatpush1.msra.mxu0 0.0
    %861 = vmatprep.subr.mxu0 0.0
    %862 = vmatpush1.msra.mxu0 0.0
    %863 = vmatprep.subr.mxu0 0.0
    %864 = vmatpush1.msra.mxu0 0.0
    %865 = vmatprep.subr.mxu0 0.0
    %866 = vmatpush1.msra.mxu0 0.0
    %867 = vmatprep.mubr.f32.mxu0 0.0
    %868 = vmatmul.mubr.f32.gmra.mrb[0].mxu0 %v726
    %v869 = vpop.f32.mrb[0].mxu0
    %v870 = vadd.f32 %v597, %v869
    %v871 = vpop.f32.mrb[0].mxu0
    %872 = vmatprep.mubr.f32.mxu0 0.0
    %873 = vmatmul.mubr.f32.gmra.mrb[0].mxu0 %v729
    %v874 = vpop.f32.mrb[0].mxu0
    %v875 = vadd.f32 %v602, %v874
    %v876 = vpop.f32.mrb[0].mxu0
    %877 = vmatprep.mubr.f32.mxu0 0.0
    %878 = vmatmul.mubr.f32.gmra.mrb[0].mxu0 %v732
    %v879 = vpop.f32.mrb[0].mxu0
    %v880 = vadd.f32 %v607, %v879
    %v881 = vpop.f32.mrb[0].mxu0
    %882 = vmatprep.mubr.f32.mxu0 0.0
    %883 = vmatmul.mubr.f32.gmra.mrb[0].mxu0 %v735
    %v884 = vpop.f32.mrb[0].mxu0
    %v885 = vadd.f32 %v612, %v884
    %v886 = vpop.f32.mrb[0].mxu0
    %887 = vmatprep.mubr.f32.mxu0 0.0
    %888 = vmatmul.mubr.f32.gmra.mrb[0].mxu0 %v738
    %v889 = vpop.f32.mrb[0].mxu0
    %v890 = vadd.f32 %v617, %v889
    %v891 = vpop.f32.mrb[0].mxu0
    %892 = vmatprep.mubr.f32.mxu0 0.0
    %893 = vmatmul.mubr.f32.gmra.mrb[0].mxu0 %v741
    %v894 = vpop.f32.mrb[0].mxu0
    %v895 = vadd.f32 %v622, %v894
    %v896 = vpop.f32.mrb[0].mxu0
    %897 = vmatprep.mubr.f32.mxu0 0.0
    %898 = vmatmul.mubr.f32.gmra.mrb[0].mxu0 %v744
    %v899 = vpop.f32.mrb[0].mxu0
    %v900 = vadd.f32 %v627, %v899
    %v901 = vpop.f32.mrb[0].mxu0
    %902 = vmatprep.mubr.f32.mxu0 0.0
    %903 = vmatmul.mubr.f32.gmra.mrb[0].mxu0 %v747
    %v904 = vpop.f32.mrb[0].mxu0
    %v905 = vadd.f32 %v632, %v904
    %v906 = vpop.f32.mrb[0].mxu0
    %907 = vmatprep.mubr.f32.mxu0 0.0
    %908 = vmatmul.mubr.f32.gmra.mrb[0].mxu0 %v750
    %v909 = vpop.f32.mrb[0].mxu0
    %v910 = vadd.f32 %v637, %v909
    %v911 = vpop.f32.mrb[0].mxu0
    %912 = vmatprep.mubr.f32.mxu0 0.0
    %913 = vmatmul.mubr.f32.gmra.mrb[0].mxu0 %v753
    %v914 = vpop.f32.mrb[0].mxu0
    %v915 = vadd.f32 %v642, %v914
    %v916 = vpop.f32.mrb[0].mxu0
    %917 = vmatprep.mubr.f32.mxu0 0.0
    %918 = vmatmul.mubr.f32.gmra.mrb[0].mxu0 %v756
    %v919 = vpop.f32.mrb[0].mxu0
    %v920 = vadd.f32 %v647, %v919
    %v921 = vpop.f32.mrb[0].mxu0
    %922 = vmatprep.mubr.f32.mxu0 0.0
    %923 = vmatmul.mubr.f32.gmra.mrb[0].mxu0 %v759
    %v924 = vpop.f32.mrb[0].mxu0
    %v925 = vadd.f32 %v652, %v924
    %v926 = vpop.f32.mrb[0].mxu0
    %927 = vmatprep.mubr.f32.mxu0 0.0
    %928 = vmatmul.mubr.f32.gmra.mrb[0].mxu0 %v762
    %v929 = vpop.f32.mrb[0].mxu0
    %v930 = vadd.f32 %v657, %v929
    %v931 = vpop.f32.mrb[0].mxu0
    %932 = vmatprep.mubr.f32.mxu0 0.0
    %933 = vmatmul.mubr.f32.gmra.mrb[0].mxu0 %v765
    %v934 = vpop.f32.mrb[0].mxu0
    %v935 = vadd.f32 %v662, %v934
    %v936 = vpop.f32.mrb[0].mxu0
    %937 = vmatprep.mubr.f32.mxu0 0.0
    %938 = vmatmul.mubr.f32.gmra.mrb[0].mxu0 %v768
    %v939 = vpop.f32.mrb[0].mxu0
    %v940 = vadd.f32 %v667, %v939
    %v941 = vpop.f32.mrb[0].mxu0
    %942 = vmatprep.mubr.f32.mxu0 0.0
    %943 = vmatmul.mubr.f32.gmra.mrb[0].mxu0 %v771
    %v944 = vpop.f32.mrb[0].mxu0
    %v945 = vadd.f32 %v672, %v944
    %v946 = vpop.f32.mrb[0].mxu0
    %947 = vmatprep.mubr.f32.mxu0 0.0
    %948 = vmatmul.mubr.f32.gmra.mrb[0].mxu0 %v774
    %v949 = vpop.f32.mrb[0].mxu0
    %v950 = vadd.f32 %v677, %v949
    %v951 = vpop.f32.mrb[0].mxu0
    %952 = vmatprep.mubr.f32.mxu0 0.0
    %953 = vmatmul.mubr.f32.gmra.mrb[0].mxu0 %v777
    %v954 = vpop.f32.mrb[0].mxu0
    %v955 = vadd.f32 %v682, %v954
    %v956 = vpop.f32.mrb[0].mxu0
    %957 = vmatprep.mubr.f32.mxu0 0.0
    %958 = vmatmul.mubr.f32.gmra.mrb[0].mxu0 %v780
    %v959 = vpop.f32.mrb[0].mxu0
    %v960 = vadd.f32 %v687, %v959
    %v961 = vpop.f32.mrb[0].mxu0
    %962 = vmatprep.mubr.f32.mxu0 0.0
    %963 = vmatmul.mubr.f32.gmra.mrb[0].mxu0 %v783
    %v964 = vpop.f32.mrb[0].mxu0
    %v965 = vadd.f32 %v692, %v964
    %v966 = vpop.f32.mrb[0].mxu0
    %967 = vmatprep.mubr.f32.mxu0 0.0
    %968 = vmatmul.mubr.f32.gmra.mrb[0].mxu0 %v786
    %v969 = vpop.f32.mrb[0].mxu0
    %v970 = vadd.f32 %v697, %v969
    %v971 = vpop.f32.mrb[0].mxu0
    %972 = vmatprep.mubr.f32.mxu0 0.0
    %973 = vmatmul.mubr.f32.gmra.mrb[0].mxu0 %v789
    %v974 = vpop.f32.mrb[0].mxu0
    %v975 = vadd.f32 %v702, %v974
    %v976 = vpop.f32.mrb[0].mxu0
    %977 = vmatprep.mubr.f32.mxu0 0.0
    %978 = vmatmul.mubr.f32.gmra.mrb[0].mxu0 %v792
    %v979 = vpop.f32.mrb[0].mxu0
    %v980 = vadd.f32 %v707, %v979
    %v981 = vpop.f32.mrb[0].mxu0
    %982 = vmatprep.mubr.f32.mxu0 0.0
    %983 = vmatmul.mubr.f32.gmra.mrb[0].mxu0 %v795
    %v984 = vpop.f32.mrb[0].mxu0
    %v985 = vadd.f32 %v712, %v984
    %v986 = vpop.f32.mrb[0].mxu0
    %987 = vmatprep.mubr.f32.mxu0 0.0
    %988 = vmatmul.mubr.f32.gmra.mrb[0].mxu0 %v798
    %v989 = vpop.f32.mrb[0].mxu0
    %v990 = vadd.f32 %v717, %v989
    %v991 = vpop.f32.mrb[0].mxu0
    %992 = vmatprep.mubr.f32.mxu0 0.0
    %993 = vmatmul.mubr.f32.gmra.mrb[0].mxu0 %v801
    %v994 = vpop.f32.mrb[0].mxu0
    %v995 = vadd.f32 %v722, %v994
    %v996 = vpop.f32.mrb[0].mxu0
    %997 = vdwg.mxu0
    %v998 = vld [vmem:[#allocation2 + $0x2] sm:$0xff]
    %v999 = vld [vmem:[#allocation2 + $0xa] sm:$0xff]
    %v1000 = vld [vmem:[#allocation2 + $0x12] sm:$0xff]
    %v1001 = vld [vmem:[#allocation2 + $0x1a] sm:$0xff]
    %v1002 = vld [vmem:[#allocation2 + $0x22] sm:$0xff]
    %v1003 = vld [vmem:[#allocation2 + $0x2a] sm:$0xff]
    %v1004 = vld [vmem:[#allocation2 + $0x32] sm:$0xff]
    %v1005 = vld [vmem:[#allocation2 + $0x3a] sm:$0xff]
    %v1006 = vld [vmem:[#allocation2 + $0x42] sm:$0xff]
    %v1007 = vld [vmem:[#allocation2 + $0x4a] sm:$0xff]
    %v1008 = vld [vmem:[#allocation2 + $0x52] sm:$0xff]
    %v1009 = vld [vmem:[#allocation2 + $0x5a] sm:$0xff]
    %v1010 = vld [vmem:[#allocation2 + $0x62] sm:$0xff]
    %v1011 = vld [vmem:[#allocation2 + $0x6a] sm:$0xff]
    %v1012 = vld [vmem:[#allocation2 + $0x72] sm:$0xff]
    %v1013 = vld [vmem:[#allocation2 + $0x7a] sm:$0xff]
    %v1014 = vld [vmem:[#allocation2 + $0x82] sm:$0xff]
    %v1015 = vld [vmem:[#allocation2 + $0x8a] sm:$0xff]
    %v1016 = vld [vmem:[#allocation2 + $0x92] sm:$0xff]
    %v1017 = vld [vmem:[#allocation2 + $0x9a] sm:$0xff]
    %v1018 = vld [vmem:[#allocation2 + $0xa2] sm:$0xff]
    %v1019 = vld [vmem:[#allocation2 + $0xaa] sm:$0xff]
    %v1020 = vld [vmem:[#allocation2 + $0xb2] sm:$0xff]
    %v1021 = vld [vmem:[#allocation2 + $0xba] sm:$0xff]
    %v1022 = vld [vmem:[#allocation2 + $0xc2] sm:$0xff]
    %v1023 = vld [vmem:[#allocation2 + $0xca] sm:$0x1f]
    %v1024 = vld [vmem:[%s1 + $0x4b] sm:$0xff]
    %v1025 = vld [vmem:[%s1 + $0x53] sm:$0xff]
    %v1026 = vld [vmem:[%s1 + $0x5b] sm:$0xff]
    %v1027 = vld [vmem:[%s1 + $0x63] sm:$0xff]
    %v1029 = vsel %vm363, %v998, 0
    %v1032 = vsel %vm363, %v999, 0
    %v1035 = vsel %vm363, %v1000, 0
    %v1038 = vsel %vm363, %v1001, 0
    %v1041 = vsel %vm363, %v1002, 0
    %v1044 = vsel %vm363, %v1003, 0
    %v1047 = vsel %vm363, %v1004, 0
    %v1050 = vsel %vm363, %v1005, 0
    %v1053 = vsel %vm363, %v1006, 0
    %v1056 = vsel %vm363, %v1007, 0
    %v1059 = vsel %vm363, %v1008, 0
    %v1062 = vsel %vm363, %v1009, 0
    %v1065 = vsel %vm363, %v1010, 0
    %v1068 = vsel %vm363, %v1011, 0
    %v1071 = vsel %vm363, %v1012, 0
    %v1074 = vsel %vm363, %v1013, 0
    %v1077 = vsel %vm363, %v1014, 0
    %v1080 = vsel %vm363, %v1015, 0
    %v1083 = vsel %vm363, %v1016, 0
    %v1086 = vsel %vm363, %v1017, 0
    %v1089 = vsel %vm363, %v1018, 0
    %v1092 = vsel %vm363, %v1019, 0
    %v1095 = vsel %vm363, %v1020, 0
    %v1098 = vsel %vm363, %v1021, 0
    %v1101 = vsel %vm363, %v1022, 0
    %v1104 = vsel %vm363, %v1023, 0
    %1106 = vmatprep.subr.mxu0 0.0
    %1107 = vmatpush1.msra.mxu0 %v1024
    %1108 = vmatprep.subr.mxu0 0.0
    %1109 = vmatpush1.msra.mxu0 %v1025
    %1110 = vmatprep.subr.mxu0 0.0
    %1111 = vmatpush1.msra.mxu0 %v1026
    %1112 = vmatprep.subr.mxu0 0.0
    %1113 = vmatpush1.msra.mxu0 %v1027
    %1114 = vmatprep.subr.mxu0 0.0
    %1115 = vmatpush1.msra.mxu0 0.0
    %1116 = vmatprep.subr.mxu0 0.0
    %1117 = vmatpush1.msra.mxu0 0.0
    %1118 = vmatprep.subr.mxu0 0.0
    %1119 = vmatpush1.msra.mxu0 0.0
    %1120 = vmatprep.subr.mxu0 0.0
    %1121 = vmatpush1.msra.mxu0 0.0
    %1122 = vmatprep.subr.mxu0 0.0
    %1123 = vmatpush1.msra.mxu0 0.0
    %1124 = vmatprep.subr.mxu0 0.0
    %1125 = vmatpush1.msra.mxu0 0.0
    %1126 = vmatprep.subr.mxu0 0.0
    %1127 = vmatpush1.msra.mxu0 0.0
    %1128 = vmatprep.subr.mxu0 0.0
    %1129 = vmatpush1.msra.mxu0 0.0
    %1130 = vmatprep.subr.mxu0 0.0
    %1131 = vmatpush1.msra.mxu0 0.0
    %1132 = vmatprep.subr.mxu0 0.0
    %1133 = vmatpush1.msra.mxu0 0.0
    %1134 = vmatprep.subr.mxu0 0.0
    %1135 = vmatpush1.msra.mxu0 0.0
    %1136 = vmatprep.subr.mxu0 0.0
    %1137 = vmatpush1.msra.mxu0 0.0
    %1138 = vmatprep.subr.mxu0 0.0
    %1139 = vmatpush1.msra.mxu0 0.0
    %1140 = vmatprep.subr.mxu0 0.0
    %1141 = vmatpush1.msra.mxu0 0.0
    %1142 = vmatprep.subr.mxu0 0.0
    %1143 = vmatpush1.msra.mxu0 0.0
    %1144 = vmatprep.subr.mxu0 0.0
    %1145 = vmatpush1.msra.mxu0 0.0
    %1146 = vmatprep.subr.mxu0 0.0
    %1147 = vmatpush1.msra.mxu0 0.0
    %1148 = vmatprep.subr.mxu0 0.0
    %1149 = vmatpush1.msra.mxu0 0.0
    %1150 = vmatprep.subr.mxu0 0.0
    %1151 = vmatpush1.msra.mxu0 0.0
    %1152 = vmatprep.subr.mxu0 0.0
    %1153 = vmatpush1.msra.mxu0 0.0
    %1154 = vmatprep.subr.mxu0 0.0
    %1155 = vmatpush1.msra.mxu0 0.0
    %1156 = vmatprep.subr.mxu0 0.0
    %1157 = vmatpush1.msra.mxu0 0.0
    %1158 = vmatprep.subr.mxu0 0.0
    %1159 = vmatpush1.msra.mxu0 0.0
    %1160 = vmatprep.subr.mxu0 0.0
    %1161 = vmatpush1.msra.mxu0 0.0
    %1162 = vmatprep.subr.mxu0 0.0
    %1163 = vmatpush1.msra.mxu0 0.0
    %1164 = vmatprep.subr.mxu0 0.0
    %1165 = vmatpush1.msra.mxu0 0.0
    %1166 = vmatprep.subr.mxu0 0.0
    %1167 = vmatpush1.msra.mxu0 0.0
    %1168 = vmatprep.subr.mxu0 0.0
    %1169 = vmatpush1.msra.mxu0 0.0
    %1170 = vmatprep.mubr.f32.mxu0 0.0
    %1171 = vmatmul.mubr.f32.gmra.mrb[0].mxu0 %v1029
    %v1172 = vpop.f32.mrb[0].mxu0
    %v1173 = vadd.f32 0.0, %v1172
    %v1174 = vpop.f32.mrb[0].mxu0
    %1175 = vmatprep.mubr.f32.mxu0 0.0
    %1176 = vmatmul.mubr.f32.gmra.mrb[0].mxu0 %v1032
    %v1177 = vpop.f32.mrb[0].mxu0
    %v1178 = vadd.f32 0.0, %v1177
    %v1179 = vpop.f32.mrb[0].mxu0
    %1180 = vmatprep.mubr.f32.mxu0 0.0
    %1181 = vmatmul.mubr.f32.gmra.mrb[0].mxu0 %v1035
    %v1182 = vpop.f32.mrb[0].mxu0
    %v1183 = vadd.f32 0.0, %v1182
    %v1184 = vpop.f32.mrb[0].mxu0
    %1185 = vmatprep.mubr.f32.mxu0 0.0
    %1186 = vmatmul.mubr.f32.gmra.mrb[0].mxu0 %v1038
    %v1187 = vpop.f32.mrb[0].mxu0
    %v1188 = vadd.f32 0.0, %v1187
    %v1189 = vpop.f32.mrb[0].mxu0
    %1190 = vmatprep.mubr.f32.mxu0 0.0
    %1191 = vmatmul.mubr.f32.gmra.mrb[0].mxu0 %v1041
    %v1192 = vpop.f32.mrb[0].mxu0
    %v1193 = vadd.f32 0.0, %v1192
    %v1194 = vpop.f32.mrb[0].mxu0
    %1195 = vmatprep.mubr.f32.mxu0 0.0
    %1196 = vmatmul.mubr.f32.gmra.mrb[0].mxu0 %v1044
    %v1197 = vpop.f32.mrb[0].mxu0
    %v1198 = vadd.f32 0.0, %v1197
    %v1199 = vpop.f32.mrb[0].mxu0
    %1200 = vmatprep.mubr.f32.mxu0 0.0
    %1201 = vmatmul.mubr.f32.gmra.mrb[0].mxu0 %v1047
    %v1202 = vpop.f32.mrb[0].mxu0
    %v1203 = vadd.f32 0.0, %v1202
    %v1204 = vpop.f32.mrb[0].mxu0
    %1205 = vmatprep.mubr.f32.mxu0 0.0
    %1206 = vmatmul.mubr.f32.gmra.mrb[0].mxu0 %v1050
    %v1207 = vpop.f32.mrb[0].mxu0
    %v1208 = vadd.f32 0.0, %v1207
    %v1209 = vpop.f32.mrb[0].mxu0
    %1210 = vmatprep.mubr.f32.mxu0 0.0
    %1211 = vmatmul.mubr.f32.gmra.mrb[0].mxu0 %v1053
    %v1212 = vpop.f32.mrb[0].mxu0
    %v1213 = vadd.f32 0.0, %v1212
    %v1214 = vpop.f32.mrb[0].mxu0
    %1215 = vmatprep.mubr.f32.mxu0 0.0
    %1216 = vmatmul.mubr.f32.gmra.mrb[0].mxu0 %v1056
    %v1217 = vpop.f32.mrb[0].mxu0
    %v1218 = vadd.f32 0.0, %v1217
    %v1219 = vpop.f32.mrb[0].mxu0
    %1220 = vmatprep.mubr.f32.mxu0 0.0
    %1221 = vmatmul.mubr.f32.gmra.mrb[0].mxu0 %v1059
    %v1222 = vpop.f32.mrb[0].mxu0
    %v1223 = vadd.f32 0.0, %v1222
    %v1224 = vpop.f32.mrb[0].mxu0
    %1225 = vmatprep.mubr.f32.mxu0 0.0
    %1226 = vmatmul.mubr.f32.gmra.mrb[0].mxu0 %v1062
    %v1227 = vpop.f32.mrb[0].mxu0
    %v1228 = vadd.f32 0.0, %v1227
    %v1229 = vpop.f32.mrb[0].mxu0
    %1230 = vmatprep.mubr.f32.mxu0 0.0
    %1231 = vmatmul.mubr.f32.gmra.mrb[0].mxu0 %v1065
    %v1232 = vpop.f32.mrb[0].mxu0
    %v1233 = vadd.f32 0.0, %v1232
    %v1234 = vpop.f32.mrb[0].mxu0
    %1235 = vmatprep.mubr.f32.mxu0 0.0
    %1236 = vmatmul.mubr.f32.gmra.mrb[0].mxu0 %v1068
    %v1237 = vpop.f32.mrb[0].mxu0
    %v1238 = vadd.f32 0.0, %v1237
    %v1239 = vpop.f32.mrb[0].mxu0
    %1240 = vmatprep.mubr.f32.mxu0 0.0
    %1241 = vmatmul.mubr.f32.gmra.mrb[0].mxu0 %v1071
    %v1242 = vpop.f32.mrb[0].mxu0
    %v1243 = vadd.f32 0.0, %v1242
    %v1244 = vpop.f32.mrb[0].mxu0
    %1245 = vmatprep.mubr.f32.mxu0 0.0
    %1246 = vmatmul.mubr.f32.gmra.mrb[0].mxu0 %v1074
    %v1247 = vpop.f32.mrb[0].mxu0
    %v1248 = vadd.f32 0.0, %v1247
    %v1249 = vpop.f32.mrb[0].mxu0
    %1250 = vmatprep.mubr.f32.mxu0 0.0
    %1251 = vmatmul.mubr.f32.gmra.mrb[0].mxu0 %v1077
    %v1252 = vpop.f32.mrb[0].mxu0
    %v1253 = vadd.f32 0.0, %v1252
    %v1254 = vpop.f32.mrb[0].mxu0
    %1255 = vmatprep.mubr.f32.mxu0 0.0
    %1256 = vmatmul.mubr.f32.gmra.mrb[0].mxu0 %v1080
    %v1257 = vpop.f32.mrb[0].mxu0
    %v1258 = vadd.f32 0.0, %v1257
    %v1259 = vpop.f32.mrb[0].mxu0
    %1260 = vmatprep.mubr.f32.mxu0 0.0
    %1261 = vmatmul.mubr.f32.gmra.mrb[0].mxu0 %v1083
    %v1262 = vpop.f32.mrb[0].mxu0
    %v1263 = vadd.f32 0.0, %v1262
    %v1264 = vpop.f32.mrb[0].mxu0
    %1265 = vmatprep.mubr.f32.mxu0 0.0
    %1266 = vmatmul.mubr.f32.gmra.mrb[0].mxu0 %v1086
    %v1267 = vpop.f32.mrb[0].mxu0
    %v1268 = vadd.f32 0.0, %v1267
    %v1269 = vpop.f32.mrb[0].mxu0
    %1270 = vmatprep.mubr.f32.mxu0 0.0
    %1271 = vmatmul.mubr.f32.gmra.mrb[0].mxu0 %v1089
    %v1272 = vpop.f32.mrb[0].mxu0
    %v1273 = vadd.f32 0.0, %v1272
    %v1274 = vpop.f32.mrb[0].mxu0
    %1275 = vmatprep.mubr.f32.mxu0 0.0
    %1276 = vmatmul.mubr.f32.gmra.mrb[0].mxu0 %v1092
    %v1277 = vpop.f32.mrb[0].mxu0
    %v1278 = vadd.f32 0.0, %v1277
    %v1279 = vpop.f32.mrb[0].mxu0
    %1280 = vmatprep.mubr.f32.mxu0 0.0
    %1281 = vmatmul.mubr.f32.gmra.mrb[0].mxu0 %v1095
    %v1282 = vpop.f32.mrb[0].mxu0
    %v1283 = vadd.f32 0.0, %v1282
    %v1284 = vpop.f32.mrb[0].mxu0
    %1285 = vmatprep.mubr.f32.mxu0 0.0
    %1286 = vmatmul.mubr.f32.gmra.mrb[0].mxu0 %v1098
    %v1287 = vpop.f32.mrb[0].mxu0
    %v1288 = vadd.f32 0.0, %v1287
    %v1289 = vpop.f32.mrb[0].mxu0
    %1290 = vmatprep.mubr.f32.mxu0 0.0
    %1291 = vmatmul.mubr.f32.gmra.mrb[0].mxu0 %v1101
    %v1292 = vpop.f32.mrb[0].mxu0
    %v1293 = vadd.f32 0.0, %v1292
    %v1294 = vpop.f32.mrb[0].mxu0
    %1295 = vmatprep.mubr.f32.mxu0 0.0
    %1296 = vmatmul.mubr.f32.gmra.mrb[0].mxu0 %v1104
    %v1297 = vpop.f32.mrb[0].mxu0
    %v1298 = vadd.f32 0.0, %v1297
    %v1299 = vpop.f32.mrb[0].mxu0
    %1300 = vdwg.mxu0
    %v1301 = vadd.f32 %v870, %v1173
    %v1302 = vadd.f32 %v875, %v1178
    %v1303 = vadd.f32 %v880, %v1183
    %v1304 = vadd.f32 %v885, %v1188
    %v1305 = vadd.f32 %v890, %v1193
    %v1306 = vadd.f32 %v895, %v1198
    %v1307 = vadd.f32 %v900, %v1203
    %v1308 = vadd.f32 %v905, %v1208
    %v1309 = vadd.f32 %v910, %v1213
    %v1310 = vadd.f32 %v915, %v1218
    %v1311 = vadd.f32 %v920, %v1223
    %v1312 = vadd.f32 %v925, %v1228
    %v1313 = vadd.f32 %v930, %v1233
    %v1314 = vadd.f32 %v935, %v1238
    %v1315 = vadd.f32 %v940, %v1243
    %v1316 = vadd.f32 %v945, %v1248
    %v1317 = vadd.f32 %v950, %v1253
    %v1318 = vadd.f32 %v955, %v1258
    %v1319 = vadd.f32 %v960, %v1263
    %v1320 = vadd.f32 %v965, %v1268
    %v1321 = vadd.f32 %v970, %v1273
    %v1322 = vadd.f32 %v975, %v1278
    %v1323 = vadd.f32 %v980, %v1283
    %v1324 = vadd.f32 %v985, %v1288
    %v1325 = vadd.f32 %v990, %v1293
    %v1326 = vadd.f32 %v995, %v1298
    %v1327 = vld [vmem:[#allocation2 + $0x3] sm:$0xff]
    %v1328 = vld [vmem:[#allocation2 + $0xb] sm:$0xff]
    %v1329 = vld [vmem:[#allocation2 + $0x13] sm:$0xff]
    %v1330 = vld [vmem:[#allocation2 + $0x1b] sm:$0xff]
    %v1331 = vld [vmem:[#allocation2 + $0x23] sm:$0xff]
    %v1332 = vld [vmem:[#allocation2 + $0x2b] sm:$0xff]
    %v1333 = vld [vmem:[#allocation2 + $0x33] sm:$0xff]
    %v1334 = vld [vmem:[#allocation2 + $0x3b] sm:$0xff]
    %v1335 = vld [vmem:[#allocation2 + $0x43] sm:$0xff]
    %v1336 = vld [vmem:[#allocation2 + $0x4b] sm:$0xff]
    %v1337 = vld [vmem:[#allocation2 + $0x53] sm:$0xff]
    %v1338 = vld [vmem:[#allocation2 + $0x5b] sm:$0xff]
    %v1339 = vld [vmem:[#allocation2 + $0x63] sm:$0xff]
    %v1340 = vld [vmem:[#allocation2 + $0x6b] sm:$0xff]
    %v1341 = vld [vmem:[#allocation2 + $0x73] sm:$0xff]
    %v1342 = vld [vmem:[#allocation2 + $0x7b] sm:$0xff]
    %v1343 = vld [vmem:[#allocation2 + $0x83] sm:$0xff]
    %v1344 = vld [vmem:[#allocation2 + $0x8b] sm:$0xff]
    %v1345 = vld [vmem:[#allocation2 + $0x93] sm:$0xff]
    %v1346 = vld [vmem:[#allocation2 + $0x9b] sm:$0xff]
    %v1347 = vld [vmem:[#allocation2 + $0xa3] sm:$0xff]
    %v1348 = vld [vmem:[#allocation2 + $0xab] sm:$0xff]
    %v1349 = vld [vmem:[#allocation2 + $0xb3] sm:$0xff]
    %v1350 = vld [vmem:[#allocation2 + $0xbb] sm:$0xff]
    %v1351 = vld [vmem:[#allocation2 + $0xc3] sm:$0xff]
    %v1352 = vld [vmem:[#allocation2 + $0xcb] sm:$0x1f]
    %v1353 = vld [vmem:[%s1 + $0x6b] sm:$0xff]
    %v1354 = vld [vmem:[%s1 + $0x73] sm:$0xff]
    %v1355 = vld [vmem:[%s1 + $0x7b] sm:$0xff]
    %v1356 = vld [vmem:[%s1 + $0x83] sm:$0xff]
    %v1358 = vsel %vm363, %v1327, 0
    %v1361 = vsel %vm363, %v1328, 0
    %v1364 = vsel %vm363, %v1329, 0
    %v1367 = vsel %vm363, %v1330, 0
    %v1370 = vsel %vm363, %v1331, 0
    %v1373 = vsel %vm363, %v1332, 0
    %v1376 = vsel %vm363, %v1333, 0
    %v1379 = vsel %vm363, %v1334, 0
    %v1382 = vsel %vm363, %v1335, 0
    %v1385 = vsel %vm363, %v1336, 0
    %v1388 = vsel %vm363, %v1337, 0
    %v1391 = vsel %vm363, %v1338, 0
    %v1394 = vsel %vm363, %v1339, 0
    %v1397 = vsel %vm363, %v1340, 0
    %v1400 = vsel %vm363, %v1341, 0
    %v1403 = vsel %vm363, %v1342, 0
    %v1406 = vsel %vm363, %v1343, 0
    %v1409 = vsel %vm363, %v1344, 0
    %v1412 = vsel %vm363, %v1345, 0
    %v1415 = vsel %vm363, %v1346, 0
    %v1418 = vsel %vm363, %v1347, 0
    %v1421 = vsel %vm363, %v1348, 0
    %v1424 = vsel %vm363, %v1349, 0
    %v1427 = vsel %vm363, %v1350, 0
    %v1430 = vsel %vm363, %v1351, 0
    %v1433 = vsel %vm363, %v1352, 0
    %1435 = vmatprep.subr.mxu0 0.0
    %1436 = vmatpush1.msra.mxu0 %v1353
    %1437 = vmatprep.subr.mxu0 0.0
    %1438 = vmatpush1.msra.mxu0 %v1354
    %1439 = vmatprep.subr.mxu0 0.0
    %1440 = vmatpush1.msra.mxu0 %v1355
    %1441 = vmatprep.subr.mxu0 0.0
    %1442 = vmatpush1.msra.mxu0 %v1356
    %1443 = vmatprep.subr.mxu0 0.0
    %1444 = vmatpush1.msra.mxu0 0.0
    %1445 = vmatprep.subr.mxu0 0.0
    %1446 = vmatpush1.msra.mxu0 0.0
    %1447 = vmatprep.subr.mxu0 0.0
    %1448 = vmatpush1.msra.mxu0 0.0
    %1449 = vmatprep.subr.mxu0 0.0
    %1450 = vmatpush1.msra.mxu0 0.0
    %1451 = vmatprep.subr.mxu0 0.0
    %1452 = vmatpush1.msra.mxu0 0.0
    %1453 = vmatprep.subr.mxu0 0.0
    %1454 = vmatpush1.msra.mxu0 0.0
    %1455 = vmatprep.subr.mxu0 0.0
    %1456 = vmatpush1.msra.mxu0 0.0
    %1457 = vmatprep.subr.mxu0 0.0
    %1458 = vmatpush1.msra.mxu0 0.0
    %1459 = vmatprep.subr.mxu0 0.0
    %1460 = vmatpush1.msra.mxu0 0.0
    %1461 = vmatprep.subr.mxu0 0.0
    %1462 = vmatpush1.msra.mxu0 0.0
    %1463 = vmatprep.subr.mxu0 0.0
    %1464 = vmatpush1.msra.mxu0 0.0
    %1465 = vmatprep.subr.mxu0 0.0
    %1466 = vmatpush1.msra.mxu0 0.0
    %1467 = vmatprep.subr.mxu0 0.0
    %1468 = vmatpush1.msra.mxu0 0.0
    %1469 = vmatprep.subr.mxu0 0.0
    %1470 = vmatpush1.msra.mxu0 0.0
    %1471 = vmatprep.subr.mxu0 0.0
    %1472 = vmatpush1.msra.mxu0 0.0
    %1473 = vmatprep.subr.mxu0 0.0
    %1474 = vmatpush1.msra.mxu0 0.0
    %1475 = vmatprep.subr.mxu0 0.0
    %1476 = vmatpush1.msra.mxu0 0.0
    %1477 = vmatprep.subr.mxu0 0.0
    %1478 = vmatpush1.msra.mxu0 0.0
    %1479 = vmatprep.subr.mxu0 0.0
    %1480 = vmatpush1.msra.mxu0 0.0
    %1481 = vmatprep.subr.mxu0 0.0
    %1482 = vmatpush1.msra.mxu0 0.0
    %1483 = vmatprep.subr.mxu0 0.0
    %1484 = vmatpush1.msra.mxu0 0.0
    %1485 = vmatprep.subr.mxu0 0.0
    %1486 = vmatpush1.msra.mxu0 0.0
    %1487 = vmatprep.subr.mxu0 0.0
    %1488 = vmatpush1.msra.mxu0 0.0
    %1489 = vmatprep.subr.mxu0 0.0
    %1490 = vmatpush1.msra.mxu0 0.0
    %1491 = vmatprep.subr.mxu0 0.0
    %1492 = vmatpush1.msra.mxu0 0.0
    %1493 = vmatprep.subr.mxu0 0.0
    %1494 = vmatpush1.msra.mxu0 0.0
    %1495 = vmatprep.subr.mxu0 0.0
    %1496 = vmatpush1.msra.mxu0 0.0
    %1497 = vmatprep.subr.mxu0 0.0
    %1498 = vmatpush1.msra.mxu0 0.0
    %1499 = vmatprep.mubr.f32.mxu0 0.0
    %1500 = vmatmul.mubr.f32.gmra.mrb[0].mxu0 %v1358
    %v1501 = vpop.f32.mrb[0].mxu0
    %v1502 = vadd.f32 0.0, %v1501
    %v1503 = vpop.f32.mrb[0].mxu0
    %1504 = vmatprep.mubr.f32.mxu0 0.0
    %1505 = vmatmul.mubr.f32.gmra.mrb[0].mxu0 %v1361
    %v1506 = vpop.f32.mrb[0].mxu0
    %v1507 = vadd.f32 0.0, %v1506
    %v1508 = vpop.f32.mrb[0].mxu0
    %1509 = vmatprep.mubr.f32.mxu0 0.0
    %1510 = vmatmul.mubr.f32.gmra.mrb[0].mxu0 %v1364
    %v1511 = vpop.f32.mrb[0].mxu0
    %v1512 = vadd.f32 0.0, %v1511
    %v1513 = vpop.f32.mrb[0].mxu0
    %1514 = vmatprep.mubr.f32.mxu0 0.0
    %1515 = vmatmul.mubr.f32.gmra.mrb[0].mxu0 %v1367
    %v1516 = vpop.f32.mrb[0].mxu0
    %v1517 = vadd.f32 0.0, %v1516
    %v1518 = vpop.f32.mrb[0].mxu0
    %1519 = vmatprep.mubr.f32.mxu0 0.0
    %1520 = vmatmul.mubr.f32.gmra.mrb[0].mxu0 %v1370
    %v1521 = vpop.f32.mrb[0].mxu0
    %v1522 = vadd.f32 0.0, %v1521
    %v1523 = vpop.f32.mrb[0].mxu0
    %1524 = vmatprep.mubr.f32.mxu0 0.0
    %1525 = vmatmul.mubr.f32.gmra.mrb[0].mxu0 %v1373
    %v1526 = vpop.f32.mrb[0].mxu0
    %v1527 = vadd.f32 0.0, %v1526
    %v1528 = vpop.f32.mrb[0].mxu0
    %1529 = vmatprep.mubr.f32.mxu0 0.0
    %1530 = vmatmul.mubr.f32.gmra.mrb[0].mxu0 %v1376
    %v1531 = vpop.f32.mrb[0].mxu0
    %v1532 = vadd.f32 0.0, %v1531
    %v1533 = vpop.f32.mrb[0].mxu0
    %1534 = vmatprep.mubr.f32.mxu0 0.0
    %1535 = vmatmul.mubr.f32.gmra.mrb[0].mxu0 %v1379
    %v1536 = vpop.f32.mrb[0].mxu0
    %v1537 = vadd.f32 0.0, %v1536
    %v1538 = vpop.f32.mrb[0].mxu0
    %1539 = vmatprep.mubr.f32.mxu0 0.0
    %1540 = vmatmul.mubr.f32.gmra.mrb[0].mxu0 %v1382
    %v1541 = vpop.f32.mrb[0].mxu0
    %v1542 = vadd.f32 0.0, %v1541
    %v1543 = vpop.f32.mrb[0].mxu0
    %1544 = vmatprep.mubr.f32.mxu0 0.0
    %1545 = vmatmul.mubr.f32.gmra.mrb[0].mxu0 %v1385
    %v1546 = vpop.f32.mrb[0].mxu0
    %v1547 = vadd.f32 0.0, %v1546
    %v1548 = vpop.f32.mrb[0].mxu0
    %1549 = vmatprep.mubr.f32.mxu0 0.0
    %1550 = vmatmul.mubr.f32.gmra.mrb[0].mxu0 %v1388
    %v1551 = vpop.f32.mrb[0].mxu0
    %v1552 = vadd.f32 0.0, %v1551
    %v1553 = vpop.f32.mrb[0].mxu0
    %1554 = vmatprep.mubr.f32.mxu0 0.0
    %1555 = vmatmul.mubr.f32.gmra.mrb[0].mxu0 %v1391
    %v1556 = vpop.f32.mrb[0].mxu0
    %v1557 = vadd.f32 0.0, %v1556
    %v1558 = vpop.f32.mrb[0].mxu0
    %1559 = vmatprep.mubr.f32.mxu0 0.0
    %1560 = vmatmul.mubr.f32.gmra.mrb[0].mxu0 %v1394
    %v1561 = vpop.f32.mrb[0].mxu0
    %v1562 = vadd.f32 0.0, %v1561
    %v1563 = vpop.f32.mrb[0].mxu0
    %1564 = vmatprep.mubr.f32.mxu0 0.0
    %1565 = vmatmul.mubr.f32.gmra.mrb[0].mxu0 %v1397
    %v1566 = vpop.f32.mrb[0].mxu0
    %v1567 = vadd.f32 0.0, %v1566
    %v1568 = vpop.f32.mrb[0].mxu0
    %1569 = vmatprep.mubr.f32.mxu0 0.0
    %1570 = vmatmul.mubr.f32.gmra.mrb[0].mxu0 %v1400
    %v1571 = vpop.f32.mrb[0].mxu0
    %v1572 = vadd.f32 0.0, %v1571
    %v1573 = vpop.f32.mrb[0].mxu0
    %1574 = vmatprep.mubr.f32.mxu0 0.0
    %1575 = vmatmul.mubr.f32.gmra.mrb[0].mxu0 %v1403
    %v1576 = vpop.f32.mrb[0].mxu0
    %v1577 = vadd.f32 0.0, %v1576
    %v1578 = vpop.f32.mrb[0].mxu0
    %1579 = vmatprep.mubr.f32.mxu0 0.0
    %1580 = vmatmul.mubr.f32.gmra.mrb[0].mxu0 %v1406
    %v1581 = vpop.f32.mrb[0].mxu0
    %v1582 = vadd.f32 0.0, %v1581
    %v1583 = vpop.f32.mrb[0].mxu0
    %1584 = vmatprep.mubr.f32.mxu0 0.0
    %1585 = vmatmul.mubr.f32.gmra.mrb[0].mxu0 %v1409
    %v1586 = vpop.f32.mrb[0].mxu0
    %v1587 = vadd.f32 0.0, %v1586
    %v1588 = vpop.f32.mrb[0].mxu0
    %1589 = vmatprep.mubr.f32.mxu0 0.0
    %1590 = vmatmul.mubr.f32.gmra.mrb[0].mxu0 %v1412
    %v1591 = vpop.f32.mrb[0].mxu0
    %v1592 = vadd.f32 0.0, %v1591
    %v1593 = vpop.f32.mrb[0].mxu0
    %1594 = vmatprep.mubr.f32.mxu0 0.0
    %1595 = vmatmul.mubr.f32.gmra.mrb[0].mxu0 %v1415
    %v1596 = vpop.f32.mrb[0].mxu0
    %v1597 = vadd.f32 0.0, %v1596
    %v1598 = vpop.f32.mrb[0].mxu0
    %1599 = vmatprep.mubr.f32.mxu0 0.0
    %1600 = vmatmul.mubr.f32.gmra.mrb[0].mxu0 %v1418
    %v1601 = vpop.f32.mrb[0].mxu0
    %v1602 = vadd.f32 0.0, %v1601
    %v1603 = vpop.f32.mrb[0].mxu0
    %1604 = vmatprep.mubr.f32.mxu0 0.0
    %1605 = vmatmul.mubr.f32.gmra.mrb[0].mxu0 %v1421
    %v1606 = vpop.f32.mrb[0].mxu0
    %v1607 = vadd.f32 0.0, %v1606
    %v1608 = vpop.f32.mrb[0].mxu0
    %1609 = vmatprep.mubr.f32.mxu0 0.0
    %1610 = vmatmul.mubr.f32.gmra.mrb[0].mxu0 %v1424
    %v1611 = vpop.f32.mrb[0].mxu0
    %v1612 = vadd.f32 0.0, %v1611
    %v1613 = vpop.f32.mrb[0].mxu0
    %1614 = vmatprep.mubr.f32.mxu0 0.0
    %1615 = vmatmul.mubr.f32.gmra.mrb[0].mxu0 %v1427
    %v1616 = vpop.f32.mrb[0].mxu0
    %v1617 = vadd.f32 0.0, %v1616
    %v1618 = vpop.f32.mrb[0].mxu0
    %1619 = vmatprep.mubr.f32.mxu0 0.0
    %1620 = vmatmul.mubr.f32.gmra.mrb[0].mxu0 %v1430
    %v1621 = vpop.f32.mrb[0].mxu0
    %v1622 = vadd.f32 0.0, %v1621
    %v1623 = vpop.f32.mrb[0].mxu0
    %1624 = vmatprep.mubr.f32.mxu0 0.0
    %1625 = vmatmul.mubr.f32.gmra.mrb[0].mxu0 %v1433
    %v1626 = vpop.f32.mrb[0].mxu0
    %v1627 = vadd.f32 0.0, %v1626
    %v1628 = vpop.f32.mrb[0].mxu0
    %1629 = vdwg.mxu0
    %v1630 = vadd.f32 %v1301, %v1502
    %v1631 = vadd.f32 %v1302, %v1507
    %v1632 = vadd.f32 %v1303, %v1512
    %v1633 = vadd.f32 %v1304, %v1517
    %v1634 = vadd.f32 %v1305, %v1522
    %v1635 = vadd.f32 %v1306, %v1527
    %v1636 = vadd.f32 %v1307, %v1532
    %v1637 = vadd.f32 %v1308, %v1537
    %v1638 = vadd.f32 %v1309, %v1542
    %v1639 = vadd.f32 %v1310, %v1547
    %v1640 = vadd.f32 %v1311, %v1552
    %v1641 = vadd.f32 %v1312, %v1557
    %v1642 = vadd.f32 %v1313, %v1562
    %v1643 = vadd.f32 %v1314, %v1567
    %v1644 = vadd.f32 %v1315, %v1572
    %v1645 = vadd.f32 %v1316, %v1577
    %v1646 = vadd.f32 %v1317, %v1582
    %v1647 = vadd.f32 %v1318, %v1587
    %v1648 = vadd.f32 %v1319, %v1592
    %v1649 = vadd.f32 %v1320, %v1597
    %v1650 = vadd.f32 %v1321, %v1602
    %v1651 = vadd.f32 %v1322, %v1607
    %v1652 = vadd.f32 %v1323, %v1612
    %v1653 = vadd.f32 %v1324, %v1617
    %v1654 = vadd.f32 %v1325, %v1622
    %v1655 = vadd.f32 %v1326, %v1627
    %v1656 = vld [vmem:[#allocation2 + $0x4] sm:$0xff]
    %v1657 = vld [vmem:[#allocation2 + $0xc] sm:$0xff]
    %v1658 = vld [vmem:[#allocation2 + $0x14] sm:$0xff]
    %v1659 = vld [vmem:[#allocation2 + $0x1c] sm:$0xff]
    %v1660 = vld [vmem:[#allocation2 + $0x24] sm:$0xff]
    %v1661 = vld [vmem:[#allocation2 + $0x2c] sm:$0xff]
    %v1662 = vld [vmem:[#allocation2 + $0x34] sm:$0xff]
    %v1663 = vld [vmem:[#allocation2 + $0x3c] sm:$0xff]
    %v1664 = vld [vmem:[#allocation2 + $0x44] sm:$0xff]
    %v1665 = vld [vmem:[#allocation2 + $0x4c] sm:$0xff]
    %v1666 = vld [vmem:[#allocation2 + $0x54] sm:$0xff]
    %v1667 = vld [vmem:[#allocation2 + $0x5c] sm:$0xff]
    %v1668 = vld [vmem:[#allocation2 + $0x64] sm:$0xff]
    %v1669 = vld [vmem:[#allocation2 + $0x6c] sm:$0xff]
    %v1670 = vld [vmem:[#allocation2 + $0x74] sm:$0xff]
    %v1671 = vld [vmem:[#allocation2 + $0x7c] sm:$0xff]
    %v1672 = vld [vmem:[#allocation2 + $0x84] sm:$0xff]
    %v1673 = vld [vmem:[#allocation2 + $0x8c] sm:$0xff]
    %v1674 = vld [vmem:[#allocation2 + $0x94] sm:$0xff]
    %v1675 = vld [vmem:[#allocation2 + $0x9c] sm:$0xff]
    %v1676 = vld [vmem:[#allocation2 + $0xa4] sm:$0xff]
    %v1677 = vld [vmem:[#allocation2 + $0xac] sm:$0xff]
    %v1678 = vld [vmem:[#allocation2 + $0xb4] sm:$0xff]
    %v1679 = vld [vmem:[#allocation2 + $0xbc] sm:$0xff]
    %v1680 = vld [vmem:[#allocation2 + $0xc4] sm:$0xff]
    %v1681 = vld [vmem:[#allocation2 + $0xcc] sm:$0x1f]
    %v1682 = vld [vmem:[%s1 + $0x8b] sm:$0xff]
    %v1683 = vld [vmem:[%s1 + $0x93] sm:$0xff]
    %v1684 = vld [vmem:[%s1 + $0x9b] sm:$0xff]
    %v1685 = vld [vmem:[%s1 + $0xa3] sm:$0xff]
    %v1687 = vsel %vm363, %v1656, 0
    %v1690 = vsel %vm363, %v1657, 0
    %v1693 = vsel %vm363, %v1658, 0
    %v1696 = vsel %vm363, %v1659, 0
    %v1699 = vsel %vm363, %v1660, 0
    %v1702 = vsel %vm363, %v1661, 0
    %v1705 = vsel %vm363, %v1662, 0
    %v1708 = vsel %vm363, %v1663, 0
    %v1711 = vsel %vm363, %v1664, 0
    %v1714 = vsel %vm363, %v1665, 0
    %v1717 = vsel %vm363, %v1666, 0
    %v1720 = vsel %vm363, %v1667, 0
    %v1723 = vsel %vm363, %v1668, 0
    %v1726 = vsel %vm363, %v1669, 0
    %v1729 = vsel %vm363, %v1670, 0
    %v1732 = vsel %vm363, %v1671, 0
    %v1735 = vsel %vm363, %v1672, 0
    %v1738 = vsel %vm363, %v1673, 0
    %v1741 = vsel %vm363, %v1674, 0
    %v1744 = vsel %vm363, %v1675, 0
    %v1747 = vsel %vm363, %v1676, 0
    %v1750 = vsel %vm363, %v1677, 0
    %v1753 = vsel %vm363, %v1678, 0
    %v1756 = vsel %vm363, %v1679, 0
    %v1759 = vsel %vm363, %v1680, 0
    %v1762 = vsel %vm363, %v1681, 0
    %1764 = vmatprep.subr.mxu0 0.0
    %1765 = vmatpush1.msra.mxu0 %v1682
    %1766 = vmatprep.subr.mxu0 0.0
    %1767 = vmatpush1.msra.mxu0 %v1683
    %1768 = vmatprep.subr.mxu0 0.0
    %1769 = vmatpush1.msra.mxu0 %v1684
    %1770 = vmatprep.subr.mxu0 0.0
    %1771 = vmatpush1.msra.mxu0 %v1685
    %1772 = vmatprep.subr.mxu0 0.0
    %1773 = vmatpush1.msra.mxu0 0.0
    %1774 = vmatprep.subr.mxu0 0.0
    %1775 = vmatpush1.msra.mxu0 0.0
    %1776 = vmatprep.subr.mxu0 0.0
    %1777 = vmatpush1.msra.mxu0 0.0
    %1778 = vmatprep.subr.mxu0 0.0
    %1779 = vmatpush1.msra.mxu0 0.0
    %1780 = vmatprep.subr.mxu0 0.0
    %1781 = vmatpush1.msra.mxu0 0.0
    %1782 = vmatprep.subr.mxu0 0.0
    %1783 = vmatpush1.msra.mxu0 0.0
    %1784 = vmatprep.subr.mxu0 0.0
    %1785 = vmatpush1.msra.mxu0 0.0
    %1786 = vmatprep.subr.mxu0 0.0
    %1787 = vmatpush1.msra.mxu0 0.0
    %1788 = vmatprep.subr.mxu0 0.0
    %1789 = vmatpush1.msra.mxu0 0.0
    %1790 = vmatprep.subr.mxu0 0.0
    %1791 = vmatpush1.msra.mxu0 0.0
    %1792 = vmatprep.subr.mxu0 0.0
    %1793 = vmatpush1.msra.mxu0 0.0
    %1794 = vmatprep.subr.mxu0 0.0
    %1795 = vmatpush1.msra.mxu0 0.0
    %1796 = vmatprep.subr.mxu0 0.0
    %1797 = vmatpush1.msra.mxu0 0.0
    %1798 = vmatprep.subr.mxu0 0.0
    %1799 = vmatpush1.msra.mxu0 0.0
    %1800 = vmatprep.subr.mxu0 0.0
    %1801 = vmatpush1.msra.mxu0 0.0
    %1802 = vmatprep.subr.mxu0 0.0
    %1803 = vmatpush1.msra.mxu0 0.0
    %1804 = vmatprep.subr.mxu0 0.0
    %1805 = vmatpush1.msra.mxu0 0.0
    %1806 = vmatprep.subr.mxu0 0.0
    %1807 = vmatpush1.msra.mxu0 0.0
    %1808 = vmatprep.subr.mxu0 0.0
    %1809 = vmatpush1.msra.mxu0 0.0
    %1810 = vmatprep.subr.mxu0 0.0
    %1811 = vmatpush1.msra.mxu0 0.0
    %1812 = vmatprep.subr.mxu0 0.0
    %1813 = vmatpush1.msra.mxu0 0.0
    %1814 = vmatprep.subr.mxu0 0.0
    %1815 = vmatpush1.msra.mxu0 0.0
    %1816 = vmatprep.subr.mxu0 0.0
    %1817 = vmatpush1.msra.mxu0 0.0
    %1818 = vmatprep.subr.mxu0 0.0
    %1819 = vmatpush1.msra.mxu0 0.0
    %1820 = vmatprep.subr.mxu0 0.0
    %1821 = vmatpush1.msra.mxu0 0.0
    %1822 = vmatprep.subr.mxu0 0.0
    %1823 = vmatpush1.msra.mxu0 0.0
    %1824 = vmatprep.subr.mxu0 0.0
    %1825 = vmatpush1.msra.mxu0 0.0
    %1826 = vmatprep.subr.mxu0 0.0
    %1827 = vmatpush1.msra.mxu0 0.0
    %1828 = vmatprep.mubr.f32.mxu0 0.0
    %1829 = vmatmul.mubr.f32.gmra.mrb[0].mxu0 %v1687
    %v1830 = vpop.f32.mrb[0].mxu0
    %v1831 = vadd.f32 0.0, %v1830
    %v1832 = vpop.f32.mrb[0].mxu0
    %1833 = vmatprep.mubr.f32.mxu0 0.0
    %1834 = vmatmul.mubr.f32.gmra.mrb[0].mxu0 %v1690
    %v1835 = vpop.f32.mrb[0].mxu0
    %v1836 = vadd.f32 0.0, %v1835
    %v1837 = vpop.f32.mrb[0].mxu0
    %1838 = vmatprep.mubr.f32.mxu0 0.0
    %1839 = vmatmul.mubr.f32.gmra.mrb[0].mxu0 %v1693
    %v1840 = vpop.f32.mrb[0].mxu0
    %v1841 = vadd.f32 0.0, %v1840
    %v1842 = vpop.f32.mrb[0].mxu0
    %1843 = vmatprep.mubr.f32.mxu0 0.0
    %1844 = vmatmul.mubr.f32.gmra.mrb[0].mxu0 %v1696
    %v1845 = vpop.f32.mrb[0].mxu0
    %v1846 = vadd.f32 0.0, %v1845
    %v1847 = vpop.f32.mrb[0].mxu0
    %1848 = vmatprep.mubr.f32.mxu0 0.0
    %1849 = vmatmul.mubr.f32.gmra.mrb[0].mxu0 %v1699
    %v1850 = vpop.f32.mrb[0].mxu0
    %v1851 = vadd.f32 0.0, %v1850
    %v1852 = vpop.f32.mrb[0].mxu0
    %1853 = vmatprep.mubr.f32.mxu0 0.0
    %1854 = vmatmul.mubr.f32.gmra.mrb[0].mxu0 %v1702
    %v1855 = vpop.f32.mrb[0].mxu0
    %v1856 = vadd.f32 0.0, %v1855
    %v1857 = vpop.f32.mrb[0].mxu0
    %1858 = vmatprep.mubr.f32.mxu0 0.0
    %1859 = vmatmul.mubr.f32.gmra.mrb[0].mxu0 %v1705
    %v1860 = vpop.f32.mrb[0].mxu0
    %v1861 = vadd.f32 0.0, %v1860
    %v1862 = vpop.f32.mrb[0].mxu0
    %1863 = vmatprep.mubr.f32.mxu0 0.0
    %1864 = vmatmul.mubr.f32.gmra.mrb[0].mxu0 %v1708
    %v1865 = vpop.f32.mrb[0].mxu0
    %v1866 = vadd.f32 0.0, %v1865
    %v1867 = vpop.f32.mrb[0].mxu0
    %1868 = vmatprep.mubr.f32.mxu0 0.0
    %1869 = vmatmul.mubr.f32.gmra.mrb[0].mxu0 %v1711
    %v1870 = vpop.f32.mrb[0].mxu0
    %v1871 = vadd.f32 0.0, %v1870
    %v1872 = vpop.f32.mrb[0].mxu0
    %1873 = vmatprep.mubr.f32.mxu0 0.0
    %1874 = vmatmul.mubr.f32.gmra.mrb[0].mxu0 %v1714
    %v1875 = vpop.f32.mrb[0].mxu0
    %v1876 = vadd.f32 0.0, %v1875
    %v1877 = vpop.f32.mrb[0].mxu0
    %1878 = vmatprep.mubr.f32.mxu0 0.0
    %1879 = vmatmul.mubr.f32.gmra.mrb[0].mxu0 %v1717
    %v1880 = vpop.f32.mrb[0].mxu0
    %v1881 = vadd.f32 0.0, %v1880
    %v1882 = vpop.f32.mrb[0].mxu0
    %1883 = vmatprep.mubr.f32.mxu0 0.0
    %1884 = vmatmul.mubr.f32.gmra.mrb[0].mxu0 %v1720
    %v1885 = vpop.f32.mrb[0].mxu0
    %v1886 = vadd.f32 0.0, %v1885
    %v1887 = vpop.f32.mrb[0].mxu0
    %1888 = vmatprep.mubr.f32.mxu0 0.0
    %1889 = vmatmul.mubr.f32.gmra.mrb[0].mxu0 %v1723
    %v1890 = vpop.f32.mrb[0].mxu0
    %v1891 = vadd.f32 0.0, %v1890
    %v1892 = vpop.f32.mrb[0].mxu0
    %1893 = vmatprep.mubr.f32.mxu0 0.0
    %1894 = vmatmul.mubr.f32.gmra.mrb[0].mxu0 %v1726
    %v1895 = vpop.f32.mrb[0].mxu0
    %v1896 = vadd.f32 0.0, %v1895
    %v1897 = vpop.f32.mrb[0].mxu0
    %1898 = vmatprep.mubr.f32.mxu0 0.0
    %1899 = vmatmul.mubr.f32.gmra.mrb[0].mxu0 %v1729
    %v1900 = vpop.f32.mrb[0].mxu0
    %v1901 = vadd.f32 0.0, %v1900
    %v1902 = vpop.f32.mrb[0].mxu0
    %1903 = vmatprep.mubr.f32.mxu0 0.0
    %1904 = vmatmul.mubr.f32.gmra.mrb[0].mxu0 %v1732
    %v1905 = vpop.f32.mrb[0].mxu0
    %v1906 = vadd.f32 0.0, %v1905
    %v1907 = vpop.f32.mrb[0].mxu0
    %1908 = vmatprep.mubr.f32.mxu0 0.0
    %1909 = vmatmul.mubr.f32.gmra.mrb[0].mxu0 %v1735
    %v1910 = vpop.f32.mrb[0].mxu0
    %v1911 = vadd.f32 0.0, %v1910
    %v1912 = vpop.f32.mrb[0].mxu0
    %1913 = vmatprep.mubr.f32.mxu0 0.0
    %1914 = vmatmul.mubr.f32.gmra.mrb[0].mxu0 %v1738
    %v1915 = vpop.f32.mrb[0].mxu0
    %v1916 = vadd.f32 0.0, %v1915
    %v1917 = vpop.f32.mrb[0].mxu0
    %1918 = vmatprep.mubr.f32.mxu0 0.0
    %1919 = vmatmul.mubr.f32.gmra.mrb[0].mxu0 %v1741
    %v1920 = vpop.f32.mrb[0].mxu0
    %v1921 = vadd.f32 0.0, %v1920
    %v1922 = vpop.f32.mrb[0].mxu0
    %1923 = vmatprep.mubr.f32.mxu0 0.0
    %1924 = vmatmul.mubr.f32.gmra.mrb[0].mxu0 %v1744
    %v1925 = vpop.f32.mrb[0].mxu0
    %v1926 = vadd.f32 0.0, %v1925
    %v1927 = vpop.f32.mrb[0].mxu0
    %1928 = vmatprep.mubr.f32.mxu0 0.0
    %1929 = vmatmul.mubr.f32.gmra.mrb[0].mxu0 %v1747
    %v1930 = vpop.f32.mrb[0].mxu0
    %v1931 = vadd.f32 0.0, %v1930
    %v1932 = vpop.f32.mrb[0].mxu0
    %1933 = vmatprep.mubr.f32.mxu0 0.0
    %1934 = vmatmul.mubr.f32.gmra.mrb[0].mxu0 %v1750
    %v1935 = vpop.f32.mrb[0].mxu0
    %v1936 = vadd.f32 0.0, %v1935
    %v1937 = vpop.f32.mrb[0].mxu0
    %1938 = vmatprep.mubr.f32.mxu0 0.0
    %1939 = vmatmul.mubr.f32.gmra.mrb[0].mxu0 %v1753
    %v1940 = vpop.f32.mrb[0].mxu0
    %v1941 = vadd.f32 0.0, %v1940
    %v1942 = vpop.f32.mrb[0].mxu0
    %1943 = vmatprep.mubr.f32.mxu0 0.0
    %1944 = vmatmul.mubr.f32.gmra.mrb[0].mxu0 %v1756
    %v1945 = vpop.f32.mrb[0].mxu0
    %v1946 = vadd.f32 0.0, %v1945
    %v1947 = vpop.f32.mrb[0].mxu0
    %1948 = vmatprep.mubr.f32.mxu0 0.0
    %1949 = vmatmul.mubr.f32.gmra.mrb[0].mxu0 %v1759
    %v1950 = vpop.f32.mrb[0].mxu0
    %v1951 = vadd.f32 0.0, %v1950
    %v1952 = vpop.f32.mrb[0].mxu0
    %1953 = vmatprep.mubr.f32.mxu0 0.0
    %1954 = vmatmul.mubr.f32.gmra.mrb[0].mxu0 %v1762
    %v1955 = vpop.f32.mrb[0].mxu0
    %v1956 = vadd.f32 0.0, %v1955
    %v1957 = vpop.f32.mrb[0].mxu0
    %1958 = vdwg.mxu0
    %v1959 = vadd.f32 %v1630, %v1831
    %v1960 = vadd.f32 %v1631, %v1836
    %v1961 = vadd.f32 %v1632, %v1841
    %v1962 = vadd.f32 %v1633, %v1846
    %v1963 = vadd.f32 %v1634, %v1851
    %v1964 = vadd.f32 %v1635, %v1856
    %v1965 = vadd.f32 %v1636, %v1861
    %v1966 = vadd.f32 %v1637, %v1866
    %v1967 = vadd.f32 %v1638, %v1871
    %v1968 = vadd.f32 %v1639, %v1876
    %v1969 = vadd.f32 %v1640, %v1881
    %v1970 = vadd.f32 %v1641, %v1886
    %v1971 = vadd.f32 %v1642, %v1891
    %v1972 = vadd.f32 %v1643, %v1896
    %v1973 = vadd.f32 %v1644, %v1901
    %v1974 = vadd.f32 %v1645, %v1906
    %v1975 = vadd.f32 %v1646, %v1911
    %v1976 = vadd.f32 %v1647, %v1916
    %v1977 = vadd.f32 %v1648, %v1921
    %v1978 = vadd.f32 %v1649, %v1926
    %v1979 = vadd.f32 %v1650, %v1931
    %v1980 = vadd.f32 %v1651, %v1936
    %v1981 = vadd.f32 %v1652, %v1941
    %v1982 = vadd.f32 %v1653, %v1946
    %v1983 = vadd.f32 %v1654, %v1951
    %v1984 = vadd.f32 %v1655, %v1956
    %v1985 = vld [vmem:[#allocation2 + $0x5] sm:$0xff]
    %v1986 = vld [vmem:[#allocation2 + $0xd] sm:$0xff]
    %v1987 = vld [vmem:[#allocation2 + $0x15] sm:$0xff]
    %v1988 = vld [vmem:[#allocation2 + $0x1d] sm:$0xff]
    %v1989 = vld [vmem:[#allocation2 + $0x25] sm:$0xff]
    %v1990 = vld [vmem:[#allocation2 + $0x2d] sm:$0xff]
    %v1991 = vld [vmem:[#allocation2 + $0x35] sm:$0xff]
    %v1992 = vld [vmem:[#allocation2 + $0x3d] sm:$0xff]
    %v1993 = vld [vmem:[#allocation2 + $0x45] sm:$0xff]
    %v1994 = vld [vmem:[#allocation2 + $0x4d] sm:$0xff]
    %v1995 = vld [vmem:[#allocation2 + $0x55] sm:$0xff]
    %v1996 = vld [vmem:[#allocation2 + $0x5d] sm:$0xff]
    %v1997 = vld [vmem:[#allocation2 + $0x65] sm:$0xff]
    %v1998 = vld [vmem:[#allocation2 + $0x6d] sm:$0xff]
    %v1999 = vld [vmem:[#allocation2 + $0x75] sm:$0xff]
    %v2000 = vld [vmem:[#allocation2 + $0x7d] sm:$0xff]
    %v2001 = vld [vmem:[#allocation2 + $0x85] sm:$0xff]
    %v2002 = vld [vmem:[#allocation2 + $0x8d] sm:$0xff]
    %v2003 = vld [vmem:[#allocation2 + $0x95] sm:$0xff]
    %v2004 = vld [vmem:[#allocation2 + $0x9d] sm:$0xff]
    %v2005 = vld [vmem:[#allocation2 + $0xa5] sm:$0xff]
    %v2006 = vld [vmem:[#allocation2 + $0xad] sm:$0xff]
    %v2007 = vld [vmem:[#allocation2 + $0xb5] sm:$0xff]
    %v2008 = vld [vmem:[#allocation2 + $0xbd] sm:$0xff]
    %v2009 = vld [vmem:[#allocation2 + $0xc5] sm:$0xff]
    %v2010 = vld [vmem:[#allocation2 + $0xcd] sm:$0x1f]
    %v2011 = vld [vmem:[%s1 + $0xab] sm:$0xff]
    %v2012 = vld [vmem:[%s1 + $0xb3] sm:$0xff]
    %v2013 = vld [vmem:[%s1 + $0xbb] sm:$0xff]
    %v2014 = vld [vmem:[%s1 + $0xc3] sm:$0xff]
    %v2016 = vsel %vm363, %v1985, 0
    %v2019 = vsel %vm363, %v1986, 0
    %v2022 = vsel %vm363, %v1987, 0
    %v2025 = vsel %vm363, %v1988, 0
    %v2028 = vsel %vm363, %v1989, 0
    %v2031 = vsel %vm363, %v1990, 0
    %v2034 = vsel %vm363, %v1991, 0
    %v2037 = vsel %vm363, %v1992, 0
    %v2040 = vsel %vm363, %v1993, 0
    %v2043 = vsel %vm363, %v1994, 0
    %v2046 = vsel %vm363, %v1995, 0
    %v2049 = vsel %vm363, %v1996, 0
    %v2052 = vsel %vm363, %v1997, 0
    %v2055 = vsel %vm363, %v1998, 0
    %v2058 = vsel %vm363, %v1999, 0
    %v2061 = vsel %vm363, %v2000, 0
    %v2064 = vsel %vm363, %v2001, 0
    %v2067 = vsel %vm363, %v2002, 0
    %v2070 = vsel %vm363, %v2003, 0
    %v2073 = vsel %vm363, %v2004, 0
    %v2076 = vsel %vm363, %v2005, 0
    %v2079 = vsel %vm363, %v2006, 0
    %v2082 = vsel %vm363, %v2007, 0
    %v2085 = vsel %vm363, %v2008, 0
    %v2088 = vsel %vm363, %v2009, 0
    %v2091 = vsel %vm363, %v2010, 0
    %2093 = vmatprep.subr.mxu0 0.0
    %2094 = vmatpush1.msra.mxu0 %v2011
    %2095 = vmatprep.subr.mxu0 0.0
    %2096 = vmatpush1.msra.mxu0 %v2012
    %2097 = vmatprep.subr.mxu0 0.0
    %2098 = vmatpush1.msra.mxu0 %v2013
    %2099 = vmatprep.subr.mxu0 0.0
    %2100 = vmatpush1.msra.mxu0 %v2014
    %2101 = vmatprep.subr.mxu0 0.0
    %2102 = vmatpush1.msra.mxu0 0.0
    %2103 = vmatprep.subr.mxu0 0.0
    %2104 = vmatpush1.msra.mxu0 0.0
    %2105 = vmatprep.subr.mxu0 0.0
    %2106 = vmatpush1.msra.mxu0 0.0
    %2107 = vmatprep.subr.mxu0 0.0
    %2108 = vmatpush1.msra.mxu0 0.0
    %2109 = vmatprep.subr.mxu0 0.0
    %2110 = vmatpush1.msra.mxu0 0.0
    %2111 = vmatprep.subr.mxu0 0.0
    %2112 = vmatpush1.msra.mxu0 0.0
    %2113 = vmatprep.subr.mxu0 0.0
    %2114 = vmatpush1.msra.mxu0 0.0
    %2115 = vmatprep.subr.mxu0 0.0
    %2116 = vmatpush1.msra.mxu0 0.0
    %2117 = vmatprep.subr.mxu0 0.0
    %2118 = vmatpush1.msra.mxu0 0.0
    %2119 = vmatprep.subr.mxu0 0.0
    %2120 = vmatpush1.msra.mxu0 0.0
    %2121 = vmatprep.subr.mxu0 0.0
    %2122 = vmatpush1.msra.mxu0 0.0
    %2123 = vmatprep.subr.mxu0 0.0
    %2124 = vmatpush1.msra.mxu0 0.0
    %2125 = vmatprep.subr.mxu0 0.0
    %2126 = vmatpush1.msra.mxu0 0.0
    %2127 = vmatprep.subr.mxu0 0.0
    %2128 = vmatpush1.msra.mxu0 0.0
    %2129 = vmatprep.subr.mxu0 0.0
    %2130 = vmatpush1.msra.mxu0 0.0
    %2131 = vmatprep.subr.mxu0 0.0
    %2132 = vmatpush1.msra.mxu0 0.0
    %2133 = vmatprep.subr.mxu0 0.0
    %2134 = vmatpush1.msra.mxu0 0.0
    %2135 = vmatprep.subr.mxu0 0.0
    %2136 = vmatpush1.msra.mxu0 0.0
    %2137 = vmatprep.subr.mxu0 0.0
    %2138 = vmatpush1.msra.mxu0 0.0
    %2139 = vmatprep.subr.mxu0 0.0
    %2140 = vmatpush1.msra.mxu0 0.0
    %2141 = vmatprep.subr.mxu0 0.0
    %2142 = vmatpush1.msra.mxu0 0.0
    %2143 = vmatprep.subr.mxu0 0.0
    %2144 = vmatpush1.msra.mxu0 0.0
    %2145 = vmatprep.subr.mxu0 0.0
    %2146 = vmatpush1.msra.mxu0 0.0
    %2147 = vmatprep.subr.mxu0 0.0
    %2148 = vmatpush1.msra.mxu0 0.0
    %2149 = vmatprep.subr.mxu0 0.0
    %2150 = vmatpush1.msra.mxu0 0.0
    %2151 = vmatprep.subr.mxu0 0.0
    %2152 = vmatpush1.msra.mxu0 0.0
    %2153 = vmatprep.subr.mxu0 0.0
    %2154 = vmatpush1.msra.mxu0 0.0
    %2155 = vmatprep.subr.mxu0 0.0
    %2156 = vmatpush1.msra.mxu0 0.0
    %2157 = vmatprep.mubr.f32.mxu0 0.0
    %2158 = vmatmul.mubr.f32.gmra.mrb[0].mxu0 %v2016
    %v2159 = vpop.f32.mrb[0].mxu0
    %v2160 = vadd.f32 0.0, %v2159
    %v2161 = vpop.f32.mrb[0].mxu0
    %2162 = vmatprep.mubr.f32.mxu0 0.0
    %2163 = vmatmul.mubr.f32.gmra.mrb[0].mxu0 %v2019
    %v2164 = vpop.f32.mrb[0].mxu0
    %v2165 = vadd.f32 0.0, %v2164
    %v2166 = vpop.f32.mrb[0].mxu0
    %2167 = vmatprep.mubr.f32.mxu0 0.0
    %2168 = vmatmul.mubr.f32.gmra.mrb[0].mxu0 %v2022
    %v2169 = vpop.f32.mrb[0].mxu0
    %v2170 = vadd.f32 0.0, %v2169
    %v2171 = vpop.f32.mrb[0].mxu0
    %2172 = vmatprep.mubr.f32.mxu0 0.0
    %2173 = vmatmul.mubr.f32.gmra.mrb[0].mxu0 %v2025
    %v2174 = vpop.f32.mrb[0].mxu0
    %v2175 = vadd.f32 0.0, %v2174
    %v2176 = vpop.f32.mrb[0].mxu0
    %2177 = vmatprep.mubr.f32.mxu0 0.0
    %2178 = vmatmul.mubr.f32.gmra.mrb[0].mxu0 %v2028
    %v2179 = vpop.f32.mrb[0].mxu0
    %v2180 = vadd.f32 0.0, %v2179
    %v2181 = vpop.f32.mrb[0].mxu0
    %2182 = vmatprep.mubr.f32.mxu0 0.0
    %2183 = vmatmul.mubr.f32.gmra.mrb[0].mxu0 %v2031
    %v2184 = vpop.f32.mrb[0].mxu0
    %v2185 = vadd.f32 0.0, %v2184
    %v2186 = vpop.f32.mrb[0].mxu0
    %2187 = vmatprep.mubr.f32.mxu0 0.0
    %2188 = vmatmul.mubr.f32.gmra.mrb[0].mxu0 %v2034
    %v2189 = vpop.f32.mrb[0].mxu0
    %v2190 = vadd.f32 0.0, %v2189
    %v2191 = vpop.f32.mrb[0].mxu0
    %2192 = vmatprep.mubr.f32.mxu0 0.0
    %2193 = vmatmul.mubr.f32.gmra.mrb[0].mxu0 %v2037
    %v2194 = vpop.f32.mrb[0].mxu0
    %v2195 = vadd.f32 0.0, %v2194
    %v2196 = vpop.f32.mrb[0].mxu0
    %2197 = vmatprep.mubr.f32.mxu0 0.0
    %2198 = vmatmul.mubr.f32.gmra.mrb[0].mxu0 %v2040
    %v2199 = vpop.f32.mrb[0].mxu0
    %v2200 = vadd.f32 0.0, %v2199
    %v2201 = vpop.f32.mrb[0].mxu0
    %2202 = vmatprep.mubr.f32.mxu0 0.0
    %2203 = vmatmul.mubr.f32.gmra.mrb[0].mxu0 %v2043
    %v2204 = vpop.f32.mrb[0].mxu0
    %v2205 = vadd.f32 0.0, %v2204
    %v2206 = vpop.f32.mrb[0].mxu0
    %2207 = vmatprep.mubr.f32.mxu0 0.0
    %2208 = vmatmul.mubr.f32.gmra.mrb[0].mxu0 %v2046
    %v2209 = vpop.f32.mrb[0].mxu0
    %v2210 = vadd.f32 0.0, %v2209
    %v2211 = vpop.f32.mrb[0].mxu0
    %2212 = vmatprep.mubr.f32.mxu0 0.0
    %2213 = vmatmul.mubr.f32.gmra.mrb[0].mxu0 %v2049
    %v2214 = vpop.f32.mrb[0].mxu0
    %v2215 = vadd.f32 0.0, %v2214
    %v2216 = vpop.f32.mrb[0].mxu0
    %2217 = vmatprep.mubr.f32.mxu0 0.0
    %2218 = vmatmul.mubr.f32.gmra.mrb[0].mxu0 %v2052
    %v2219 = vpop.f32.mrb[0].mxu0
    %v2220 = vadd.f32 0.0, %v2219
    %v2221 = vpop.f32.mrb[0].mxu0
    %2222 = vmatprep.mubr.f32.mxu0 0.0
    %2223 = vmatmul.mubr.f32.gmra.mrb[0].mxu0 %v2055
    %v2224 = vpop.f32.mrb[0].mxu0
    %v2225 = vadd.f32 0.0, %v2224
    %v2226 = vpop.f32.mrb[0].mxu0
    %2227 = vmatprep.mubr.f32.mxu0 0.0
    %2228 = vmatmul.mubr.f32.gmra.mrb[0].mxu0 %v2058
    %v2229 = vpop.f32.mrb[0].mxu0
    %v2230 = vadd.f32 0.0, %v2229
    %v2231 = vpop.f32.mrb[0].mxu0
    %2232 = vmatprep.mubr.f32.mxu0 0.0
    %2233 = vmatmul.mubr.f32.gmra.mrb[0].mxu0 %v2061
    %v2234 = vpop.f32.mrb[0].mxu0
    %v2235 = vadd.f32 0.0, %v2234
    %v2236 = vpop.f32.mrb[0].mxu0
    %2237 = vmatprep.mubr.f32.mxu0 0.0
    %2238 = vmatmul.mubr.f32.gmra.mrb[0].mxu0 %v2064
    %v2239 = vpop.f32.mrb[0].mxu0
    %v2240 = vadd.f32 0.0, %v2239
    %v2241 = vpop.f32.mrb[0].mxu0
    %2242 = vmatprep.mubr.f32.mxu0 0.0
    %2243 = vmatmul.mubr.f32.gmra.mrb[0].mxu0 %v2067
    %v2244 = vpop.f32.mrb[0].mxu0
    %v2245 = vadd.f32 0.0, %v2244
    %v2246 = vpop.f32.mrb[0].mxu0
    %2247 = vmatprep.mubr.f32.mxu0 0.0
    %2248 = vmatmul.mubr.f32.gmra.mrb[0].mxu0 %v2070
    %v2249 = vpop.f32.mrb[0].mxu0
    %v2250 = vadd.f32 0.0, %v2249
    %v2251 = vpop.f32.mrb[0].mxu0
    %2252 = vmatprep.mubr.f32.mxu0 0.0
    %2253 = vmatmul.mubr.f32.gmra.mrb[0].mxu0 %v2073
    %v2254 = vpop.f32.mrb[0].mxu0
    %v2255 = vadd.f32 0.0, %v2254
    %v2256 = vpop.f32.mrb[0].mxu0
    %2257 = vmatprep.mubr.f32.mxu0 0.0
    %2258 = vmatmul.mubr.f32.gmra.mrb[0].mxu0 %v2076
    %v2259 = vpop.f32.mrb[0].mxu0
    %v2260 = vadd.f32 0.0, %v2259
    %v2261 = vpop.f32.mrb[0].mxu0
    %2262 = vmatprep.mubr.f32.mxu0 0.0
    %2263 = vmatmul.mubr.f32.gmra.mrb[0].mxu0 %v2079
    %v2264 = vpop.f32.mrb[0].mxu0
    %v2265 = vadd.f32 0.0, %v2264
    %v2266 = vpop.f32.mrb[0].mxu0
    %2267 = vmatprep.mubr.f32.mxu0 0.0
    %2268 = vmatmul.mubr.f32.gmra.mrb[0].mxu0 %v2082
    %v2269 = vpop.f32.mrb[0].mxu0
    %v2270 = vadd.f32 0.0, %v2269
    %v2271 = vpop.f32.mrb[0].mxu0
    %2272 = vmatprep.mubr.f32.mxu0 0.0
    %2273 = vmatmul.mubr.f32.gmra.mrb[0].mxu0 %v2085
    %v2274 = vpop.f32.mrb[0].mxu0
    %v2275 = vadd.f32 0.0, %v2274
    %v2276 = vpop.f32.mrb[0].mxu0
    %2277 = vmatprep.mubr.f32.mxu0 0.0
    %2278 = vmatmul.mubr.f32.gmra.mrb[0].mxu0 %v2088
    %v2279 = vpop.f32.mrb[0].mxu0
    %v2280 = vadd.f32 0.0, %v2279
    %v2281 = vpop.f32.mrb[0].mxu0
    %2282 = vmatprep.mubr.f32.mxu0 0.0
    %2283 = vmatmul.mubr.f32.gmra.mrb[0].mxu0 %v2091
    %v2284 = vpop.f32.mrb[0].mxu0
    %v2285 = vadd.f32 0.0, %v2284
    %v2286 = vpop.f32.mrb[0].mxu0
    %2287 = vdwg.mxu0
    %v2288 = vadd.f32 %v1959, %v2160
    %v2289 = vadd.f32 %v1960, %v2165
    %v2290 = vadd.f32 %v1961, %v2170
    %v2291 = vadd.f32 %v1962, %v2175
    %v2292 = vadd.f32 %v1963, %v2180
    %v2293 = vadd.f32 %v1964, %v2185
    %v2294 = vadd.f32 %v1965, %v2190
    %v2295 = vadd.f32 %v1966, %v2195
    %v2296 = vadd.f32 %v1967, %v2200
    %v2297 = vadd.f32 %v1968, %v2205
    %v2298 = vadd.f32 %v1969, %v2210
    %v2299 = vadd.f32 %v1970, %v2215
    %v2300 = vadd.f32 %v1971, %v2220
    %v2301 = vadd.f32 %v1972, %v2225
    %v2302 = vadd.f32 %v1973, %v2230
    %v2303 = vadd.f32 %v1974, %v2235
    %v2304 = vadd.f32 %v1975, %v2240
    %v2305 = vadd.f32 %v1976, %v2245
    %v2306 = vadd.f32 %v1977, %v2250
    %v2307 = vadd.f32 %v1978, %v2255
    %v2308 = vadd.f32 %v1979, %v2260
    %v2309 = vadd.f32 %v1980, %v2265
    %v2310 = vadd.f32 %v1981, %v2270
    %v2311 = vadd.f32 %v1982, %v2275
    %v2312 = vadd.f32 %v1983, %v2280
    %v2313 = vadd.f32 %v1984, %v2285
    %v2314 = vld [vmem:[#allocation2 + $0x6] sm:$0xff]
    %v2315 = vld [vmem:[#allocation2 + $0xe] sm:$0xff]
    %v2316 = vld [vmem:[#allocation2 + $0x16] sm:$0xff]
    %v2317 = vld [vmem:[#allocation2 + $0x1e] sm:$0xff]
    %v2318 = vld [vmem:[#allocation2 + $0x26] sm:$0xff]
    %v2319 = vld [vmem:[#allocation2 + $0x2e] sm:$0xff]
    %v2320 = vld [vmem:[#allocation2 + $0x36] sm:$0xff]
    %v2321 = vld [vmem:[#allocation2 + $0x3e] sm:$0xff]
    %v2322 = vld [vmem:[#allocation2 + $0x46] sm:$0xff]
    %v2323 = vld [vmem:[#allocation2 + $0x4e] sm:$0xff]
    %v2324 = vld [vmem:[#allocation2 + $0x56] sm:$0xff]
    %v2325 = vld [vmem:[#allocation2 + $0x5e] sm:$0xff]
    %v2326 = vld [vmem:[#allocation2 + $0x66] sm:$0xff]
    %v2327 = vld [vmem:[#allocation2 + $0x6e] sm:$0xff]
    %v2328 = vld [vmem:[#allocation2 + $0x76] sm:$0xff]
    %v2329 = vld [vmem:[#allocation2 + $0x7e] sm:$0xff]
    %v2330 = vld [vmem:[#allocation2 + $0x86] sm:$0xff]
    %v2331 = vld [vmem:[#allocation2 + $0x8e] sm:$0xff]
    %v2332 = vld [vmem:[#allocation2 + $0x96] sm:$0xff]
    %v2333 = vld [vmem:[#allocation2 + $0x9e] sm:$0xff]
    %v2334 = vld [vmem:[#allocation2 + $0xa6] sm:$0xff]
    %v2335 = vld [vmem:[#allocation2 + $0xae] sm:$0xff]
    %v2336 = vld [vmem:[#allocation2 + $0xb6] sm:$0xff]
    %v2337 = vld [vmem:[#allocation2 + $0xbe] sm:$0xff]
    %v2338 = vld [vmem:[#allocation2 + $0xc6] sm:$0xff]
    %v2339 = vld [vmem:[#allocation2 + $0xce] sm:$0x1f]
    %v2340 = vld [vmem:[%s1 + $0xcb] sm:$0xff]
    %v2341 = vld [vmem:[%s1 + $0xd3] sm:$0xff]
    %v2342 = vld [vmem:[%s1 + $0xdb] sm:$0xff]
    %v2343 = vld [vmem:[%s1 + $0xe3] sm:$0xff]
    %v2345 = vsel %vm363, %v2314, 0
    %v2348 = vsel %vm363, %v2315, 0
    %v2351 = vsel %vm363, %v2316, 0
    %v2354 = vsel %vm363, %v2317, 0
    %v2357 = vsel %vm363, %v2318, 0
    %v2360 = vsel %vm363, %v2319, 0
    %v2363 = vsel %vm363, %v2320, 0
    %v2366 = vsel %vm363, %v2321, 0
    %v2369 = vsel %vm363, %v2322, 0
    %v2372 = vsel %vm363, %v2323, 0
    %v2375 = vsel %vm363, %v2324, 0
    %v2378 = vsel %vm363, %v2325, 0
    %v2381 = vsel %vm363, %v2326, 0
    %v2384 = vsel %vm363, %v2327, 0
    %v2387 = vsel %vm363, %v2328, 0
    %v2390 = vsel %vm363, %v2329, 0
    %v2393 = vsel %vm363, %v2330, 0
    %v2396 = vsel %vm363, %v2331, 0
    %v2399 = vsel %vm363, %v2332, 0
    %v2402 = vsel %vm363, %v2333, 0
    %v2405 = vsel %vm363, %v2334, 0
    %v2408 = vsel %vm363, %v2335, 0
    %v2411 = vsel %vm363, %v2336, 0
    %v2414 = vsel %vm363, %v2337, 0
    %v2417 = vsel %vm363, %v2338, 0
    %v2420 = vsel %vm363, %v2339, 0
    %2422 = vmatprep.subr.mxu0 0.0
    %2423 = vmatpush1.msra.mxu0 %v2340
    %2424 = vmatprep.subr.mxu0 0.0
    %2425 = vmatpush1.msra.mxu0 %v2341
    %2426 = vmatprep.subr.mxu0 0.0
    %2427 = vmatpush1.msra.mxu0 %v2342
    %2428 = vmatprep.subr.mxu0 0.0
    %2429 = vmatpush1.msra.mxu0 %v2343
    %2430 = vmatprep.subr.mxu0 0.0
    %2431 = vmatpush1.msra.mxu0 0.0
    %2432 = vmatprep.subr.mxu0 0.0
    %2433 = vmatpush1.msra.mxu0 0.0
    %2434 = vmatprep.subr.mxu0 0.0
    %2435 = vmatpush1.msra.mxu0 0.0
    %2436 = vmatprep.subr.mxu0 0.0
    %2437 = vmatpush1.msra.mxu0 0.0
    %2438 = vmatprep.subr.mxu0 0.0
    %2439 = vmatpush1.msra.mxu0 0.0
    %2440 = vmatprep.subr.mxu0 0.0
    %2441 = vmatpush1.msra.mxu0 0.0
    %2442 = vmatprep.subr.mxu0 0.0
    %2443 = vmatpush1.msra.mxu0 0.0
    %2444 = vmatprep.subr.mxu0 0.0
    %2445 = vmatpush1.msra.mxu0 0.0
    %2446 = vmatprep.subr.mxu0 0.0
    %2447 = vmatpush1.msra.mxu0 0.0
    %2448 = vmatprep.subr.mxu0 0.0
    %2449 = vmatpush1.msra.mxu0 0.0
    %2450 = vmatprep.subr.mxu0 0.0
    %2451 = vmatpush1.msra.mxu0 0.0
    %2452 = vmatprep.subr.mxu0 0.0
    %2453 = vmatpush1.msra.mxu0 0.0
    %2454 = vmatprep.subr.mxu0 0.0
    %2455 = vmatpush1.msra.mxu0 0.0
    %2456 = vmatprep.subr.mxu0 0.0
    %2457 = vmatpush1.msra.mxu0 0.0
    %2458 = vmatprep.subr.mxu0 0.0
    %2459 = vmatpush1.msra.mxu0 0.0
    %2460 = vmatprep.subr.mxu0 0.0
    %2461 = vmatpush1.msra.mxu0 0.0
    %2462 = vmatprep.subr.mxu0 0.0
    %2463 = vmatpush1.msra.mxu0 0.0
    %2464 = vmatprep.subr.mxu0 0.0
    %2465 = vmatpush1.msra.mxu0 0.0
    %2466 = vmatprep.subr.mxu0 0.0
    %2467 = vmatpush1.msra.mxu0 0.0
    %2468 = vmatprep.subr.mxu0 0.0
    %2469 = vmatpush1.msra.mxu0 0.0
    %2470 = vmatprep.subr.mxu0 0.0
    %2471 = vmatpush1.msra.mxu0 0.0
    %2472 = vmatprep.subr.mxu0 0.0
    %2473 = vmatpush1.msra.mxu0 0.0
    %2474 = vmatprep.subr.mxu0 0.0
    %2475 = vmatpush1.msra.mxu0 0.0
    %2476 = vmatprep.subr.mxu0 0.0
    %2477 = vmatpush1.msra.mxu0 0.0
    %2478 = vmatprep.subr.mxu0 0.0
    %2479 = vmatpush1.msra.mxu0 0.0
    %2480 = vmatprep.subr.mxu0 0.0
    %2481 = vmatpush1.msra.mxu0 0.0
    %2482 = vmatprep.subr.mxu0 0.0
    %2483 = vmatpush1.msra.mxu0 0.0
    %2484 = vmatprep.subr.mxu0 0.0
    %2485 = vmatpush1.msra.mxu0 0.0
    %2486 = vmatprep.mubr.f32.mxu0 0.0
    %2487 = vmatmul.mubr.f32.gmra.mrb[0].mxu0 %v2345
    %v2488 = vpop.f32.mrb[0].mxu0
    %v2489 = vadd.f32 0.0, %v2488
    %v2490 = vpop.f32.mrb[0].mxu0
    %2491 = vmatprep.mubr.f32.mxu0 0.0
    %2492 = vmatmul.mubr.f32.gmra.mrb[0].mxu0 %v2348
    %v2493 = vpop.f32.mrb[0].mxu0
    %v2494 = vadd.f32 0.0, %v2493
    %v2495 = vpop.f32.mrb[0].mxu0
    %2496 = vmatprep.mubr.f32.mxu0 0.0
    %2497 = vmatmul.mubr.f32.gmra.mrb[0].mxu0 %v2351
    %v2498 = vpop.f32.mrb[0].mxu0
    %v2499 = vadd.f32 0.0, %v2498
    %v2500 = vpop.f32.mrb[0].mxu0
    %2501 = vmatprep.mubr.f32.mxu0 0.0
    %2502 = vmatmul.mubr.f32.gmra.mrb[0].mxu0 %v2354
    %v2503 = vpop.f32.mrb[0].mxu0
    %v2504 = vadd.f32 0.0, %v2503
    %v2505 = vpop.f32.mrb[0].mxu0
    %2506 = vmatprep.mubr.f32.mxu0 0.0
    %2507 = vmatmul.mubr.f32.gmra.mrb[0].mxu0 %v2357
    %v2508 = vpop.f32.mrb[0].mxu0
    %v2509 = vadd.f32 0.0, %v2508
    %v2510 = vpop.f32.mrb[0].mxu0
    %2511 = vmatprep.mubr.f32.mxu0 0.0
    %2512 = vmatmul.mubr.f32.gmra.mrb[0].mxu0 %v2360
    %v2513 = vpop.f32.mrb[0].mxu0
    %v2514 = vadd.f32 0.0, %v2513
    %v2515 = vpop.f32.mrb[0].mxu0
    %2516 = vmatprep.mubr.f32.mxu0 0.0
    %2517 = vmatmul.mubr.f32.gmra.mrb[0].mxu0 %v2363
    %v2518 = vpop.f32.mrb[0].mxu0
    %v2519 = vadd.f32 0.0, %v2518
    %v2520 = vpop.f32.mrb[0].mxu0
    %2521 = vmatprep.mubr.f32.mxu0 0.0
    %2522 = vmatmul.mubr.f32.gmra.mrb[0].mxu0 %v2366
    %v2523 = vpop.f32.mrb[0].mxu0
    %v2524 = vadd.f32 0.0, %v2523
    %v2525 = vpop.f32.mrb[0].mxu0
    %2526 = vmatprep.mubr.f32.mxu0 0.0
    %2527 = vmatmul.mubr.f32.gmra.mrb[0].mxu0 %v2369
    %v2528 = vpop.f32.mrb[0].mxu0
    %v2529 = vadd.f32 0.0, %v2528
    %v2530 = vpop.f32.mrb[0].mxu0
    %2531 = vmatprep.mubr.f32.mxu0 0.0
    %2532 = vmatmul.mubr.f32.gmra.mrb[0].mxu0 %v2372
    %v2533 = vpop.f32.mrb[0].mxu0
    %v2534 = vadd.f32 0.0, %v2533
    %v2535 = vpop.f32.mrb[0].mxu0
    %2536 = vmatprep.mubr.f32.mxu0 0.0
    %2537 = vmatmul.mubr.f32.gmra.mrb[0].mxu0 %v2375
    %v2538 = vpop.f32.mrb[0].mxu0
    %v2539 = vadd.f32 0.0, %v2538
    %v2540 = vpop.f32.mrb[0].mxu0
    %2541 = vmatprep.mubr.f32.mxu0 0.0
    %2542 = vmatmul.mubr.f32.gmra.mrb[0].mxu0 %v2378
    %v2543 = vpop.f32.mrb[0].mxu0
    %v2544 = vadd.f32 0.0, %v2543
    %v2545 = vpop.f32.mrb[0].mxu0
    %2546 = vmatprep.mubr.f32.mxu0 0.0
    %2547 = vmatmul.mubr.f32.gmra.mrb[0].mxu0 %v2381
    %v2548 = vpop.f32.mrb[0].mxu0
    %v2549 = vadd.f32 0.0, %v2548
    %v2550 = vpop.f32.mrb[0].mxu0
    %2551 = vmatprep.mubr.f32.mxu0 0.0
    %2552 = vmatmul.mubr.f32.gmra.mrb[0].mxu0 %v2384
    %v2553 = vpop.f32.mrb[0].mxu0
    %v2554 = vadd.f32 0.0, %v2553
    %v2555 = vpop.f32.mrb[0].mxu0
    %2556 = vmatprep.mubr.f32.mxu0 0.0
    %2557 = vmatmul.mubr.f32.gmra.mrb[0].mxu0 %v2387
    %v2558 = vpop.f32.mrb[0].mxu0
    %v2559 = vadd.f32 0.0, %v2558
    %v2560 = vpop.f32.mrb[0].mxu0
    %2561 = vmatprep.mubr.f32.mxu0 0.0
    %2562 = vmatmul.mubr.f32.gmra.mrb[0].mxu0 %v2390
    %v2563 = vpop.f32.mrb[0].mxu0
    %v2564 = vadd.f32 0.0, %v2563
    %v2565 = vpop.f32.mrb[0].mxu0
    %2566 = vmatprep.mubr.f32.mxu0 0.0
    %2567 = vmatmul.mubr.f32.gmra.mrb[0].mxu0 %v2393
    %v2568 = vpop.f32.mrb[0].mxu0
    %v2569 = vadd.f32 0.0, %v2568
    %v2570 = vpop.f32.mrb[0].mxu0
    %2571 = vmatprep.mubr.f32.mxu0 0.0
    %2572 = vmatmul.mubr.f32.gmra.mrb[0].mxu0 %v2396
    %v2573 = vpop.f32.mrb[0].mxu0
    %v2574 = vadd.f32 0.0, %v2573
    %v2575 = vpop.f32.mrb[0].mxu0
    %2576 = vmatprep.mubr.f32.mxu0 0.0
    %2577 = vmatmul.mubr.f32.gmra.mrb[0].mxu0 %v2399
    %v2578 = vpop.f32.mrb[0].mxu0
    %v2579 = vadd.f32 0.0, %v2578
    %v2580 = vpop.f32.mrb[0].mxu0
    %2581 = vmatprep.mubr.f32.mxu0 0.0
    %2582 = vmatmul.mubr.f32.gmra.mrb[0].mxu0 %v2402
    %v2583 = vpop.f32.mrb[0].mxu0
    %v2584 = vadd.f32 0.0, %v2583
    %v2585 = vpop.f32.mrb[0].mxu0
    %2586 = vmatprep.mubr.f32.mxu0 0.0
    %2587 = vmatmul.mubr.f32.gmra.mrb[0].mxu0 %v2405
    %v2588 = vpop.f32.mrb[0].mxu0
    %v2589 = vadd.f32 0.0, %v2588
    %v2590 = vpop.f32.mrb[0].mxu0
    %2591 = vmatprep.mubr.f32.mxu0 0.0
    %2592 = vmatmul.mubr.f32.gmra.mrb[0].mxu0 %v2408
    %v2593 = vpop.f32.mrb[0].mxu0
    %v2594 = vadd.f32 0.0, %v2593
    %v2595 = vpop.f32.mrb[0].mxu0
    %2596 = vmatprep.mubr.f32.mxu0 0.0
    %2597 = vmatmul.mubr.f32.gmra.mrb[0].mxu0 %v2411
    %v2598 = vpop.f32.mrb[0].mxu0
    %v2599 = vadd.f32 0.0, %v2598
    %v2600 = vpop.f32.mrb[0].mxu0
    %2601 = vmatprep.mubr.f32.mxu0 0.0
    %2602 = vmatmul.mubr.f32.gmra.mrb[0].mxu0 %v2414
    %v2603 = vpop.f32.mrb[0].mxu0
    %v2604 = vadd.f32 0.0, %v2603
    %v2605 = vpop.f32.mrb[0].mxu0
    %2606 = vmatprep.mubr.f32.mxu0 0.0
    %2607 = vmatmul.mubr.f32.gmra.mrb[0].mxu0 %v2417
    %v2608 = vpop.f32.mrb[0].mxu0
    %v2609 = vadd.f32 0.0, %v2608
    %v2610 = vpop.f32.mrb[0].mxu0
    %2611 = vmatprep.mubr.f32.mxu0 0.0
    %2612 = vmatmul.mubr.f32.gmra.mrb[0].mxu0 %v2420
    %v2613 = vpop.f32.mrb[0].mxu0
    %v2614 = vadd.f32 0.0, %v2613
    %v2615 = vpop.f32.mrb[0].mxu0
    %2616 = vdwg.mxu0
    %v2617 = vadd.f32 %v2288, %v2489
    %v2618 = vadd.f32 %v2289, %v2494
    %v2619 = vadd.f32 %v2290, %v2499
    %v2620 = vadd.f32 %v2291, %v2504
    %v2621 = vadd.f32 %v2292, %v2509
    %v2622 = vadd.f32 %v2293, %v2514
    %v2623 = vadd.f32 %v2294, %v2519
    %v2624 = vadd.f32 %v2295, %v2524
    %v2625 = vadd.f32 %v2296, %v2529
    %v2626 = vadd.f32 %v2297, %v2534
    %v2627 = vadd.f32 %v2298, %v2539
    %v2628 = vadd.f32 %v2299, %v2544
    %v2629 = vadd.f32 %v2300, %v2549
    %v2630 = vadd.f32 %v2301, %v2554
    %v2631 = vadd.f32 %v2302, %v2559
    %v2632 = vadd.f32 %v2303, %v2564
    %v2633 = vadd.f32 %v2304, %v2569
    %v2634 = vadd.f32 %v2305, %v2574
    %v2635 = vadd.f32 %v2306, %v2579
    %v2636 = vadd.f32 %v2307, %v2584
    %v2637 = vadd.f32 %v2308, %v2589
    %v2638 = vadd.f32 %v2309, %v2594
    %v2639 = vadd.f32 %v2310, %v2599
    %v2640 = vadd.f32 %v2311, %v2604
    %v2641 = vadd.f32 %v2312, %v2609
    %v2642 = vadd.f32 %v2313, %v2614
    %v2643 = vld [vmem:[#allocation2 + $0x7] sm:$0xff]
    %v2644 = vld [vmem:[#allocation2 + $0xf] sm:$0xff]
    %v2645 = vld [vmem:[#allocation2 + $0x17] sm:$0xff]
    %v2646 = vld [vmem:[#allocation2 + $0x1f] sm:$0xff]
    %v2647 = vld [vmem:[#allocation2 + $0x27] sm:$0xff]
    %v2648 = vld [vmem:[#allocation2 + $0x2f] sm:$0xff]
    %v2649 = vld [vmem:[#allocation2 + $0x37] sm:$0xff]
    %v2650 = vld [vmem:[#allocation2 + $0x3f] sm:$0xff]
    %v2651 = vld [vmem:[#allocation2 + $0x47] sm:$0xff]
    %v2652 = vld [vmem:[#allocation2 + $0x4f] sm:$0xff]
    %v2653 = vld [vmem:[#allocation2 + $0x57] sm:$0xff]
    %v2654 = vld [vmem:[#allocation2 + $0x5f] sm:$0xff]
    %v2655 = vld [vmem:[#allocation2 + $0x67] sm:$0xff]
    %v2656 = vld [vmem:[#allocation2 + $0x6f] sm:$0xff]
    %v2657 = vld [vmem:[#allocation2 + $0x77] sm:$0xff]
    %v2658 = vld [vmem:[#allocation2 + $0x7f] sm:$0xff]
    %v2659 = vld [vmem:[#allocation2 + $0x87] sm:$0xff]
    %v2660 = vld [vmem:[#allocation2 + $0x8f] sm:$0xff]
    %v2661 = vld [vmem:[#allocation2 + $0x97] sm:$0xff]
    %v2662 = vld [vmem:[#allocation2 + $0x9f] sm:$0xff]
    %v2663 = vld [vmem:[#allocation2 + $0xa7] sm:$0xff]
    %v2664 = vld [vmem:[#allocation2 + $0xaf] sm:$0xff]
    %v2665 = vld [vmem:[#allocation2 + $0xb7] sm:$0xff]
    %v2666 = vld [vmem:[#allocation2 + $0xbf] sm:$0xff]
    %v2667 = vld [vmem:[#allocation2 + $0xc7] sm:$0xff]
    %v2668 = vld [vmem:[#allocation2 + $0xcf] sm:$0x1f]
    %v2669 = vld [vmem:[%s1 + $0xeb] sm:$0xff]
    %v2670 = vld [vmem:[%s1 + $0xf3] sm:$0xff]
    %v2671 = vld [vmem:[%s1 + $0xfb] sm:$0xff]
    %v2672 = vld [vmem:[%s1 + $0x103] sm:$0xff]
    %v2674 = vsel %vm363, %v2643, 0
    %v2677 = vsel %vm363, %v2644, 0
    %v2680 = vsel %vm363, %v2645, 0
    %v2683 = vsel %vm363, %v2646, 0
    %v2686 = vsel %vm363, %v2647, 0
    %v2689 = vsel %vm363, %v2648, 0
    %v2692 = vsel %vm363, %v2649, 0
    %v2695 = vsel %vm363, %v2650, 0
    %v2698 = vsel %vm363, %v2651, 0
    %v2701 = vsel %vm363, %v2652, 0
    %v2704 = vsel %vm363, %v2653, 0
    %v2707 = vsel %vm363, %v2654, 0
    %v2710 = vsel %vm363, %v2655, 0
    %v2713 = vsel %vm363, %v2656, 0
    %v2716 = vsel %vm363, %v2657, 0
    %v2719 = vsel %vm363, %v2658, 0
    %v2722 = vsel %vm363, %v2659, 0
    %v2725 = vsel %vm363, %v2660, 0
    %v2728 = vsel %vm363, %v2661, 0
    %v2731 = vsel %vm363, %v2662, 0
    %v2734 = vsel %vm363, %v2663, 0
    %v2737 = vsel %vm363, %v2664, 0
    %v2740 = vsel %vm363, %v2665, 0
    %v2743 = vsel %vm363, %v2666, 0
    %v2746 = vsel %vm363, %v2667, 0
    %v2749 = vsel %vm363, %v2668, 0
    %2751 = vmatprep.subr.mxu0 0.0
    %2752 = vmatpush1.msra.mxu0 %v2669
    %2753 = vmatprep.subr.mxu0 0.0
    %2754 = vmatpush1.msra.mxu0 %v2670
    %2755 = vmatprep.subr.mxu0 0.0
    %2756 = vmatpush1.msra.mxu0 %v2671
    %2757 = vmatprep.subr.mxu0 0.0
    %2758 = vmatpush1.msra.mxu0 %v2672
    %2759 = vmatprep.subr.mxu0 0.0
    %2760 = vmatpush1.msra.mxu0 0.0
    %2761 = vmatprep.subr.mxu0 0.0
    %2762 = vmatpush1.msra.mxu0 0.0
    %2763 = vmatprep.subr.mxu0 0.0
    %2764 = vmatpush1.msra.mxu0 0.0
    %2765 = vmatprep.subr.mxu0 0.0
    %2766 = vmatpush1.msra.mxu0 0.0
    %2767 = vmatprep.subr.mxu0 0.0
    %2768 = vmatpush1.msra.mxu0 0.0
    %2769 = vmatprep.subr.mxu0 0.0
    %2770 = vmatpush1.msra.mxu0 0.0
    %2771 = vmatprep.subr.mxu0 0.0
    %2772 = vmatpush1.msra.mxu0 0.0
    %2773 = vmatprep.subr.mxu0 0.0
    %2774 = vmatpush1.msra.mxu0 0.0
    %2775 = vmatprep.subr.mxu0 0.0
    %2776 = vmatpush1.msra.mxu0 0.0
    %2777 = vmatprep.subr.mxu0 0.0
    %2778 = vmatpush1.msra.mxu0 0.0
    %2779 = vmatprep.subr.mxu0 0.0
    %2780 = vmatpush1.msra.mxu0 0.0
    %2781 = vmatprep.subr.mxu0 0.0
    %2782 = vmatpush1.msra.mxu0 0.0
    %2783 = vmatprep.subr.mxu0 0.0
    %2784 = vmatpush1.msra.mxu0 0.0
    %2785 = vmatprep.subr.mxu0 0.0
    %2786 = vmatpush1.msra.mxu0 0.0
    %2787 = vmatprep.subr.mxu0 0.0
    %2788 = vmatpush1.msra.mxu0 0.0
    %2789 = vmatprep.subr.mxu0 0.0
    %2790 = vmatpush1.msra.mxu0 0.0
    %2791 = vmatprep.subr.mxu0 0.0
    %2792 = vmatpush1.msra.mxu0 0.0
    %2793 = vmatprep.subr.mxu0 0.0
    %2794 = vmatpush1.msra.mxu0 0.0
    %2795 = vmatprep.subr.mxu0 0.0
    %2796 = vmatpush1.msra.mxu0 0.0
    %2797 = vmatprep.subr.mxu0 0.0
    %2798 = vmatpush1.msra.mxu0 0.0
    %2799 = vmatprep.subr.mxu0 0.0
    %2800 = vmatpush1.msra.mxu0 0.0
    %2801 = vmatprep.subr.mxu0 0.0
    %2802 = vmatpush1.msra.mxu0 0.0
    %2803 = vmatprep.subr.mxu0 0.0
    %2804 = vmatpush1.msra.mxu0 0.0
    %2805 = vmatprep.subr.mxu0 0.0
    %2806 = vmatpush1.msra.mxu0 0.0
    %2807 = vmatprep.subr.mxu0 0.0
    %2808 = vmatpush1.msra.mxu0 0.0
    %2809 = vmatprep.subr.mxu0 0.0
    %2810 = vmatpush1.msra.mxu0 0.0
    %2811 = vmatprep.subr.mxu0 0.0
    %2812 = vmatpush1.msra.mxu0 0.0
    %2813 = vmatprep.subr.mxu0 0.0
    %2814 = vmatpush1.msra.mxu0 0.0
    %2815 = vmatprep.mubr.f32.mxu0 0.0
    %2816 = vmatmul.mubr.f32.gmra.mrb[0].mxu0 %v2674
    %v2817 = vpop.f32.mrb[0].mxu0
    %v2818 = vadd.f32 0.0, %v2817
    %v2819 = vpop.f32.mrb[0].mxu0
    %2820 = vmatprep.mubr.f32.mxu0 0.0
    %2821 = vmatmul.mubr.f32.gmra.mrb[0].mxu0 %v2677
    %v2822 = vpop.f32.mrb[0].mxu0
    %v2823 = vadd.f32 0.0, %v2822
    %v2824 = vpop.f32.mrb[0].mxu0
    %2825 = vmatprep.mubr.f32.mxu0 0.0
    %2826 = vmatmul.mubr.f32.gmra.mrb[0].mxu0 %v2680
    %v2827 = vpop.f32.mrb[0].mxu0
    %v2828 = vadd.f32 0.0, %v2827
    %v2829 = vpop.f32.mrb[0].mxu0
    %2830 = vmatprep.mubr.f32.mxu0 0.0
    %2831 = vmatmul.mubr.f32.gmra.mrb[0].mxu0 %v2683
    %v2832 = vpop.f32.mrb[0].mxu0
    %v2833 = vadd.f32 0.0, %v2832
    %v2834 = vpop.f32.mrb[0].mxu0
    %2835 = vmatprep.mubr.f32.mxu0 0.0
    %2836 = vmatmul.mubr.f32.gmra.mrb[0].mxu0 %v2686
    %v2837 = vpop.f32.mrb[0].mxu0
    %v2838 = vadd.f32 0.0, %v2837
    %v2839 = vpop.f32.mrb[0].mxu0
    %2840 = vmatprep.mubr.f32.mxu0 0.0
    %2841 = vmatmul.mubr.f32.gmra.mrb[0].mxu0 %v2689
    %v2842 = vpop.f32.mrb[0].mxu0
    %v2843 = vadd.f32 0.0, %v2842
    %v2844 = vpop.f32.mrb[0].mxu0
    %2845 = vmatprep.mubr.f32.mxu0 0.0
    %2846 = vmatmul.mubr.f32.gmra.mrb[0].mxu0 %v2692
    %v2847 = vpop.f32.mrb[0].mxu0
    %v2848 = vadd.f32 0.0, %v2847
    %v2849 = vpop.f32.mrb[0].mxu0
    %2850 = vmatprep.mubr.f32.mxu0 0.0
    %2851 = vmatmul.mubr.f32.gmra.mrb[0].mxu0 %v2695
    %v2852 = vpop.f32.mrb[0].mxu0
    %v2853 = vadd.f32 0.0, %v2852
    %v2854 = vpop.f32.mrb[0].mxu0
    %2855 = vmatprep.mubr.f32.mxu0 0.0
    %2856 = vmatmul.mubr.f32.gmra.mrb[0].mxu0 %v2698
    %v2857 = vpop.f32.mrb[0].mxu0
    %v2858 = vadd.f32 0.0, %v2857
    %v2859 = vpop.f32.mrb[0].mxu0
    %2860 = vmatprep.mubr.f32.mxu0 0.0
    %2861 = vmatmul.mubr.f32.gmra.mrb[0].mxu0 %v2701
    %v2862 = vpop.f32.mrb[0].mxu0
    %v2863 = vadd.f32 0.0, %v2862
    %v2864 = vpop.f32.mrb[0].mxu0
    %2865 = vmatprep.mubr.f32.mxu0 0.0
    %2866 = vmatmul.mubr.f32.gmra.mrb[0].mxu0 %v2704
    %v2867 = vpop.f32.mrb[0].mxu0
    %v2868 = vadd.f32 0.0, %v2867
    %v2869 = vpop.f32.mrb[0].mxu0
    %2870 = vmatprep.mubr.f32.mxu0 0.0
    %2871 = vmatmul.mubr.f32.gmra.mrb[0].mxu0 %v2707
    %v2872 = vpop.f32.mrb[0].mxu0
    %v2873 = vadd.f32 0.0, %v2872
    %v2874 = vpop.f32.mrb[0].mxu0
    %2875 = vmatprep.mubr.f32.mxu0 0.0
    %2876 = vmatmul.mubr.f32.gmra.mrb[0].mxu0 %v2710
    %v2877 = vpop.f32.mrb[0].mxu0
    %v2878 = vadd.f32 0.0, %v2877
    %v2879 = vpop.f32.mrb[0].mxu0
    %2880 = vmatprep.mubr.f32.mxu0 0.0
    %2881 = vmatmul.mubr.f32.gmra.mrb[0].mxu0 %v2713
    %v2882 = vpop.f32.mrb[0].mxu0
    %v2883 = vadd.f32 0.0, %v2882
    %v2884 = vpop.f32.mrb[0].mxu0
    %2885 = vmatprep.mubr.f32.mxu0 0.0
    %2886 = vmatmul.mubr.f32.gmra.mrb[0].mxu0 %v2716
    %v2887 = vpop.f32.mrb[0].mxu0
    %v2888 = vadd.f32 0.0, %v2887
    %v2889 = vpop.f32.mrb[0].mxu0
    %2890 = vmatprep.mubr.f32.mxu0 0.0
    %2891 = vmatmul.mubr.f32.gmra.mrb[0].mxu0 %v2719
    %v2892 = vpop.f32.mrb[0].mxu0
    %v2893 = vadd.f32 0.0, %v2892
    %v2894 = vpop.f32.mrb[0].mxu0
    %2895 = vmatprep.mubr.f32.mxu0 0.0
    %2896 = vmatmul.mubr.f32.gmra.mrb[0].mxu0 %v2722
    %v2897 = vpop.f32.mrb[0].mxu0
    %v2898 = vadd.f32 0.0, %v2897
    %v2899 = vpop.f32.mrb[0].mxu0
    %2900 = vmatprep.mubr.f32.mxu0 0.0
    %2901 = vmatmul.mubr.f32.gmra.mrb[0].mxu0 %v2725
    %v2902 = vpop.f32.mrb[0].mxu0
    %v2903 = vadd.f32 0.0, %v2902
    %v2904 = vpop.f32.mrb[0].mxu0
    %2905 = vmatprep.mubr.f32.mxu0 0.0
    %2906 = vmatmul.mubr.f32.gmra.mrb[0].mxu0 %v2728
    %v2907 = vpop.f32.mrb[0].mxu0
    %v2908 = vadd.f32 0.0, %v2907
    %v2909 = vpop.f32.mrb[0].mxu0
    %2910 = vmatprep.mubr.f32.mxu0 0.0
    %2911 = vmatmul.mubr.f32.gmra.mrb[0].mxu0 %v2731
    %v2912 = vpop.f32.mrb[0].mxu0
    %v2913 = vadd.f32 0.0, %v2912
    %v2914 = vpop.f32.mrb[0].mxu0
    %2915 = vmatprep.mubr.f32.mxu0 0.0
    %2916 = vmatmul.mubr.f32.gmra.mrb[0].mxu0 %v2734
    %v2917 = vpop.f32.mrb[0].mxu0
    %v2918 = vadd.f32 0.0, %v2917
    %v2919 = vpop.f32.mrb[0].mxu0
    %2920 = vmatprep.mubr.f32.mxu0 0.0
    %2921 = vmatmul.mubr.f32.gmra.mrb[0].mxu0 %v2737
    %v2922 = vpop.f32.mrb[0].mxu0
    %v2923 = vadd.f32 0.0, %v2922
    %v2924 = vpop.f32.mrb[0].mxu0
    %2925 = vmatprep.mubr.f32.mxu0 0.0
    %2926 = vmatmul.mubr.f32.gmra.mrb[0].mxu0 %v2740
    %v2927 = vpop.f32.mrb[0].mxu0
    %v2928 = vadd.f32 0.0, %v2927
    %v2929 = vpop.f32.mrb[0].mxu0
    %2930 = vmatprep.mubr.f32.mxu0 0.0
    %2931 = vmatmul.mubr.f32.gmra.mrb[0].mxu0 %v2743
    %v2932 = vpop.f32.mrb[0].mxu0
    %v2933 = vadd.f32 0.0, %v2932
    %v2934 = vpop.f32.mrb[0].mxu0
    %2935 = vmatprep.mubr.f32.mxu0 0.0
    %2936 = vmatmul.mubr.f32.gmra.mrb[0].mxu0 %v2746
    %v2937 = vpop.f32.mrb[0].mxu0
    %v2938 = vadd.f32 0.0, %v2937
    %v2939 = vpop.f32.mrb[0].mxu0
    %2940 = vmatprep.mubr.f32.mxu0 0.0
    %2941 = vmatmul.mubr.f32.gmra.mrb[0].mxu0 %v2749
    %v2942 = vpop.f32.mrb[0].mxu0
    %v2943 = vadd.f32 0.0, %v2942
    %v2944 = vpop.f32.mrb[0].mxu0
    %2945 = vdwg.mxu0
    %v2946 = vadd.f32 %v2617, %v2818
    %v2947 = vadd.f32 %v2618, %v2823
    %v2948 = vadd.f32 %v2619, %v2828
    %v2949 = vadd.f32 %v2620, %v2833
    %v2950 = vadd.f32 %v2621, %v2838
    %v2951 = vadd.f32 %v2622, %v2843
    %v2952 = vadd.f32 %v2623, %v2848
    %v2953 = vadd.f32 %v2624, %v2853
    %v2954 = vadd.f32 %v2625, %v2858
    %v2955 = vadd.f32 %v2626, %v2863
    %v2956 = vadd.f32 %v2627, %v2868
    %v2957 = vadd.f32 %v2628, %v2873
    %v2958 = vadd.f32 %v2629, %v2878
    %v2959 = vadd.f32 %v2630, %v2883
    %v2960 = vadd.f32 %v2631, %v2888
    %v2961 = vadd.f32 %v2632, %v2893
    %v2962 = vadd.f32 %v2633, %v2898
    %v2963 = vadd.f32 %v2634, %v2903
    %v2964 = vadd.f32 %v2635, %v2908
    %v2965 = vadd.f32 %v2636, %v2913
    %v2966 = vadd.f32 %v2637, %v2918
    %v2967 = vadd.f32 %v2638, %v2923
    %v2968 = vadd.f32 %v2639, %v2928
    %v2969 = vadd.f32 %v2640, %v2933
    %v2970 = vadd.f32 %v2641, %v2938
    %v2971 = vadd.f32 %v2642, %v2943
    %v2972 = vld [vmem:[%s1 + $0x18b] sm:$0x1]
    %v2973 = vlaneseq
    %v2974 = vshrl.u32 %v2973, 7
    %v2975 = vsub.s32 0, %v2974
    %v2976 = vrot.slane %v2972, %v2975
    %v2977 = vadd.f32 %v2946, %v2976
    %v2978 = vadd.f32 %v2947, %v2976
    %v2979 = vadd.f32 %v2948, %v2976
    %v2980 = vadd.f32 %v2949, %v2976
    %v2981 = vadd.f32 %v2950, %v2976
    %v2982 = vadd.f32 %v2951, %v2976
    %v2983 = vadd.f32 %v2952, %v2976
    %v2984 = vadd.f32 %v2953, %v2976
    %v2985 = vadd.f32 %v2954, %v2976
    %v2986 = vadd.f32 %v2955, %v2976
    %v2987 = vadd.f32 %v2956, %v2976
    %v2988 = vadd.f32 %v2957, %v2976
    %v2989 = vadd.f32 %v2958, %v2976
    %v2990 = vadd.f32 %v2959, %v2976
    %v2991 = vadd.f32 %v2960, %v2976
    %v2992 = vadd.f32 %v2961, %v2976
    %v2993 = vadd.f32 %v2962, %v2976
    %v2994 = vadd.f32 %v2963, %v2976
    %v2995 = vadd.f32 %v2964, %v2976
    %v2996 = vadd.f32 %v2965, %v2976
    %v2997 = vadd.f32 %v2966, %v2976
    %v2998 = vadd.f32 %v2967, %v2976
    %v2999 = vadd.f32 %v2968, %v2976
    %v3000 = vadd.f32 %v2969, %v2976
    %v3001 = vadd.f32 %v2970, %v2976
    %v3002 = vadd.f32 %v2971, %v2976
    %v3003 = vld [vmem:[%s3] sm:$0xff]
    %v3004 = vld [vmem:[%s3 + $0x8] sm:$0xff]
    %v3005 = vld [vmem:[%s3 + $0x10] sm:$0xff]
    %v3006 = vld [vmem:[%s3 + $0x18] sm:$0xff]
    %v3007 = vld [vmem:[%s3 + $0x20] sm:$0xff]
    %v3008 = vld [vmem:[%s3 + $0x28] sm:$0xff]
    %v3009 = vld [vmem:[%s3 + $0x30] sm:$0xff]
    %v3010 = vld [vmem:[%s3 + $0x38] sm:$0xff]
    %v3011 = vld [vmem:[%s3 + $0x40] sm:$0xff]
    %v3012 = vld [vmem:[%s3 + $0x48] sm:$0xff]
    %v3013 = vld [vmem:[%s3 + $0x50] sm:$0xff]
    %v3014 = vld [vmem:[%s3 + $0x58] sm:$0xff]
    %v3015 = vld [vmem:[%s3 + $0x60] sm:$0xff]
    %v3016 = vld [vmem:[%s3 + $0x68] sm:$0xff]
    %v3017 = vld [vmem:[%s3 + $0x70] sm:$0x3]
    %v3018 = vld [vmem:[%s3 + $0x78] sm:$0x3]
    %vm3019 = vcmask 629760
    %v3021 = vsel %vm3019, %v3004, 0
    %v3024 = vsel %vm3019, %v3006, 0
    %v3027 = vsel %vm3019, %v3008, 0
    %v3030 = vsel %vm3019, %v3010, 0
    %v3033 = vsel %vm3019, %v3012, 0
    %v3036 = vsel %vm3019, %v3014, 0
    %v3039 = vsel %vm3019, %v3016, 0
    %v3042 = vsel %vm3019, %v3018, 0
    %vm3044 = vcmask 1044480
    %v3046 = vsel %vm3044, %v3002, 0
    %3048 = vmatprep.subr.mxu0 0.0
    %3049 = vmatpush1.msra.mxu0 %v2977
    %3050 = vmatprep.subr.mxu0 0.0
    %3051 = vmatpush1.msra.mxu0 %v2978
    %3052 = vmatprep.subr.mxu0 0.0
    %3053 = vmatpush1.msra.mxu0 %v2979
    %3054 = vmatprep.subr.mxu0 0.0
    %3055 = vmatpush1.msra.mxu0 %v2980
    %3056 = vmatprep.subr.mxu0 0.0
    %3057 = vmatpush1.msra.mxu0 %v2981
    %3058 = vmatprep.subr.mxu0 0.0
    %3059 = vmatpush1.msra.mxu0 %v2982
    %3060 = vmatprep.subr.mxu0 0.0
    %3061 = vmatpush1.msra.mxu0 %v2983
    %3062 = vmatprep.subr.mxu0 0.0
    %3063 = vmatpush1.msra.mxu0 %v2984
    %3064 = vmatprep.subr.mxu0 0.0
    %3065 = vmatpush1.msra.mxu0 %v2985
    %3066 = vmatprep.subr.mxu0 0.0
    %3067 = vmatpush1.msra.mxu0 %v2986
    %3068 = vmatprep.subr.mxu0 0.0
    %3069 = vmatpush1.msra.mxu0 %v2987
    %3070 = vmatprep.subr.mxu0 0.0
    %3071 = vmatpush1.msra.mxu0 %v2988
    %3072 = vmatprep.subr.mxu0 0.0
    %3073 = vmatpush1.msra.mxu0 %v2989
    %3074 = vmatprep.subr.mxu0 0.0
    %3075 = vmatpush1.msra.mxu0 %v2990
    %3076 = vmatprep.subr.mxu0 0.0
    %3077 = vmatpush1.msra.mxu0 %v2991
    %3078 = vmatprep.subr.mxu0 0.0
    %3079 = vmatpush1.msra.mxu0 %v2992
    %3080 = vmatprep.subr.mxu0 0.0
    %3081 = vmatpush1.msra.mxu0 %v2993
    %3082 = vmatprep.subr.mxu0 0.0
    %3083 = vmatpush1.msra.mxu0 %v2994
    %3084 = vmatprep.subr.mxu0 0.0
    %3085 = vmatpush1.msra.mxu0 %v2995
    %3086 = vmatprep.subr.mxu0 0.0
    %3087 = vmatpush1.msra.mxu0 %v2996
    %3088 = vmatprep.subr.mxu0 0.0
    %3089 = vmatpush1.msra.mxu0 %v2997
    %3090 = vmatprep.subr.mxu0 0.0
    %3091 = vmatpush1.msra.mxu0 %v2998
    %3092 = vmatprep.subr.mxu0 0.0
    %3093 = vmatpush1.msra.mxu0 %v2999
    %3094 = vmatprep.subr.mxu0 0.0
    %3095 = vmatpush1.msra.mxu0 %v3000
    %3096 = vmatprep.subr.mxu0 0.0
    %3097 = vmatpush1.msra.mxu0 %v3001
    %3098 = vmatprep.subr.mxu0 0.0
    %3099 = vmatpush1.msra.mxu0 %v3046
    %3100 = vmatprep.subr.mxu0 0.0
    %3101 = vmatpush1.msra.mxu0 0.0
    %3102 = vmatprep.subr.mxu0 0.0
    %3103 = vmatpush1.msra.mxu0 0.0
    %3104 = vmatprep.subr.mxu0 0.0
    %3105 = vmatpush1.msra.mxu0 0.0
    %3106 = vmatprep.subr.mxu0 0.0
    %3107 = vmatpush1.msra.mxu0 0.0
    %3108 = vmatprep.subr.mxu0 0.0
    %3109 = vmatpush1.msra.mxu0 0.0
    %3110 = vmatprep.subr.mxu0 0.0
    %3111 = vmatpush1.msra.mxu0 0.0
    %3112 = vmatprep.mubr.f32.mxu0 %v3021
    %3113 = vmatmul.mubr.f32.gmra.mrb[0].mxu0 %v3003
    %v3114 = vpop.f32.mrb[0].mxu0
    %v3115 = vadd.f32 0.0, %v3114
    %v3116 = vpop.f32.mrb[0].mxu0
    %3117 = vmatprep.mubr.f32.mxu0 %v3024
    %3118 = vmatmul.mubr.f32.gmra.mrb[0].mxu0 %v3005
    %v3119 = vpop.f32.mrb[0].mxu0
    %v3120 = vadd.f32 0.0, %v3119
    %v3121 = vpop.f32.mrb[0].mxu0
    %3122 = vmatprep.mubr.f32.mxu0 %v3027
    %3123 = vmatmul.mubr.f32.gmra.mrb[0].mxu0 %v3007
    %v3124 = vpop.f32.mrb[0].mxu0
    %v3125 = vadd.f32 0.0, %v3124
    %v3126 = vpop.f32.mrb[0].mxu0
    %3127 = vmatprep.mubr.f32.mxu0 %v3030
    %3128 = vmatmul.mubr.f32.gmra.mrb[0].mxu0 %v3009
    %v3129 = vpop.f32.mrb[0].mxu0
    %v3130 = vadd.f32 0.0, %v3129
    %v3131 = vpop.f32.mrb[0].mxu0
    %3132 = vmatprep.mubr.f32.mxu0 %v3033
    %3133 = vmatmul.mubr.f32.gmra.mrb[0].mxu0 %v3011
    %v3134 = vpop.f32.mrb[0].mxu0
    %v3135 = vadd.f32 0.0, %v3134
    %v3136 = vpop.f32.mrb[0].mxu0
    %3137 = vmatprep.mubr.f32.mxu0 %v3036
    %3138 = vmatmul.mubr.f32.gmra.mrb[0].mxu0 %v3013
    %v3139 = vpop.f32.mrb[0].mxu0
    %v3140 = vadd.f32 0.0, %v3139
    %v3141 = vpop.f32.mrb[0].mxu0
    %3142 = vmatprep.mubr.f32.mxu0 %v3039
    %3143 = vmatmul.mubr.f32.gmra.mrb[0].mxu0 %v3015
    %v3144 = vpop.f32.mrb[0].mxu0
    %v3145 = vadd.f32 0.0, %v3144
    %v3146 = vpop.f32.mrb[0].mxu0
    %3147 = vmatprep.mubr.f32.mxu0 %v3042
    %3148 = vmatmul.mubr.f32.gmra.mrb[0].mxu0 %v3017
    %v3149 = vpop.f32.mrb[0].mxu0
    %v3150 = vadd.f32 0.0, %v3149
    %v3151 = vpop.f32.mrb[0].mxu0
    %3152 = vdwg.mxu0
    %v3153 = vmax.f32 %v3115, 0.0
    %v3154 = vmax.f32 %v3120, 0.0
    %v3155 = vmax.f32 %v3125, 0.0
    %v3156 = vmax.f32 %v3130, 0.0
    %v3157 = vmax.f32 %v3135, 0.0
    %v3158 = vmax.f32 %v3140, 0.0
    %v3159 = vmax.f32 %v3145, 0.0
    %v3160 = vmax.f32 %v3150, 0.0
    %3161 = vst.msk [vmem:[#allocation3] sm:$0xff] %vm363, %v3153
    %3162 = vst.msk [vmem:[#allocation3 + $0x8] sm:$0xff] %vm363, %v3154
    %3163 = vst.msk [vmem:[#allocation3 + $0x10] sm:$0xff] %vm363, %v3155
    %3164 = vst.msk [vmem:[#allocation3 + $0x18] sm:$0xff] %vm363, %v3156
    %3165 = vst.msk [vmem:[#allocation3 + $0x20] sm:$0xff] %vm363, %v3157
    %3166 = vst.msk [vmem:[#allocation3 + $0x28] sm:$0xff] %vm363, %v3158
    %3167 = vst.msk [vmem:[#allocation3 + $0x30] sm:$0xff] %vm363, %v3159
    %vm3168 = vcmask 254976
    %3169 = vst.msk [vmem:[#allocation3 + $0x38] sm:$0x3] %vm3168, %v3160
    %v3170 = vld [vmem:[#allocation3] sm:$0xff]
    %v3171 = vld [vmem:[#allocation3 + $0x8] sm:$0xff]
    %v3172 = vld [vmem:[#allocation3 + $0x10] sm:$0xff]
    %v3173 = vld [vmem:[#allocation3 + $0x18] sm:$0xff]
    %v3174 = vld [vmem:[#allocation3 + $0x20] sm:$0xff]
    %v3175 = vld [vmem:[#allocation3 + $0x28] sm:$0xff]
    %v3176 = vld [vmem:[#allocation3 + $0x30] sm:$0x7f]
    %v3177 = vld [vmem:[%s1 + $0x10b] sm:$0xff]
    %v3178 = vld [vmem:[%s1 + $0x113] sm:$0xff]
    %v3179 = vld [vmem:[%s1 + $0x11b] sm:$0xff]
    %v3180 = vld [vmem:[%s1 + $0x123] sm:$0xff]
    %v3181 = vld [vmem:[#allocation3 + $0x1] sm:$0xff]
    %v3182 = vld [vmem:[#allocation3 + $0x9] sm:$0xff]
    %v3183 = vld [vmem:[#allocation3 + $0x11] sm:$0xff]
    %v3184 = vld [vmem:[#allocation3 + $0x19] sm:$0xff]
    %v3185 = vld [vmem:[#allocation3 + $0x21] sm:$0xff]
    %v3186 = vld [vmem:[#allocation3 + $0x29] sm:$0xff]
    %v3187 = vld [vmem:[#allocation3 + $0x31] sm:$0x7f]
    %v3188 = vld [vmem:[%s1 + $0x12b] sm:$0xff]
    %v3189 = vld [vmem:[%s1 + $0x133] sm:$0xff]
    %v3190 = vld [vmem:[%s1 + $0x13b] sm:$0xff]
    %v3191 = vld [vmem:[%s1 + $0x143] sm:$0xff]
    %v3193 = vsel %vm363, %v3181, 0
    %v3196 = vsel %vm363, %v3182, 0
    %v3199 = vsel %vm363, %v3183, 0
    %v3202 = vsel %vm363, %v3184, 0
    %v3205 = vsel %vm363, %v3185, 0
    %v3208 = vsel %vm363, %v3186, 0
    %v3211 = vsel %vm363, %v3187, 0
    %3213 = vmatprep.subr.mxu0 0.0
    %3214 = vmatpush1.msra.mxu0 %v3188
    %3215 = vmatprep.subr.mxu0 0.0
    %3216 = vmatpush1.msra.mxu0 %v3189
    %3217 = vmatprep.subr.mxu0 0.0
    %3218 = vmatpush1.msra.mxu0 %v3190
    %3219 = vmatprep.subr.mxu0 0.0
    %3220 = vmatpush1.msra.mxu0 %v3191
    %3221 = vmatprep.subr.mxu0 0.0
    %3222 = vmatpush1.msra.mxu0 0.0
    %3223 = vmatprep.subr.mxu0 0.0
    %3224 = vmatpush1.msra.mxu0 0.0
    %3225 = vmatprep.subr.mxu0 0.0
    %3226 = vmatpush1.msra.mxu0 0.0
    %3227 = vmatprep.subr.mxu0 0.0
    %3228 = vmatpush1.msra.mxu0 0.0
    %3229 = vmatprep.subr.mxu0 0.0
    %3230 = vmatpush1.msra.mxu0 0.0
    %3231 = vmatprep.subr.mxu0 0.0
    %3232 = vmatpush1.msra.mxu0 0.0
    %3233 = vmatprep.subr.mxu0 0.0
    %3234 = vmatpush1.msra.mxu0 0.0
    %3235 = vmatprep.subr.mxu0 0.0
    %3236 = vmatpush1.msra.mxu0 0.0
    %3237 = vmatprep.subr.mxu0 0.0
    %3238 = vmatpush1.msra.mxu0 0.0
    %3239 = vmatprep.subr.mxu0 0.0
    %3240 = vmatpush1.msra.mxu0 0.0
    %3241 = vmatprep.subr.mxu0 0.0
    %3242 = vmatpush1.msra.mxu0 0.0
    %3243 = vmatprep.subr.mxu0 0.0
    %3244 = vmatpush1.msra.mxu0 0.0
    %3245 = vmatprep.subr.mxu0 0.0
    %3246 = vmatpush1.msra.mxu0 0.0
    %3247 = vmatprep.subr.mxu0 0.0
    %3248 = vmatpush1.msra.mxu0 0.0
    %3249 = vmatprep.subr.mxu0 0.0
    %3250 = vmatpush1.msra.mxu0 0.0
    %3251 = vmatprep.subr.mxu0 0.0
    %3252 = vmatpush1.msra.mxu0 0.0
    %3253 = vmatprep.subr.mxu0 0.0
    %3254 = vmatpush1.msra.mxu0 0.0
    %3255 = vmatprep.subr.mxu0 0.0
    %3256 = vmatpush1.msra.mxu0 0.0
    %3257 = vmatprep.subr.mxu0 0.0
    %3258 = vmatpush1.msra.mxu0 0.0
    %3259 = vmatprep.subr.mxu0 0.0
    %3260 = vmatpush1.msra.mxu0 0.0
    %3261 = vmatprep.subr.mxu0 0.0
    %3262 = vmatpush1.msra.mxu0 0.0
    %3263 = vmatprep.subr.mxu0 0.0
    %3264 = vmatpush1.msra.mxu0 0.0
    %3265 = vmatprep.subr.mxu0 0.0
    %3266 = vmatpush1.msra.mxu0 0.0
    %3267 = vmatprep.subr.mxu0 0.0
    %3268 = vmatpush1.msra.mxu0 0.0
    %3269 = vmatprep.subr.mxu0 0.0
    %3270 = vmatpush1.msra.mxu0 0.0
    %3271 = vmatprep.subr.mxu0 0.0
    %3272 = vmatpush1.msra.mxu0 0.0
    %3273 = vmatprep.subr.mxu0 0.0
    %3274 = vmatpush1.msra.mxu0 0.0
    %3275 = vmatprep.subr.mxu0 0.0
    %3276 = vmatpush1.msra.mxu0 0.0
    %3277 = vmatprep.mubr.f32.mxu0 0.0
    %3278 = vmatmul.mubr.f32.gmra.mrb[0].mxu0 %v3193
    %v3279 = vpop.f32.mrb[0].mxu0
    %v3280 = vadd.f32 0.0, %v3279
    %v3281 = vpop.f32.mrb[0].mxu0
    %3282 = vmatprep.mubr.f32.mxu0 0.0
    %3283 = vmatmul.mubr.f32.gmra.mrb[0].mxu0 %v3196
    %v3284 = vpop.f32.mrb[0].mxu0
    %v3285 = vadd.f32 0.0, %v3284
    %v3286 = vpop.f32.mrb[0].mxu0
    %3287 = vmatprep.mubr.f32.mxu0 0.0
    %3288 = vmatmul.mubr.f32.gmra.mrb[0].mxu0 %v3199
    %v3289 = vpop.f32.mrb[0].mxu0
    %v3290 = vadd.f32 0.0, %v3289
    %v3291 = vpop.f32.mrb[0].mxu0
    %3292 = vmatprep.mubr.f32.mxu0 0.0
    %3293 = vmatmul.mubr.f32.gmra.mrb[0].mxu0 %v3202
    %v3294 = vpop.f32.mrb[0].mxu0
    %v3295 = vadd.f32 0.0, %v3294
    %v3296 = vpop.f32.mrb[0].mxu0
    %3297 = vmatprep.mubr.f32.mxu0 0.0
    %3298 = vmatmul.mubr.f32.gmra.mrb[0].mxu0 %v3205
    %v3299 = vpop.f32.mrb[0].mxu0
    %v3300 = vadd.f32 0.0, %v3299
    %v3301 = vpop.f32.mrb[0].mxu0
    %3302 = vmatprep.mubr.f32.mxu0 0.0
    %3303 = vmatmul.mubr.f32.gmra.mrb[0].mxu0 %v3208
    %v3304 = vpop.f32.mrb[0].mxu0
    %v3305 = vadd.f32 0.0, %v3304
    %v3306 = vpop.f32.mrb[0].mxu0
    %3307 = vmatprep.mubr.f32.mxu0 0.0
    %3308 = vmatmul.mubr.f32.gmra.mrb[0].mxu0 %v3211
    %v3309 = vpop.f32.mrb[0].mxu0
    %v3310 = vadd.f32 0.0, %v3309
    %v3311 = vpop.f32.mrb[0].mxu0
    %3312 = vdwg.mxu0
    %v3314 = vsel %vm363, %v3170, 0
    %v3317 = vsel %vm363, %v3171, 0
    %v3320 = vsel %vm363, %v3172, 0
    %v3323 = vsel %vm363, %v3173, 0
    %v3326 = vsel %vm363, %v3174, 0
    %v3329 = vsel %vm363, %v3175, 0
    %v3332 = vsel %vm363, %v3176, 0
    %3334 = vmatprep.subr.mxu0 0.0
    %3335 = vmatpush1.msra.mxu0 %v3177
    %3336 = vmatprep.subr.mxu0 0.0
    %3337 = vmatpush1.msra.mxu0 %v3178
    %3338 = vmatprep.subr.mxu0 0.0
    %3339 = vmatpush1.msra.mxu0 %v3179
    %3340 = vmatprep.subr.mxu0 0.0
    %3341 = vmatpush1.msra.mxu0 %v3180
    %3342 = vmatprep.subr.mxu0 0.0
    %3343 = vmatpush1.msra.mxu0 0.0
    %3344 = vmatprep.subr.mxu0 0.0
    %3345 = vmatpush1.msra.mxu0 0.0
    %3346 = vmatprep.subr.mxu0 0.0
    %3347 = vmatpush1.msra.mxu0 0.0
    %3348 = vmatprep.subr.mxu0 0.0
    %3349 = vmatpush1.msra.mxu0 0.0
    %3350 = vmatprep.subr.mxu0 0.0
    %3351 = vmatpush1.msra.mxu0 0.0
    %3352 = vmatprep.subr.mxu0 0.0
    %3353 = vmatpush1.msra.mxu0 0.0
    %3354 = vmatprep.subr.mxu0 0.0
    %3355 = vmatpush1.msra.mxu0 0.0
    %3356 = vmatprep.subr.mxu0 0.0
    %3357 = vmatpush1.msra.mxu0 0.0
    %3358 = vmatprep.subr.mxu0 0.0
    %3359 = vmatpush1.msra.mxu0 0.0
    %3360 = vmatprep.subr.mxu0 0.0
    %3361 = vmatpush1.msra.mxu0 0.0
    %3362 = vmatprep.subr.mxu0 0.0
    %3363 = vmatpush1.msra.mxu0 0.0
    %3364 = vmatprep.subr.mxu0 0.0
    %3365 = vmatpush1.msra.mxu0 0.0
    %3366 = vmatprep.subr.mxu0 0.0
    %3367 = vmatpush1.msra.mxu0 0.0
    %3368 = vmatprep.subr.mxu0 0.0
    %3369 = vmatpush1.msra.mxu0 0.0
    %3370 = vmatprep.subr.mxu0 0.0
    %3371 = vmatpush1.msra.mxu0 0.0
    %3372 = vmatprep.subr.mxu0 0.0
    %3373 = vmatpush1.msra.mxu0 0.0
    %3374 = vmatprep.subr.mxu0 0.0
    %3375 = vmatpush1.msra.mxu0 0.0
    %3376 = vmatprep.subr.mxu0 0.0
    %3377 = vmatpush1.msra.mxu0 0.0
    %3378 = vmatprep.subr.mxu0 0.0
    %3379 = vmatpush1.msra.mxu0 0.0
    %3380 = vmatprep.subr.mxu0 0.0
    %3381 = vmatpush1.msra.mxu0 0.0
    %3382 = vmatprep.subr.mxu0 0.0
    %3383 = vmatpush1.msra.mxu0 0.0
    %3384 = vmatprep.subr.mxu0 0.0
    %3385 = vmatpush1.msra.mxu0 0.0
    %3386 = vmatprep.subr.mxu0 0.0
    %3387 = vmatpush1.msra.mxu0 0.0
    %3388 = vmatprep.subr.mxu0 0.0
    %3389 = vmatpush1.msra.mxu0 0.0
    %3390 = vmatprep.subr.mxu0 0.0
    %3391 = vmatpush1.msra.mxu0 0.0
    %3392 = vmatprep.subr.mxu0 0.0
    %3393 = vmatpush1.msra.mxu0 0.0
    %3394 = vmatprep.subr.mxu0 0.0
    %3395 = vmatpush1.msra.mxu0 0.0
    %3396 = vmatprep.subr.mxu0 0.0
    %3397 = vmatpush1.msra.mxu0 0.0
    %3398 = vmatprep.mubr.f32.mxu0 0.0
    %3399 = vmatmul.mubr.f32.gmra.mrb[0].mxu0 %v3314
    %v3400 = vpop.f32.mrb[0].mxu0
    %v3401 = vadd.f32 %v3280, %v3400
    %v3402 = vpop.f32.mrb[0].mxu0
    %3403 = vmatprep.mubr.f32.mxu0 0.0
    %3404 = vmatmul.mubr.f32.gmra.mrb[0].mxu0 %v3317
    %v3405 = vpop.f32.mrb[0].mxu0
    %v3406 = vadd.f32 %v3285, %v3405
    %v3407 = vpop.f32.mrb[0].mxu0
    %3408 = vmatprep.mubr.f32.mxu0 0.0
    %3409 = vmatmul.mubr.f32.gmra.mrb[0].mxu0 %v3320
    %v3410 = vpop.f32.mrb[0].mxu0
    %v3411 = vadd.f32 %v3290, %v3410
    %v3412 = vpop.f32.mrb[0].mxu0
    %3413 = vmatprep.mubr.f32.mxu0 0.0
    %3414 = vmatmul.mubr.f32.gmra.mrb[0].mxu0 %v3323
    %v3415 = vpop.f32.mrb[0].mxu0
    %v3416 = vadd.f32 %v3295, %v3415
    %v3417 = vpop.f32.mrb[0].mxu0
    %3418 = vmatprep.mubr.f32.mxu0 0.0
    %3419 = vmatmul.mubr.f32.gmra.mrb[0].mxu0 %v3326
    %v3420 = vpop.f32.mrb[0].mxu0
    %v3421 = vadd.f32 %v3300, %v3420
    %v3422 = vpop.f32.mrb[0].mxu0
    %3423 = vmatprep.mubr.f32.mxu0 0.0
    %3424 = vmatmul.mubr.f32.gmra.mrb[0].mxu0 %v3329
    %v3425 = vpop.f32.mrb[0].mxu0
    %v3426 = vadd.f32 %v3305, %v3425
    %v3427 = vpop.f32.mrb[0].mxu0
    %3428 = vmatprep.mubr.f32.mxu0 0.0
    %3429 = vmatmul.mubr.f32.gmra.mrb[0].mxu0 %v3332
    %v3430 = vpop.f32.mrb[0].mxu0
    %v3431 = vadd.f32 %v3310, %v3430
    %v3432 = vpop.f32.mrb[0].mxu0
    %3433 = vdwg.mxu0
    %v3434 = vld [vmem:[#allocation3 + $0x2] sm:$0xff]
    %v3435 = vld [vmem:[#allocation3 + $0xa] sm:$0xff]
    %v3436 = vld [vmem:[#allocation3 + $0x12] sm:$0xff]
    %v3437 = vld [vmem:[#allocation3 + $0x1a] sm:$0xff]
    %v3438 = vld [vmem:[#allocation3 + $0x22] sm:$0xff]
    %v3439 = vld [vmem:[#allocation3 + $0x2a] sm:$0xff]
    %v3440 = vld [vmem:[#allocation3 + $0x32] sm:$0x7f]
    %v3441 = vld [vmem:[%s1 + $0x14b] sm:$0xff]
    %v3442 = vld [vmem:[%s1 + $0x153] sm:$0xff]
    %v3443 = vld [vmem:[%s1 + $0x15b] sm:$0xff]
    %v3444 = vld [vmem:[%s1 + $0x163] sm:$0xff]
    %v3446 = vsel %vm363, %v3434, 0
    %v3449 = vsel %vm363, %v3435, 0
    %v3452 = vsel %vm363, %v3436, 0
    %v3455 = vsel %vm363, %v3437, 0
    %v3458 = vsel %vm363, %v3438, 0
    %v3461 = vsel %vm363, %v3439, 0
    %v3464 = vsel %vm363, %v3440, 0
    %3466 = vmatprep.subr.mxu0 0.0
    %3467 = vmatpush1.msra.mxu0 %v3441
    %3468 = vmatprep.subr.mxu0 0.0
    %3469 = vmatpush1.msra.mxu0 %v3442
    %3470 = vmatprep.subr.mxu0 0.0
    %3471 = vmatpush1.msra.mxu0 %v3443
    %3472 = vmatprep.subr.mxu0 0.0
    %3473 = vmatpush1.msra.mxu0 %v3444
    %3474 = vmatprep.subr.mxu0 0.0
    %3475 = vmatpush1.msra.mxu0 0.0
    %3476 = vmatprep.subr.mxu0 0.0
    %3477 = vmatpush1.msra.mxu0 0.0
    %3478 = vmatprep.subr.mxu0 0.0
    %3479 = vmatpush1.msra.mxu0 0.0
    %3480 = vmatprep.subr.mxu0 0.0
    %3481 = vmatpush1.msra.mxu0 0.0
    %3482 = vmatprep.subr.mxu0 0.0
    %3483 = vmatpush1.msra.mxu0 0.0
    %3484 = vmatprep.subr.mxu0 0.0
    %3485 = vmatpush1.msra.mxu0 0.0
    %3486 = vmatprep.subr.mxu0 0.0
    %3487 = vmatpush1.msra.mxu0 0.0
    %3488 = vmatprep.subr.mxu0 0.0
    %3489 = vmatpush1.msra.mxu0 0.0
    %3490 = vmatprep.subr.mxu0 0.0
    %3491 = vmatpush1.msra.mxu0 0.0
    %3492 = vmatprep.subr.mxu0 0.0
    %3493 = vmatpush1.msra.mxu0 0.0
    %3494 = vmatprep.subr.mxu0 0.0
    %3495 = vmatpush1.msra.mxu0 0.0
    %3496 = vmatprep.subr.mxu0 0.0
    %3497 = vmatpush1.msra.mxu0 0.0
    %3498 = vmatprep.subr.mxu0 0.0
    %3499 = vmatpush1.msra.mxu0 0.0
    %3500 = vmatprep.subr.mxu0 0.0
    %3501 = vmatpush1.msra.mxu0 0.0
    %3502 = vmatprep.subr.mxu0 0.0
    %3503 = vmatpush1.msra.mxu0 0.0
    %3504 = vmatprep.subr.mxu0 0.0
    %3505 = vmatpush1.msra.mxu0 0.0
    %3506 = vmatprep.subr.mxu0 0.0
    %3507 = vmatpush1.msra.mxu0 0.0
    %3508 = vmatprep.subr.mxu0 0.0
    %3509 = vmatpush1.msra.mxu0 0.0
    %3510 = vmatprep.subr.mxu0 0.0
    %3511 = vmatpush1.msra.mxu0 0.0
    %3512 = vmatprep.subr.mxu0 0.0
    %3513 = vmatpush1.msra.mxu0 0.0
    %3514 = vmatprep.subr.mxu0 0.0
    %3515 = vmatpush1.msra.mxu0 0.0
    %3516 = vmatprep.subr.mxu0 0.0
    %3517 = vmatpush1.msra.mxu0 0.0
    %3518 = vmatprep.subr.mxu0 0.0
    %3519 = vmatpush1.msra.mxu0 0.0
    %3520 = vmatprep.subr.mxu0 0.0
    %3521 = vmatpush1.msra.mxu0 0.0
    %3522 = vmatprep.subr.mxu0 0.0
    %3523 = vmatpush1.msra.mxu0 0.0
    %3524 = vmatprep.subr.mxu0 0.0
    %3525 = vmatpush1.msra.mxu0 0.0
    %3526 = vmatprep.subr.mxu0 0.0
    %3527 = vmatpush1.msra.mxu0 0.0
    %3528 = vmatprep.subr.mxu0 0.0
    %3529 = vmatpush1.msra.mxu0 0.0
    %3530 = vmatprep.mubr.f32.mxu0 0.0
    %3531 = vmatmul.mubr.f32.gmra.mrb[0].mxu0 %v3446
    %v3532 = vpop.f32.mrb[0].mxu0
    %v3533 = vadd.f32 0.0, %v3532
    %v3534 = vpop.f32.mrb[0].mxu0
    %3535 = vmatprep.mubr.f32.mxu0 0.0
    %3536 = vmatmul.mubr.f32.gmra.mrb[0].mxu0 %v3449
    %v3537 = vpop.f32.mrb[0].mxu0
    %v3538 = vadd.f32 0.0, %v3537
    %v3539 = vpop.f32.mrb[0].mxu0
    %3540 = vmatprep.mubr.f32.mxu0 0.0
    %3541 = vmatmul.mubr.f32.gmra.mrb[0].mxu0 %v3452
    %v3542 = vpop.f32.mrb[0].mxu0
    %v3543 = vadd.f32 0.0, %v3542
    %v3544 = vpop.f32.mrb[0].mxu0
    %3545 = vmatprep.mubr.f32.mxu0 0.0
    %3546 = vmatmul.mubr.f32.gmra.mrb[0].mxu0 %v3455
    %v3547 = vpop.f32.mrb[0].mxu0
    %v3548 = vadd.f32 0.0, %v3547
    %v3549 = vpop.f32.mrb[0].mxu0
    %3550 = vmatprep.mubr.f32.mxu0 0.0
    %3551 = vmatmul.mubr.f32.gmra.mrb[0].mxu0 %v3458
    %v3552 = vpop.f32.mrb[0].mxu0
    %v3553 = vadd.f32 0.0, %v3552
    %v3554 = vpop.f32.mrb[0].mxu0
    %3555 = vmatprep.mubr.f32.mxu0 0.0
    %3556 = vmatmul.mubr.f32.gmra.mrb[0].mxu0 %v3461
    %v3557 = vpop.f32.mrb[0].mxu0
    %v3558 = vadd.f32 0.0, %v3557
    %v3559 = vpop.f32.mrb[0].mxu0
    %3560 = vmatprep.mubr.f32.mxu0 0.0
    %3561 = vmatmul.mubr.f32.gmra.mrb[0].mxu0 %v3464
    %v3562 = vpop.f32.mrb[0].mxu0
    %v3563 = vadd.f32 0.0, %v3562
    %v3564 = vpop.f32.mrb[0].mxu0
    %3565 = vdwg.mxu0
    %v3566 = vadd.f32 %v3401, %v3533
    %v3567 = vadd.f32 %v3406, %v3538
    %v3568 = vadd.f32 %v3411, %v3543
    %v3569 = vadd.f32 %v3416, %v3548
    %v3570 = vadd.f32 %v3421, %v3553
    %v3571 = vadd.f32 %v3426, %v3558
    %v3572 = vadd.f32 %v3431, %v3563
    %v3573 = vld [vmem:[#allocation3 + $0x3] sm:$0xff]
    %v3574 = vld [vmem:[#allocation3 + $0xb] sm:$0xff]
    %v3575 = vld [vmem:[#allocation3 + $0x13] sm:$0xff]
    %v3576 = vld [vmem:[#allocation3 + $0x1b] sm:$0xff]
    %v3577 = vld [vmem:[#allocation3 + $0x23] sm:$0xff]
    %v3578 = vld [vmem:[#allocation3 + $0x2b] sm:$0xff]
    %v3579 = vld [vmem:[#allocation3 + $0x33] sm:$0x7f]
    %v3580 = vld [vmem:[%s1 + $0x16b] sm:$0xff]
    %v3581 = vld [vmem:[%s1 + $0x173] sm:$0xff]
    %v3582 = vld [vmem:[%s1 + $0x17b] sm:$0xff]
    %v3583 = vld [vmem:[%s1 + $0x183] sm:$0xff]
    %v3585 = vsel %vm363, %v3573, 0
    %v3588 = vsel %vm363, %v3574, 0
    %v3591 = vsel %vm363, %v3575, 0
    %v3594 = vsel %vm363, %v3576, 0
    %v3597 = vsel %vm363, %v3577, 0
    %v3600 = vsel %vm363, %v3578, 0
    %v3603 = vsel %vm363, %v3579, 0
    %3605 = vmatprep.subr.mxu0 0.0
    %3606 = vmatpush1.msra.mxu0 %v3580
    %3607 = vmatprep.subr.mxu0 0.0
    %3608 = vmatpush1.msra.mxu0 %v3581
    %3609 = vmatprep.subr.mxu0 0.0
    %3610 = vmatpush1.msra.mxu0 %v3582
    %3611 = vmatprep.subr.mxu0 0.0
    %3612 = vmatpush1.msra.mxu0 %v3583
    %3613 = vmatprep.subr.mxu0 0.0
    %3614 = vmatpush1.msra.mxu0 0.0
    %3615 = vmatprep.subr.mxu0 0.0
    %3616 = vmatpush1.msra.mxu0 0.0
    %3617 = vmatprep.subr.mxu0 0.0
    %3618 = vmatpush1.msra.mxu0 0.0
    %3619 = vmatprep.subr.mxu0 0.0
    %3620 = vmatpush1.msra.mxu0 0.0
    %3621 = vmatprep.subr.mxu0 0.0
    %3622 = vmatpush1.msra.mxu0 0.0
    %3623 = vmatprep.subr.mxu0 0.0
    %3624 = vmatpush1.msra.mxu0 0.0
    %3625 = vmatprep.subr.mxu0 0.0
    %3626 = vmatpush1.msra.mxu0 0.0
    %3627 = vmatprep.subr.mxu0 0.0
    %3628 = vmatpush1.msra.mxu0 0.0
    %3629 = vmatprep.subr.mxu0 0.0
    %3630 = vmatpush1.msra.mxu0 0.0
    %3631 = vmatprep.subr.mxu0 0.0
    %3632 = vmatpush1.msra.mxu0 0.0
    %3633 = vmatprep.subr.mxu0 0.0
    %3634 = vmatpush1.msra.mxu0 0.0
    %3635 = vmatprep.subr.mxu0 0.0
    %3636 = vmatpush1.msra.mxu0 0.0
    %3637 = vmatprep.subr.mxu0 0.0
    %3638 = vmatpush1.msra.mxu0 0.0
    %3639 = vmatprep.subr.mxu0 0.0
    %3640 = vmatpush1.msra.mxu0 0.0
    %3641 = vmatprep.subr.mxu0 0.0
    %3642 = vmatpush1.msra.mxu0 0.0
    %3643 = vmatprep.subr.mxu0 0.0
    %3644 = vmatpush1.msra.mxu0 0.0
    %3645 = vmatprep.subr.mxu0 0.0
    %3646 = vmatpush1.msra.mxu0 0.0
    %3647 = vmatprep.subr.mxu0 0.0
    %3648 = vmatpush1.msra.mxu0 0.0
    %3649 = vmatprep.subr.mxu0 0.0
    %3650 = vmatpush1.msra.mxu0 0.0
    %3651 = vmatprep.subr.mxu0 0.0
    %3652 = vmatpush1.msra.mxu0 0.0
    %3653 = vmatprep.subr.mxu0 0.0
    %3654 = vmatpush1.msra.mxu0 0.0
    %3655 = vmatprep.subr.mxu0 0.0
    %3656 = vmatpush1.msra.mxu0 0.0
    %3657 = vmatprep.subr.mxu0 0.0
    %3658 = vmatpush1.msra.mxu0 0.0
    %3659 = vmatprep.subr.mxu0 0.0
    %3660 = vmatpush1.msra.mxu0 0.0
    %3661 = vmatprep.subr.mxu0 0.0
    %3662 = vmatpush1.msra.mxu0 0.0
    %3663 = vmatprep.subr.mxu0 0.0
    %3664 = vmatpush1.msra.mxu0 0.0
    %3665 = vmatprep.subr.mxu0 0.0
    %3666 = vmatpush1.msra.mxu0 0.0
    %3667 = vmatprep.subr.mxu0 0.0
    %3668 = vmatpush1.msra.mxu0 0.0
    %3669 = vmatprep.mubr.f32.mxu0 0.0
    %3670 = vmatmul.mubr.f32.gmra.mrb[0].mxu0 %v3585
    %v3671 = vpop.f32.mrb[0].mxu0
    %v3672 = vadd.f32 0.0, %v3671
    %v3673 = vpop.f32.mrb[0].mxu0
    %3674 = vmatprep.mubr.f32.mxu0 0.0
    %3675 = vmatmul.mubr.f32.gmra.mrb[0].mxu0 %v3588
    %v3676 = vpop.f32.mrb[0].mxu0
    %v3677 = vadd.f32 0.0, %v3676
    %v3678 = vpop.f32.mrb[0].mxu0
    %3679 = vmatprep.mubr.f32.mxu0 0.0
    %3680 = vmatmul.mubr.f32.gmra.mrb[0].mxu0 %v3591
    %v3681 = vpop.f32.mrb[0].mxu0
    %v3682 = vadd.f32 0.0, %v3681
    %v3683 = vpop.f32.mrb[0].mxu0
    %3684 = vmatprep.mubr.f32.mxu0 0.0
    %3685 = vmatmul.mubr.f32.gmra.mrb[0].mxu0 %v3594
    %v3686 = vpop.f32.mrb[0].mxu0
    %v3687 = vadd.f32 0.0, %v3686
    %v3688 = vpop.f32.mrb[0].mxu0
    %3689 = vmatprep.mubr.f32.mxu0 0.0
    %3690 = vmatmul.mubr.f32.gmra.mrb[0].mxu0 %v3597
    %v3691 = vpop.f32.mrb[0].mxu0
    %v3692 = vadd.f32 0.0, %v3691
    %v3693 = vpop.f32.mrb[0].mxu0
    %3694 = vmatprep.mubr.f32.mxu0 0.0
    %3695 = vmatmul.mubr.f32.gmra.mrb[0].mxu0 %v3600
    %v3696 = vpop.f32.mrb[0].mxu0
    %v3697 = vadd.f32 0.0, %v3696
    %v3698 = vpop.f32.mrb[0].mxu0
    %3699 = vmatprep.mubr.f32.mxu0 0.0
    %3700 = vmatmul.mubr.f32.gmra.mrb[0].mxu0 %v3603
    %v3701 = vpop.f32.mrb[0].mxu0
    %v3702 = vadd.f32 0.0, %v3701
    %v3703 = vpop.f32.mrb[0].mxu0
    %3704 = vdwg.mxu0
    %v3705 = vadd.f32 %v3566, %v3672
    %v3706 = vadd.f32 %v3567, %v3677
    %v3707 = vadd.f32 %v3568, %v3682
    %v3708 = vadd.f32 %v3569, %v3687
    %v3709 = vadd.f32 %v3570, %v3692
    %v3710 = vadd.f32 %v3571, %v3697
    %v3711 = vadd.f32 %v3572, %v3702
    %v3712 = vld [vmem:[%s1 + $0x18c] sm:$0x1]
    %v3713 = vlaneseq
    %v3714 = vshrl.u32 %v3713, 7
    %v3715 = vsub.s32 0, %v3714
    %v3716 = vrot.slane %v3712, %v3715
    %v3717 = vadd.f32 %v3705, %v3716
    %v3718 = vadd.f32 %v3706, %v3716
    %v3719 = vadd.f32 %v3707, %v3716
    %v3720 = vadd.f32 %v3708, %v3716
    %v3721 = vadd.f32 %v3709, %v3716
    %v3722 = vadd.f32 %v3710, %v3716
    %v3723 = vadd.f32 %v3711, %v3716
    %v3724 = vmax.f32 %v3717, 0.0
    %v3725 = vmax.f32 %v3718, 0.0
    %v3726 = vmax.f32 %v3719, 0.0
    %v3727 = vmax.f32 %v3720, 0.0
    %v3728 = vmax.f32 %v3721, 0.0
    %v3729 = vmax.f32 %v3722, 0.0
    %v3730 = vmax.f32 %v3723, 0.0
    %v3731 = vld [vmem:[%s3 + $0x140] sm:$0xfc]
    %v3732 = vld [vmem:[%s3 + $0x150] sm:$0xff]
    %v3733 = vld [vmem:[%s3 + $0x160] sm:$0xff]
    %v3734 = vld [vmem:[%s3 + $0x170] sm:$0xf]
    %vm3739 = vcmask 1045504
    %v3740 = vrot.slane %v3731, 2
    %v3741 = vrot.slane %v3732, 2
    %v3742 = vsel %vm3739, %v3740, %v3741
    %v3743 = vrot.slane %v3733, 2
    %v3744 = vsel %vm3739, %v3741, %v3743
    %v3745 = vrot.slane %v3734, 2
    %v3746 = vsel %vm3739, %v3743, %v3745
    %vm3747 = vcmask 449536
    %v3748 = vsel %vm3747, %v3742, 0
    %v3750 = vsel %vm3747, %v3744, 0
    %v3752 = vsel %vm3747, %v3746, 0
    %v3754 = vsel %vm3747, %v3745, 0
    %vm3756 = vcmask 1046528
    %v3758 = vsel %vm3756, %v3730, 0
    %3760 = vmatprep.subr.mxu0 0.0
    %3761 = vmatpush1.msra.mxu0 %v3724
    %3762 = vmatprep.subr.mxu0 0.0
    %3763 = vmatpush1.msra.mxu0 %v3725
    %3764 = vmatprep.subr.mxu0 0.0
    %3765 = vmatpush1.msra.mxu0 %v3726
    %3766 = vmatprep.subr.mxu0 0.0
    %3767 = vmatpush1.msra.mxu0 %v3727
    %3768 = vmatprep.subr.mxu0 0.0
    %3769 = vmatpush1.msra.mxu0 %v3728
    %3770 = vmatprep.subr.mxu0 0.0
    %3771 = vmatpush1.msra.mxu0 %v3729
    %3772 = vmatprep.subr.mxu0 0.0
    %3773 = vmatpush1.msra.mxu0 %v3758
    %3774 = vmatprep.subr.mxu0 0.0
    %3775 = vmatpush1.msra.mxu0 0.0
    %3776 = vmatprep.subr.mxu0 0.0
    %3777 = vmatpush1.msra.mxu0 0.0
    %3778 = vmatprep.subr.mxu0 0.0
    %3779 = vmatpush1.msra.mxu0 0.0
    %3780 = vmatprep.subr.mxu0 0.0
    %3781 = vmatpush1.msra.mxu0 0.0
    %3782 = vmatprep.subr.mxu0 0.0
    %3783 = vmatpush1.msra.mxu0 0.0
    %3784 = vmatprep.subr.mxu0 0.0
    %3785 = vmatpush1.msra.mxu0 0.0
    %3786 = vmatprep.subr.mxu0 0.0
    %3787 = vmatpush1.msra.mxu0 0.0
    %3788 = vmatprep.subr.mxu0 0.0
    %3789 = vmatpush1.msra.mxu0 0.0
    %3790 = vmatprep.subr.mxu0 0.0
    %3791 = vmatpush1.msra.mxu0 0.0
    %3792 = vmatprep.subr.mxu0 0.0
    %3793 = vmatpush1.msra.mxu0 0.0
    %3794 = vmatprep.subr.mxu0 0.0
    %3795 = vmatpush1.msra.mxu0 0.0
    %3796 = vmatprep.subr.mxu0 0.0
    %3797 = vmatpush1.msra.mxu0 0.0
    %3798 = vmatprep.subr.mxu0 0.0
    %3799 = vmatpush1.msra.mxu0 0.0
    %3800 = vmatprep.subr.mxu0 0.0
    %3801 = vmatpush1.msra.mxu0 0.0
    %3802 = vmatprep.subr.mxu0 0.0
    %3803 = vmatpush1.msra.mxu0 0.0
    %3804 = vmatprep.subr.mxu0 0.0
    %3805 = vmatpush1.msra.mxu0 0.0
    %3806 = vmatprep.subr.mxu0 0.0
    %3807 = vmatpush1.msra.mxu0 0.0
    %3808 = vmatprep.subr.mxu0 0.0
    %3809 = vmatpush1.msra.mxu0 0.0
    %3810 = vmatprep.subr.mxu0 0.0
    %3811 = vmatpush1.msra.mxu0 0.0
    %3812 = vmatprep.subr.mxu0 0.0
    %3813 = vmatpush1.msra.mxu0 0.0
    %3814 = vmatprep.subr.mxu0 0.0
    %3815 = vmatpush1.msra.mxu0 0.0
    %3816 = vmatprep.subr.mxu0 0.0
    %3817 = vmatpush1.msra.mxu0 0.0
    %3818 = vmatprep.subr.mxu0 0.0
    %3819 = vmatpush1.msra.mxu0 0.0
    %3820 = vmatprep.subr.mxu0 0.0
    %3821 = vmatpush1.msra.mxu0 0.0
    %3822 = vmatprep.subr.mxu0 0.0
    %3823 = vmatpush1.msra.mxu0 0.0
    %3824 = vmatprep.mubr.f32.mxu0 0.0
    %3825 = vmatmul.mubr.f32.gmra.mrb[0].mxu0 %v3748
    %v3826 = vpop.f32.mrb[0].mxu0
    %v3827 = vadd.f32 0.0, %v3826
    %v3828 = vpop.f32.mrb[0].mxu0
    %3829 = vmatprep.mubr.f32.mxu0 0.0
    %3830 = vmatmul.mubr.f32.gmra.mrb[0].mxu0 %v3750
    %v3831 = vpop.f32.mrb[0].mxu0
    %v3832 = vadd.f32 0.0, %v3831
    %v3833 = vpop.f32.mrb[0].mxu0
    %3834 = vmatprep.mubr.f32.mxu0 0.0
    %3835 = vmatmul.mubr.f32.gmra.mrb[0].mxu0 %v3752
    %v3836 = vpop.f32.mrb[0].mxu0
    %v3837 = vadd.f32 0.0, %v3836
    %v3838 = vpop.f32.mrb[0].mxu0
    %3839 = vmatprep.mubr.f32.mxu0 0.0
    %3840 = vmatmul.mubr.f32.gmra.mrb[0].mxu0 %v3754
    %v3841 = vpop.f32.mrb[0].mxu0
    %v3842 = vadd.f32 0.0, %v3841
    %v3843 = vpop.f32.mrb[0].mxu0
    %3844 = vdwg.mxu0
    %v3845 = vld [vmem:[%s3 + $0x70] sm:$0xfc]
    %v3846 = vld [vmem:[%s3 + $0x80] sm:$0xff]
    %v3847 = vld [vmem:[%s3 + $0x90] sm:$0xff]
    %v3848 = vld [vmem:[%s3 + $0xa0] sm:$0xff]
    %v3849 = vld [vmem:[%s3 + $0xb0] sm:$0xff]
    %v3850 = vld [vmem:[%s3 + $0xc0] sm:$0xff]
    %v3851 = vld [vmem:[%s3 + $0xd0] sm:$0xff]
    %v3852 = vld [vmem:[%s3 + $0xe0] sm:$0xff]
    %v3853 = vld [vmem:[%s3 + $0xf0] sm:$0xff]
    %v3854 = vld [vmem:[%s3 + $0x100] sm:$0xff]
    %v3855 = vld [vmem:[%s3 + $0x110] sm:$0xff]
    %v3856 = vld [vmem:[%s3 + $0x120] sm:$0xff]
    %v3857 = vld [vmem:[%s3 + $0x130] sm:$0xff]
    %v3858 = vld [vmem:[%s3 + $0x140] sm:$0x3]
    %v3873 = vrot.slane %v3845, 2
    %v3874 = vrot.slane %v3846, 2
    %v3875 = vsel %vm3739, %v3873, %v3874
    %v3876 = vrot.slane %v3847, 2
    %v3877 = vsel %vm3739, %v3874, %v3876
    %v3878 = vrot.slane %v3848, 2
    %v3879 = vsel %vm3739, %v3876, %v3878
    %v3880 = vrot.slane %v3849, 2
    %v3881 = vsel %vm3739, %v3878, %v3880
    %v3882 = vrot.slane %v3850, 2
    %v3883 = vsel %vm3739, %v3880, %v3882
    %v3884 = vrot.slane %v3851, 2
    %v3885 = vsel %vm3739, %v3882, %v3884
    %v3886 = vrot.slane %v3852, 2
    %v3887 = vsel %vm3739, %v3884, %v3886
    %v3888 = vrot.slane %v3853, 2
    %v3889 = vsel %vm3739, %v3886, %v3888
    %v3890 = vrot.slane %v3854, 2
    %v3891 = vsel %vm3739, %v3888, %v3890
    %v3892 = vrot.slane %v3855, 2
    %v3893 = vsel %vm3739, %v3890, %v3892
    %v3894 = vrot.slane %v3856, 2
    %v3895 = vsel %vm3739, %v3892, %v3894
    %v3896 = vrot.slane %v3857, 2
    %v3897 = vsel %vm3739, %v3894, %v3896
    %v3898 = vrot.slane %v3858, 2
    %v3899 = vsel %vm3739, %v3896, %v3898
    %v3900 = vsel %vm3747, %v3875, 0
    %v3902 = vsel %vm3747, %v3877, 0
    %v3904 = vsel %vm3747, %v3879, 0
    %v3906 = vsel %vm3747, %v3881, 0
    %v3908 = vsel %vm3747, %v3883, 0
    %v3910 = vsel %vm3747, %v3885, 0
    %v3912 = vsel %vm3747, %v3887, 0
    %v3914 = vsel %vm3747, %v3889, 0
    %v3916 = vsel %vm3747, %v3891, 0
    %v3918 = vsel %vm3747, %v3893, 0
    %v3920 = vsel %vm3747, %v3895, 0
    %v3922 = vsel %vm3747, %v3897, 0
    %v3924 = vsel %vm3747, %v3899, 0
    %3926 = vmatprep.subr.mxu0 0.0
    %3927 = vmatpush1.msra.mxu0 %v3724
    %3928 = vmatprep.subr.mxu0 0.0
    %3929 = vmatpush1.msra.mxu0 %v3725
    %3930 = vmatprep.subr.mxu0 0.0
    %3931 = vmatpush1.msra.mxu0 %v3726
    %3932 = vmatprep.subr.mxu0 0.0
    %3933 = vmatpush1.msra.mxu0 %v3727
    %3934 = vmatprep.subr.mxu0 0.0
    %3935 = vmatpush1.msra.mxu0 %v3728
    %3936 = vmatprep.subr.mxu0 0.0
    %3937 = vmatpush1.msra.mxu0 %v3729
    %3938 = vmatprep.subr.mxu0 0.0
    %3939 = vmatpush1.msra.mxu0 %v3758
    %3940 = vmatprep.subr.mxu0 0.0
    %3941 = vmatpush1.msra.mxu0 0.0
    %3942 = vmatprep.subr.mxu0 0.0
    %3943 = vmatpush1.msra.mxu0 0.0
    %3944 = vmatprep.subr.mxu0 0.0
    %3945 = vmatpush1.msra.mxu0 0.0
    %3946 = vmatprep.subr.mxu0 0.0
    %3947 = vmatpush1.msra.mxu0 0.0
    %3948 = vmatprep.subr.mxu0 0.0
    %3949 = vmatpush1.msra.mxu0 0.0
    %3950 = vmatprep.subr.mxu0 0.0
    %3951 = vmatpush1.msra.mxu0 0.0
    %3952 = vmatprep.subr.mxu0 0.0
    %3953 = vmatpush1.msra.mxu0 0.0
    %3954 = vmatprep.subr.mxu0 0.0
    %3955 = vmatpush1.msra.mxu0 0.0
    %3956 = vmatprep.subr.mxu0 0.0
    %3957 = vmatpush1.msra.mxu0 0.0
    %3958 = vmatprep.subr.mxu0 0.0
    %3959 = vmatpush1.msra.mxu0 0.0
    %3960 = vmatprep.subr.mxu0 0.0
    %3961 = vmatpush1.msra.mxu0 0.0
    %3962 = vmatprep.subr.mxu0 0.0
    %3963 = vmatpush1.msra.mxu0 0.0
    %3964 = vmatprep.subr.mxu0 0.0
    %3965 = vmatpush1.msra.mxu0 0.0
    %3966 = vmatprep.subr.mxu0 0.0
    %3967 = vmatpush1.msra.mxu0 0.0
    %3968 = vmatprep.subr.mxu0 0.0
    %3969 = vmatpush1.msra.mxu0 0.0
    %3970 = vmatprep.subr.mxu0 0.0
    %3971 = vmatpush1.msra.mxu0 0.0
    %3972 = vmatprep.subr.mxu0 0.0
    %3973 = vmatpush1.msra.mxu0 0.0
    %3974 = vmatprep.subr.mxu0 0.0
    %3975 = vmatpush1.msra.mxu0 0.0
    %3976 = vmatprep.subr.mxu0 0.0
    %3977 = vmatpush1.msra.mxu0 0.0
    %3978 = vmatprep.subr.mxu0 0.0
    %3979 = vmatpush1.msra.mxu0 0.0
    %3980 = vmatprep.subr.mxu0 0.0
    %3981 = vmatpush1.msra.mxu0 0.0
    %3982 = vmatprep.subr.mxu0 0.0
    %3983 = vmatpush1.msra.mxu0 0.0
    %3984 = vmatprep.subr.mxu0 0.0
    %3985 = vmatpush1.msra.mxu0 0.0
    %3986 = vmatprep.subr.mxu0 0.0
    %3987 = vmatpush1.msra.mxu0 0.0
    %3988 = vmatprep.subr.mxu0 0.0
    %3989 = vmatpush1.msra.mxu0 0.0
    %3990 = vmatprep.mubr.f32.mxu0 0.0
    %3991 = vmatmul.mubr.f32.gmra.mrb[0].mxu0 %v3900
    %v3992 = vpop.f32.mrb[0].mxu0
    %v3993 = vadd.f32 0.0, %v3992
    %v3994 = vpop.f32.mrb[0].mxu0
    %3995 = vmatprep.mubr.f32.mxu0 0.0
    %3996 = vmatmul.mubr.f32.gmra.mrb[0].mxu0 %v3902
    %v3997 = vpop.f32.mrb[0].mxu0
    %v3998 = vadd.f32 0.0, %v3997
    %v3999 = vpop.f32.mrb[0].mxu0
    %4000 = vmatprep.mubr.f32.mxu0 0.0
    %4001 = vmatmul.mubr.f32.gmra.mrb[0].mxu0 %v3904
    %v4002 = vpop.f32.mrb[0].mxu0
    %v4003 = vadd.f32 0.0, %v4002
    %v4004 = vpop.f32.mrb[0].mxu0
    %4005 = vmatprep.mubr.f32.mxu0 0.0
    %4006 = vmatmul.mubr.f32.gmra.mrb[0].mxu0 %v3906
    %v4007 = vpop.f32.mrb[0].mxu0
    %v4008 = vadd.f32 0.0, %v4007
    %v4009 = vpop.f32.mrb[0].mxu0
    %4010 = vmatprep.mubr.f32.mxu0 0.0
    %4011 = vmatmul.mubr.f32.gmra.mrb[0].mxu0 %v3908
    %v4012 = vpop.f32.mrb[0].mxu0
    %v4013 = vadd.f32 0.0, %v4012
    %v4014 = vpop.f32.mrb[0].mxu0
    %4015 = vmatprep.mubr.f32.mxu0 0.0
    %4016 = vmatmul.mubr.f32.gmra.mrb[0].mxu0 %v3910
    %v4017 = vpop.f32.mrb[0].mxu0
    %v4018 = vadd.f32 0.0, %v4017
    %v4019 = vpop.f32.mrb[0].mxu0
    %4020 = vmatprep.mubr.f32.mxu0 0.0
    %4021 = vmatmul.mubr.f32.gmra.mrb[0].mxu0 %v3912
    %v4022 = vpop.f32.mrb[0].mxu0
    %v4023 = vadd.f32 0.0, %v4022
    %v4024 = vpop.f32.mrb[0].mxu0
    %4025 = vmatprep.mubr.f32.mxu0 0.0
    %4026 = vmatmul.mubr.f32.gmra.mrb[0].mxu0 %v3914
    %v4027 = vpop.f32.mrb[0].mxu0
    %v4028 = vadd.f32 0.0, %v4027
    %v4029 = vpop.f32.mrb[0].mxu0
    %4030 = vmatprep.mubr.f32.mxu0 0.0
    %4031 = vmatmul.mubr.f32.gmra.mrb[0].mxu0 %v3916
    %v4032 = vpop.f32.mrb[0].mxu0
    %v4033 = vadd.f32 0.0, %v4032
    %v4034 = vpop.f32.mrb[0].mxu0
    %4035 = vmatprep.mubr.f32.mxu0 0.0
    %4036 = vmatmul.mubr.f32.gmra.mrb[0].mxu0 %v3918
    %v4037 = vpop.f32.mrb[0].mxu0
    %v4038 = vadd.f32 0.0, %v4037
    %v4039 = vpop.f32.mrb[0].mxu0
    %4040 = vmatprep.mubr.f32.mxu0 0.0
    %4041 = vmatmul.mubr.f32.gmra.mrb[0].mxu0 %v3920
    %v4042 = vpop.f32.mrb[0].mxu0
    %v4043 = vadd.f32 0.0, %v4042
    %v4044 = vpop.f32.mrb[0].mxu0
    %4045 = vmatprep.mubr.f32.mxu0 0.0
    %4046 = vmatmul.mubr.f32.gmra.mrb[0].mxu0 %v3922
    %v4047 = vpop.f32.mrb[0].mxu0
    %v4048 = vadd.f32 0.0, %v4047
    %v4049 = vpop.f32.mrb[0].mxu0
    %4050 = vmatprep.mubr.f32.mxu0 0.0
    %4051 = vmatmul.mubr.f32.gmra.mrb[0].mxu0 %v3924
    %v4052 = vpop.f32.mrb[0].mxu0
    %v4053 = vadd.f32 0.0, %v4052
    %v4054 = vpop.f32.mrb[0].mxu0
    %4055 = vdwg.mxu0
    %4056 = vst.msk [vmem:[#allocation8] sm:$0xff] %vm363, %v3827
    %4057 = vst.msk [vmem:[#allocation8 + $0x8] sm:$0xff] %vm363, %v3832
    %4058 = vst.msk [vmem:[#allocation8 + $0x10] sm:$0xff] %vm363, %v3837
    %4059 = vst.msk [vmem:[#allocation8 + $0x18] sm:$0x3] %vm3168, %v3842
    %v4060 = vld [vmem:[%s2] sm:$0xff]
    %v4061 = vld [vmem:[%s2 + $0x8] sm:$0xff]
    %v4062 = vld [vmem:[%s2 + $0x10] sm:$0xff]
    %v4063 = vld [vmem:[%s2 + $0x18] sm:$0xff]
    %v4064 = vld [vmem:[%s2 + $0x20] sm:$0xff]
    %v4065 = vld [vmem:[%s2 + $0x28] sm:$0xff]
    %v4066 = vld [vmem:[%s2 + $0x30] sm:$0xff]
    %v4067 = vld [vmem:[%s2 + $0x38] sm:$0xff]
    %v4068 = vld [vmem:[%s2 + $0x40] sm:$0xff]
    %v4069 = vld [vmem:[%s2 + $0x48] sm:$0xff]
    %v4070 = vld [vmem:[%s2 + $0x50] sm:$0xff]
    %v4071 = vld [vmem:[%s2 + $0x58] sm:$0xff]
    %v4072 = vld [vmem:[%s2 + $0x60] sm:$0x1]
    %v4073 = vld [vmem:[%s2 + $0x61] sm:$0x1]
    %v4074 = vld [vmem:[%s2 + $0x62] sm:$0x1]
    %v4075 = vlaneseq
    %v4076 = vshrl.u32 %v4075, 7
    %v4077 = vsub.s32 0, %v4076
    %v4078 = vrot.slane %v4072, %v4077
    %v4080 = vsel %vm363, %v3993, 0
    %v4083 = vsel %vm363, %v3998, 0
    %v4086 = vsel %vm363, %v4003, 0
    %v4089 = vsel %vm363, %v4008, 0
    %v4092 = vsel %vm363, %v4013, 0
    %v4095 = vsel %vm363, %v4018, 0
    %v4098 = vsel %vm363, %v4023, 0
    %v4101 = vsel %vm363, %v4028, 0
    %v4104 = vsel %vm363, %v4033, 0
    %v4107 = vsel %vm363, %v4038, 0
    %v4110 = vsel %vm363, %v4043, 0
    %v4113 = vsel %vm363, %v4048, 0
    %v4116 = vsel %vm363, %v4053, 0
    %4118 = vmatprep.subr.mxu0 0.0
    %4119 = vmatpush1.msra.mxu0 %v4060
    %4120 = vmatprep.subr.mxu0 0.0
    %4121 = vmatpush1.msra.mxu0 %v4061
    %4122 = vmatprep.subr.mxu0 0.0
    %4123 = vmatpush1.msra.mxu0 %v4062
    %4124 = vmatprep.subr.mxu0 0.0
    %4125 = vmatpush1.msra.mxu0 %v4063
    %4126 = vmatprep.subr.mxu0 0.0
    %4127 = vmatpush1.msra.mxu0 0.0
    %4128 = vmatprep.subr.mxu0 0.0
    %4129 = vmatpush1.msra.mxu0 0.0
    %4130 = vmatprep.subr.mxu0 0.0
    %4131 = vmatpush1.msra.mxu0 0.0
    %4132 = vmatprep.subr.mxu0 0.0
    %4133 = vmatpush1.msra.mxu0 0.0
    %4134 = vmatprep.subr.mxu0 0.0
    %4135 = vmatpush1.msra.mxu0 0.0
    %4136 = vmatprep.subr.mxu0 0.0
    %4137 = vmatpush1.msra.mxu0 0.0
    %4138 = vmatprep.subr.mxu0 0.0
    %4139 = vmatpush1.msra.mxu0 0.0
    %4140 = vmatprep.subr.mxu0 0.0
    %4141 = vmatpush1.msra.mxu0 0.0
    %4142 = vmatprep.subr.mxu0 0.0
    %4143 = vmatpush1.msra.mxu0 0.0
    %4144 = vmatprep.subr.mxu0 0.0
    %4145 = vmatpush1.msra.mxu0 0.0
    %4146 = vmatprep.subr.mxu0 0.0
    %4147 = vmatpush1.msra.mxu0 0.0
    %4148 = vmatprep.subr.mxu0 0.0
    %4149 = vmatpush1.msra.mxu0 0.0
    %4150 = vmatprep.subr.mxu0 0.0
    %4151 = vmatpush1.msra.mxu0 0.0
    %4152 = vmatprep.subr.mxu0 0.0
    %4153 = vmatpush1.msra.mxu0 0.0
    %4154 = vmatprep.subr.mxu0 0.0
    %4155 = vmatpush1.msra.mxu0 0.0
    %4156 = vmatprep.subr.mxu0 0.0
    %4157 = vmatpush1.msra.mxu0 0.0
    %4158 = vmatprep.subr.mxu0 0.0
    %4159 = vmatpush1.msra.mxu0 0.0
    %4160 = vmatprep.subr.mxu0 0.0
    %4161 = vmatpush1.msra.mxu0 0.0
    %4162 = vmatprep.subr.mxu0 0.0
    %4163 = vmatpush1.msra.mxu0 0.0
    %4164 = vmatprep.subr.mxu0 0.0
    %4165 = vmatpush1.msra.mxu0 0.0
    %4166 = vmatprep.subr.mxu0 0.0
    %4167 = vmatpush1.msra.mxu0 0.0
    %4168 = vmatprep.subr.mxu0 0.0
    %4169 = vmatpush1.msra.mxu0 0.0
    %4170 = vmatprep.subr.mxu0 0.0
    %4171 = vmatpush1.msra.mxu0 0.0
    %4172 = vmatprep.subr.mxu0 0.0
    %4173 = vmatpush1.msra.mxu0 0.0
    %4174 = vmatprep.subr.mxu0 0.0
    %4175 = vmatpush1.msra.mxu0 0.0
    %4176 = vmatprep.subr.mxu0 0.0
    %4177 = vmatpush1.msra.mxu0 0.0
    %4178 = vmatprep.subr.mxu0 0.0
    %4179 = vmatpush1.msra.mxu0 0.0
    %4180 = vmatprep.subr.mxu0 0.0
    %4181 = vmatpush1.msra.mxu0 0.0
    %4182 = vmatprep.mubr.f32.mxu0 0.0
    %4183 = vmatmul.mubr.f32.gmra.mrb[0].mxu0 %v4080
    %v4184 = vpop.f32.mrb[0].mxu0
    %v4185 = vadd.f32 %v4078, %v4184
    %v4186 = vpop.f32.mrb[0].mxu0
    %4187 = vmatprep.mubr.f32.mxu0 0.0
    %4188 = vmatmul.mubr.f32.gmra.mrb[0].mxu0 %v4083
    %v4189 = vpop.f32.mrb[0].mxu0
    %v4190 = vadd.f32 %v4078, %v4189
    %v4191 = vpop.f32.mrb[0].mxu0
    %4192 = vmatprep.mubr.f32.mxu0 0.0
    %4193 = vmatmul.mubr.f32.gmra.mrb[0].mxu0 %v4086
    %v4194 = vpop.f32.mrb[0].mxu0
    %v4195 = vadd.f32 %v4078, %v4194
    %v4196 = vpop.f32.mrb[0].mxu0
    %4197 = vmatprep.mubr.f32.mxu0 0.0
    %4198 = vmatmul.mubr.f32.gmra.mrb[0].mxu0 %v4089
    %v4199 = vpop.f32.mrb[0].mxu0
    %v4200 = vadd.f32 %v4078, %v4199
    %v4201 = vpop.f32.mrb[0].mxu0
    %4202 = vmatprep.mubr.f32.mxu0 0.0
    %4203 = vmatmul.mubr.f32.gmra.mrb[0].mxu0 %v4092
    %v4204 = vpop.f32.mrb[0].mxu0
    %v4205 = vadd.f32 %v4078, %v4204
    %v4206 = vpop.f32.mrb[0].mxu0
    %4207 = vmatprep.mubr.f32.mxu0 0.0
    %4208 = vmatmul.mubr.f32.gmra.mrb[0].mxu0 %v4095
    %v4209 = vpop.f32.mrb[0].mxu0
    %v4210 = vadd.f32 %v4078, %v4209
    %v4211 = vpop.f32.mrb[0].mxu0
    %4212 = vmatprep.mubr.f32.mxu0 0.0
    %4213 = vmatmul.mubr.f32.gmra.mrb[0].mxu0 %v4098
    %v4214 = vpop.f32.mrb[0].mxu0
    %v4215 = vadd.f32 %v4078, %v4214
    %v4216 = vpop.f32.mrb[0].mxu0
    %4217 = vmatprep.mubr.f32.mxu0 0.0
    %4218 = vmatmul.mubr.f32.gmra.mrb[0].mxu0 %v4101
    %v4219 = vpop.f32.mrb[0].mxu0
    %v4220 = vadd.f32 %v4078, %v4219
    %v4221 = vpop.f32.mrb[0].mxu0
    %4222 = vmatprep.mubr.f32.mxu0 0.0
    %4223 = vmatmul.mubr.f32.gmra.mrb[0].mxu0 %v4104
    %v4224 = vpop.f32.mrb[0].mxu0
    %v4225 = vadd.f32 %v4078, %v4224
    %v4226 = vpop.f32.mrb[0].mxu0
    %4227 = vmatprep.mubr.f32.mxu0 0.0
    %4228 = vmatmul.mubr.f32.gmra.mrb[0].mxu0 %v4107
    %v4229 = vpop.f32.mrb[0].mxu0
    %v4230 = vadd.f32 %v4078, %v4229
    %v4231 = vpop.f32.mrb[0].mxu0
    %4232 = vmatprep.mubr.f32.mxu0 0.0
    %4233 = vmatmul.mubr.f32.gmra.mrb[0].mxu0 %v4110
    %v4234 = vpop.f32.mrb[0].mxu0
    %v4235 = vadd.f32 %v4078, %v4234
    %v4236 = vpop.f32.mrb[0].mxu0
    %4237 = vmatprep.mubr.f32.mxu0 0.0
    %4238 = vmatmul.mubr.f32.gmra.mrb[0].mxu0 %v4113
    %v4239 = vpop.f32.mrb[0].mxu0
    %v4240 = vadd.f32 %v4078, %v4239
    %v4241 = vpop.f32.mrb[0].mxu0
    %4242 = vmatprep.mubr.f32.mxu0 0.0
    %4243 = vmatmul.mubr.f32.gmra.mrb[0].mxu0 %v4116
    %v4244 = vpop.f32.mrb[0].mxu0
    %v4245 = vadd.f32 %v4078, %v4244
    %v4246 = vpop.f32.mrb[0].mxu0
    %4247 = vdwg.mxu0
    %4248 = vst [vmem:[#allocation4] sm:$0xff] %v4185
    %4249 = vst [vmem:[#allocation4 + $0x8] sm:$0xff] %v4190
    %4250 = vst [vmem:[#allocation4 + $0x10] sm:$0xff] %v4195
    %4251 = vst [vmem:[#allocation4 + $0x18] sm:$0xff] %v4200
    %4252 = vst [vmem:[#allocation4 + $0x20] sm:$0xff] %v4205
    %4253 = vst [vmem:[#allocation4 + $0x28] sm:$0xff] %v4210
    %4254 = vst [vmem:[#allocation4 + $0x30] sm:$0xff] %v4215
    %4255 = vst [vmem:[#allocation4 + $0x38] sm:$0xff] %v4220
    %4256 = vst [vmem:[#allocation4 + $0x40] sm:$0xff] %v4225
    %4257 = vst [vmem:[#allocation4 + $0x48] sm:$0xff] %v4230
    %4258 = vst [vmem:[#allocation4 + $0x50] sm:$0xff] %v4235
    %4259 = vst [vmem:[#allocation4 + $0x58] sm:$0xff] %v4240
    %4260 = vst [vmem:[#allocation4 + $0x60] sm:$0xff] %v4245
    %v4261 = vld [vmem:[#allocation4] sm:$0xff]
    %v4262 = vlaneseq
    %v4263 = vshrl.u32 %v4262, 7
    %v4264 = vsub.s32 0, %v4263
    %v4265 = vrot.slane %v4073, %v4264
    %v4267 = vsel %vm363, 0.0, 0
    %4269 = vmatprep.subr.mxu0 0.0
    %4270 = vmatpush1.msra.mxu0 %v4064
    %4271 = vmatprep.subr.mxu0 0.0
    %4272 = vmatpush1.msra.mxu0 %v4065
    %4273 = vmatprep.subr.mxu0 0.0
    %4274 = vmatpush1.msra.mxu0 %v4066
    %4275 = vmatprep.subr.mxu0 0.0
    %4276 = vmatpush1.msra.mxu0 %v4067
    %4277 = vmatprep.subr.mxu0 0.0
    %4278 = vmatpush1.msra.mxu0 0.0
    %4279 = vmatprep.subr.mxu0 0.0
    %4280 = vmatpush1.msra.mxu0 0.0
    %4281 = vmatprep.subr.mxu0 0.0
    %4282 = vmatpush1.msra.mxu0 0.0
    %4283 = vmatprep.subr.mxu0 0.0
    %4284 = vmatpush1.msra.mxu0 0.0
    %4285 = vmatprep.subr.mxu0 0.0
    %4286 = vmatpush1.msra.mxu0 0.0
    %4287 = vmatprep.subr.mxu0 0.0
    %4288 = vmatpush1.msra.mxu0 0.0
    %4289 = vmatprep.subr.mxu0 0.0
    %4290 = vmatpush1.msra.mxu0 0.0
    %4291 = vmatprep.subr.mxu0 0.0
    %4292 = vmatpush1.msra.mxu0 0.0
    %4293 = vmatprep.subr.mxu0 0.0
    %4294 = vmatpush1.msra.mxu0 0.0
    %4295 = vmatprep.subr.mxu0 0.0
    %4296 = vmatpush1.msra.mxu0 0.0
    %4297 = vmatprep.subr.mxu0 0.0
    %4298 = vmatpush1.msra.mxu0 0.0
    %4299 = vmatprep.subr.mxu0 0.0
    %4300 = vmatpush1.msra.mxu0 0.0
    %4301 = vmatprep.subr.mxu0 0.0
    %4302 = vmatpush1.msra.mxu0 0.0
    %4303 = vmatprep.subr.mxu0 0.0
    %4304 = vmatpush1.msra.mxu0 0.0
    %4305 = vmatprep.subr.mxu0 0.0
    %4306 = vmatpush1.msra.mxu0 0.0
    %4307 = vmatprep.subr.mxu0 0.0
    %4308 = vmatpush1.msra.mxu0 0.0
    %4309 = vmatprep.subr.mxu0 0.0
    %4310 = vmatpush1.msra.mxu0 0.0
    %4311 = vmatprep.subr.mxu0 0.0
    %4312 = vmatpush1.msra.mxu0 0.0
    %4313 = vmatprep.subr.mxu0 0.0
    %4314 = vmatpush1.msra.mxu0 0.0
    %4315 = vmatprep.subr.mxu0 0.0
    %4316 = vmatpush1.msra.mxu0 0.0
    %4317 = vmatprep.subr.mxu0 0.0
    %4318 = vmatpush1.msra.mxu0 0.0
    %4319 = vmatprep.subr.mxu0 0.0
    %4320 = vmatpush1.msra.mxu0 0.0
    %4321 = vmatprep.subr.mxu0 0.0
    %4322 = vmatpush1.msra.mxu0 0.0
    %4323 = vmatprep.subr.mxu0 0.0
    %4324 = vmatpush1.msra.mxu0 0.0
    %4325 = vmatprep.subr.mxu0 0.0
    %4326 = vmatpush1.msra.mxu0 0.0
    %4327 = vmatprep.subr.mxu0 0.0
    %4328 = vmatpush1.msra.mxu0 0.0
    %4329 = vmatprep.subr.mxu0 0.0
    %4330 = vmatpush1.msra.mxu0 0.0
    %4331 = vmatprep.subr.mxu0 0.0
    %4332 = vmatpush1.msra.mxu0 0.0
    %4333 = vmatprep.mubr.f32.mxu0 0.0
    %4334 = vmatmul.mubr.f32.gmra.mrb[0].mxu0 %v4267
    %v4335 = vpop.f32.mrb[0].mxu0
    %v4336 = vadd.f32 %v4265, %v4335
    %v4337 = vpop.f32.mrb[0].mxu0
    %4338 = vdwg.mxu0
    %v4339 = vadd.f32 %v4261, %v4336
    %v4340 = vxor.u32 %v4339, 2147483648
    %v4341 = vmul.f32 %v4340, 1.442695
    %v4342 = vpow.pop %v4341
    %v4343 = vadd.f32 %v4342, 1.0
    %v4344 = vrcp.pop %v4343
    %v4345 = vmul.f32 1.0, %v4344
    %4347 = vrot.lane.b32.xlu0 %v4336, 64
    %v4348 = vpop.permute.xlu0 %4347
    %v4350 = vmul.f32 %v4345, %v4348
    %4352 = vrot.lane.b32.xlu0 %v4350, 64
    %v4353 = vpop.permute.xlu0 %4352
    %v4355 = vadd.f32 %v4261, %v4353
    %v4356 = vtanh.pop %v4355
    %v4357 = vsub.f32 1.0, %v4345
    %4359 = vrot.lane.b32.xlu0 %v4356, 96
    %v4360 = vpop.permute.xlu0 %4359
    %v4362 = vmul.f32 %v4357, %v4360
    %v4363 = vmul.f32 %v4345, 0.0
    %v4364 = vadd.f32 %v4362, %v4363
    %4366 = vrot.lane.b32.xlu0 %v4364, 96
    %v4367 = vpop.permute.xlu0 %4366
    %4369 = vst.msk [vmem:[#allocation5] sm:$0x3] %vm3168, %v4367
    %v4370 = vld [vmem:[#allocation4 + $0x8] sm:$0xff]
    %v4371 = vsel %vm363, %v4367, 0
    %4373 = vmatprep.subr.mxu0 0.0
    %4374 = vmatpush1.msra.mxu0 %v4064
    %4375 = vmatprep.subr.mxu0 0.0
    %4376 = vmatpush1.msra.mxu0 %v4065
    %4377 = vmatprep.subr.mxu0 0.0
    %4378 = vmatpush1.msra.mxu0 %v4066
    %4379 = vmatprep.subr.mxu0 0.0
    %4380 = vmatpush1.msra.mxu0 %v4067
    %4381 = vmatprep.subr.mxu0 0.0
    %4382 = vmatpush1.msra.mxu0 0.0
    %4383 = vmatprep.subr.mxu0 0.0
    %4384 = vmatpush1.msra.mxu0 0.0
    %4385 = vmatprep.subr.mxu0 0.0
    %4386 = vmatpush1.msra.mxu0 0.0
    %4387 = vmatprep.subr.mxu0 0.0
    %4388 = vmatpush1.msra.mxu0 0.0
    %4389 = vmatprep.subr.mxu0 0.0
    %4390 = vmatpush1.msra.mxu0 0.0
    %4391 = vmatprep.subr.mxu0 0.0
    %4392 = vmatpush1.msra.mxu0 0.0
    %4393 = vmatprep.subr.mxu0 0.0
    %4394 = vmatpush1.msra.mxu0 0.0
    %4395 = vmatprep.subr.mxu0 0.0
    %4396 = vmatpush1.msra.mxu0 0.0
    %4397 = vmatprep.subr.mxu0 0.0
    %4398 = vmatpush1.msra.mxu0 0.0
    %4399 = vmatprep.subr.mxu0 0.0
    %4400 = vmatpush1.msra.mxu0 0.0
    %4401 = vmatprep.subr.mxu0 0.0
    %4402 = vmatpush1.msra.mxu0 0.0
    %4403 = vmatprep.subr.mxu0 0.0
    %4404 = vmatpush1.msra.mxu0 0.0
    %4405 = vmatprep.subr.mxu0 0.0
    %4406 = vmatpush1.msra.mxu0 0.0
    %4407 = vmatprep.subr.mxu0 0.0
    %4408 = vmatpush1.msra.mxu0 0.0
    %4409 = vmatprep.subr.mxu0 0.0
    %4410 = vmatpush1.msra.mxu0 0.0
    %4411 = vmatprep.subr.mxu0 0.0
    %4412 = vmatpush1.msra.mxu0 0.0
    %4413 = vmatprep.subr.mxu0 0.0
    %4414 = vmatpush1.msra.mxu0 0.0
    %4415 = vmatprep.subr.mxu0 0.0
    %4416 = vmatpush1.msra.mxu0 0.0
    %4417 = vmatprep.subr.mxu0 0.0
    %4418 = vmatpush1.msra.mxu0 0.0
    %4419 = vmatprep.subr.mxu0 0.0
    %4420 = vmatpush1.msra.mxu0 0.0
    %4421 = vmatprep.subr.mxu0 0.0
    %4422 = vmatpush1.msra.mxu0 0.0
    %4423 = vmatprep.subr.mxu0 0.0
    %4424 = vmatpush1.msra.mxu0 0.0
    %4425 = vmatprep.subr.mxu0 0.0
    %4426 = vmatpush1.msra.mxu0 0.0
    %4427 = vmatprep.subr.mxu0 0.0
    %4428 = vmatpush1.msra.mxu0 0.0
    %4429 = vmatprep.subr.mxu0 0.0
    %4430 = vmatpush1.msra.mxu0 0.0
    %4431 = vmatprep.subr.mxu0 0.0
    %4432 = vmatpush1.msra.mxu0 0.0
    %4433 = vmatprep.subr.mxu0 0.0
    %4434 = vmatpush1.msra.mxu0 0.0
    %4435 = vmatprep.subr.mxu0 0.0
    %4436 = vmatpush1.msra.mxu0 0.0
    %4437 = vmatprep.mubr.f32.mxu0 0.0
    %4438 = vmatmul.mubr.f32.gmra.mrb[0].mxu0 %v4371
    %v4439 = vpop.f32.mrb[0].mxu0
    %v4440 = vadd.f32 %v4265, %v4439
    %v4441 = vpop.f32.mrb[0].mxu0
    %4442 = vdwg.mxu0
    %v4443 = vadd.f32 %v4370, %v4440
    %v4444 = vxor.u32 %v4443, 2147483648
    %v4445 = vmul.f32 %v4444, 1.442695
    %v4446 = vpow.pop %v4445
    %v4447 = vadd.f32 %v4446, 1.0
    %v4448 = vrcp.pop %v4447
    %v4449 = vmul.f32 1.0, %v4448
    %4451 = vrot.lane.b32.xlu0 %v4440, 64
    %v4452 = vpop.permute.xlu0 %4451
    %v4454 = vmul.f32 %v4449, %v4452
    %4456 = vrot.lane.b32.xlu0 %v4454, 64
    %v4457 = vpop.permute.xlu0 %4456
    %v4459 = vadd.f32 %v4370, %v4457
    %v4460 = vtanh.pop %v4459
    %v4461 = vsub.f32 1.0, %v4449
    %4463 = vrot.lane.b32.xlu0 %v4460, 96
    %v4464 = vpop.permute.xlu0 %4463
    %v4466 = vmul.f32 %v4461, %v4464
    %v4467 = vmul.f32 %v4449, %v4364
    %v4468 = vadd.f32 %v4466, %v4467
    %4470 = vrot.lane.b32.xlu0 %v4468, 96
    %v4471 = vpop.permute.xlu0 %4470
    %4473 = vst.msk [vmem:[#allocation5 + $0x2] sm:$0x3] %vm3168, %v4471
    %v4474 = vld [vmem:[#allocation4 + $0x10] sm:$0xff]
    %v4475 = vsel %vm363, %v4471, 0
    %4477 = vmatprep.subr.mxu0 0.0
    %4478 = vmatpush1.msra.mxu0 %v4064
    %4479 = vmatprep.subr.mxu0 0.0
    %4480 = vmatpush1.msra.mxu0 %v4065
    %4481 = vmatprep.subr.mxu0 0.0
    %4482 = vmatpush1.msra.mxu0 %v4066
    %4483 = vmatprep.subr.mxu0 0.0
    %4484 = vmatpush1.msra.mxu0 %v4067
    %4485 = vmatprep.subr.mxu0 0.0
    %4486 = vmatpush1.msra.mxu0 0.0
    %4487 = vmatprep.subr.mxu0 0.0
    %4488 = vmatpush1.msra.mxu0 0.0
    %4489 = vmatprep.subr.mxu0 0.0
    %4490 = vmatpush1.msra.mxu0 0.0
    %4491 = vmatprep.subr.mxu0 0.0
    %4492 = vmatpush1.msra.mxu0 0.0
    %4493 = vmatprep.subr.mxu0 0.0
    %4494 = vmatpush1.msra.mxu0 0.0
    %4495 = vmatprep.subr.mxu0 0.0
    %4496 = vmatpush1.msra.mxu0 0.0
    %4497 = vmatprep.subr.mxu0 0.0
    %4498 = vmatpush1.msra.mxu0 0.0
    %4499 = vmatprep.subr.mxu0 0.0
    %4500 = vmatpush1.msra.mxu0 0.0
    %4501 = vmatprep.subr.mxu0 0.0
    %4502 = vmatpush1.msra.mxu0 0.0
    %4503 = vmatprep.subr.mxu0 0.0
    %4504 = vmatpush1.msra.mxu0 0.0
    %4505 = vmatprep.subr.mxu0 0.0
    %4506 = vmatpush1.msra.mxu0 0.0
    %4507 = vmatprep.subr.mxu0 0.0
    %4508 = vmatpush1.msra.mxu0 0.0
    %4509 = vmatprep.subr.mxu0 0.0
    %4510 = vmatpush1.msra.mxu0 0.0
    %4511 = vmatprep.subr.mxu0 0.0
    %4512 = vmatpush1.msra.mxu0 0.0
    %4513 = vmatprep.subr.mxu0 0.0
    %4514 = vmatpush1.msra.mxu0 0.0
    %4515 = vmatprep.subr.mxu0 0.0
    %4516 = vmatpush1.msra.mxu0 0.0
    %4517 = vmatprep.subr.mxu0 0.0
    %4518 = vmatpush1.msra.mxu0 0.0
    %4519 = vmatprep.subr.mxu0 0.0
    %4520 = vmatpush1.msra.mxu0 0.0
    %4521 = vmatprep.subr.mxu0 0.0
    %4522 = vmatpush1.msra.mxu0 0.0
    %4523 = vmatprep.subr.mxu0 0.0
    %4524 = vmatpush1.msra.mxu0 0.0
    %4525 = vmatprep.subr.mxu0 0.0
    %4526 = vmatpush1.msra.mxu0 0.0
    %4527 = vmatprep.subr.mxu0 0.0
    %4528 = vmatpush1.msra.mxu0 0.0
    %4529 = vmatprep.subr.mxu0 0.0
    %4530 = vmatpush1.msra.mxu0 0.0
    %4531 = vmatprep.subr.mxu0 0.0
    %4532 = vmatpush1.msra.mxu0 0.0
    %4533 = vmatprep.subr.mxu0 0.0
    %4534 = vmatpush1.msra.mxu0 0.0
    %4535 = vmatprep.subr.mxu0 0.0
    %4536 = vmatpush1.msra.mxu0 0.0
    %4537 = vmatprep.subr.mxu0 0.0
    %4538 = vmatpush1.msra.mxu0 0.0
    %4539 = vmatprep.subr.mxu0 0.0
    %4540 = vmatpush1.msra.mxu0 0.0
    %4541 = vmatprep.mubr.f32.mxu0 0.0
    %4542 = vmatmul.mubr.f32.gmra.mrb[0].mxu0 %v4475
    %v4543 = vpop.f32.mrb[0].mxu0
    %v4544 = vadd.f32 %v4265, %v4543
    %v4545 = vpop.f32.mrb[0].mxu0
    %4546 = vdwg.mxu0
    %v4547 = vadd.f32 %v4474, %v4544
    %v4548 = vxor.u32 %v4547, 2147483648
    %v4549 = vmul.f32 %v4548, 1.442695
    %v4550 = vpow.pop %v4549
    %v4551 = vadd.f32 %v4550, 1.0
    %v4552 = vrcp.pop %v4551
    %v4553 = vmul.f32 1.0, %v4552
    %4555 = vrot.lane.b32.xlu0 %v4544, 64
    %v4556 = vpop.permute.xlu0 %4555
    %v4558 = vmul.f32 %v4553, %v4556
    %4560 = vrot.lane.b32.xlu0 %v4558, 64
    %v4561 = vpop.permute.xlu0 %4560
    %v4563 = vadd.f32 %v4474, %v4561
    %v4564 = vtanh.pop %v4563
    %v4565 = vsub.f32 1.0, %v4553
    %4567 = vrot.lane.b32.xlu0 %v4564, 96
    %v4568 = vpop.permute.xlu0 %4567
    %v4570 = vmul.f32 %v4565, %v4568
    %v4571 = vmul.f32 %v4553, %v4468
    %v4572 = vadd.f32 %v4570, %v4571
    %4574 = vrot.lane.b32.xlu0 %v4572, 96
    %v4575 = vpop.permute.xlu0 %4574
    %4577 = vst.msk [vmem:[#allocation5 + $0x4] sm:$0x3] %vm3168, %v4575
    %v4578 = vld [vmem:[#allocation4 + $0x18] sm:$0xff]
    %v4579 = vsel %vm363, %v4575, 0
    %4581 = vmatprep.subr.mxu0 0.0
    %4582 = vmatpush1.msra.mxu0 %v4064
    %4583 = vmatprep.subr.mxu0 0.0
    %4584 = vmatpush1.msra.mxu0 %v4065
    %4585 = vmatprep.subr.mxu0 0.0
    %4586 = vmatpush1.msra.mxu0 %v4066
    %4587 = vmatprep.subr.mxu0 0.0
    %4588 = vmatpush1.msra.mxu0 %v4067
    %4589 = vmatprep.subr.mxu0 0.0
    %4590 = vmatpush1.msra.mxu0 0.0
    %4591 = vmatprep.subr.mxu0 0.0
    %4592 = vmatpush1.msra.mxu0 0.0
    %4593 = vmatprep.subr.mxu0 0.0
    %4594 = vmatpush1.msra.mxu0 0.0
    %4595 = vmatprep.subr.mxu0 0.0
    %4596 = vmatpush1.msra.mxu0 0.0
    %4597 = vmatprep.subr.mxu0 0.0
    %4598 = vmatpush1.msra.mxu0 0.0
    %4599 = vmatprep.subr.mxu0 0.0
    %4600 = vmatpush1.msra.mxu0 0.0
    %4601 = vmatprep.subr.mxu0 0.0
    %4602 = vmatpush1.msra.mxu0 0.0
    %4603 = vmatprep.subr.mxu0 0.0
    %4604 = vmatpush1.msra.mxu0 0.0
    %4605 = vmatprep.subr.mxu0 0.0
    %4606 = vmatpush1.msra.mxu0 0.0
    %4607 = vmatprep.subr.mxu0 0.0
    %4608 = vmatpush1.msra.mxu0 0.0
    %4609 = vmatprep.subr.mxu0 0.0
    %4610 = vmatpush1.msra.mxu0 0.0
    %4611 = vmatprep.subr.mxu0 0.0
    %4612 = vmatpush1.msra.mxu0 0.0
    %4613 = vmatprep.subr.mxu0 0.0
    %4614 = vmatpush1.msra.mxu0 0.0
    %4615 = vmatprep.subr.mxu0 0.0
    %4616 = vmatpush1.msra.mxu0 0.0
    %4617 = vmatprep.subr.mxu0 0.0
    %4618 = vmatpush1.msra.mxu0 0.0
    %4619 = vmatprep.subr.mxu0 0.0
    %4620 = vmatpush1.msra.mxu0 0.0
    %4621 = vmatprep.subr.mxu0 0.0
    %4622 = vmatpush1.msra.mxu0 0.0
    %4623 = vmatprep.subr.mxu0 0.0
    %4624 = vmatpush1.msra.mxu0 0.0
    %4625 = vmatprep.subr.mxu0 0.0
    %4626 = vmatpush1.msra.mxu0 0.0
    %4627 = vmatprep.subr.mxu0 0.0
    %4628 = vmatpush1.msra.mxu0 0.0
    %4629 = vmatprep.subr.mxu0 0.0
    %4630 = vmatpush1.msra.mxu0 0.0
    %4631 = vmatprep.subr.mxu0 0.0
    %4632 = vmatpush1.msra.mxu0 0.0
    %4633 = vmatprep.subr.mxu0 0.0
    %4634 = vmatpush1.msra.mxu0 0.0
    %4635 = vmatprep.subr.mxu0 0.0
    %4636 = vmatpush1.msra.mxu0 0.0
    %4637 = vmatprep.subr.mxu0 0.0
    %4638 = vmatpush1.msra.mxu0 0.0
    %4639 = vmatprep.subr.mxu0 0.0
    %4640 = vmatpush1.msra.mxu0 0.0
    %4641 = vmatprep.subr.mxu0 0.0
    %4642 = vmatpush1.msra.mxu0 0.0
    %4643 = vmatprep.subr.mxu0 0.0
    %4644 = vmatpush1.msra.mxu0 0.0
    %4645 = vmatprep.mubr.f32.mxu0 0.0
    %4646 = vmatmul.mubr.f32.gmra.mrb[0].mxu0 %v4579
    %v4647 = vpop.f32.mrb[0].mxu0
    %v4648 = vadd.f32 %v4265, %v4647
    %v4649 = vpop.f32.mrb[0].mxu0
    %4650 = vdwg.mxu0
    %v4651 = vadd.f32 %v4578, %v4648
    %v4652 = vxor.u32 %v4651, 2147483648
    %v4653 = vmul.f32 %v4652, 1.442695
    %v4654 = vpow.pop %v4653
    %v4655 = vadd.f32 %v4654, 1.0
    %v4656 = vrcp.pop %v4655
    %v4657 = vmul.f32 1.0, %v4656
    %4659 = vrot.lane.b32.xlu0 %v4648, 64
    %v4660 = vpop.permute.xlu0 %4659
    %v4662 = vmul.f32 %v4657, %v4660
    %4664 = vrot.lane.b32.xlu0 %v4662, 64
    %v4665 = vpop.permute.xlu0 %4664
    %v4667 = vadd.f32 %v4578, %v4665
    %v4668 = vtanh.pop %v4667
    %v4669 = vsub.f32 1.0, %v4657
    %4671 = vrot.lane.b32.xlu0 %v4668, 96
    %v4672 = vpop.permute.xlu0 %4671
    %v4674 = vmul.f32 %v4669, %v4672
    %v4675 = vmul.f32 %v4657, %v4572
    %v4676 = vadd.f32 %v4674, %v4675
    %4678 = vrot.lane.b32.xlu0 %v4676, 96
    %v4679 = vpop.permute.xlu0 %4678
    %4681 = vst.msk [vmem:[#allocation5 + $0x6] sm:$0x3] %vm3168, %v4679
    %v4682 = vld [vmem:[#allocation4 + $0x20] sm:$0xff]
    %v4683 = vsel %vm363, %v4679, 0
    %4685 = vmatprep.subr.mxu0 0.0
    %4686 = vmatpush1.msra.mxu0 %v4064
    %4687 = vmatprep.subr.mxu0 0.0
    %4688 = vmatpush1.msra.mxu0 %v4065
    %4689 = vmatprep.subr.mxu0 0.0
    %4690 = vmatpush1.msra.mxu0 %v4066
    %4691 = vmatprep.subr.mxu0 0.0
    %4692 = vmatpush1.msra.mxu0 %v4067
    %4693 = vmatprep.subr.mxu0 0.0
    %4694 = vmatpush1.msra.mxu0 0.0
    %4695 = vmatprep.subr.mxu0 0.0
    %4696 = vmatpush1.msra.mxu0 0.0
    %4697 = vmatprep.subr.mxu0 0.0
    %4698 = vmatpush1.msra.mxu0 0.0
    %4699 = vmatprep.subr.mxu0 0.0
    %4700 = vmatpush1.msra.mxu0 0.0
    %4701 = vmatprep.subr.mxu0 0.0
    %4702 = vmatpush1.msra.mxu0 0.0
    %4703 = vmatprep.subr.mxu0 0.0
    %4704 = vmatpush1.msra.mxu0 0.0
    %4705 = vmatprep.subr.mxu0 0.0
    %4706 = vmatpush1.msra.mxu0 0.0
    %4707 = vmatprep.subr.mxu0 0.0
    %4708 = vmatpush1.msra.mxu0 0.0
    %4709 = vmatprep.subr.mxu0 0.0
    %4710 = vmatpush1.msra.mxu0 0.0
    %4711 = vmatprep.subr.mxu0 0.0
    %4712 = vmatpush1.msra.mxu0 0.0
    %4713 = vmatprep.subr.mxu0 0.0
    %4714 = vmatpush1.msra.mxu0 0.0
    %4715 = vmatprep.subr.mxu0 0.0
    %4716 = vmatpush1.msra.mxu0 0.0
    %4717 = vmatprep.subr.mxu0 0.0
    %4718 = vmatpush1.msra.mxu0 0.0
    %4719 = vmatprep.subr.mxu0 0.0
    %4720 = vmatpush1.msra.mxu0 0.0
    %4721 = vmatprep.subr.mxu0 0.0
    %4722 = vmatpush1.msra.mxu0 0.0
    %4723 = vmatprep.subr.mxu0 0.0
    %4724 = vmatpush1.msra.mxu0 0.0
    %4725 = vmatprep.subr.mxu0 0.0
    %4726 = vmatpush1.msra.mxu0 0.0
    %4727 = vmatprep.subr.mxu0 0.0
    %4728 = vmatpush1.msra.mxu0 0.0
    %4729 = vmatprep.subr.mxu0 0.0
    %4730 = vmatpush1.msra.mxu0 0.0
    %4731 = vmatprep.subr.mxu0 0.0
    %4732 = vmatpush1.msra.mxu0 0.0
    %4733 = vmatprep.subr.mxu0 0.0
    %4734 = vmatpush1.msra.mxu0 0.0
    %4735 = vmatprep.subr.mxu0 0.0
    %4736 = vmatpush1.msra.mxu0 0.0
    %4737 = vmatprep.subr.mxu0 0.0
    %4738 = vmatpush1.msra.mxu0 0.0
    %4739 = vmatprep.subr.mxu0 0.0
    %4740 = vmatpush1.msra.mxu0 0.0
    %4741 = vmatprep.subr.mxu0 0.0
    %4742 = vmatpush1.msra.mxu0 0.0
    %4743 = vmatprep.subr.mxu0 0.0
    %4744 = vmatpush1.msra.mxu0 0.0
    %4745 = vmatprep.subr.mxu0 0.0
    %4746 = vmatpush1.msra.mxu0 0.0
    %4747 = vmatprep.subr.mxu0 0.0
    %4748 = vmatpush1.msra.mxu0 0.0
    %4749 = vmatprep.mubr.f32.mxu0 0.0
    %4750 = vmatmul.mubr.f32.gmra.mrb[0].mxu0 %v4683
    %v4751 = vpop.f32.mrb[0].mxu0
    %v4752 = vadd.f32 %v4265, %v4751
    %v4753 = vpop.f32.mrb[0].mxu0
    %4754 = vdwg.mxu0
    %v4755 = vadd.f32 %v4682, %v4752
    %v4756 = vxor.u32 %v4755, 2147483648
    %v4757 = vmul.f32 %v4756, 1.442695
    %v4758 = vpow.pop %v4757
    %v4759 = vadd.f32 %v4758, 1.0
    %v4760 = vrcp.pop %v4759
    %v4761 = vmul.f32 1.0, %v4760
    %4763 = vrot.lane.b32.xlu0 %v4752, 64
    %v4764 = vpop.permute.xlu0 %4763
    %v4766 = vmul.f32 %v4761, %v4764
    %4768 = vrot.lane.b32.xlu0 %v4766, 64
    %v4769 = vpop.permute.xlu0 %4768
    %v4771 = vadd.f32 %v4682, %v4769
    %v4772 = vtanh.pop %v4771
    %v4773 = vsub.f32 1.0, %v4761
    %4775 = vrot.lane.b32.xlu0 %v4772, 96
    %v4776 = vpop.permute.xlu0 %4775
    %v4778 = vmul.f32 %v4773, %v4776
    %v4779 = vmul.f32 %v4761, %v4676
    %v4780 = vadd.f32 %v4778, %v4779
    %4782 = vrot.lane.b32.xlu0 %v4780, 96
    %v4783 = vpop.permute.xlu0 %4782
    %4785 = vst.msk [vmem:[#allocation5 + $0x8] sm:$0x3] %vm3168, %v4783
    %v4786 = vld [vmem:[#allocation4 + $0x28] sm:$0xff]
    %v4787 = vsel %vm363, %v4783, 0
    %4789 = vmatprep.subr.mxu0 0.0
    %4790 = vmatpush1.msra.mxu0 %v4064
    %4791 = vmatprep.subr.mxu0 0.0
    %4792 = vmatpush1.msra.mxu0 %v4065
    %4793 = vmatprep.subr.mxu0 0.0
    %4794 = vmatpush1.msra.mxu0 %v4066
    %4795 = vmatprep.subr.mxu0 0.0
    %4796 = vmatpush1.msra.mxu0 %v4067
    %4797 = vmatprep.subr.mxu0 0.0
    %4798 = vmatpush1.msra.mxu0 0.0
    %4799 = vmatprep.subr.mxu0 0.0
    %4800 = vmatpush1.msra.mxu0 0.0
    %4801 = vmatprep.subr.mxu0 0.0
    %4802 = vmatpush1.msra.mxu0 0.0
    %4803 = vmatprep.subr.mxu0 0.0
    %4804 = vmatpush1.msra.mxu0 0.0
    %4805 = vmatprep.subr.mxu0 0.0
    %4806 = vmatpush1.msra.mxu0 0.0
    %4807 = vmatprep.subr.mxu0 0.0
    %4808 = vmatpush1.msra.mxu0 0.0
    %4809 = vmatprep.subr.mxu0 0.0
    %4810 = vmatpush1.msra.mxu0 0.0
    %4811 = vmatprep.subr.mxu0 0.0
    %4812 = vmatpush1.msra.mxu0 0.0
    %4813 = vmatprep.subr.mxu0 0.0
    %4814 = vmatpush1.msra.mxu0 0.0
    %4815 = vmatprep.subr.mxu0 0.0
    %4816 = vmatpush1.msra.mxu0 0.0
    %4817 = vmatprep.subr.mxu0 0.0
    %4818 = vmatpush1.msra.mxu0 0.0
    %4819 = vmatprep.subr.mxu0 0.0
    %4820 = vmatpush1.msra.mxu0 0.0
    %4821 = vmatprep.subr.mxu0 0.0
    %4822 = vmatpush1.msra.mxu0 0.0
    %4823 = vmatprep.subr.mxu0 0.0
    %4824 = vmatpush1.msra.mxu0 0.0
    %4825 = vmatprep.subr.mxu0 0.0
    %4826 = vmatpush1.msra.mxu0 0.0
    %4827 = vmatprep.subr.mxu0 0.0
    %4828 = vmatpush1.msra.mxu0 0.0
    %4829 = vmatprep.subr.mxu0 0.0
    %4830 = vmatpush1.msra.mxu0 0.0
    %4831 = vmatprep.subr.mxu0 0.0
    %4832 = vmatpush1.msra.mxu0 0.0
    %4833 = vmatprep.subr.mxu0 0.0
    %4834 = vmatpush1.msra.mxu0 0.0
    %4835 = vmatprep.subr.mxu0 0.0
    %4836 = vmatpush1.msra.mxu0 0.0
    %4837 = vmatprep.subr.mxu0 0.0
    %4838 = vmatpush1.msra.mxu0 0.0
    %4839 = vmatprep.subr.mxu0 0.0
    %4840 = vmatpush1.msra.mxu0 0.0
    %4841 = vmatprep.subr.mxu0 0.0
    %4842 = vmatpush1.msra.mxu0 0.0
    %4843 = vmatprep.subr.mxu0 0.0
    %4844 = vmatpush1.msra.mxu0 0.0
    %4845 = vmatprep.subr.mxu0 0.0
    %4846 = vmatpush1.msra.mxu0 0.0
    %4847 = vmatprep.subr.mxu0 0.0
    %4848 = vmatpush1.msra.mxu0 0.0
    %4849 = vmatprep.subr.mxu0 0.0
    %4850 = vmatpush1.msra.mxu0 0.0
    %4851 = vmatprep.subr.mxu0 0.0
    %4852 = vmatpush1.msra.mxu0 0.0
    %4853 = vmatprep.mubr.f32.mxu0 0.0
    %4854 = vmatmul.mubr.f32.gmra.mrb[0].mxu0 %v4787
    %v4855 = vpop.f32.mrb[0].mxu0
    %v4856 = vadd.f32 %v4265, %v4855
    %v4857 = vpop.f32.mrb[0].mxu0
    %4858 = vdwg.mxu0
    %v4859 = vadd.f32 %v4786, %v4856
    %v4860 = vxor.u32 %v4859, 2147483648
    %v4861 = vmul.f32 %v4860, 1.442695
    %v4862 = vpow.pop %v4861
    %v4863 = vadd.f32 %v4862, 1.0
    %v4864 = vrcp.pop %v4863
    %v4865 = vmul.f32 1.0, %v4864
    %4867 = vrot.lane.b32.xlu0 %v4856, 64
    %v4868 = vpop.permute.xlu0 %4867
    %v4870 = vmul.f32 %v4865, %v4868
    %4872 = vrot.lane.b32.xlu0 %v4870, 64
    %v4873 = vpop.permute.xlu0 %4872
    %v4875 = vadd.f32 %v4786, %v4873
    %v4876 = vtanh.pop %v4875
    %v4877 = vsub.f32 1.0, %v4865
    %4879 = vrot.lane.b32.xlu0 %v4876, 96
    %v4880 = vpop.permute.xlu0 %4879
    %v4882 = vmul.f32 %v4877, %v4880
    %v4883 = vmul.f32 %v4865, %v4780
    %v4884 = vadd.f32 %v4882, %v4883
    %4886 = vrot.lane.b32.xlu0 %v4884, 96
    %v4887 = vpop.permute.xlu0 %4886
    %4889 = vst.msk [vmem:[#allocation5 + $0xa] sm:$0x3] %vm3168, %v4887
    %v4890 = vld [vmem:[#allocation4 + $0x30] sm:$0xff]
    %v4891 = vsel %vm363, %v4887, 0
    %4893 = vmatprep.subr.mxu0 0.0
    %4894 = vmatpush1.msra.mxu0 %v4064
    %4895 = vmatprep.subr.mxu0 0.0
    %4896 = vmatpush1.msra.mxu0 %v4065
    %4897 = vmatprep.subr.mxu0 0.0
    %4898 = vmatpush1.msra.mxu0 %v4066
    %4899 = vmatprep.subr.mxu0 0.0
    %4900 = vmatpush1.msra.mxu0 %v4067
    %4901 = vmatprep.subr.mxu0 0.0
    %4902 = vmatpush1.msra.mxu0 0.0
    %4903 = vmatprep.subr.mxu0 0.0
    %4904 = vmatpush1.msra.mxu0 0.0
    %4905 = vmatprep.subr.mxu0 0.0
    %4906 = vmatpush1.msra.mxu0 0.0
    %4907 = vmatprep.subr.mxu0 0.0
    %4908 = vmatpush1.msra.mxu0 0.0
    %4909 = vmatprep.subr.mxu0 0.0
    %4910 = vmatpush1.msra.mxu0 0.0
    %4911 = vmatprep.subr.mxu0 0.0
    %4912 = vmatpush1.msra.mxu0 0.0
    %4913 = vmatprep.subr.mxu0 0.0
    %4914 = vmatpush1.msra.mxu0 0.0
    %4915 = vmatprep.subr.mxu0 0.0
    %4916 = vmatpush1.msra.mxu0 0.0
    %4917 = vmatprep.subr.mxu0 0.0
    %4918 = vmatpush1.msra.mxu0 0.0
    %4919 = vmatprep.subr.mxu0 0.0
    %4920 = vmatpush1.msra.mxu0 0.0
    %4921 = vmatprep.subr.mxu0 0.0
    %4922 = vmatpush1.msra.mxu0 0.0
    %4923 = vmatprep.subr.mxu0 0.0
    %4924 = vmatpush1.msra.mxu0 0.0
    %4925 = vmatprep.subr.mxu0 0.0
    %4926 = vmatpush1.msra.mxu0 0.0
    %4927 = vmatprep.subr.mxu0 0.0
    %4928 = vmatpush1.msra.mxu0 0.0
    %4929 = vmatprep.subr.mxu0 0.0
    %4930 = vmatpush1.msra.mxu0 0.0
    %4931 = vmatprep.subr.mxu0 0.0
    %4932 = vmatpush1.msra.mxu0 0.0
    %4933 = vmatprep.subr.mxu0 0.0
    %4934 = vmatpush1.msra.mxu0 0.0
    %4935 = vmatprep.subr.mxu0 0.0
    %4936 = vmatpush1.msra.mxu0 0.0
    %4937 = vmatprep.subr.mxu0 0.0
    %4938 = vmatpush1.msra.mxu0 0.0
    %4939 = vmatprep.subr.mxu0 0.0
    %4940 = vmatpush1.msra.mxu0 0.0
    %4941 = vmatprep.subr.mxu0 0.0
    %4942 = vmatpush1.msra.mxu0 0.0
    %4943 = vmatprep.subr.mxu0 0.0
    %4944 = vmatpush1.msra.mxu0 0.0
    %4945 = vmatprep.subr.mxu0 0.0
    %4946 = vmatpush1.msra.mxu0 0.0
    %4947 = vmatprep.subr.mxu0 0.0
    %4948 = vmatpush1.msra.mxu0 0.0
    %4949 = vmatprep.subr.mxu0 0.0
    %4950 = vmatpush1.msra.mxu0 0.0
    %4951 = vmatprep.subr.mxu0 0.0
    %4952 = vmatpush1.msra.mxu0 0.0
    %4953 = vmatprep.subr.mxu0 0.0
    %4954 = vmatpush1.msra.mxu0 0.0
    %4955 = vmatprep.subr.mxu0 0.0
    %4956 = vmatpush1.msra.mxu0 0.0
    %4957 = vmatprep.mubr.f32.mxu0 0.0
    %4958 = vmatmul.mubr.f32.gmra.mrb[0].mxu0 %v4891
    %v4959 = vpop.f32.mrb[0].mxu0
    %v4960 = vadd.f32 %v4265, %v4959
    %v4961 = vpop.f32.mrb[0].mxu0
    %4962 = vdwg.mxu0
    %v4963 = vadd.f32 %v4890, %v4960
    %v4964 = vxor.u32 %v4963, 2147483648
    %v4965 = vmul.f32 %v4964, 1.442695
    %v4966 = vpow.pop %v4965
    %v4967 = vadd.f32 %v4966, 1.0
    %v4968 = vrcp.pop %v4967
    %v4969 = vmul.f32 1.0, %v4968
    %4971 = vrot.lane.b32.xlu0 %v4960, 64
    %v4972 = vpop.permute.xlu0 %4971
    %v4974 = vmul.f32 %v4969, %v4972
    %4976 = vrot.lane.b32.xlu0 %v4974, 64
    %v4977 = vpop.permute.xlu0 %4976
    %v4979 = vadd.f32 %v4890, %v4977
    %v4980 = vtanh.pop %v4979
    %v4981 = vsub.f32 1.0, %v4969
    %4983 = vrot.lane.b32.xlu0 %v4980, 96
    %v4984 = vpop.permute.xlu0 %4983
    %v4986 = vmul.f32 %v4981, %v4984
    %v4987 = vmul.f32 %v4969, %v4884
    %v4988 = vadd.f32 %v4986, %v4987
    %4990 = vrot.lane.b32.xlu0 %v4988, 96
    %v4991 = vpop.permute.xlu0 %4990
    %4993 = vst.msk [vmem:[#allocation5 + $0xc] sm:$0x3] %vm3168, %v4991
    %v4994 = vld [vmem:[#allocation4 + $0x38] sm:$0xff]
    %v4995 = vsel %vm363, %v4991, 0
    %4997 = vmatprep.subr.mxu0 0.0
    %4998 = vmatpush1.msra.mxu0 %v4064
    %4999 = vmatprep.subr.mxu0 0.0
    %5000 = vmatpush1.msra.mxu0 %v4065
    %5001 = vmatprep.subr.mxu0 0.0
    %5002 = vmatpush1.msra.mxu0 %v4066
    %5003 = vmatprep.subr.mxu0 0.0
    %5004 = vmatpush1.msra.mxu0 %v4067
    %5005 = vmatprep.subr.mxu0 0.0
    %5006 = vmatpush1.msra.mxu0 0.0
    %5007 = vmatprep.subr.mxu0 0.0
    %5008 = vmatpush1.msra.mxu0 0.0
    %5009 = vmatprep.subr.mxu0 0.0
    %5010 = vmatpush1.msra.mxu0 0.0
    %5011 = vmatprep.subr.mxu0 0.0
    %5012 = vmatpush1.msra.mxu0 0.0
    %5013 = vmatprep.subr.mxu0 0.0
    %5014 = vmatpush1.msra.mxu0 0.0
    %5015 = vmatprep.subr.mxu0 0.0
    %5016 = vmatpush1.msra.mxu0 0.0
    %5017 = vmatprep.subr.mxu0 0.0
    %5018 = vmatpush1.msra.mxu0 0.0
    %5019 = vmatprep.subr.mxu0 0.0
    %5020 = vmatpush1.msra.mxu0 0.0
    %5021 = vmatprep.subr.mxu0 0.0
    %5022 = vmatpush1.msra.mxu0 0.0
    %5023 = vmatprep.subr.mxu0 0.0
    %5024 = vmatpush1.msra.mxu0 0.0
    %5025 = vmatprep.subr.mxu0 0.0
    %5026 = vmatpush1.msra.mxu0 0.0
    %5027 = vmatprep.subr.mxu0 0.0
    %5028 = vmatpush1.msra.mxu0 0.0
    %5029 = vmatprep.subr.mxu0 0.0
    %5030 = vmatpush1.msra.mxu0 0.0
    %5031 = vmatprep.subr.mxu0 0.0
    %5032 = vmatpush1.msra.mxu0 0.0
    %5033 = vmatprep.subr.mxu0 0.0
    %5034 = vmatpush1.msra.mxu0 0.0
    %5035 = vmatprep.subr.mxu0 0.0
    %5036 = vmatpush1.msra.mxu0 0.0
    %5037 = vmatprep.subr.mxu0 0.0
    %5038 = vmatpush1.msra.mxu0 0.0
    %5039 = vmatprep.subr.mxu0 0.0
    %5040 = vmatpush1.msra.mxu0 0.0
    %5041 = vmatprep.subr.mxu0 0.0
    %5042 = vmatpush1.msra.mxu0 0.0
    %5043 = vmatprep.subr.mxu0 0.0
    %5044 = vmatpush1.msra.mxu0 0.0
    %5045 = vmatprep.subr.mxu0 0.0
    %5046 = vmatpush1.msra.mxu0 0.0
    %5047 = vmatprep.subr.mxu0 0.0
    %5048 = vmatpush1.msra.mxu0 0.0
    %5049 = vmatprep.subr.mxu0 0.0
    %5050 = vmatpush1.msra.mxu0 0.0
    %5051 = vmatprep.subr.mxu0 0.0
    %5052 = vmatpush1.msra.mxu0 0.0
    %5053 = vmatprep.subr.mxu0 0.0
    %5054 = vmatpush1.msra.mxu0 0.0
    %5055 = vmatprep.subr.mxu0 0.0
    %5056 = vmatpush1.msra.mxu0 0.0
    %5057 = vmatprep.subr.mxu0 0.0
    %5058 = vmatpush1.msra.mxu0 0.0
    %5059 = vmatprep.subr.mxu0 0.0
    %5060 = vmatpush1.msra.mxu0 0.0
    %5061 = vmatprep.mubr.f32.mxu0 0.0
    %5062 = vmatmul.mubr.f32.gmra.mrb[0].mxu0 %v4995
    %v5063 = vpop.f32.mrb[0].mxu0
    %v5064 = vadd.f32 %v4265, %v5063
    %v5065 = vpop.f32.mrb[0].mxu0
    %5066 = vdwg.mxu0
    %v5067 = vadd.f32 %v4994, %v5064
    %v5068 = vxor.u32 %v5067, 2147483648
    %v5069 = vmul.f32 %v5068, 1.442695
    %v5070 = vpow.pop %v5069
    %v5071 = vadd.f32 %v5070, 1.0
    %v5072 = vrcp.pop %v5071
    %v5073 = vmul.f32 1.0, %v5072
    %5075 = vrot.lane.b32.xlu0 %v5064, 64
    %v5076 = vpop.permute.xlu0 %5075
    %v5078 = vmul.f32 %v5073, %v5076
    %5080 = vrot.lane.b32.xlu0 %v5078, 64
    %v5081 = vpop.permute.xlu0 %5080
    %v5083 = vadd.f32 %v4994, %v5081
    %v5084 = vtanh.pop %v5083
    %v5085 = vsub.f32 1.0, %v5073
    %5087 = vrot.lane.b32.xlu0 %v5084, 96
    %v5088 = vpop.permute.xlu0 %5087
    %v5090 = vmul.f32 %v5085, %v5088
    %v5091 = vmul.f32 %v5073, %v4988
    %v5092 = vadd.f32 %v5090, %v5091
    %5094 = vrot.lane.b32.xlu0 %v5092, 96
    %v5095 = vpop.permute.xlu0 %5094
    %5097 = vst.msk [vmem:[#allocation5 + $0xe] sm:$0x3] %vm3168, %v5095
    %v5098 = vld [vmem:[#allocation4 + $0x40] sm:$0xff]
    %v5099 = vsel %vm363, %v5095, 0
    %5101 = vmatprep.subr.mxu0 0.0
    %5102 = vmatpush1.msra.mxu0 %v4064
    %5103 = vmatprep.subr.mxu0 0.0
    %5104 = vmatpush1.msra.mxu0 %v4065
    %5105 = vmatprep.subr.mxu0 0.0
    %5106 = vmatpush1.msra.mxu0 %v4066
    %5107 = vmatprep.subr.mxu0 0.0
    %5108 = vmatpush1.msra.mxu0 %v4067
    %5109 = vmatprep.subr.mxu0 0.0
    %5110 = vmatpush1.msra.mxu0 0.0
    %5111 = vmatprep.subr.mxu0 0.0
    %5112 = vmatpush1.msra.mxu0 0.0
    %5113 = vmatprep.subr.mxu0 0.0
    %5114 = vmatpush1.msra.mxu0 0.0
    %5115 = vmatprep.subr.mxu0 0.0
    %5116 = vmatpush1.msra.mxu0 0.0
    %5117 = vmatprep.subr.mxu0 0.0
    %5118 = vmatpush1.msra.mxu0 0.0
    %5119 = vmatprep.subr.mxu0 0.0
    %5120 = vmatpush1.msra.mxu0 0.0
    %5121 = vmatprep.subr.mxu0 0.0
    %5122 = vmatpush1.msra.mxu0 0.0
    %5123 = vmatprep.subr.mxu0 0.0
    %5124 = vmatpush1.msra.mxu0 0.0
    %5125 = vmatprep.subr.mxu0 0.0
    %5126 = vmatpush1.msra.mxu0 0.0
    %5127 = vmatprep.subr.mxu0 0.0
    %5128 = vmatpush1.msra.mxu0 0.0
    %5129 = vmatprep.subr.mxu0 0.0
    %5130 = vmatpush1.msra.mxu0 0.0
    %5131 = vmatprep.subr.mxu0 0.0
    %5132 = vmatpush1.msra.mxu0 0.0
    %5133 = vmatprep.subr.mxu0 0.0
    %5134 = vmatpush1.msra.mxu0 0.0
    %5135 = vmatprep.subr.mxu0 0.0
    %5136 = vmatpush1.msra.mxu0 0.0
    %5137 = vmatprep.subr.mxu0 0.0
    %5138 = vmatpush1.msra.mxu0 0.0
    %5139 = vmatprep.subr.mxu0 0.0
    %5140 = vmatpush1.msra.mxu0 0.0
    %5141 = vmatprep.subr.mxu0 0.0
    %5142 = vmatpush1.msra.mxu0 0.0
    %5143 = vmatprep.subr.mxu0 0.0
    %5144 = vmatpush1.msra.mxu0 0.0
    %5145 = vmatprep.subr.mxu0 0.0
    %5146 = vmatpush1.msra.mxu0 0.0
    %5147 = vmatprep.subr.mxu0 0.0
    %5148 = vmatpush1.msra.mxu0 0.0
    %5149 = vmatprep.subr.mxu0 0.0
    %5150 = vmatpush1.msra.mxu0 0.0
    %5151 = vmatprep.subr.mxu0 0.0
    %5152 = vmatpush1.msra.mxu0 0.0
    %5153 = vmatprep.subr.mxu0 0.0
    %5154 = vmatpush1.msra.mxu0 0.0
    %5155 = vmatprep.subr.mxu0 0.0
    %5156 = vmatpush1.msra.mxu0 0.0
    %5157 = vmatprep.subr.mxu0 0.0
    %5158 = vmatpush1.msra.mxu0 0.0
    %5159 = vmatprep.subr.mxu0 0.0
    %5160 = vmatpush1.msra.mxu0 0.0
    %5161 = vmatprep.subr.mxu0 0.0
    %5162 = vmatpush1.msra.mxu0 0.0
    %5163 = vmatprep.subr.mxu0 0.0
    %5164 = vmatpush1.msra.mxu0 0.0
    %5165 = vmatprep.mubr.f32.mxu0 0.0
    %5166 = vmatmul.mubr.f32.gmra.mrb[0].mxu0 %v5099
    %v5167 = vpop.f32.mrb[0].mxu0
    %v5168 = vadd.f32 %v4265, %v5167
    %v5169 = vpop.f32.mrb[0].mxu0
    %5170 = vdwg.mxu0
    %v5171 = vadd.f32 %v5098, %v5168
    %v5172 = vxor.u32 %v5171, 2147483648
    %v5173 = vmul.f32 %v5172, 1.442695
    %v5174 = vpow.pop %v5173
    %v5175 = vadd.f32 %v5174, 1.0
    %v5176 = vrcp.pop %v5175
    %v5177 = vmul.f32 1.0, %v5176
    %5179 = vrot.lane.b32.xlu0 %v5168, 64
    %v5180 = vpop.permute.xlu0 %5179
    %v5182 = vmul.f32 %v5177, %v5180
    %5184 = vrot.lane.b32.xlu0 %v5182, 64
    %v5185 = vpop.permute.xlu0 %5184
    %v5187 = vadd.f32 %v5098, %v5185
    %v5188 = vtanh.pop %v5187
    %v5189 = vsub.f32 1.0, %v5177
    %5191 = vrot.lane.b32.xlu0 %v5188, 96
    %v5192 = vpop.permute.xlu0 %5191
    %v5194 = vmul.f32 %v5189, %v5192
    %v5195 = vmul.f32 %v5177, %v5092
    %v5196 = vadd.f32 %v5194, %v5195
    %5198 = vrot.lane.b32.xlu0 %v5196, 96
    %v5199 = vpop.permute.xlu0 %5198
    %5201 = vst.msk [vmem:[#allocation5 + $0x10] sm:$0x3] %vm3168, %v5199
    %v5202 = vld [vmem:[#allocation4 + $0x48] sm:$0xff]
    %v5203 = vsel %vm363, %v5199, 0
    %5205 = vmatprep.subr.mxu0 0.0
    %5206 = vmatpush1.msra.mxu0 %v4064
    %5207 = vmatprep.subr.mxu0 0.0
    %5208 = vmatpush1.msra.mxu0 %v4065
    %5209 = vmatprep.subr.mxu0 0.0
    %5210 = vmatpush1.msra.mxu0 %v4066
    %5211 = vmatprep.subr.mxu0 0.0
    %5212 = vmatpush1.msra.mxu0 %v4067
    %5213 = vmatprep.subr.mxu0 0.0
    %5214 = vmatpush1.msra.mxu0 0.0
    %5215 = vmatprep.subr.mxu0 0.0
    %5216 = vmatpush1.msra.mxu0 0.0
    %5217 = vmatprep.subr.mxu0 0.0
    %5218 = vmatpush1.msra.mxu0 0.0
    %5219 = vmatprep.subr.mxu0 0.0
    %5220 = vmatpush1.msra.mxu0 0.0
    %5221 = vmatprep.subr.mxu0 0.0
    %5222 = vmatpush1.msra.mxu0 0.0
    %5223 = vmatprep.subr.mxu0 0.0
    %5224 = vmatpush1.msra.mxu0 0.0
    %5225 = vmatprep.subr.mxu0 0.0
    %5226 = vmatpush1.msra.mxu0 0.0
    %5227 = vmatprep.subr.mxu0 0.0
    %5228 = vmatpush1.msra.mxu0 0.0
    %5229 = vmatprep.subr.mxu0 0.0
    %5230 = vmatpush1.msra.mxu0 0.0
    %5231 = vmatprep.subr.mxu0 0.0
    %5232 = vmatpush1.msra.mxu0 0.0
    %5233 = vmatprep.subr.mxu0 0.0
    %5234 = vmatpush1.msra.mxu0 0.0
    %5235 = vmatprep.subr.mxu0 0.0
    %5236 = vmatpush1.msra.mxu0 0.0
    %5237 = vmatprep.subr.mxu0 0.0
    %5238 = vmatpush1.msra.mxu0 0.0
    %5239 = vmatprep.subr.mxu0 0.0
    %5240 = vmatpush1.msra.mxu0 0.0
    %5241 = vmatprep.subr.mxu0 0.0
    %5242 = vmatpush1.msra.mxu0 0.0
    %5243 = vmatprep.subr.mxu0 0.0
    %5244 = vmatpush1.msra.mxu0 0.0
    %5245 = vmatprep.subr.mxu0 0.0
    %5246 = vmatpush1.msra.mxu0 0.0
    %5247 = vmatprep.subr.mxu0 0.0
    %5248 = vmatpush1.msra.mxu0 0.0
    %5249 = vmatprep.subr.mxu0 0.0
    %5250 = vmatpush1.msra.mxu0 0.0
    %5251 = vmatprep.subr.mxu0 0.0
    %5252 = vmatpush1.msra.mxu0 0.0
    %5253 = vmatprep.subr.mxu0 0.0
    %5254 = vmatpush1.msra.mxu0 0.0
    %5255 = vmatprep.subr.mxu0 0.0
    %5256 = vmatpush1.msra.mxu0 0.0
    %5257 = vmatprep.subr.mxu0 0.0
    %5258 = vmatpush1.msra.mxu0 0.0
    %5259 = vmatprep.subr.mxu0 0.0
    %5260 = vmatpush1.msra.mxu0 0.0
    %5261 = vmatprep.subr.mxu0 0.0
    %5262 = vmatpush1.msra.mxu0 0.0
    %5263 = vmatprep.subr.mxu0 0.0
    %5264 = vmatpush1.msra.mxu0 0.0
    %5265 = vmatprep.subr.mxu0 0.0
    %5266 = vmatpush1.msra.mxu0 0.0
    %5267 = vmatprep.subr.mxu0 0.0
    %5268 = vmatpush1.msra.mxu0 0.0
    %5269 = vmatprep.mubr.f32.mxu0 0.0
    %5270 = vmatmul.mubr.f32.gmra.mrb[0].mxu0 %v5203
    %v5271 = vpop.f32.mrb[0].mxu0
    %v5272 = vadd.f32 %v4265, %v5271
    %v5273 = vpop.f32.mrb[0].mxu0
    %5274 = vdwg.mxu0
    %v5275 = vadd.f32 %v5202, %v5272
    %v5276 = vxor.u32 %v5275, 2147483648
    %v5277 = vmul.f32 %v5276, 1.442695
    %v5278 = vpow.pop %v5277
    %v5279 = vadd.f32 %v5278, 1.0
    %v5280 = vrcp.pop %v5279
    %v5281 = vmul.f32 1.0, %v5280
    %5283 = vrot.lane.b32.xlu0 %v5272, 64
    %v5284 = vpop.permute.xlu0 %5283
    %v5286 = vmul.f32 %v5281, %v5284
    %5288 = vrot.lane.b32.xlu0 %v5286, 64
    %v5289 = vpop.permute.xlu0 %5288
    %v5291 = vadd.f32 %v5202, %v5289
    %v5292 = vtanh.pop %v5291
    %v5293 = vsub.f32 1.0, %v5281
    %5295 = vrot.lane.b32.xlu0 %v5292, 96
    %v5296 = vpop.permute.xlu0 %5295
    %v5298 = vmul.f32 %v5293, %v5296
    %v5299 = vmul.f32 %v5281, %v5196
    %v5300 = vadd.f32 %v5298, %v5299
    %5302 = vrot.lane.b32.xlu0 %v5300, 96
    %v5303 = vpop.permute.xlu0 %5302
    %5305 = vst.msk [vmem:[#allocation5 + $0x12] sm:$0x3] %vm3168, %v5303
    %v5306 = vld [vmem:[#allocation4 + $0x50] sm:$0xff]
    %v5307 = vsel %vm363, %v5303, 0
    %5309 = vmatprep.subr.mxu0 0.0
    %5310 = vmatpush1.msra.mxu0 %v4064
    %5311 = vmatprep.subr.mxu0 0.0
    %5312 = vmatpush1.msra.mxu0 %v4065
    %5313 = vmatprep.subr.mxu0 0.0
    %5314 = vmatpush1.msra.mxu0 %v4066
    %5315 = vmatprep.subr.mxu0 0.0
    %5316 = vmatpush1.msra.mxu0 %v4067
    %5317 = vmatprep.subr.mxu0 0.0
    %5318 = vmatpush1.msra.mxu0 0.0
    %5319 = vmatprep.subr.mxu0 0.0
    %5320 = vmatpush1.msra.mxu0 0.0
    %5321 = vmatprep.subr.mxu0 0.0
    %5322 = vmatpush1.msra.mxu0 0.0
    %5323 = vmatprep.subr.mxu0 0.0
    %5324 = vmatpush1.msra.mxu0 0.0
    %5325 = vmatprep.subr.mxu0 0.0
    %5326 = vmatpush1.msra.mxu0 0.0
    %5327 = vmatprep.subr.mxu0 0.0
    %5328 = vmatpush1.msra.mxu0 0.0
    %5329 = vmatprep.subr.mxu0 0.0
    %5330 = vmatpush1.msra.mxu0 0.0
    %5331 = vmatprep.subr.mxu0 0.0
    %5332 = vmatpush1.msra.mxu0 0.0
    %5333 = vmatprep.subr.mxu0 0.0
    %5334 = vmatpush1.msra.mxu0 0.0
    %5335 = vmatprep.subr.mxu0 0.0
    %5336 = vmatpush1.msra.mxu0 0.0
    %5337 = vmatprep.subr.mxu0 0.0
    %5338 = vmatpush1.msra.mxu0 0.0
    %5339 = vmatprep.subr.mxu0 0.0
    %5340 = vmatpush1.msra.mxu0 0.0
    %5341 = vmatprep.subr.mxu0 0.0
    %5342 = vmatpush1.msra.mxu0 0.0
    %5343 = vmatprep.subr.mxu0 0.0
    %5344 = vmatpush1.msra.mxu0 0.0
    %5345 = vmatprep.subr.mxu0 0.0
    %5346 = vmatpush1.msra.mxu0 0.0
    %5347 = vmatprep.subr.mxu0 0.0
    %5348 = vmatpush1.msra.mxu0 0.0
    %5349 = vmatprep.subr.mxu0 0.0
    %5350 = vmatpush1.msra.mxu0 0.0
    %5351 = vmatprep.subr.mxu0 0.0
    %5352 = vmatpush1.msra.mxu0 0.0
    %5353 = vmatprep.subr.mxu0 0.0
    %5354 = vmatpush1.msra.mxu0 0.0
    %5355 = vmatprep.subr.mxu0 0.0
    %5356 = vmatpush1.msra.mxu0 0.0
    %5357 = vmatprep.subr.mxu0 0.0
    %5358 = vmatpush1.msra.mxu0 0.0
    %5359 = vmatprep.subr.mxu0 0.0
    %5360 = vmatpush1.msra.mxu0 0.0
    %5361 = vmatprep.subr.mxu0 0.0
    %5362 = vmatpush1.msra.mxu0 0.0
    %5363 = vmatprep.subr.mxu0 0.0
    %5364 = vmatpush1.msra.mxu0 0.0
    %5365 = vmatprep.subr.mxu0 0.0
    %5366 = vmatpush1.msra.mxu0 0.0
    %5367 = vmatprep.subr.mxu0 0.0
    %5368 = vmatpush1.msra.mxu0 0.0
    %5369 = vmatprep.subr.mxu0 0.0
    %5370 = vmatpush1.msra.mxu0 0.0
    %5371 = vmatprep.subr.mxu0 0.0
    %5372 = vmatpush1.msra.mxu0 0.0
    %5373 = vmatprep.mubr.f32.mxu0 0.0
    %5374 = vmatmul.mubr.f32.gmra.mrb[0].mxu0 %v5307
    %v5375 = vpop.f32.mrb[0].mxu0
    %v5376 = vadd.f32 %v4265, %v5375
    %v5377 = vpop.f32.mrb[0].mxu0
    %5378 = vdwg.mxu0
    %v5379 = vadd.f32 %v5306, %v5376
    %v5380 = vxor.u32 %v5379, 2147483648
    %v5381 = vmul.f32 %v5380, 1.442695
    %v5382 = vpow.pop %v5381
    %v5383 = vadd.f32 %v5382, 1.0
    %v5384 = vrcp.pop %v5383
    %v5385 = vmul.f32 1.0, %v5384
    %5387 = vrot.lane.b32.xlu0 %v5376, 64
    %v5388 = vpop.permute.xlu0 %5387
    %v5390 = vmul.f32 %v5385, %v5388
    %5392 = vrot.lane.b32.xlu0 %v5390, 64
    %v5393 = vpop.permute.xlu0 %5392
    %v5395 = vadd.f32 %v5306, %v5393
    %v5396 = vtanh.pop %v5395
    %v5397 = vsub.f32 1.0, %v5385
    %5399 = vrot.lane.b32.xlu0 %v5396, 96
    %v5400 = vpop.permute.xlu0 %5399
    %v5402 = vmul.f32 %v5397, %v5400
    %v5403 = vmul.f32 %v5385, %v5300
    %v5404 = vadd.f32 %v5402, %v5403
    %5406 = vrot.lane.b32.xlu0 %v5404, 96
    %v5407 = vpop.permute.xlu0 %5406
    %5409 = vst.msk [vmem:[#allocation5 + $0x14] sm:$0x3] %vm3168, %v5407
    %v5410 = vld [vmem:[#allocation4 + $0x58] sm:$0xff]
    %v5411 = vsel %vm363, %v5407, 0
    %5413 = vmatprep.subr.mxu0 0.0
    %5414 = vmatpush1.msra.mxu0 %v4064
    %5415 = vmatprep.subr.mxu0 0.0
    %5416 = vmatpush1.msra.mxu0 %v4065
    %5417 = vmatprep.subr.mxu0 0.0
    %5418 = vmatpush1.msra.mxu0 %v4066
    %5419 = vmatprep.subr.mxu0 0.0
    %5420 = vmatpush1.msra.mxu0 %v4067
    %5421 = vmatprep.subr.mxu0 0.0
    %5422 = vmatpush1.msra.mxu0 0.0
    %5423 = vmatprep.subr.mxu0 0.0
    %5424 = vmatpush1.msra.mxu0 0.0
    %5425 = vmatprep.subr.mxu0 0.0
    %5426 = vmatpush1.msra.mxu0 0.0
    %5427 = vmatprep.subr.mxu0 0.0
    %5428 = vmatpush1.msra.mxu0 0.0
    %5429 = vmatprep.subr.mxu0 0.0
    %5430 = vmatpush1.msra.mxu0 0.0
    %5431 = vmatprep.subr.mxu0 0.0
    %5432 = vmatpush1.msra.mxu0 0.0
    %5433 = vmatprep.subr.mxu0 0.0
    %5434 = vmatpush1.msra.mxu0 0.0
    %5435 = vmatprep.subr.mxu0 0.0
    %5436 = vmatpush1.msra.mxu0 0.0
    %5437 = vmatprep.subr.mxu0 0.0
    %5438 = vmatpush1.msra.mxu0 0.0
    %5439 = vmatprep.subr.mxu0 0.0
    %5440 = vmatpush1.msra.mxu0 0.0
    %5441 = vmatprep.subr.mxu0 0.0
    %5442 = vmatpush1.msra.mxu0 0.0
    %5443 = vmatprep.subr.mxu0 0.0
    %5444 = vmatpush1.msra.mxu0 0.0
    %5445 = vmatprep.subr.mxu0 0.0
    %5446 = vmatpush1.msra.mxu0 0.0
    %5447 = vmatprep.subr.mxu0 0.0
    %5448 = vmatpush1.msra.mxu0 0.0
    %5449 = vmatprep.subr.mxu0 0.0
    %5450 = vmatpush1.msra.mxu0 0.0
    %5451 = vmatprep.subr.mxu0 0.0
    %5452 = vmatpush1.msra.mxu0 0.0
    %5453 = vmatprep.subr.mxu0 0.0
    %5454 = vmatpush1.msra.mxu0 0.0
    %5455 = vmatprep.subr.mxu0 0.0
    %5456 = vmatpush1.msra.mxu0 0.0
    %5457 = vmatprep.subr.mxu0 0.0
    %5458 = vmatpush1.msra.mxu0 0.0
    %5459 = vmatprep.subr.mxu0 0.0
    %5460 = vmatpush1.msra.mxu0 0.0
    %5461 = vmatprep.subr.mxu0 0.0
    %5462 = vmatpush1.msra.mxu0 0.0
    %5463 = vmatprep.subr.mxu0 0.0
    %5464 = vmatpush1.msra.mxu0 0.0
    %5465 = vmatprep.subr.mxu0 0.0
    %5466 = vmatpush1.msra.mxu0 0.0
    %5467 = vmatprep.subr.mxu0 0.0
    %5468 = vmatpush1.msra.mxu0 0.0
    %5469 = vmatprep.subr.mxu0 0.0
    %5470 = vmatpush1.msra.mxu0 0.0
    %5471 = vmatprep.subr.mxu0 0.0
    %5472 = vmatpush1.msra.mxu0 0.0
    %5473 = vmatprep.subr.mxu0 0.0
    %5474 = vmatpush1.msra.mxu0 0.0
    %5475 = vmatprep.subr.mxu0 0.0
    %5476 = vmatpush1.msra.mxu0 0.0
    %5477 = vmatprep.mubr.f32.mxu0 0.0
    %5478 = vmatmul.mubr.f32.gmra.mrb[0].mxu0 %v5411
    %v5479 = vpop.f32.mrb[0].mxu0
    %v5480 = vadd.f32 %v4265, %v5479
    %v5481 = vpop.f32.mrb[0].mxu0
    %5482 = vdwg.mxu0
    %v5483 = vadd.f32 %v5410, %v5480
    %v5484 = vxor.u32 %v5483, 2147483648
    %v5485 = vmul.f32 %v5484, 1.442695
    %v5486 = vpow.pop %v5485
    %v5487 = vadd.f32 %v5486, 1.0
    %v5488 = vrcp.pop %v5487
    %v5489 = vmul.f32 1.0, %v5488
    %5491 = vrot.lane.b32.xlu0 %v5480, 64
    %v5492 = vpop.permute.xlu0 %5491
    %v5494 = vmul.f32 %v5489, %v5492
    %5496 = vrot.lane.b32.xlu0 %v5494, 64
    %v5497 = vpop.permute.xlu0 %5496
    %v5499 = vadd.f32 %v5410, %v5497
    %v5500 = vtanh.pop %v5499
    %v5501 = vsub.f32 1.0, %v5489
    %5503 = vrot.lane.b32.xlu0 %v5500, 96
    %v5504 = vpop.permute.xlu0 %5503
    %v5506 = vmul.f32 %v5501, %v5504
    %v5507 = vmul.f32 %v5489, %v5404
    %v5508 = vadd.f32 %v5506, %v5507
    %5510 = vrot.lane.b32.xlu0 %v5508, 96
    %v5511 = vpop.permute.xlu0 %5510
    %5513 = vst.msk [vmem:[#allocation5 + $0x16] sm:$0x3] %vm3168, %v5511
    %v5514 = vld [vmem:[#allocation4 + $0x60] sm:$0xff]
    %v5515 = vsel %vm363, %v5511, 0
    %5517 = vmatprep.subr.mxu0 0.0
    %5518 = vmatpush1.msra.mxu0 %v4064
    %5519 = vmatprep.subr.mxu0 0.0
    %5520 = vmatpush1.msra.mxu0 %v4065
    %5521 = vmatprep.subr.mxu0 0.0
    %5522 = vmatpush1.msra.mxu0 %v4066
    %5523 = vmatprep.subr.mxu0 0.0
    %5524 = vmatpush1.msra.mxu0 %v4067
    %5525 = vmatprep.subr.mxu0 0.0
    %5526 = vmatpush1.msra.mxu0 0.0
    %5527 = vmatprep.subr.mxu0 0.0
    %5528 = vmatpush1.msra.mxu0 0.0
    %5529 = vmatprep.subr.mxu0 0.0
    %5530 = vmatpush1.msra.mxu0 0.0
    %5531 = vmatprep.subr.mxu0 0.0
    %5532 = vmatpush1.msra.mxu0 0.0
    %5533 = vmatprep.subr.mxu0 0.0
    %5534 = vmatpush1.msra.mxu0 0.0
    %5535 = vmatprep.subr.mxu0 0.0
    %5536 = vmatpush1.msra.mxu0 0.0
    %5537 = vmatprep.subr.mxu0 0.0
    %5538 = vmatpush1.msra.mxu0 0.0
    %5539 = vmatprep.subr.mxu0 0.0
    %5540 = vmatpush1.msra.mxu0 0.0
    %5541 = vmatprep.subr.mxu0 0.0
    %5542 = vmatpush1.msra.mxu0 0.0
    %5543 = vmatprep.subr.mxu0 0.0
    %5544 = vmatpush1.msra.mxu0 0.0
    %5545 = vmatprep.subr.mxu0 0.0
    %5546 = vmatpush1.msra.mxu0 0.0
    %5547 = vmatprep.subr.mxu0 0.0
    %5548 = vmatpush1.msra.mxu0 0.0
    %5549 = vmatprep.subr.mxu0 0.0
    %5550 = vmatpush1.msra.mxu0 0.0
    %5551 = vmatprep.subr.mxu0 0.0
    %5552 = vmatpush1.msra.mxu0 0.0
    %5553 = vmatprep.subr.mxu0 0.0
    %5554 = vmatpush1.msra.mxu0 0.0
    %5555 = vmatprep.subr.mxu0 0.0
    %5556 = vmatpush1.msra.mxu0 0.0
    %5557 = vmatprep.subr.mxu0 0.0
    %5558 = vmatpush1.msra.mxu0 0.0
    %5559 = vmatprep.subr.mxu0 0.0
    %5560 = vmatpush1.msra.mxu0 0.0
    %5561 = vmatprep.subr.mxu0 0.0
    %5562 = vmatpush1.msra.mxu0 0.0
    %5563 = vmatprep.subr.mxu0 0.0
    %5564 = vmatpush1.msra.mxu0 0.0
    %5565 = vmatprep.subr.mxu0 0.0
    %5566 = vmatpush1.msra.mxu0 0.0
    %5567 = vmatprep.subr.mxu0 0.0
    %5568 = vmatpush1.msra.mxu0 0.0
    %5569 = vmatprep.subr.mxu0 0.0
    %5570 = vmatpush1.msra.mxu0 0.0
    %5571 = vmatprep.subr.mxu0 0.0
    %5572 = vmatpush1.msra.mxu0 0.0
    %5573 = vmatprep.subr.mxu0 0.0
    %5574 = vmatpush1.msra.mxu0 0.0
    %5575 = vmatprep.subr.mxu0 0.0
    %5576 = vmatpush1.msra.mxu0 0.0
    %5577 = vmatprep.subr.mxu0 0.0
    %5578 = vmatpush1.msra.mxu0 0.0
    %5579 = vmatprep.subr.mxu0 0.0
    %5580 = vmatpush1.msra.mxu0 0.0
    %5581 = vmatprep.mubr.f32.mxu0 0.0
    %5582 = vmatmul.mubr.f32.gmra.mrb[0].mxu0 %v5515
    %v5583 = vpop.f32.mrb[0].mxu0
    %v5584 = vadd.f32 %v4265, %v5583
    %v5585 = vpop.f32.mrb[0].mxu0
    %5586 = vdwg.mxu0
    %v5587 = vadd.f32 %v5514, %v5584
    %v5588 = vxor.u32 %v5587, 2147483648
    %v5589 = vmul.f32 %v5588, 1.442695
    %v5590 = vpow.pop %v5589
    %v5591 = vadd.f32 %v5590, 1.0
    %v5592 = vrcp.pop %v5591
    %v5593 = vmul.f32 1.0, %v5592
    %5595 = vrot.lane.b32.xlu0 %v5584, 64
    %v5596 = vpop.permute.xlu0 %5595
    %v5598 = vmul.f32 %v5593, %v5596
    %5600 = vrot.lane.b32.xlu0 %v5598, 64
    %v5601 = vpop.permute.xlu0 %5600
    %v5603 = vadd.f32 %v5514, %v5601
    %v5604 = vtanh.pop %v5603
    %v5605 = vsub.f32 1.0, %v5593
    %5607 = vrot.lane.b32.xlu0 %v5604, 96
    %v5608 = vpop.permute.xlu0 %5607
    %v5610 = vmul.f32 %v5605, %v5608
    %v5611 = vmul.f32 %v5593, %v5508
    %v5612 = vadd.f32 %v5610, %v5611
    %5614 = vrot.lane.b32.xlu0 %v5612, 96
    %v5615 = vpop.permute.xlu0 %5614
    %5617 = vst.msk [vmem:[#allocation5 + $0x18] sm:$0x3] %vm3168, %v5615
    %v5618 = vld [vmem:[#allocation5] sm:$0xff]
    %v5619 = vld [vmem:[#allocation5 + $0x8] sm:$0xff]
    %v5620 = vld [vmem:[#allocation5 + $0x10] sm:$0xff]
    %v5621 = vld [vmem:[#allocation5 + $0x18] sm:$0x3]
    %v5622 = vlaneseq
    %v5623 = vshrl.u32 %v5622, 7
    %v5624 = vsub.s32 0, %v5623
    %v5625 = vrot.slane %v4074, %v5624
    %v5627 = vsel %vm363, %v5618, 0
    %v5630 = vsel %vm363, %v5619, 0
    %v5633 = vsel %vm363, %v5620, 0
    %v5636 = vsel %vm363, %v5621, 0
    %5638 = vmatprep.subr.mxu0 0.0
    %5639 = vmatpush1.msra.mxu0 %v4068
    %5640 = vmatprep.subr.mxu0 0.0
    %5641 = vmatpush1.msra.mxu0 %v4069
    %5642 = vmatprep.subr.mxu0 0.0
    %5643 = vmatpush1.msra.mxu0 %v4070
    %5644 = vmatprep.subr.mxu0 0.0
    %5645 = vmatpush1.msra.mxu0 %v4071
    %5646 = vmatprep.subr.mxu0 0.0
    %5647 = vmatpush1.msra.mxu0 0.0
    %5648 = vmatprep.subr.mxu0 0.0
    %5649 = vmatpush1.msra.mxu0 0.0
    %5650 = vmatprep.subr.mxu0 0.0
    %5651 = vmatpush1.msra.mxu0 0.0
    %5652 = vmatprep.subr.mxu0 0.0
    %5653 = vmatpush1.msra.mxu0 0.0
    %5654 = vmatprep.subr.mxu0 0.0
    %5655 = vmatpush1.msra.mxu0 0.0
    %5656 = vmatprep.subr.mxu0 0.0
    %5657 = vmatpush1.msra.mxu0 0.0
    %5658 = vmatprep.subr.mxu0 0.0
    %5659 = vmatpush1.msra.mxu0 0.0
    %5660 = vmatprep.subr.mxu0 0.0
    %5661 = vmatpush1.msra.mxu0 0.0
    %5662 = vmatprep.subr.mxu0 0.0
    %5663 = vmatpush1.msra.mxu0 0.0
    %5664 = vmatprep.subr.mxu0 0.0
    %5665 = vmatpush1.msra.mxu0 0.0
    %5666 = vmatprep.subr.mxu0 0.0
    %5667 = vmatpush1.msra.mxu0 0.0
    %5668 = vmatprep.subr.mxu0 0.0
    %5669 = vmatpush1.msra.mxu0 0.0
    %5670 = vmatprep.subr.mxu0 0.0
    %5671 = vmatpush1.msra.mxu0 0.0
    %5672 = vmatprep.subr.mxu0 0.0
    %5673 = vmatpush1.msra.mxu0 0.0
    %5674 = vmatprep.subr.mxu0 0.0
    %5675 = vmatpush1.msra.mxu0 0.0
    %5676 = vmatprep.subr.mxu0 0.0
    %5677 = vmatpush1.msra.mxu0 0.0
    %5678 = vmatprep.subr.mxu0 0.0
    %5679 = vmatpush1.msra.mxu0 0.0
    %5680 = vmatprep.subr.mxu0 0.0
    %5681 = vmatpush1.msra.mxu0 0.0
    %5682 = vmatprep.subr.mxu0 0.0
    %5683 = vmatpush1.msra.mxu0 0.0
    %5684 = vmatprep.subr.mxu0 0.0
    %5685 = vmatpush1.msra.mxu0 0.0
    %5686 = vmatprep.subr.mxu0 0.0
    %5687 = vmatpush1.msra.mxu0 0.0
    %5688 = vmatprep.subr.mxu0 0.0
    %5689 = vmatpush1.msra.mxu0 0.0
    %5690 = vmatprep.subr.mxu0 0.0
    %5691 = vmatpush1.msra.mxu0 0.0
    %5692 = vmatprep.subr.mxu0 0.0
    %5693 = vmatpush1.msra.mxu0 0.0
    %5694 = vmatprep.subr.mxu0 0.0
    %5695 = vmatpush1.msra.mxu0 0.0
    %5696 = vmatprep.subr.mxu0 0.0
    %5697 = vmatpush1.msra.mxu0 0.0
    %5698 = vmatprep.subr.mxu0 0.0
    %5699 = vmatpush1.msra.mxu0 0.0
    %5700 = vmatprep.subr.mxu0 0.0
    %5701 = vmatpush1.msra.mxu0 0.0
    %5702 = vmatprep.mubr.f32.mxu0 0.0
    %5703 = vmatmul.mubr.f32.gmra.mrb[0].mxu0 %v5627
    %v5704 = vpop.f32.mrb[0].mxu0
    %v5705 = vadd.f32 %v5625, %v5704
    %v5706 = vpop.f32.mrb[0].mxu0
    %5707 = vmatprep.mubr.f32.mxu0 0.0
    %5708 = vmatmul.mubr.f32.gmra.mrb[0].mxu0 %v5630
    %v5709 = vpop.f32.mrb[0].mxu0
    %v5710 = vadd.f32 %v5625, %v5709
    %v5711 = vpop.f32.mrb[0].mxu0
    %5712 = vmatprep.mubr.f32.mxu0 0.0
    %5713 = vmatmul.mubr.f32.gmra.mrb[0].mxu0 %v5633
    %v5714 = vpop.f32.mrb[0].mxu0
    %v5715 = vadd.f32 %v5625, %v5714
    %v5716 = vpop.f32.mrb[0].mxu0
    %5717 = vmatprep.mubr.f32.mxu0 0.0
    %5718 = vmatmul.mubr.f32.gmra.mrb[0].mxu0 %v5636
    %v5719 = vpop.f32.mrb[0].mxu0
    %v5720 = vpop.f32.mrb[0].mxu0
    %5721 = vdwg.mxu0
    %v5726 = vrot.slane %v3827, 2
    %v5727 = vrot.slane %v3832, 2
    %v5728 = vsel %vm3739, %v5726, %v5727
    %v5729 = vrot.slane %v3837, 2
    %v5730 = vsel %vm3739, %v5727, %v5729
    %v5731 = vrot.slane %v3842, 2
    %v5732 = vsel %vm3739, %v5729, %v5731
    %v5734 = vsel %vm363, %v5705, 0
    %v5737 = vsel %vm363, %v5710, 0
    %v5740 = vsel %vm363, %v5715, 0
    %v5742 = vsel %vm363, %v5728, 0
    %v5744 = vsel %vm363, %v5730, 0
    %v5746 = vsel %vm363, %v5732, 0
    %5748 = vmatprep.subr.mxu0 0.0
    %5749 = vmatpush1.xpose.msra.mxu0 %v5742
    %5750 = vmatprep.subr.mxu0 0.0
    %5751 = vmatpush1.xpose.msra.mxu0 %v5744
    %5752 = vmatprep.subr.mxu0 0.0
    %5753 = vmatpush1.xpose.msra.mxu0 %v5746
    %5754 = vmatprep.subr.mxu0 0.0
    %5755 = vmatpush1.xpose.msra.mxu0 0.0
    %5756 = vmatprep.subr.mxu0 0.0
    %5757 = vmatpush1.xpose.msra.mxu0 0.0
    %5758 = vmatprep.subr.mxu0 0.0
    %5759 = vmatpush1.xpose.msra.mxu0 0.0
    %5760 = vmatprep.subr.mxu0 0.0
    %5761 = vmatpush1.xpose.msra.mxu0 0.0
    %5762 = vmatprep.subr.mxu0 0.0
    %5763 = vmatpush1.xpose.msra.mxu0 0.0
    %5764 = vmatprep.subr.mxu0 0.0
    %5765 = vmatpush1.xpose.msra.mxu0 0.0
    %5766 = vmatprep.subr.mxu0 0.0
    %5767 = vmatpush1.xpose.msra.mxu0 0.0
    %5768 = vmatprep.subr.mxu0 0.0
    %5769 = vmatpush1.xpose.msra.mxu0 0.0
    %5770 = vmatprep.subr.mxu0 0.0
    %5771 = vmatpush1.xpose.msra.mxu0 0.0
    %5772 = vmatprep.subr.mxu0 0.0
    %5773 = vmatpush1.xpose.msra.mxu0 0.0
    %5774 = vmatprep.subr.mxu0 0.0
    %5775 = vmatpush1.xpose.msra.mxu0 0.0
    %5776 = vmatprep.subr.mxu0 0.0
    %5777 = vmatpush1.xpose.msra.mxu0 0.0
    %5778 = vmatprep.subr.mxu0 0.0
    %5779 = vmatpush1.xpose.msra.mxu0 0.0
    %5780 = vmatprep.subr.mxu0 0.0
    %5781 = vmatpush1.xpose.msra.mxu0 0.0
    %5782 = vmatprep.subr.mxu0 0.0
    %5783 = vmatpush1.xpose.msra.mxu0 0.0
    %5784 = vmatprep.subr.mxu0 0.0
    %5785 = vmatpush1.xpose.msra.mxu0 0.0
    %5786 = vmatprep.subr.mxu0 0.0
    %5787 = vmatpush1.xpose.msra.mxu0 0.0
    %5788 = vmatprep.subr.mxu0 0.0
    %5789 = vmatpush1.xpose.msra.mxu0 0.0
    %5790 = vmatprep.subr.mxu0 0.0
    %5791 = vmatpush1.xpose.msra.mxu0 0.0
    %5792 = vmatprep.subr.mxu0 0.0
    %5793 = vmatpush1.xpose.msra.mxu0 0.0
    %5794 = vmatprep.subr.mxu0 0.0
    %5795 = vmatpush1.xpose.msra.mxu0 0.0
    %5796 = vmatprep.subr.mxu0 0.0
    %5797 = vmatpush1.xpose.msra.mxu0 0.0
    %5798 = vmatprep.subr.mxu0 0.0
    %5799 = vmatpush1.xpose.msra.mxu0 0.0
    %5800 = vmatprep.subr.mxu0 0.0
    %5801 = vmatpush1.xpose.msra.mxu0 0.0
    %5802 = vmatprep.subr.mxu0 0.0
    %5803 = vmatpush1.xpose.msra.mxu0 0.0
    %5804 = vmatprep.subr.mxu0 0.0
    %5805 = vmatpush1.xpose.msra.mxu0 0.0
    %5806 = vmatprep.subr.mxu0 0.0
    %5807 = vmatpush1.xpose.msra.mxu0 0.0
    %5808 = vmatprep.subr.mxu0 0.0
    %5809 = vmatpush1.xpose.msra.mxu0 0.0
    %5810 = vmatprep.subr.mxu0 0.0
    %5811 = vmatpush1.xpose.msra.mxu0 0.0
    %5812 = vmatprep.mubr.f32.mxu0 0.0
    %5813 = vmatmul.mubr.f32.gmra.mrb[0].mxu0 %v5734
    %v5814 = vpop.f32.mrb[0].mxu0
    %v5815 = vadd.f32 0.0, %v5814
    %v5816 = vpop.f32.mrb[0].mxu0
    %5817 = vmatprep.mubr.f32.mxu0 0.0
    %5818 = vmatmul.mubr.f32.gmra.mrb[0].mxu0 %v5737
    %v5819 = vpop.f32.mrb[0].mxu0
    %v5820 = vadd.f32 0.0, %v5819
    %v5821 = vpop.f32.mrb[0].mxu0
    %5822 = vmatprep.mubr.f32.mxu0 0.0
    %5823 = vmatmul.mubr.f32.gmra.mrb[0].mxu0 %v5740
    %v5824 = vpop.f32.mrb[0].mxu0
    %v5825 = vadd.f32 0.0, %v5824
    %v5826 = vpop.f32.mrb[0].mxu0
    %5827 = vdwg.mxu0
    %v5831 = vmul.f32 %v5705, %v5728
    %v5832 = vmul.f32 %v5710, %v5730
    %v5833 = vmul.f32 %v5715, %v5732
    %v5834 = vsel %vm363, %v5831, 0.0
    %5835 = vadd.xlane.f32.xlu0 %v5834
    %v5836 = vpop.xlane.xlu0 %5835
    %v5837 = vsel %vm363, %v5832, 0.0
    %5838 = vadd.xlane.f32.xlu0 %v5837
    %v5839 = vpop.xlane.xlu0 %5838
    %v5840 = vsel %vm363, %v5833, 0.0
    %5841 = vadd.xlane.f32.xlu0 %v5840
    %v5842 = vpop.xlane.xlu0 %5841
    %vm5843 = vcmask 195584
    %v5844 = vsel %vm5843, %v5815, -inf
    %5845 = vmax.xlane.f32.xlu0 %v5844
    %v5846 = vpop.xlane.xlu0 %5845
    %v5847 = vsel %vm5843, %v5820, -inf
    %5848 = vmax.xlane.f32.xlu0 %v5847
    %v5849 = vpop.xlane.xlu0 %5848
    %v5850 = vsel %vm5843, %v5825, -inf
    %5851 = vmax.xlane.f32.xlu0 %v5850
    %v5852 = vpop.xlane.xlu0 %5851
    %v5853 = vsub.f32 %v5815, %v5846
    %v5854 = vsub.f32 %v5820, %v5849
    %v5855 = vsub.f32 %v5825, %v5852
    %v5856 = vmul.f32 %v5853, 1.442695
    %v5857 = vpow.pop %v5856
    %v5858 = vmul.f32 %v5854, 1.442695
    %v5859 = vpow.pop %v5858
    %v5860 = vmul.f32 %v5855, 1.442695
    %v5861 = vpow.pop %v5860
    %v5862 = vsel %vm5843, %v5857, 0.0
    %5863 = vadd.xlane.f32.xlu0 %v5862
    %v5864 = vpop.xlane.xlu0 %5863
    %v5865 = vsel %vm5843, %v5859, 0.0
    %5866 = vadd.xlane.f32.xlu0 %v5865
    %v5867 = vpop.xlane.xlu0 %5866
    %v5868 = vsel %vm5843, %v5861, 0.0
    %5869 = vadd.xlane.f32.xlu0 %v5868
    %v5870 = vpop.xlane.xlu0 %5869
    %v5871 = vlog2.pop %v5864
    %v5872 = vmul.f32 %v5871, 0.6931472
    %v5873 = vlog2.pop %v5867
    %v5874 = vmul.f32 %v5873, 0.6931472
    %v5875 = vlog2.pop %v5870
    %v5876 = vmul.f32 %v5875, 0.6931472
    %v5877 = vadd.f32 %v5872, %v5846
    %v5878 = vadd.f32 %v5874, %v5849
    %v5879 = vadd.f32 %v5876, %v5852
    %v5880 = vsub.f32 %v5877, %v5836
    %v5881 = vsub.f32 %v5878, %v5839
    %v5882 = vsub.f32 %v5879, %v5842
    %v5883 = vadd.f32 %v5880, %v5881
    %v5884 = vadd.f32 %v5883, %v5882
    %v5885 = vrot.slane %v5884, 4
    %v5886 = vadd.f32 %v5884, %v5885
    %v5887 = vrot.slane %v5886, 2
    %v5888 = vadd.f32 %v5886, %v5887
    %v5889 = vrot.slane %v5888, 1
    %v5890 = vadd.f32 %v5888, %v5889
    %v5891 = vmul.f32 %v5890, 0.041666668
    %v5892 = vadd.f32 %v5891, 0.0
    %5893 = vrot.lane.b32.xlu0 %v5705, 96
    %v5894 = vpop.permute.xlu0 %5893
    %5895 = vrot.lane.b32.xlu0 %v5710, 96
    %v5896 = vpop.permute.xlu0 %5895
    %5897 = vrot.lane.b32.xlu0 %v5715, 96
    %v5898 = vpop.permute.xlu0 %5897
    %vm5899 = vcmask 1043456
    %v5900 = vrot.slane %v3827, 4
    %v5901 = vrot.slane %v3832, 4
    %v5902 = vsel %vm5899, %v5900, %v5901
    %v5903 = vrot.slane %v3837, 4
    %v5904 = vsel %vm5899, %v5901, %v5903
    %v5905 = vrot.slane %v3842, 4
    %v5906 = vsel %vm5899, %v5903, %v5905
    %v5907 = vsel %vm363, %v5894, 0
    %v5909 = vsel %vm363, %v5896, 0
    %v5911 = vsel %vm363, %v5898, 0
    %v5913 = vsel %vm363, %v5902, 0
    %v5915 = vsel %vm363, %v5904, 0
    %v5917 = vsel %vm363, %v5906, 0
    %5919 = vmatprep.subr.mxu0 0.0
    %5920 = vmatpush1.xpose.msra.mxu0 %v5913
    %5921 = vmatprep.subr.mxu0 0.0
    %5922 = vmatpush1.xpose.msra.mxu0 %v5915
    %5923 = vmatprep.subr.mxu0 0.0
    %5924 = vmatpush1.xpose.msra.mxu0 %v5917
    %5925 = vmatprep.subr.mxu0 0.0
    %5926 = vmatpush1.xpose.msra.mxu0 0.0
    %5927 = vmatprep.subr.mxu0 0.0
    %5928 = vmatpush1.xpose.msra.mxu0 0.0
    %5929 = vmatprep.subr.mxu0 0.0
    %5930 = vmatpush1.xpose.msra.mxu0 0.0
    %5931 = vmatprep.subr.mxu0 0.0
    %5932 = vmatpush1.xpose.msra.mxu0 0.0
    %5933 = vmatprep.subr.mxu0 0.0
    %5934 = vmatpush1.xpose.msra.mxu0 0.0
    %5935 = vmatprep.subr.mxu0 0.0
    %5936 = vmatpush1.xpose.msra.mxu0 0.0
    %5937 = vmatprep.subr.mxu0 0.0
    %5938 = vmatpush1.xpose.msra.mxu0 0.0
    %5939 = vmatprep.subr.mxu0 0.0
    %5940 = vmatpush1.xpose.msra.mxu0 0.0
    %5941 = vmatprep.subr.mxu0 0.0
    %5942 = vmatpush1.xpose.msra.mxu0 0.0
    %5943 = vmatprep.subr.mxu0 0.0
    %5944 = vmatpush1.xpose.msra.mxu0 0.0
    %5945 = vmatprep.subr.mxu0 0.0
    %5946 = vmatpush1.xpose.msra.mxu0 0.0
    %5947 = vmatprep.subr.mxu0 0.0
    %5948 = vmatpush1.xpose.msra.mxu0 0.0
    %5949 = vmatprep.subr.mxu0 0.0
    %5950 = vmatpush1.xpose.msra.mxu0 0.0
    %5951 = vmatprep.subr.mxu0 0.0
    %5952 = vmatpush1.xpose.msra.mxu0 0.0
    %5953 = vmatprep.subr.mxu0 0.0
    %5954 = vmatpush1.xpose.msra.mxu0 0.0
    %5955 = vmatprep.subr.mxu0 0.0
    %5956 = vmatpush1.xpose.msra.mxu0 0.0
    %5957 = vmatprep.subr.mxu0 0.0
    %5958 = vmatpush1.xpose.msra.mxu0 0.0
    %5959 = vmatprep.subr.mxu0 0.0
    %5960 = vmatpush1.xpose.msra.mxu0 0.0
    %5961 = vmatprep.subr.mxu0 0.0
    %5962 = vmatpush1.xpose.msra.mxu0 0.0
    %5963 = vmatprep.subr.mxu0 0.0
    %5964 = vmatpush1.xpose.msra.mxu0 0.0
    %5965 = vmatprep.subr.mxu0 0.0
    %5966 = vmatpush1.xpose.msra.mxu0 0.0
    %5967 = vmatprep.subr.mxu0 0.0
    %5968 = vmatpush1.xpose.msra.mxu0 0.0
    %5969 = vmatprep.subr.mxu0 0.0
    %5970 = vmatpush1.xpose.msra.mxu0 0.0
    %5971 = vmatprep.subr.mxu0 0.0
    %5972 = vmatpush1.xpose.msra.mxu0 0.0
    %5973 = vmatprep.subr.mxu0 0.0
    %5974 = vmatpush1.xpose.msra.mxu0 0.0
    %5975 = vmatprep.subr.mxu0 0.0
    %5976 = vmatpush1.xpose.msra.mxu0 0.0
    %5977 = vmatprep.subr.mxu0 0.0
    %5978 = vmatpush1.xpose.msra.mxu0 0.0
    %5979 = vmatprep.subr.mxu0 0.0
    %5980 = vmatpush1.xpose.msra.mxu0 0.0
    %5981 = vmatprep.subr.mxu0 0.0
    %5982 = vmatpush1.xpose.msra.mxu0 0.0
    %5983 = vmatprep.mubr.f32.mxu0 0.0
    %5984 = vmatmul.mubr.f32.gmra.mrb[0].mxu0 %v5907
    %v5985 = vpop.f32.mrb[0].mxu0
    %v5986 = vadd.f32 0.0, %v5985
    %v5987 = vpop.f32.mrb[0].mxu0
    %5988 = vmatprep.mubr.f32.mxu0 0.0
    %5989 = vmatmul.mubr.f32.gmra.mrb[0].mxu0 %v5909
    %v5990 = vpop.f32.mrb[0].mxu0
    %v5991 = vadd.f32 0.0, %v5990
    %v5992 = vpop.f32.mrb[0].mxu0
    %5993 = vmatprep.mubr.f32.mxu0 0.0
    %5994 = vmatmul.mubr.f32.gmra.mrb[0].mxu0 %v5911
    %v5995 = vpop.f32.mrb[0].mxu0
    %v5996 = vadd.f32 0.0, %v5995
    %v5997 = vpop.f32.mrb[0].mxu0
    %5998 = vdwg.mxu0
    %5999 = vrot.lane.b32.xlu0 %v5902, 32
    %v6000 = vpop.permute.xlu0 %5999
    %6001 = vrot.lane.b32.xlu0 %v5904, 32
    %v6002 = vpop.permute.xlu0 %6001
    %6003 = vrot.lane.b32.xlu0 %v5906, 32
    %v6004 = vpop.permute.xlu0 %6003
    %v6008 = vmul.f32 %v5705, %v6000
    %v6009 = vmul.f32 %v5710, %v6002
    %v6010 = vmul.f32 %v5715, %v6004
    %6014 = vrot.lane.b32.xlu0 %v6008, 96
    %v6015 = vpop.permute.xlu0 %6014
    %6016 = vrot.lane.b32.xlu0 %v6009, 96
    %v6017 = vpop.permute.xlu0 %6016
    %6018 = vrot.lane.b32.xlu0 %v6010, 96
    %v6019 = vpop.permute.xlu0 %6018
    %v6023 = vsel %vm363, %v6015, 0.0
    %6024 = vadd.xlane.f32.xlu0 %v6023
    %v6025 = vpop.xlane.xlu0 %6024
    %v6026 = vsel %vm363, %v6017, 0.0
    %6027 = vadd.xlane.f32.xlu0 %v6026
    %v6028 = vpop.xlane.xlu0 %6027
    %vm6029 = vcmask 259072
    %v6030 = vsel %vm6029, %v6019, 0.0
    %6031 = vadd.xlane.f32.xlu0 %v6030
    %v6032 = vpop.xlane.xlu0 %6031
    %vm6033 = vcmask 179200
    %v6034 = vsel %vm6033, %v5986, -inf
    %6035 = vmax.xlane.f32.xlu0 %v6034
    %v6036 = vpop.xlane.xlu0 %6035
    %v6037 = vsel %vm6033, %v5991, -inf
    %6038 = vmax.xlane.f32.xlu0 %v6037
    %v6039 = vpop.xlane.xlu0 %6038
    %vm6040 = vcmask 177152
    %v6041 = vsel %vm6040, %v5996, -inf
    %6042 = vmax.xlane.f32.xlu0 %v6041
    %v6043 = vpop.xlane.xlu0 %6042
    %v6044 = vsub.f32 %v5986, %v6036
    %v6045 = vsub.f32 %v5991, %v6039
    %v6046 = vsub.f32 %v5996, %v6043
    %v6047 = vmul.f32 %v6044, 1.442695
    %v6048 = vpow.pop %v6047
    %v6049 = vmul.f32 %v6045, 1.442695
    %v6050 = vpow.pop %v6049
    %v6051 = vmul.f32 %v6046, 1.442695
    %v6052 = vpow.pop %v6051
    %v6053 = vsel %vm6033, %v6048, 0.0
    %6054 = vadd.xlane.f32.xlu0 %v6053
    %v6055 = vpop.xlane.xlu0 %6054
    %v6056 = vsel %vm6033, %v6050, 0.0
    %6057 = vadd.xlane.f32.xlu0 %v6056
    %v6058 = vpop.xlane.xlu0 %6057
    %v6059 = vsel %vm6040, %v6052, 0.0
    %6060 = vadd.xlane.f32.xlu0 %v6059
    %v6061 = vpop.xlane.xlu0 %6060
    %v6062 = vlog2.pop %v6055
    %v6063 = vmul.f32 %v6062, 0.6931472
    %v6064 = vlog2.pop %v6058
    %v6065 = vmul.f32 %v6064, 0.6931472
    %v6066 = vlog2.pop %v6061
    %v6067 = vmul.f32 %v6066, 0.6931472
    %v6068 = vadd.f32 %v6063, %v6036
    %v6069 = vadd.f32 %v6065, %v6039
    %v6070 = vadd.f32 %v6067, %v6043
    %v6071 = vsub.f32 %v6068, %v6025
    %v6072 = vsub.f32 %v6069, %v6028
    %v6073 = vsub.f32 %v6070, %v6032
    %v6074 = vadd.f32 %v6071, %v6072
    %v6075 = vsel %vm3739, %v6073, 0.0
    %v6076 = vadd.f32 %v6074, %v6075
    %v6077 = vrot.slane %v6076, 4
    %v6078 = vadd.f32 %v6076, %v6077
    %v6079 = vrot.slane %v6078, 2
    %v6080 = vadd.f32 %v6078, %v6079
    %v6081 = vrot.slane %v6080, 1
    %v6082 = vadd.f32 %v6080, %v6081
    %v6083 = vmul.f32 %v6082, 0.045454547
    %v6084 = vadd.f32 %v5892, %v6083
    %6085 = vrot.lane.b32.xlu0 %v5705, 64
    %v6086 = vpop.permute.xlu0 %6085
    %6087 = vrot.lane.b32.xlu0 %v5710, 64
    %v6088 = vpop.permute.xlu0 %6087
    %6089 = vrot.lane.b32.xlu0 %v5715, 64
    %v6090 = vpop.permute.xlu0 %6089
    %vm6091 = vcmask 1041408
    %v6092 = vrot.slane %v3827, 6
    %v6093 = vrot.slane %v3832, 6
    %v6094 = vsel %vm6091, %v6092, %v6093
    %v6095 = vrot.slane %v3837, 6
    %v6096 = vsel %vm6091, %v6093, %v6095
    %v6097 = vrot.slane %v3842, 6
    %v6098 = vsel %vm6091, %v6095, %v6097
    %v6099 = vsel %vm363, %v6086, 0
    %v6101 = vsel %vm363, %v6088, 0
    %v6103 = vsel %vm363, %v6090, 0
    %v6105 = vsel %vm363, %v6094, 0
    %v6107 = vsel %vm363, %v6096, 0
    %v6109 = vsel %vm363, %v6098, 0
    %6111 = vmatprep.subr.mxu0 0.0
    %6112 = vmatpush1.xpose.msra.mxu0 %v6105
    %6113 = vmatprep.subr.mxu0 0.0
    %6114 = vmatpush1.xpose.msra.mxu0 %v6107
    %6115 = vmatprep.subr.mxu0 0.0
    %6116 = vmatpush1.xpose.msra.mxu0 %v6109
    %6117 = vmatprep.subr.mxu0 0.0
    %6118 = vmatpush1.xpose.msra.mxu0 0.0
    %6119 = vmatprep.subr.mxu0 0.0
    %6120 = vmatpush1.xpose.msra.mxu0 0.0
    %6121 = vmatprep.subr.mxu0 0.0
    %6122 = vmatpush1.xpose.msra.mxu0 0.0
    %6123 = vmatprep.subr.mxu0 0.0
    %6124 = vmatpush1.xpose.msra.mxu0 0.0
    %6125 = vmatprep.subr.mxu0 0.0
    %6126 = vmatpush1.xpose.msra.mxu0 0.0
    %6127 = vmatprep.subr.mxu0 0.0
    %6128 = vmatpush1.xpose.msra.mxu0 0.0
    %6129 = vmatprep.subr.mxu0 0.0
    %6130 = vmatpush1.xpose.msra.mxu0 0.0
    %6131 = vmatprep.subr.mxu0 0.0
    %6132 = vmatpush1.xpose.msra.mxu0 0.0
    %6133 = vmatprep.subr.mxu0 0.0
    %6134 = vmatpush1.xpose.msra.mxu0 0.0
    %6135 = vmatprep.subr.mxu0 0.0
    %6136 = vmatpush1.xpose.msra.mxu0 0.0
    %6137 = vmatprep.subr.mxu0 0.0
    %6138 = vmatpush1.xpose.msra.mxu0 0.0
    %6139 = vmatprep.subr.mxu0 0.0
    %6140 = vmatpush1.xpose.msra.mxu0 0.0
    %6141 = vmatprep.subr.mxu0 0.0
    %6142 = vmatpush1.xpose.msra.mxu0 0.0
    %6143 = vmatprep.subr.mxu0 0.0
    %6144 = vmatpush1.xpose.msra.mxu0 0.0
    %6145 = vmatprep.subr.mxu0 0.0
    %6146 = vmatpush1.xpose.msra.mxu0 0.0
    %6147 = vmatprep.subr.mxu0 0.0
    %6148 = vmatpush1.xpose.msra.mxu0 0.0
    %6149 = vmatprep.subr.mxu0 0.0
    %6150 = vmatpush1.xpose.msra.mxu0 0.0
    %6151 = vmatprep.subr.mxu0 0.0
    %6152 = vmatpush1.xpose.msra.mxu0 0.0
    %6153 = vmatprep.subr.mxu0 0.0
    %6154 = vmatpush1.xpose.msra.mxu0 0.0
    %6155 = vmatprep.subr.mxu0 0.0
    %6156 = vmatpush1.xpose.msra.mxu0 0.0
    %6157 = vmatprep.subr.mxu0 0.0
    %6158 = vmatpush1.xpose.msra.mxu0 0.0
    %6159 = vmatprep.subr.mxu0 0.0
    %6160 = vmatpush1.xpose.msra.mxu0 0.0
    %6161 = vmatprep.subr.mxu0 0.0
    %6162 = vmatpush1.xpose.msra.mxu0 0.0
    %6163 = vmatprep.subr.mxu0 0.0
    %6164 = vmatpush1.xpose.msra.mxu0 0.0
    %6165 = vmatprep.subr.mxu0 0.0
    %6166 = vmatpush1.xpose.msra.mxu0 0.0
    %6167 = vmatprep.subr.mxu0 0.0
    %6168 = vmatpush1.xpose.msra.mxu0 0.0
    %6169 = vmatprep.subr.mxu0 0.0
    %6170 = vmatpush1.xpose.msra.mxu0 0.0
    %6171 = vmatprep.subr.mxu0 0.0
    %6172 = vmatpush1.xpose.msra.mxu0 0.0
    %6173 = vmatprep.subr.mxu0 0.0
    %6174 = vmatpush1.xpose.msra.mxu0 0.0
    %6175 = vmatprep.mubr.f32.mxu0 0.0
    %6176 = vmatmul.mubr.f32.gmra.mrb[0].mxu0 %v6099
    %v6177 = vpop.f32.mrb[0].mxu0
    %v6178 = vadd.f32 0.0, %v6177
    %v6179 = vpop.f32.mrb[0].mxu0
    %6180 = vmatprep.mubr.f32.mxu0 0.0
    %6181 = vmatmul.mubr.f32.gmra.mrb[0].mxu0 %v6101
    %v6182 = vpop.f32.mrb[0].mxu0
    %v6183 = vadd.f32 0.0, %v6182
    %v6184 = vpop.f32.mrb[0].mxu0
    %6185 = vmatprep.mubr.f32.mxu0 0.0
    %6186 = vmatmul.mubr.f32.gmra.mrb[0].mxu0 %v6103
    %v6187 = vpop.f32.mrb[0].mxu0
    %v6188 = vadd.f32 0.0, %v6187
    %v6189 = vpop.f32.mrb[0].mxu0
    %6190 = vdwg.mxu0
    %6191 = vrot.lane.b32.xlu0 %v6094, 64
    %v6192 = vpop.permute.xlu0 %6191
    %6193 = vrot.lane.b32.xlu0 %v6096, 64
    %v6194 = vpop.permute.xlu0 %6193
    %6195 = vrot.lane.b32.xlu0 %v6098, 64
    %v6196 = vpop.permute.xlu0 %6195
    %v6200 = vmul.f32 %v5705, %v6192
    %v6201 = vmul.f32 %v5710, %v6194
    %v6202 = vmul.f32 %v5715, %v6196
    %6206 = vrot.lane.b32.xlu0 %v6200, 64
    %v6207 = vpop.permute.xlu0 %6206
    %6208 = vrot.lane.b32.xlu0 %v6201, 64
    %v6209 = vpop.permute.xlu0 %6208
    %6210 = vrot.lane.b32.xlu0 %v6202, 64
    %v6211 = vpop.permute.xlu0 %6210
    %v6215 = vsel %vm363, %v6207, 0.0
    %6216 = vadd.xlane.f32.xlu0 %v6215
    %v6217 = vpop.xlane.xlu0 %6216
    %v6218 = vsel %vm363, %v6209, 0.0
    %6219 = vadd.xlane.f32.xlu0 %v6218
    %v6220 = vpop.xlane.xlu0 %6219
    %v6221 = vsel %vm390, %v6211, 0.0
    %6222 = vadd.xlane.f32.xlu0 %v6221
    %v6223 = vpop.xlane.xlu0 %6222
    %vm6224 = vcmask 162816
    %v6225 = vsel %vm6224, %v6178, -inf
    %6226 = vmax.xlane.f32.xlu0 %v6225
    %v6227 = vpop.xlane.xlu0 %6226
    %v6228 = vsel %vm6224, %v6183, -inf
    %6229 = vmax.xlane.f32.xlu0 %v6228
    %v6230 = vpop.xlane.xlu0 %6229
    %vm6231 = vcmask 158720
    %v6232 = vsel %vm6231, %v6188, -inf
    %6233 = vmax.xlane.f32.xlu0 %v6232
    %v6234 = vpop.xlane.xlu0 %6233
    %v6235 = vsub.f32 %v6178, %v6227
    %v6236 = vsub.f32 %v6183, %v6230
    %v6237 = vsub.f32 %v6188, %v6234
    %v6238 = vmul.f32 %v6235, 1.442695
    %v6239 = vpow.pop %v6238
    %v6240 = vmul.f32 %v6236, 1.442695
    %v6241 = vpow.pop %v6240
    %v6242 = vmul.f32 %v6237, 1.442695
    %v6243 = vpow.pop %v6242
    %v6244 = vsel %vm6224, %v6239, 0.0
    %6245 = vadd.xlane.f32.xlu0 %v6244
    %v6246 = vpop.xlane.xlu0 %6245
    %v6247 = vsel %vm6224, %v6241, 0.0
    %6248 = vadd.xlane.f32.xlu0 %v6247
    %v6249 = vpop.xlane.xlu0 %6248
    %v6250 = vsel %vm6231, %v6243, 0.0
    %6251 = vadd.xlane.f32.xlu0 %v6250
    %v6252 = vpop.xlane.xlu0 %6251
    %v6253 = vlog2.pop %v6246
    %v6254 = vmul.f32 %v6253, 0.6931472
    %v6255 = vlog2.pop %v6249
    %v6256 = vmul.f32 %v6255, 0.6931472
    %v6257 = vlog2.pop %v6252
    %v6258 = vmul.f32 %v6257, 0.6931472
    %v6259 = vadd.f32 %v6254, %v6227
    %v6260 = vadd.f32 %v6256, %v6230
    %v6261 = vadd.f32 %v6258, %v6234
    %v6262 = vsub.f32 %v6259, %v6217
    %v6263 = vsub.f32 %v6260, %v6220
    %v6264 = vsub.f32 %v6261, %v6223
    %v6265 = vadd.f32 %v6262, %v6263
    %v6266 = vsel %vm5899, %v6264, 0.0
    %v6267 = vadd.f32 %v6265, %v6266
    %v6268 = vrot.slane %v6267, 4
    %v6269 = vadd.f32 %v6267, %v6268
    %v6270 = vrot.slane %v6269, 2
    %v6271 = vadd.f32 %v6269, %v6270
    %v6272 = vrot.slane %v6271, 1
    %v6273 = vadd.f32 %v6271, %v6272
    %v6274 = vmul.f32 %v6273, 0.05
    %v6275 = vadd.f32 %v6084, %v6274
    %6276 = vrot.lane.b32.xlu0 %v5705, 32
    %v6277 = vpop.permute.xlu0 %6276
    %6278 = vrot.lane.b32.xlu0 %v5710, 32
    %v6279 = vpop.permute.xlu0 %6278
    %6280 = vrot.lane.b32.xlu0 %v5715, 32
    %v6281 = vpop.permute.xlu0 %6280
    %v6282 = vsel %vm363, %v6277, 0
    %v6284 = vsel %vm363, %v6279, 0
    %v6286 = vsel %vm363, %v6281, 0
    %v6288 = vsel %vm363, %v3832, 0
    %v6290 = vsel %vm363, %v3837, 0
    %v6292 = vsel %vm363, %v3842, 0
    %6294 = vmatprep.subr.mxu0 0.0
    %6295 = vmatpush1.xpose.msra.mxu0 %v6288
    %6296 = vmatprep.subr.mxu0 0.0
    %6297 = vmatpush1.xpose.msra.mxu0 %v6290
    %6298 = vmatprep.subr.mxu0 0.0
    %6299 = vmatpush1.xpose.msra.mxu0 %v6292
    %6300 = vmatprep.subr.mxu0 0.0
    %6301 = vmatpush1.xpose.msra.mxu0 0.0
    %6302 = vmatprep.subr.mxu0 0.0
    %6303 = vmatpush1.xpose.msra.mxu0 0.0
    %6304 = vmatprep.subr.mxu0 0.0
    %6305 = vmatpush1.xpose.msra.mxu0 0.0
    %6306 = vmatprep.subr.mxu0 0.0
    %6307 = vmatpush1.xpose.msra.mxu0 0.0
    %6308 = vmatprep.subr.mxu0 0.0
    %6309 = vmatpush1.xpose.msra.mxu0 0.0
    %6310 = vmatprep.subr.mxu0 0.0
    %6311 = vmatpush1.xpose.msra.mxu0 0.0
    %6312 = vmatprep.subr.mxu0 0.0
    %6313 = vmatpush1.xpose.msra.mxu0 0.0
    %6314 = vmatprep.subr.mxu0 0.0
    %6315 = vmatpush1.xpose.msra.mxu0 0.0
    %6316 = vmatprep.subr.mxu0 0.0
    %6317 = vmatpush1.xpose.msra.mxu0 0.0
    %6318 = vmatprep.subr.mxu0 0.0
    %6319 = vmatpush1.xpose.msra.mxu0 0.0
    %6320 = vmatprep.subr.mxu0 0.0
    %6321 = vmatpush1.xpose.msra.mxu0 0.0
    %6322 = vmatprep.subr.mxu0 0.0
    %6323 = vmatpush1.xpose.msra.mxu0 0.0
    %6324 = vmatprep.subr.mxu0 0.0
    %6325 = vmatpush1.xpose.msra.mxu0 0.0
    %6326 = vmatprep.subr.mxu0 0.0
    %6327 = vmatpush1.xpose.msra.mxu0 0.0
    %6328 = vmatprep.subr.mxu0 0.0
    %6329 = vmatpush1.xpose.msra.mxu0 0.0
    %6330 = vmatprep.subr.mxu0 0.0
    %6331 = vmatpush1.xpose.msra.mxu0 0.0
    %6332 = vmatprep.subr.mxu0 0.0
    %6333 = vmatpush1.xpose.msra.mxu0 0.0
    %6334 = vmatprep.subr.mxu0 0.0
    %6335 = vmatpush1.xpose.msra.mxu0 0.0
    %6336 = vmatprep.subr.mxu0 0.0
    %6337 = vmatpush1.xpose.msra.mxu0 0.0
    %6338 = vmatprep.subr.mxu0 0.0
    %6339 = vmatpush1.xpose.msra.mxu0 0.0
    %6340 = vmatprep.subr.mxu0 0.0
    %6341 = vmatpush1.xpose.msra.mxu0 0.0
    %6342 = vmatprep.subr.mxu0 0.0
    %6343 = vmatpush1.xpose.msra.mxu0 0.0
    %6344 = vmatprep.subr.mxu0 0.0
    %6345 = vmatpush1.xpose.msra.mxu0 0.0
    %6346 = vmatprep.subr.mxu0 0.0
    %6347 = vmatpush1.xpose.msra.mxu0 0.0
    %6348 = vmatprep.subr.mxu0 0.0
    %6349 = vmatpush1.xpose.msra.mxu0 0.0
    %6350 = vmatprep.subr.mxu0 0.0
    %6351 = vmatpush1.xpose.msra.mxu0 0.0
    %6352 = vmatprep.subr.mxu0 0.0
    %6353 = vmatpush1.xpose.msra.mxu0 0.0
    %6354 = vmatprep.subr.mxu0 0.0
    %6355 = vmatpush1.xpose.msra.mxu0 0.0
    %6356 = vmatprep.subr.mxu0 0.0
    %6357 = vmatpush1.xpose.msra.mxu0 0.0
    %6358 = vmatprep.mubr.f32.mxu0 0.0
    %6359 = vmatmul.mubr.f32.gmra.mrb[0].mxu0 %v6282
    %v6360 = vpop.f32.mrb[0].mxu0
    %v6361 = vadd.f32 0.0, %v6360
    %v6362 = vpop.f32.mrb[0].mxu0
    %6363 = vmatprep.mubr.f32.mxu0 0.0
    %6364 = vmatmul.mubr.f32.gmra.mrb[0].mxu0 %v6284
    %v6365 = vpop.f32.mrb[0].mxu0
    %v6366 = vadd.f32 0.0, %v6365
    %v6367 = vpop.f32.mrb[0].mxu0
    %6368 = vmatprep.mubr.f32.mxu0 0.0
    %6369 = vmatmul.mubr.f32.gmra.mrb[0].mxu0 %v6286
    %v6370 = vpop.f32.mrb[0].mxu0
    %v6371 = vadd.f32 0.0, %v6370
    %v6372 = vpop.f32.mrb[0].mxu0
    %6373 = vdwg.mxu0
    %6374 = vrot.lane.b32.xlu0 %v3832, 96
    %v6375 = vpop.permute.xlu0 %6374
    %6376 = vrot.lane.b32.xlu0 %v3837, 96
    %v6377 = vpop.permute.xlu0 %6376
    %6378 = vrot.lane.b32.xlu0 %v3842, 96
    %v6379 = vpop.permute.xlu0 %6378
    %v6383 = vmul.f32 %v5705, %v6375
    %v6384 = vmul.f32 %v5710, %v6377
    %v6385 = vmul.f32 %v5715, %v6379
    %6389 = vrot.lane.b32.xlu0 %v6383, 32
    %v6390 = vpop.permute.xlu0 %6389
    %6391 = vrot.lane.b32.xlu0 %v6384, 32
    %v6392 = vpop.permute.xlu0 %6391
    %6393 = vrot.lane.b32.xlu0 %v6385, 32
    %v6394 = vpop.permute.xlu0 %6393
    %v6398 = vsel %vm363, %v6390, 0.0
    %6399 = vadd.xlane.f32.xlu0 %v6398
    %v6400 = vpop.xlane.xlu0 %6399
    %v6401 = vsel %vm363, %v6392, 0.0
    %6402 = vadd.xlane.f32.xlu0 %v6401
    %v6403 = vpop.xlane.xlu0 %6402
    %v6404 = vsel %vm3168, %v6394, 0.0
    %6405 = vadd.xlane.f32.xlu0 %v6404
    %v6406 = vpop.xlane.xlu0 %6405
    %vm6407 = vcmask 146432
    %v6408 = vsel %vm6407, %v6361, -inf
    %6409 = vmax.xlane.f32.xlu0 %v6408
    %v6410 = vpop.xlane.xlu0 %6409
    %v6411 = vsel %vm6407, %v6366, -inf
    %6412 = vmax.xlane.f32.xlu0 %v6411
    %v6413 = vpop.xlane.xlu0 %6412
    %vm6414 = vcmask 140288
    %v6415 = vsel %vm6414, %v6371, -inf
    %6416 = vmax.xlane.f32.xlu0 %v6415
    %v6417 = vpop.xlane.xlu0 %6416
    %v6418 = vsub.f32 %v6361, %v6410
    %v6419 = vsub.f32 %v6366, %v6413
    %v6420 = vsub.f32 %v6371, %v6417
    %v6421 = vmul.f32 %v6418, 1.442695
    %v6422 = vpow.pop %v6421
    %v6423 = vmul.f32 %v6419, 1.442695
    %v6424 = vpow.pop %v6423
    %v6425 = vmul.f32 %v6420, 1.442695
    %v6426 = vpow.pop %v6425
    %v6427 = vsel %vm6407, %v6422, 0.0
    %6428 = vadd.xlane.f32.xlu0 %v6427
    %v6429 = vpop.xlane.xlu0 %6428
    %v6430 = vsel %vm6407, %v6424, 0.0
    %6431 = vadd.xlane.f32.xlu0 %v6430
    %v6432 = vpop.xlane.xlu0 %6431
    %v6433 = vsel %vm6414, %v6426, 0.0
    %6434 = vadd.xlane.f32.xlu0 %v6433
    %v6435 = vpop.xlane.xlu0 %6434
    %v6436 = vlog2.pop %v6429
    %v6437 = vmul.f32 %v6436, 0.6931472
    %v6438 = vlog2.pop %v6432
    %v6439 = vmul.f32 %v6438, 0.6931472
    %v6440 = vlog2.pop %v6435
    %v6441 = vmul.f32 %v6440, 0.6931472
    %v6442 = vadd.f32 %v6437, %v6410
    %v6443 = vadd.f32 %v6439, %v6413
    %v6444 = vadd.f32 %v6441, %v6417
    %v6445 = vsub.f32 %v6442, %v6400
    %v6446 = vsub.f32 %v6443, %v6403
    %v6447 = vsub.f32 %v6444, %v6406
    %v6448 = vadd.f32 %v6445, %v6446
    %v6449 = vsel %vm6091, %v6447, 0.0
    %v6450 = vadd.f32 %v6448, %v6449
    %v6451 = vrot.slane %v6450, 4
    %v6452 = vadd.f32 %v6450, %v6451
    %v6453 = vrot.slane %v6452, 2
    %v6454 = vadd.f32 %v6452, %v6453
    %v6455 = vrot.slane %v6454, 1
    %v6456 = vadd.f32 %v6454, %v6455
    %v6457 = vmul.f32 %v6456, 0.055555556
    %v6458 = vadd.f32 %v6275, %v6457
    %v6459 = vmul.f32 %v6458, 0.25
    %vm6460 = vcmask 0
    %6461 = vst.msk [vmem:[#allocation6] sm:$0x1] %vm6460, %v6459
    // Predicated region
    $region18: #{_forward_impl.1} parent=1 // pred_check
      _
    $region19: #{_forward_impl.1} parent=1 // pred_check_branch
      %6463 = sbr.rel (0) target = $region21
    $region20: #{_forward_impl.1} parent=1 // pred_region
      %s6465 = ssub.s32 16, 16
      %6466 = vsyncadd [#allocation7], %s6465
      %s6468 = sshll.u32 [#allocation6], 4
      %s6469 = int_to_ptr.vmem [resolvable:$true] %s6468
      %6471 = dma.vmem_to_hbm [thread:$0]  %s6469, 16, %s4, [#allocation7]
    $region21: #{_forward_impl.1} parent=1 // pred_fallthru
      _
    // Predicated region
    $region22: #{_forward_impl.1} parent=1 // pred_check
      _
    $region23: #{_forward_impl.1} parent=1 // pred_check_branch
      %6473 = sbr.rel (0) target = $region25
    $region24: #{_forward_impl.1} parent=1 // pred_region
      %s6475 = ssub.s32 512, 512
      %6476 = vsyncadd [#allocation9], %s6475
      %s6477 = sshll.u32 [#allocation8], 4
      %s6478 = int_to_ptr.vmem [resolvable:$true] %s6477
      %6483 = dma.vmem_to_hbm [thread:$0]  %s6478, 512, %s5, [#allocation9], 128, 128, 8
    $region25: #{_forward_impl.1} parent=1 // pred_fallthru
      _
    // Predicated region
    $region26: #{_forward_impl.1} parent=1 // pred_check
      _
    $region27: #{_forward_impl.1} parent=1 // pred_check_branch
      %6485 = sbr.rel (0) target = $region29
    $region28: #{_forward_impl.1} parent=1 // pred_region
      %6486 = dma.done [#allocation7], 16
    $region29: #{_forward_impl.1} parent=1 // pred_fallthru
      _
    // Predicated region
    $region30: #{_forward_impl.1} parent=1 // pred_check
      _
    $region31: #{_forward_impl.1} parent=1 // pred_check_branch
      %6488 = sbr.rel (0) target = $region33
    $region32: #{_forward_impl.1} parent=1 // pred_region
      %6489 = dma.done [#allocation9], 512
    $region33: #{_forward_impl.1} parent=1 // pred_fallthru
      _
    %6490 = vsyncpa [#allocation7], 1
    %6491 = vsyncpa [#allocation9], 1

</llo_original>
